<compile_context>
chip_gen: v7x
topology: tpu7x:2x2x1
jax: 0.10.0
libtpu: 0.0.40
codegen_flags: <defaults>
</compile_context>

<pallas_src>
import functools

import jax
import jax.numpy as jnp
from jax.experimental import pallas as pl
from jax.experimental.pallas import tpu as pltpu

# MXU operand dtype (accumulation is always f32 via preferred_element_type).
MATMUL_DTYPE = jnp.bfloat16

_SQRT_HALF = 0.7071067811865476  # 1/sqrt(2) for exact-erf GELU (nn.GELU default)
_LN_EPS = 1e-5


# --------------------------------------------------------------------------------------
# Small in-kernel math helpers (all f32 VPU/EUP math)
# --------------------------------------------------------------------------------------
def _layernorm(x, gamma, beta, eps):
    mu = jnp.mean(x, axis=-1, keepdims=True)
    var = jnp.mean(jnp.square(x - mu), axis=-1, keepdims=True)
    return (x - mu) * jax.lax.rsqrt(var + eps) * gamma + beta


def _erf_approx(x):
    # Abramowitz & Stegun 7.1.26, max abs error ~1.5e-7; uses only exp/mul/add/where,
    # so it lowers in Mosaic (lax.erf has no guaranteed Pallas lowering).
    a1, a2, a3, a4, a5 = 0.254829592, -0.284496736, 1.421413741, -1.453152027, 1.061405429
    p = 0.3275911
    ax = jnp.abs(x)
    t = 1.0 / (1.0 + p * ax)
    poly = ((((a5 * t + a4) * t + a3) * t + a2) * t + a1) * t
    y = 1.0 - poly * jnp.exp(-ax * ax)
    return jnp.where(x >= 0, y, -y)


def _gelu_exact(x):
    return 0.5 * x * (1.0 + _erf_approx(x * _SQRT_HALF))


def _pick_batch_tile(bsz, rows_per_batch, target_rows, max_bt=8):
    """Largest divisor of bsz such that bt*rows ~ target_rows and unroll stays small."""
    cap = max(1, min(max_bt, target_rows // max(rows_per_batch, 1)))
    for bt in range(min(bsz, cap), 0, -1):
        if bsz % bt == 0:
            return bt
    return 1


def _vmem_limit(est_bytes):
    # Leave the compiler default alone for small working sets; raise it (with headroom,
    # capped below v7x's 64 MiB physical VMEM) only when the per-step tiles get large.
    if est_bytes <= 12 * 1024 * 1024:
        return None
    return int(min(60 * 1024 * 1024, 2 * est_bytes))


# --------------------------------------------------------------------------------------
# Fused PreNorm(Attention) + residual : one grid step per batch tile of bt elements.
# --------------------------------------------------------------------------------------
def _attn_block_kernel(x_ref, g_ref, bln_ref, wqkv_ref, wo_ref, bo_ref, o_ref,
                       *, heads, dim_head, scale, eps, mm_dtype):
    bt = x_ref.shape[0]
    inner = heads * dim_head
    gamma, beta = g_ref[...], bln_ref[...]
    wqkv = wqkv_ref[...]          # already in mm_dtype (cast in wrapper)
    wo = wo_ref[...]
    bo = bo_ref[...]
    for b in range(bt):                                            # static unroll, bt <= 8
        x = x_ref[b].astype(jnp.float32)                           # (n, dim)
        xn = _layernorm(x, gamma, beta, eps)
        qkv = jnp.dot(xn.astype(mm_dtype), wqkv,
                      preferred_element_type=jnp.float32)          # (n, 3*inner)
        head_out = []
        for h in range(heads):                                     # static unroll over heads
            lo = h * dim_head
            hi = lo + dim_head
            q = qkv[:, lo:hi]
            k = qkv[:, inner + lo:inner + hi]
            v = qkv[:, 2 * inner + lo:2 * inner + hi]
            dots = jax.lax.dot_general(q.astype(mm_dtype), k.astype(mm_dtype),
                                       (((1,), (1,)), ((), ())),
                                       preferred_element_type=jnp.float32) * scale
            dots = dots - jnp.max(dots, axis=-1, keepdims=True)
            e = jnp.exp(dots)
            attn = e * pl.reciprocal(jnp.sum(e, axis=-1, keepdims=True), approx=True)
            head_out.append(jnp.dot(attn.astype(mm_dtype), v.astype(mm_dtype),
                                    preferred_element_type=jnp.float32))   # (n, dh)
        merged = jnp.concatenate(head_out, axis=-1)                # (n, inner)
        y = jnp.dot(merged.astype(mm_dtype), wo,                   # ONE fused out-projection
                    preferred_element_type=jnp.float32) + bo
        o_ref[b] = (x + y).astype(o_ref.dtype)                     # fused residual


def self_attn_block(p, x, heads, dim_head, eps=_LN_EPS):
    bsz, n, dim = x.shape
    inner = heads * dim_head
    scale = dim_head ** -0.5
    bt = _pick_batch_tile(bsz, n, target_rows=256)
    kernel = functools.partial(_attn_block_kernel, heads=heads, dim_head=dim_head,
                               scale=scale, eps=eps, mm_dtype=MATMUL_DTYPE)
    itemsize = jnp.dtype(MATMUL_DTYPE).itemsize
    w_bytes = itemsize * (dim * 3 * inner + inner * dim)
    est = w_bytes + 4 * (4 * bt * n * dim + n * (4 * inner + 2 * dim) + heads * n * n)
    flops = bsz * n * (2 * dim * 3 * inner + 4 * n * inner + 2 * inner * dim)
    return pl.pallas_call(
        kernel,
        out_shape=jax.ShapeDtypeStruct((bsz, n, dim), x.dtype),
        grid=(bsz // bt,),
        in_specs=[
            pl.BlockSpec((bt, n, dim), lambda i: (i, 0, 0)),
            pl.BlockSpec((1, dim), lambda i: (0, 0)),
            pl.BlockSpec((1, dim), lambda i: (0, 0)),
            pl.BlockSpec((dim, 3 * inner), lambda i: (0, 0)),
            pl.BlockSpec((inner, dim), lambda i: (0, 0)),
            pl.BlockSpec((1, dim), lambda i: (0, 0)),
        ],
        out_specs=pl.BlockSpec((bt, n, dim), lambda i: (i, 0, 0)),
        compiler_params=pltpu.CompilerParams(
            dimension_semantics=("parallel",),
            vmem_limit_bytes=_vmem_limit(est)),
        cost_estimate=pl.CostEstimate(flops=int(flops),
                                      transcendentals=int(bsz * n * (heads * n + 1)),
                                      bytes_accessed=int(8 * bsz * n * dim + w_bytes)),
    )(x,
      p["norm"]["g"].reshape(1, dim), p["norm"]["b"].reshape(1, dim),
      p["w_qkv"].astype(MATMUL_DTYPE), p["w_out"].astype(MATMUL_DTYPE),
      p["b_out"].reshape(1, dim))


# --------------------------------------------------------------------------------------
# Fused PreNorm(FeedForward) + residual : same batch-tile grid, no pad / slice round trip.
# --------------------------------------------------------------------------------------
def _ffn_block_kernel(x_ref, g_ref, bln_ref, w1_ref, b1_ref, w2_ref, b2_ref, o_ref,
                      *, eps, mm_dtype):
    bt = x_ref.shape[0]
    gamma, beta = g_ref[...], bln_ref[...]
    w1, b1 = w1_ref[...], b1_ref[...]
    w2, b2 = w2_ref[...], b2_ref[...]
    for b in range(bt):                                            # static unroll, bt <= 8
        x = x_ref[b].astype(jnp.float32)                           # (n, dim)
        xn = _layernorm(x, gamma, beta, eps)
        h = jnp.dot(xn.astype(mm_dtype), w1,
                    preferred_element_type=jnp.float32) + b1
        h = _gelu_exact(h)                                         # exact-erf GELU (f32)
        y = jnp.dot(h.astype(mm_dtype), w2,
                    preferred_element_type=jnp.float32) + b2
        o_ref[b] = (x + y).astype(o_ref.dtype)                     # fused residual


def ffn_block(p, x, eps=_LN_EPS):
    bsz, n, dim = x.shape
    hidden = p["w1"].shape[1]
    bt = _pick_batch_tile(bsz, n, target_rows=1024)
    kernel = functools.partial(_ffn_block_kernel, eps=eps, mm_dtype=MATMUL_DTYPE)
    itemsize = jnp.dtype(MATMUL_DTYPE).itemsize
    w_bytes = itemsize * (2 * dim * hidden)
    est = w_bytes + 4 * (4 * bt * n * dim + n * hidden + n * dim)
    flops = 4 * bsz * n * dim * hidden
    return pl.pallas_call(
        kernel,
        out_shape=jax.ShapeDtypeStruct((bsz, n, dim), x.dtype),
        grid=(bsz // bt,),
        in_specs=[
            pl.BlockSpec((bt, n, dim), lambda i: (i, 0, 0)),
            pl.BlockSpec((1, dim), lambda i: (0, 0)),
            pl.BlockSpec((1, dim), lambda i: (0, 0)),
            pl.BlockSpec((dim, hidden), lambda i: (0, 0)),
            pl.BlockSpec((1, hidden), lambda i: (0, 0)),
            pl.BlockSpec((hidden, dim), lambda i: (0, 0)),
            pl.BlockSpec((1, dim), lambda i: (0, 0)),
        ],
        out_specs=pl.BlockSpec((bt, n, dim), lambda i: (i, 0, 0)),
        compiler_params=pltpu.CompilerParams(
            dimension_semantics=("parallel",),
            vmem_limit_bytes=_vmem_limit(est)),
        cost_estimate=pl.CostEstimate(flops=int(flops),
                                      transcendentals=int(bsz * n * hidden),
                                      bytes_accessed=int(8 * bsz * n * dim + w_bytes)),
    )(x, p["norm"]["g"].reshape(1, dim), p["norm"]["b"].reshape(1, dim),
      p["w1"].astype(MATMUL_DTYPE), p["b1"].reshape(1, hidden),
      p["w2"].astype(MATMUL_DTYPE), p["b2"].reshape(1, dim))


# --------------------------------------------------------------------------------------
# Fused cross-attention CLS path:
#   f-proj(CLS) -> LN -> K|V (ctx rows) / K|V|Q (CLS row) -> 1-query attention ->
#   merged out-projection -> +residual -> g-projection back to the other branch's dim.
# Context rows only go through the K|V columns (separate w_kv / w_q weights).
# --------------------------------------------------------------------------------------
def _cross_attn_kernel(cls_ref, ctx_ref, wf_ref, bf_ref, g_ref, bln_ref,
                       wkv_ref, wq_ref, wo_ref, bo_ref, wg_ref, bg_ref, o_ref,
                       *, heads, dim_head, scale, eps, mm_dtype):
    bt = cls_ref.shape[0]
    inner = heads * dim_head
    gamma, beta = g_ref[...], bln_ref[...]
    wf, bf = wf_ref[...], bf_ref[...]
    wkv, wq = wkv_ref[...], wq_ref[...]
    wo, bo = wo_ref[...], bo_ref[...]
    wg, bg = wg_ref[...], bg_ref[...]
    for b in range(bt):                                            # static unroll, bt <= 8
        cls_t = cls_ref[b].astype(jnp.float32)                     # (1, src_dim)
        ctx = ctx_ref[b].astype(jnp.float32)                       # (n_ctx, dim)

        cal_q = jnp.dot(cls_t.astype(mm_dtype), wf,
                        preferred_element_type=jnp.float32) + bf   # (1, dim)
        n_cls = _layernorm(cal_q, gamma, beta, eps)                # (1, dim)
        n_ctx = _layernorm(ctx, gamma, beta, eps)                  # (n_ctx, dim)

        kv_cls = jnp.dot(n_cls.astype(mm_dtype), wkv,
                         preferred_element_type=jnp.float32)       # (1, 2*inner)
        q_cls = jnp.dot(n_cls.astype(mm_dtype), wq,
                        preferred_element_type=jnp.float32)        # (1, inner)
        kv_ctx = jnp.dot(n_ctx.astype(mm_dtype), wkv,              # K|V only for ctx rows
                         preferred_element_type=jnp.float32)       # (n_ctx, 2*inner)

        head_out = []
        for h in range(heads):
            lo = h * dim_head
            hi = lo + dim_head
            q = q_cls[:, lo:hi]                                    # (1, dh)
            k_cls = kv_cls[:, lo:hi]
            v_cls = kv_cls[:, inner + lo:inner + hi]
            k_ctx = kv_ctx[:, lo:hi]                               # (n_ctx, dh)
            v_ctx = kv_ctx[:, inner + lo:inner + hi]

            # round operands to mm_dtype so the CLS score matches the MXU-path rounding
            qr = q.astype(mm_dtype).astype(jnp.float32)
            kr = k_cls.astype(mm_dtype).astype(jnp.float32)
            d_cls = jnp.sum(qr * kr, axis=-1, keepdims=True) * scale            # (1, 1)
            d_ctx = jax.lax.dot_general(q.astype(mm_dtype), k_ctx.astype(mm_dtype),
                                        (((1,), (1,)), ((), ())),
                                        preferred_element_type=jnp.float32) * scale  # (1, n_ctx)
            m = jnp.maximum(d_cls, jnp.max(d_ctx, axis=-1, keepdims=True))
            e_cls = jnp.exp(d_cls - m)
            e_ctx = jnp.exp(d_ctx - m)
            inv = pl.reciprocal(e_cls + jnp.sum(e_ctx, axis=-1, keepdims=True),
                                approx=True)
            oh = (e_cls * inv) * v_cls + jnp.dot((e_ctx * inv).astype(mm_dtype),
                                                 v_ctx.astype(mm_dtype),
                                                 preferred_element_type=jnp.float32)  # (1, dh)
            head_out.append(oh)

        merged = jnp.concatenate(head_out, axis=-1)                # (1, inner)
        attn_out = jnp.dot(merged.astype(mm_dtype), wo,            # ONE fused out-projection
                           preferred_element_type=jnp.float32) + bo
        cal_out = cal_q + attn_out                                 # residual on projected CLS
        res = jnp.dot(cal_out.astype(mm_dtype), wg,
                      preferred_element_type=jnp.float32) + bg     # (1, out_dim)
        o_ref[b] = res.astype(o_ref.dtype)


def cross_attn_block(p_f, p_ca, p_g, cls_tok, ctx, heads, dim_head, out_dim, eps=_LN_EPS):
    bsz, _, src_dim = cls_tok.shape
    n_ctx, dim = ctx.shape[1], ctx.shape[2]
    inner = heads * dim_head
    scale = dim_head ** -0.5
    bt = _pick_batch_tile(bsz, n_ctx, target_rows=1024)
    kernel = functools.partial(_cross_attn_kernel, heads=heads, dim_head=dim_head,
                               scale=scale, eps=eps, mm_dtype=MATMUL_DTYPE)
    itemsize = jnp.dtype(MATMUL_DTYPE).itemsize
    w_bytes = itemsize * (src_dim * dim + dim * 3 * inner + inner * dim + dim * out_dim)
    est = w_bytes + 4 * (4 * bt * (src_dim + n_ctx * dim + out_dim)
                         + n_ctx * (dim + 2 * inner))
    n_tok = n_ctx + 1
    flops = bsz * 2 * (src_dim * dim + n_tok * dim * 2 * inner + dim * inner
                       + 2 * n_tok * inner + inner * dim + dim * out_dim)
    return pl.pallas_call(
        kernel,
        out_shape=jax.ShapeDtypeStruct((bsz, 1, out_dim), ctx.dtype),
        grid=(bsz // bt,),
        in_specs=[
            pl.BlockSpec((bt, 1, src_dim), lambda i: (i, 0, 0)),
            pl.BlockSpec((bt, n_ctx, dim), lambda i: (i, 0, 0)),
            pl.BlockSpec((src_dim, dim), lambda i: (0, 0)),
            pl.BlockSpec((1, dim), lambda i: (0, 0)),
            pl.BlockSpec((1, dim), lambda i: (0, 0)),
            pl.BlockSpec((1, dim), lambda i: (0, 0)),
            pl.BlockSpec((dim, 2 * inner), lambda i: (0, 0)),
            pl.BlockSpec((dim, inner), lambda i: (0, 0)),
            pl.BlockSpec((inner, dim), lambda i: (0, 0)),
            pl.BlockSpec((1, dim), lambda i: (0, 0)),
            pl.BlockSpec((dim, out_dim), lambda i: (0, 0)),
            pl.BlockSpec((1, out_dim), lambda i: (0, 0)),
        ],
        out_specs=pl.BlockSpec((bt, 1, out_dim), lambda i: (i, 0, 0)),
        compiler_params=pltpu.CompilerParams(
            dimension_semantics=("parallel",),
            vmem_limit_bytes=_vmem_limit(est)),
        cost_estimate=pl.CostEstimate(flops=int(flops),
                                      transcendentals=int(bsz * heads * n_tok),
                                      bytes_accessed=int(4 * bsz * (src_dim + n_ctx * dim
                                                                    + out_dim) + w_bytes)),
    )(cls_tok, ctx,
      p_f["w"].astype(MATMUL_DTYPE), p_f["b"].reshape(1, dim),
      p_ca["norm"]["g"].reshape(1, dim), p_ca["norm"]["b"].reshape(1, dim),
      p_ca["w_kv"].astype(MATMUL_DTYPE), p_ca["w_q"].astype(MATMUL_DTYPE),
      p_ca["w_out"].astype(MATMUL_DTYPE), p_ca["b_out"].reshape(1, dim),
      p_g["w"].astype(MATMUL_DTYPE), p_g["b"].reshape(1, out_dim))


# --------------------------------------------------------------------------------------
# Module "apply"
# --------------------------------------------------------------------------------------
def transformer_apply(p, x, heads, dim_head):
    for layer in p["layers"]:
        x = self_attn_block(layer["attn"], x, heads, dim_head)   # residual fused in-kernel
        x = ffn_block(layer["ff"], x)                            # residual fused in-kernel
    return x


def multiscale_apply(params, xs, xl, cfg):
    xs = transformer_apply(params["enc_small"], xs, cfg["small_heads"], cfg["small_dim_head"])
    xl = transformer_apply(params["enc_large"], xl, cfg["large_heads"], cfg["large_dim_head"])
    for layer in params["cross"]:
        small_class, x_small = xs[:, 0:1], xs[:, 1:]
        large_class, x_large = xl[:, 0:1], xl[:, 1:]
        # large-branch CLS attends over small-branch patches (f_ls -> cross_attn_l -> g_sl)
        new_large_cls = cross_attn_block(layer["f_ls"], layer["cal"], layer["g_sl"],
                                         large_class, x_small,
                                         cfg["cross_heads"], cfg["small_dim_head"],
                                         cfg["large_dim"])
        xl = jnp.concatenate([new_large_cls, x_large], axis=1)
        # small-branch CLS attends over large-branch patches (f_sl -> cross_attn_s -> g_ls)
        new_small_cls = cross_attn_block(layer["f_sl"], layer["cas"], layer["g_ls"],
                                         small_class, x_large,
                                         cfg["cross_heads"], cfg["large_dim_head"],
                                         cfg["small_dim"])
        xs = jnp.concatenate([new_small_cls, x_small], axis=1)
    return xs, xl


# --------------------------------------------------------------------------------------
# Pure-JAX f32 reference (same parameters) for numerical validation of the fused kernels.
# --------------------------------------------------------------------------------------
def _ln_ref(x, g, b, eps=_LN_EPS):
    mu = jnp.mean(x, -1, keepdims=True)
    var = jnp.mean(jnp.square(x - mu), -1, keepdims=True)
    return (x - mu) * jax.lax.rsqrt(var + eps) * g + b


def _attn_ref(p, x, heads, dim_head):
    bsz, n, dim = x.shape
    inner = heads * dim_head
    xn = _ln_ref(x, p["norm"]["g"], p["norm"]["b"])
    qkv = xn @ p["w_qkv"]
    q, k, v = jnp.split(qkv, 3, axis=-1)
    sp = lambda t: t.reshape(bsz, n, heads, dim_head).transpose(0, 2, 1, 3)
    q, k, v = sp(q), sp(k), sp(v)
    dots = jnp.einsum("bhid,bhjd->bhij", q, k) * dim_head ** -0.5
    attn = jax.nn.softmax(dots, axis=-1)
    out = jnp.einsum("bhij,bhjd->bhid", attn, v).transpose(0, 2, 1, 3).reshape(bsz, n, inner)
    return x + out @ p["w_out"] + p["b_out"]


def _ffn_ref(p, x):
    xn = _ln_ref(x, p["norm"]["g"], p["norm"]["b"])
    h = xn @ p["w1"] + p["b1"]
    h = 0.5 * h * (1.0 + jax.lax.erf(h * jnp.float32(_SQRT_HALF)))
    return x + h @ p["w2"] + p["b2"]


def _cross_ref(p_f, p_ca, p_g, cls_tok, ctx, heads, dim_head):
    bsz = cls_tok.shape[0]
    inner = heads * dim_head
    cal_q = cls_tok @ p_f["w"] + p_f["b"]
    tokens = jnp.concatenate([cal_q, ctx], axis=1)
    n = tokens.shape[1]
    normed = _ln_ref(tokens, p_ca["norm"]["g"], p_ca["norm"]["b"])
    kv = normed @ p_ca["w_kv"]
    k, v = kv[..., :inner], kv[..., inner:]
    q = normed[:, 0:1] @ p_ca["w_q"]
    sp = lambda t, nn: t.reshape(bsz, nn, heads, dim_head).transpose(0, 2, 1, 3)
    kh, vh, qh = sp(k, n), sp(v, n), sp(q, 1)
    dots = jnp.einsum("bhid,bhjd->bhij", qh, kh) * dim_head ** -0.5
    attn = jax.nn.softmax(dots, axis=-1)
    out = jnp.einsum("bhij,bhjd->bhid", attn, vh).transpose(0, 2, 1, 3).reshape(bsz, 1, inner)
    cal_out = cal_q + out @ p_ca["w_out"] + p_ca["b_out"]
    return cal_out @ p_g["w"] + p_g["b"]


def multiscale_reference(params, xs, xl, cfg):
    for layer in params["enc_small"]["layers"]:
        xs = _attn_ref(layer["attn"], xs, cfg["small_heads"], cfg["small_dim_head"])
        xs = _ffn_ref(layer["ff"], xs)
    for layer in params["enc_large"]["layers"]:
        xl = _attn_ref(layer["attn"], xl, cfg["large_heads"], cfg["large_dim_head"])
        xl = _ffn_ref(layer["ff"], xl)
    for layer in params["cross"]:
        small_class, x_small = xs[:, 0:1], xs[:, 1:]
        large_class, x_large = xl[:, 0:1], xl[:, 1:]
        new_l = _cross_ref(layer["f_ls"], layer["cal"], layer["g_sl"],
                           large_class, x_small, cfg["cross_heads"], cfg["small_dim_head"])
        xl = jnp.concatenate([new_l, x_large], axis=1)
        new_s = _cross_ref(layer["f_sl"], layer["cas"], layer["g_ls"],
                           small_class, x_large, cfg["cross_heads"], cfg["large_dim_head"])
        xs = jnp.concatenate([new_s, x_small], axis=1)
    return xs, xl


# --------------------------------------------------------------------------------------
# Parameter initialization
# --------------------------------------------------------------------------------------
def _w(keygen, din, dout, scale=0.05):
    return jax.random.normal(keygen(), (din, dout), jnp.float32) * scale


def init_linear(keygen, din, dout):
    return {"w": _w(keygen, din, dout), "b": jnp.zeros((dout,), jnp.float32)}


def init_layernorm(d):
    return {"g": jnp.ones((d,), jnp.float32), "b": jnp.zeros((d,), jnp.float32)}


def init_attention(keygen, dim, heads, dim_head):
    inner = heads * dim_head
    return {"norm": init_layernorm(dim),                 # PreNorm's LayerNorm, fused in-kernel
            "w_qkv": _w(keygen, dim, 3 * inner),         # to_qkv (bias=False)
            "w_out": _w(keygen, inner, dim),
            "b_out": jnp.zeros((dim,), jnp.float32)}


def init_cross_attention(keygen, dim, heads, dim_head):
    inner = heads * dim_head
    wk, wv, wq = _w(keygen, dim, inner), _w(keygen, dim, inner), _w(keygen, dim, inner)
    return {"norm": init_layernorm(dim),
            "w_kv": jnp.concatenate([wk, wv], axis=1),   # to_k | to_v (bias=False)
            "w_q": wq,                                   # to_q (bias=False)
            "w_out": _w(keygen, inner, dim),
            "b_out": jnp.zeros((dim,), jnp.float32)}


def init_feedforward(keygen, dim, hidden):
    return {"norm": init_layernorm(dim),
            "w1": _w(keygen, dim, hidden), "b1": jnp.zeros((hidden,), jnp.float32),
            "w2": _w(keygen, hidden, dim), "b2": jnp.zeros((dim,), jnp.float32)}


def init_transformer(keygen, dim, depth, heads, dim_head, mlp_dim):
    return {"layers": [{"attn": init_attention(keygen, dim, heads, dim_head),
                        "ff": init_feedforward(keygen, dim, mlp_dim)}
                       for _ in range(depth)]}


def init_multiscale(keygen, cfg):
    params = {
        "enc_small": init_transformer(keygen, cfg["small_dim"], cfg["small_depth"],
                                      cfg["small_heads"], cfg["small_dim_head"],
                                      cfg["small_mlp_dim"]),
        "enc_large": init_transformer(keygen, cfg["large_dim"], cfg["large_depth"],
                                      cfg["large_heads"], cfg["large_dim_head"],
                                      cfg["large_mlp_dim"]),
        "cross": [],
    }
    for _ in range(cfg["cross_attn_depth"]):
        params["cross"].append({
            "f_sl": init_linear(keygen, cfg["small_dim"], cfg["large_dim"]),
            "g_ls": init_linear(keygen, cfg["large_dim"], cfg["small_dim"]),
            "cas": init_cross_attention(keygen, cfg["large_dim"],
                                        cfg["cross_heads"], cfg["large_dim_head"]),
            "f_ls": init_linear(keygen, cfg["large_dim"], cfg["small_dim"]),
            "g_sl": init_linear(keygen, cfg["small_dim"], cfg["large_dim"]),
            "cal": init_cross_attention(keygen, cfg["small_dim"],
                                        cfg["cross_heads"], cfg["small_dim_head"]),
        })
    return params


# --------------------------------------------------------------------------------------
if __name__ == "__main__":
    # Small but structurally faithful configuration (dropout=0.0 -> all Dropouts are identity).
    cfg = dict(small_dim=32, small_depth=2, small_heads=2, small_dim_head=16,
               small_mlp_dim=64,
               large_dim=64, large_depth=1, large_heads=2, large_dim_head=32,
               large_mlp_dim=128,
               cross_attn_depth=1, cross_heads=2)

    B, NS, NL = 2, 9, 5   # batch, small-branch tokens (1 cls + 8), large-branch tokens

    key = jax.random.PRNGKey(0)
    k_xs, k_xl = jax.random.split(key)
    xs = jax.random.normal(k_xs, (B, NS, cfg["small_dim"]), jnp.float32)
    xl = jax.random.normal(k_xl, (B, NL, cfg["large_dim"]), jnp.float32)

    _pkey = [jax.random.PRNGKey(1234)]

    def keygen():
        _pkey[0], sub = jax.random.split(_pkey[0])
        return sub

    params = init_multiscale(keygen, cfg)

    fwd = jax.jit(functools.partial(multiscale_apply, cfg=cfg))
    out_xs, out_xl = fwd(params, xs, xl)
    jax.block_until_ready((out_xs, out_xl))

    ref = jax.jit(functools.partial(multiscale_reference, cfg=cfg))
    ref_xs, ref_xl = ref(params, xs, xl)
    jax.block_until_ready((ref_xs, ref_xl))

    assert out_xs.shape == (B, NS, cfg["small_dim"])
    assert out_xl.shape == (B, NL, cfg["large_dim"])
    assert bool(jnp.all(jnp.isfinite(out_xs))) and bool(jnp.all(jnp.isfinite(out_xl)))
    # tolerance covers bf16 MXU operands (f32 accumulation) + approx softmax reciprocal
    assert bool(jnp.allclose(out_xs, ref_xs, rtol=5e-2, atol=5e-2))
    assert bool(jnp.allclose(out_xl, ref_xl, rtol=5e-2, atol=5e-2))
    print("KERNEL_OK")
</pallas_src>

<mosaic_0001>
module attributes {stable_mosaic.version = 11 : i64} {
  func.func @_attn_block_kernel(%arg0: i32, %arg1: memref<2x9x32xf32, #tpu.memory_space<vmem>>, %arg2: memref<1x32xf32, #tpu.memory_space<vmem>>, %arg3: memref<1x32xf32, #tpu.memory_space<vmem>>, %arg4: memref<32x96xbf16, #tpu.memory_space<vmem>>, %arg5: memref<32x32xbf16, #tpu.memory_space<vmem>>, %arg6: memref<1x32xf32, #tpu.memory_space<vmem>>, %arg7: memref<2x9x32xf32, #tpu.memory_space<vmem>>) attributes {dimension_semantics = [#tpu.dimension_semantics<parallel>], iteration_bounds = array<i64: 1>, scalar_prefetch = 0 : i64, scratch_operands = 0 : i64, tpu.core_type = #tpu.core_type<tc>, window_params = [{transform_indices = @transform_0, window_bounds = array<i64: 2, 9, 32>}, {pipeline_mode = #tpu.pipeline_mode<synchronous>, transform_indices = @transform_1, window_bounds = array<i64: 1, 32>}, {pipeline_mode = #tpu.pipeline_mode<synchronous>, transform_indices = @transform_2, window_bounds = array<i64: 1, 32>}, {pipeline_mode = #tpu.pipeline_mode<synchronous>, transform_indices = @transform_3, window_bounds = array<i64: 32, 96>}, {pipeline_mode = #tpu.pipeline_mode<synchronous>, transform_indices = @transform_4, window_bounds = array<i64: 32, 32>}, {pipeline_mode = #tpu.pipeline_mode<synchronous>, transform_indices = @transform_5, window_bounds = array<i64: 1, 32>}, {transform_indices = @transform_6, window_bounds = array<i64: 2, 9, 32>}]} {
    %c0 = arith.constant 0 : index
    %c0_0 = arith.constant 0 : index
    %0 = vector.load %arg2[%c0, %c0_0] : memref<1x32xf32, #tpu.memory_space<vmem>>, vector<1x32xf32>
    %c0_1 = arith.constant 0 : index
    %c0_2 = arith.constant 0 : index
    %1 = vector.load %arg3[%c0_1, %c0_2] : memref<1x32xf32, #tpu.memory_space<vmem>>, vector<1x32xf32>
    %c0_3 = arith.constant 0 : index
    %c0_4 = arith.constant 0 : index
    %2 = vector.load %arg4[%c0_3, %c0_4] : memref<32x96xbf16, #tpu.memory_space<vmem>>, vector<32x96xbf16>
    %c0_5 = arith.constant 0 : index
    %c0_6 = arith.constant 0 : index
    %3 = vector.load %arg5[%c0_5, %c0_6] : memref<32x32xbf16, #tpu.memory_space<vmem>>, vector<32x32xbf16>
    %c0_7 = arith.constant 0 : index
    %c0_8 = arith.constant 0 : index
    %4 = vector.load %arg6[%c0_7, %c0_8] : memref<1x32xf32, #tpu.memory_space<vmem>>, vector<1x32xf32>
    %c0_9 = arith.constant 0 : index
    %c0_10 = arith.constant 0 : index
    %c0_11 = arith.constant 0 : index
    %5 = vector.load %arg1[%c0_9, %c0_10, %c0_11] : memref<2x9x32xf32, #tpu.memory_space<vmem>>, vector<1x9x32xf32>
    %6 = vector.shape_cast %5 : vector<1x9x32xf32> to vector<9x32xf32>
    %cst = arith.constant dense<0.000000e+00> : vector<9xf32>
    %7 = vector.multi_reduction <add>, %6, %cst [1] : vector<9x32xf32> to vector<9xf32>
    %8 = vector.shape_cast %7 : vector<9xf32> to vector<9x1xf32>
    %cst_12 = arith.constant 3.200000e+01 : f32
    %9 = vector.broadcast %cst_12 : f32 to vector<9x1xf32>
    %10 = arith.divf %8, %9 : vector<9x1xf32>
    %11 = vector.broadcast %10 : vector<9x1xf32> to vector<9x32xf32>
    %12 = arith.subf %6, %11 : vector<9x32xf32>
    %13 = arith.mulf %12, %12 : vector<9x32xf32>
    %cst_13 = arith.constant dense<0.000000e+00> : vector<9xf32>
    %14 = vector.multi_reduction <add>, %13, %cst_13 [1] : vector<9x32xf32> to vector<9xf32>
    %15 = vector.shape_cast %14 : vector<9xf32> to vector<9x1xf32>
    %cst_14 = arith.constant 3.200000e+01 : f32
    %16 = vector.broadcast %cst_14 : f32 to vector<9x1xf32>
    %17 = arith.divf %15, %16 : vector<9x1xf32>
    %18 = vector.broadcast %10 : vector<9x1xf32> to vector<9x32xf32>
    %19 = arith.subf %6, %18 : vector<9x32xf32>
    %cst_15 = arith.constant 9.99999974E-6 : f32
    %20 = vector.broadcast %cst_15 : f32 to vector<9x1xf32>
    %21 = arith.addf %17, %20 : vector<9x1xf32>
    %22 = math.rsqrt %21 : vector<9x1xf32>
    %23 = vector.broadcast %22 : vector<9x1xf32> to vector<9x32xf32>
    %24 = arith.mulf %19, %23 : vector<9x32xf32>
    %25 = vector.broadcast %0 : vector<1x32xf32> to vector<9x32xf32>
    %26 = arith.mulf %24, %25 : vector<9x32xf32>
    %27 = vector.broadcast %1 : vector<1x32xf32> to vector<9x32xf32>
    %28 = arith.addf %26, %27 : vector<9x32xf32>
    %29 = arith.truncf %28 : vector<9x32xf32> to vector<9x32xbf16>
    %cst_16 = arith.constant dense<0.000000e+00> : vector<9x96xf32>
    %30 = tpu.matmul %29, %2, %cst_16 {dimension_numbers = #tpu.dot_dimension_numbers<[1], [0], [0], [1], [0, 0, 1, 1], [], []>} : vector<9x32xbf16>, vector<32x96xbf16>, vector<9x96xf32> -> vector<9x96xf32>
    %31 = vector.extract_strided_slice %30 {offsets = [0, 0], sizes = [9, 16], strides = [1, 1]} : vector<9x96xf32> to vector<9x16xf32>
    %32 = vector.extract_strided_slice %30 {offsets = [0, 32], sizes = [9, 16], strides = [1, 1]} : vector<9x96xf32> to vector<9x16xf32>
    %33 = vector.extract_strided_slice %30 {offsets = [0, 64], sizes = [9, 16], strides = [1, 1]} : vector<9x96xf32> to vector<9x16xf32>
    %34 = arith.truncf %31 : vector<9x16xf32> to vector<9x16xbf16>
    %35 = arith.truncf %32 : vector<9x16xf32> to vector<9x16xbf16>
    %cst_17 = arith.constant dense<0.000000e+00> : vector<9x9xf32>
    %36 = tpu.matmul %34, %35, %cst_17 {dimension_numbers = #tpu.dot_dimension_numbers<[1], [1], [0], [0], [0, 0, 1, 0], [], []>} : vector<9x16xbf16>, vector<9x16xbf16>, vector<9x9xf32> -> vector<9x9xf32>
    %cst_18 = arith.constant 2.500000e-01 : f32
    %37 = vector.broadcast %cst_18 : f32 to vector<9x9xf32>
    %38 = arith.mulf %36, %37 : vector<9x9xf32>
    %cst_19 = arith.constant dense<0xFF800000> : vector<9xf32>
    %39 = vector.multi_reduction <maximumf>, %38, %cst_19 [1] : vector<9x9xf32> to vector<9xf32>
    %40 = vector.shape_cast %39 : vector<9xf32> to vector<9x1xf32>
    %41 = vector.broadcast %40 : vector<9x1xf32> to vector<9x9xf32>
    %42 = arith.subf %38, %41 : vector<9x9xf32>
    %43 = math.exp %42 : vector<9x9xf32>
    %cst_20 = arith.constant dense<0.000000e+00> : vector<9xf32>
    %44 = vector.multi_reduction <add>, %43, %cst_20 [1] : vector<9x9xf32> to vector<9xf32>
    %45 = vector.shape_cast %44 : vector<9xf32> to vector<9x1xf32>
    %46 = tpu.reciprocal %45 {approx = true} : vector<9x1xf32> -> vector<9x1xf32>
    %47 = vector.broadcast %46 : vector<9x1xf32> to vector<9x9xf32>
    %48 = arith.mulf %43, %47 : vector<9x9xf32>
    %49 = arith.truncf %48 : vector<9x9xf32> to vector<9x9xbf16>
    %50 = arith.truncf %33 : vector<9x16xf32> to vector<9x16xbf16>
    %cst_21 = arith.constant dense<0.000000e+00> : vector<9x16xf32>
    %51 = tpu.matmul %49, %50, %cst_21 {dimension_numbers = #tpu.dot_dimension_numbers<[1], [0], [0], [1], [0, 0, 1, 1], [], []>} : vector<9x9xbf16>, vector<9x16xbf16>, vector<9x16xf32> -> vector<9x16xf32>
    %52 = vector.extract_strided_slice %30 {offsets = [0, 16], sizes = [9, 16], strides = [1, 1]} : vector<9x96xf32> to vector<9x16xf32>
    %53 = vector.extract_strided_slice %30 {offsets = [0, 48], sizes = [9, 16], strides = [1, 1]} : vector<9x96xf32> to vector<9x16xf32>
    %54 = vector.extract_strided_slice %30 {offsets = [0, 80], sizes = [9, 16], strides = [1, 1]} : vector<9x96xf32> to vector<9x16xf32>
    %55 = arith.truncf %52 : vector<9x16xf32> to vector<9x16xbf16>
    %56 = arith.truncf %53 : vector<9x16xf32> to vector<9x16xbf16>
    %cst_22 = arith.constant dense<0.000000e+00> : vector<9x9xf32>
    %57 = tpu.matmul %55, %56, %cst_22 {dimension_numbers = #tpu.dot_dimension_numbers<[1], [1], [0], [0], [0, 0, 1, 0], [], []>} : vector<9x16xbf16>, vector<9x16xbf16>, vector<9x9xf32> -> vector<9x9xf32>
    %cst_23 = arith.constant 2.500000e-01 : f32
    %58 = vector.broadcast %cst_23 : f32 to vector<9x9xf32>
    %59 = arith.mulf %57, %58 : vector<9x9xf32>
    %cst_24 = arith.constant dense<0xFF800000> : vector<9xf32>
    %60 = vector.multi_reduction <maximumf>, %59, %cst_24 [1] : vector<9x9xf32> to vector<9xf32>
    %61 = vector.shape_cast %60 : vector<9xf32> to vector<9x1xf32>
    %62 = vector.broadcast %61 : vector<9x1xf32> to vector<9x9xf32>
    %63 = arith.subf %59, %62 : vector<9x9xf32>
    %64 = math.exp %63 : vector<9x9xf32>
    %cst_25 = arith.constant dense<0.000000e+00> : vector<9xf32>
    %65 = vector.multi_reduction <add>, %64, %cst_25 [1] : vector<9x9xf32> to vector<9xf32>
    %66 = vector.shape_cast %65 : vector<9xf32> to vector<9x1xf32>
    %67 = tpu.reciprocal %66 {approx = true} : vector<9x1xf32> -> vector<9x1xf32>
    %68 = vector.broadcast %67 : vector<9x1xf32> to vector<9x9xf32>
    %69 = arith.mulf %64, %68 : vector<9x9xf32>
    %70 = arith.truncf %69 : vector<9x9xf32> to vector<9x9xbf16>
    %71 = arith.truncf %54 : vector<9x16xf32> to vector<9x16xbf16>
    %cst_26 = arith.constant dense<0.000000e+00> : vector<9x16xf32>
    %72 = tpu.matmul %70, %71, %cst_26 {dimension_numbers = #tpu.dot_dimension_numbers<[1], [0], [0], [1], [0, 0, 1, 1], [], []>} : vector<9x9xbf16>, vector<9x16xbf16>, vector<9x16xf32> -> vector<9x16xf32>
    %73 = tpu.concatenate %51, %72 in 1 : vector<9x16xf32>, vector<9x16xf32> -> vector<9x32xf32>
    %74 = arith.truncf %73 : vector<9x32xf32> to vector<9x32xbf16>
    %cst_27 = arith.constant dense<0.000000e+00> : vector<9x32xf32>
    %75 = tpu.matmul %74, %3, %cst_27 {dimension_numbers = #tpu.dot_dimension_numbers<[1], [0], [0], [1], [0, 0, 1, 1], [], []>} : vector<9x32xbf16>, vector<32x32xbf16>, vector<9x32xf32> -> vector<9x32xf32>
    %76 = vector.broadcast %4 : vector<1x32xf32> to vector<9x32xf32>
    %77 = arith.addf %75, %76 : vector<9x32xf32>
    %78 = arith.addf %6, %77 : vector<9x32xf32>
    %c0_28 = arith.constant 0 : index
    %c0_29 = arith.constant 0 : index
    %c0_30 = arith.constant 0 : index
    %79 = vector.load %arg7[%c0_28, %c0_29, %c0_30] : memref<2x9x32xf32, #tpu.memory_space<vmem>>, vector<1x9x32xf32>
    %80 = vector.shape_cast %79 : vector<1x9x32xf32> to vector<9x32xf32>
    %81 = vector.shape_cast %78 : vector<9x32xf32> to vector<1x9x32xf32>
    tpu.vector_store %arg7[%c0_28, %c0_29, %c0_30], %81 {strides = array<i32>} : memref<2x9x32xf32, #tpu.memory_space<vmem>>, vector<1x9x32xf32>,
    %c1 = arith.constant 1 : index
    %c0_31 = arith.constant 0 : index
    %c0_32 = arith.constant 0 : index
    %82 = vector.load %arg1[%c1, %c0_31, %c0_32] : memref<2x9x32xf32, #tpu.memory_space<vmem>>, vector<1x9x32xf32>
    %83 = vector.shape_cast %82 : vector<1x9x32xf32> to vector<9x32xf32>
    %cst_33 = arith.constant dense<0.000000e+00> : vector<9xf32>
    %84 = vector.multi_reduction <add>, %83, %cst_33 [1] : vector<9x32xf32> to vector<9xf32>
    %85 = vector.shape_cast %84 : vector<9xf32> to vector<9x1xf32>
    %cst_34 = arith.constant 3.200000e+01 : f32
    %86 = vector.broadcast %cst_34 : f32 to vector<9x1xf32>
    %87 = arith.divf %85, %86 : vector<9x1xf32>
    %88 = vector.broadcast %87 : vector<9x1xf32> to vector<9x32xf32>
    %89 = arith.subf %83, %88 : vector<9x32xf32>
    %90 = arith.mulf %89, %89 : vector<9x32xf32>
    %cst_35 = arith.constant dense<0.000000e+00> : vector<9xf32>
    %91 = vector.multi_reduction <add>, %90, %cst_35 [1] : vector<9x32xf32> to vector<9xf32>
    %92 = vector.shape_cast %91 : vector<9xf32> to vector<9x1xf32>
    %cst_36 = arith.constant 3.200000e+01 : f32
    %93 = vector.broadcast %cst_36 : f32 to vector<9x1xf32>
    %94 = arith.divf %92, %93 : vector<9x1xf32>
    %95 = vector.broadcast %87 : vector<9x1xf32> to vector<9x32xf32>
    %96 = arith.subf %83, %95 : vector<9x32xf32>
    %cst_37 = arith.constant 9.99999974E-6 : f32
    %97 = vector.broadcast %cst_37 : f32 to vector<9x1xf32>
    %98 = arith.addf %94, %97 : vector<9x1xf32>
    %99 = math.rsqrt %98 : vector<9x1xf32>
    %100 = vector.broadcast %99 : vector<9x1xf32> to vector<9x32xf32>
    %101 = arith.mulf %96, %100 : vector<9x32xf32>
    %102 = vector.broadcast %0 : vector<1x32xf32> to vector<9x32xf32>
    %103 = arith.mulf %101, %102 : vector<9x32xf32>
    %104 = vector.broadcast %1 : vector<1x32xf32> to vector<9x32xf32>
    %105 = arith.addf %103, %104 : vector<9x32xf32>
    %106 = arith.truncf %105 : vector<9x32xf32> to vector<9x32xbf16>
    %cst_38 = arith.constant dense<0.000000e+00> : vector<9x96xf32>
    %107 = tpu.matmul %106, %2, %cst_38 {dimension_numbers = #tpu.dot_dimension_numbers<[1], [0], [0], [1], [0, 0, 1, 1], [], []>} : vector<9x32xbf16>, vector<32x96xbf16>, vector<9x96xf32> -> vector<9x96xf32>
    %108 = vector.extract_strided_slice %107 {offsets = [0, 0], sizes = [9, 16], strides = [1, 1]} : vector<9x96xf32> to vector<9x16xf32>
    %109 = vector.extract_strided_slice %107 {offsets = [0, 32], sizes = [9, 16], strides = [1, 1]} : vector<9x96xf32> to vector<9x16xf32>
    %110 = vector.extract_strided_slice %107 {offsets = [0, 64], sizes = [9, 16], strides = [1, 1]} : vector<9x96xf32> to vector<9x16xf32>
    %111 = arith.truncf %108 : vector<9x16xf32> to vector<9x16xbf16>
    %112 = arith.truncf %109 : vector<9x16xf32> to vector<9x16xbf16>
    %cst_39 = arith.constant dense<0.000000e+00> : vector<9x9xf32>
    %113 = tpu.matmul %111, %112, %cst_39 {dimension_numbers = #tpu.dot_dimension_numbers<[1], [1], [0], [0], [0, 0, 1, 0], [], []>} : vector<9x16xbf16>, vector<9x16xbf16>, vector<9x9xf32> -> vector<9x9xf32>
    %cst_40 = arith.constant 2.500000e-01 : f32
    %114 = vector.broadcast %cst_40 : f32 to vector<9x9xf32>
    %115 = arith.mulf %113, %114 : vector<9x9xf32>
    %cst_41 = arith.constant dense<0xFF800000> : vector<9xf32>
    %116 = vector.multi_reduction <maximumf>, %115, %cst_41 [1] : vector<9x9xf32> to vector<9xf32>
    %117 = vector.shape_cast %116 : vector<9xf32> to vector<9x1xf32>
    %118 = vector.broadcast %117 : vector<9x1xf32> to vector<9x9xf32>
    %119 = arith.subf %115, %118 : vector<9x9xf32>
    %120 = math.exp %119 : vector<9x9xf32>
    %cst_42 = arith.constant dense<0.000000e+00> : vector<9xf32>
    %121 = vector.multi_reduction <add>, %120, %cst_42 [1] : vector<9x9xf32> to vector<9xf32>
    %122 = vector.shape_cast %121 : vector<9xf32> to vector<9x1xf32>
    %123 = tpu.reciprocal %122 {approx = true} : vector<9x1xf32> -> vector<9x1xf32>
    %124 = vector.broadcast %123 : vector<9x1xf32> to vector<9x9xf32>
    %125 = arith.mulf %120, %124 : vector<9x9xf32>
    %126 = arith.truncf %125 : vector<9x9xf32> to vector<9x9xbf16>
    %127 = arith.truncf %110 : vector<9x16xf32> to vector<9x16xbf16>
    %cst_43 = arith.constant dense<0.000000e+00> : vector<9x16xf32>
    %128 = tpu.matmul %126, %127, %cst_43 {dimension_numbers = #tpu.dot_dimension_numbers<[1], [0], [0], [1], [0, 0, 1, 1], [], []>} : vector<9x9xbf16>, vector<9x16xbf16>, vector<9x16xf32> -> vector<9x16xf32>
    %129 = vector.extract_strided_slice %107 {offsets = [0, 16], sizes = [9, 16], strides = [1, 1]} : vector<9x96xf32> to vector<9x16xf32>
    %130 = vector.extract_strided_slice %107 {offsets = [0, 48], sizes = [9, 16], strides = [1, 1]} : vector<9x96xf32> to vector<9x16xf32>
    %131 = vector.extract_strided_slice %107 {offsets = [0, 80], sizes = [9, 16], strides = [1, 1]} : vector<9x96xf32> to vector<9x16xf32>
    %132 = arith.truncf %129 : vector<9x16xf32> to vector<9x16xbf16>
    %133 = arith.truncf %130 : vector<9x16xf32> to vector<9x16xbf16>
    %cst_44 = arith.constant dense<0.000000e+00> : vector<9x9xf32>
    %134 = tpu.matmul %132, %133, %cst_44 {dimension_numbers = #tpu.dot_dimension_numbers<[1], [1], [0], [0], [0, 0, 1, 0], [], []>} : vector<9x16xbf16>, vector<9x16xbf16>, vector<9x9xf32> -> vector<9x9xf32>
    %cst_45 = arith.constant 2.500000e-01 : f32
    %135 = vector.broadcast %cst_45 : f32 to vector<9x9xf32>
    %136 = arith.mulf %134, %135 : vector<9x9xf32>
    %cst_46 = arith.constant dense<0xFF800000> : vector<9xf32>
    %137 = vector.multi_reduction <maximumf>, %136, %cst_46 [1] : vector<9x9xf32> to vector<9xf32>
    %138 = vector.shape_cast %137 : vector<9xf32> to vector<9x1xf32>
    %139 = vector.broadcast %138 : vector<9x1xf32> to vector<9x9xf32>
    %140 = arith.subf %136, %139 : vector<9x9xf32>
    %141 = math.exp %140 : vector<9x9xf32>
    %cst_47 = arith.constant dense<0.000000e+00> : vector<9xf32>
    %142 = vector.multi_reduction <add>, %141, %cst_47 [1] : vector<9x9xf32> to vector<9xf32>
    %143 = vector.shape_cast %142 : vector<9xf32> to vector<9x1xf32>
    %144 = tpu.reciprocal %143 {approx = true} : vector<9x1xf32> -> vector<9x1xf32>
    %145 = vector.broadcast %144 : vector<9x1xf32> to vector<9x9xf32>
    %146 = arith.mulf %141, %145 : vector<9x9xf32>
    %147 = arith.truncf %146 : vector<9x9xf32> to vector<9x9xbf16>
    %148 = arith.truncf %131 : vector<9x16xf32> to vector<9x16xbf16>
    %cst_48 = arith.constant dense<0.000000e+00> : vector<9x16xf32>
    %149 = tpu.matmul %147, %148, %cst_48 {dimension_numbers = #tpu.dot_dimension_numbers<[1], [0], [0], [1], [0, 0, 1, 1], [], []>} : vector<9x9xbf16>, vector<9x16xbf16>, vector<9x16xf32> -> vector<9x16xf32>
    %150 = tpu.concatenate %128, %149 in 1 : vector<9x16xf32>, vector<9x16xf32> -> vector<9x32xf32>
    %151 = arith.truncf %150 : vector<9x32xf32> to vector<9x32xbf16>
    %cst_49 = arith.constant dense<0.000000e+00> : vector<9x32xf32>
    %152 = tpu.matmul %151, %3, %cst_49 {dimension_numbers = #tpu.dot_dimension_numbers<[1], [0], [0], [1], [0, 0, 1, 1], [], []>} : vector<9x32xbf16>, vector<32x32xbf16>, vector<9x32xf32> -> vector<9x32xf32>
    %153 = vector.broadcast %4 : vector<1x32xf32> to vector<9x32xf32>
    %154 = arith.addf %152, %153 : vector<9x32xf32>
    %155 = arith.addf %83, %154 : vector<9x32xf32>
    %c1_50 = arith.constant 1 : index
    %c0_51 = arith.constant 0 : index
    %c0_52 = arith.constant 0 : index
    %156 = vector.load %arg7[%c1_50, %c0_51, %c0_52] : memref<2x9x32xf32, #tpu.memory_space<vmem>>, vector<1x9x32xf32>
    %157 = vector.shape_cast %156 : vector<1x9x32xf32> to vector<9x32xf32>
    %158 = vector.shape_cast %155 : vector<9x32xf32> to vector<1x9x32xf32>
    tpu.vector_store %arg7[%c1_50, %c0_51, %c0_52], %158 {strides = array<i32>} : memref<2x9x32xf32, #tpu.memory_space<vmem>>, vector<1x9x32xf32>,
    return
  }
  func.func @transform_0(%arg0: i32) -> (i32, i32, i32) {
    %c0_i32 = arith.constant 0 : i32
    %c0_i32_0 = arith.constant 0 : i32
    %c0_i32_1 = arith.constant 0 : i32
    return %arg0, %c0_i32, %c0_i32_0 : i32, i32, i32
  }
  func.func @transform_1(%arg0: i32) -> (i32, i32) {
    %c0_i32 = arith.constant 0 : i32
    %c0_i32_0 = arith.constant 0 : i32
    %c0_i32_1 = arith.constant 0 : i32
    return %c0_i32, %c0_i32_0 : i32, i32
  }
  func.func @transform_2(%arg0: i32) -> (i32, i32) {
    %c0_i32 = arith.constant 0 : i32
    %c0_i32_0 = arith.constant 0 : i32
    %c0_i32_1 = arith.constant 0 : i32
    return %c0_i32, %c0_i32_0 : i32, i32
  }
  func.func @transform_3(%arg0: i32) -> (i32, i32) {
    %c0_i32 = arith.constant 0 : i32
    %c0_i32_0 = arith.constant 0 : i32
    %c0_i32_1 = arith.constant 0 : i32
    return %c0_i32, %c0_i32_0 : i32, i32
  }
  func.func @transform_4(%arg0: i32) -> (i32, i32) {
    %c0_i32 = arith.constant 0 : i32
    %c0_i32_0 = arith.constant 0 : i32
    %c0_i32_1 = arith.constant 0 : i32
    return %c0_i32, %c0_i32_0 : i32, i32
  }
  func.func @transform_5(%arg0: i32) -> (i32, i32) {
    %c0_i32 = arith.constant 0 : i32
    %c0_i32_0 = arith.constant 0 : i32
    %c0_i32_1 = arith.constant 0 : i32
    return %c0_i32, %c0_i32_0 : i32, i32
  }
  func.func @transform_6(%arg0: i32) -> (i32, i32, i32) {
    %c0_i32 = arith.constant 0 : i32
    %c0_i32_0 = arith.constant 0 : i32
    %c0_i32_1 = arith.constant 0 : i32
    return %arg0, %c0_i32, %c0_i32_0 : i32, i32, i32
  }
}

module attributes {stable_mosaic.version = 11 : i64} {
  func.func @_ffn_block_kernel(%arg0: i32, %arg1: memref<2x9x32xf32, #tpu.memory_space<vmem>>, %arg2: memref<1x32xf32, #tpu.memory_space<vmem>>, %arg3: memref<1x32xf32, #tpu.memory_space<vmem>>, %arg4: memref<32x64xbf16, #tpu.memory_space<vmem>>, %arg5: memref<1x64xf32, #tpu.memory_space<vmem>>, %arg6: memref<64x32xbf16, #tpu.memory_space<vmem>>, %arg7: memref<1x32xf32, #tpu.memory_space<vmem>>, %arg8: memref<2x9x32xf32, #tpu.memory_space<vmem>>) attributes {dimension_semantics = [#tpu.dimension_semantics<parallel>], iteration_bounds = array<i64: 1>, scalar_prefetch = 0 : i64, scratch_operands = 0 : i64, tpu.core_type = #tpu.core_type<tc>, window_params = [{transform_indices = @transform_0, window_bounds = array<i64: 2, 9, 32>}, {pipeline_mode = #tpu.pipeline_mode<synchronous>, transform_indices = @transform_1, window_bounds = array<i64: 1, 32>}, {pipeline_mode = #tpu.pipeline_mode<synchronous>, transform_indices = @transform_2, window_bounds = array<i64: 1, 32>}, {pipeline_mode = #tpu.pipeline_mode<synchronous>, transform_indices = @transform_3, window_bounds = array<i64: 32, 64>}, {pipeline_mode = #tpu.pipeline_mode<synchronous>, transform_indices = @transform_4, window_bounds = array<i64: 1, 64>}, {pipeline_mode = #tpu.pipeline_mode<synchronous>, transform_indices = @transform_5, window_bounds = array<i64: 64, 32>}, {pipeline_mode = #tpu.pipeline_mode<synchronous>, transform_indices = @transform_6, window_bounds = array<i64: 1, 32>}, {transform_indices = @transform_7, window_bounds = array<i64: 2, 9, 32>}]} {
    %c0 = arith.constant 0 : index
    %c0_0 = arith.constant 0 : index
    %0 = vector.load %arg2[%c0, %c0_0] : memref<1x32xf32, #tpu.memory_space<vmem>>, vector<1x32xf32>
    %c0_1 = arith.constant 0 : index
    %c0_2 = arith.constant 0 : index
    %1 = vector.load %arg3[%c0_1, %c0_2] : memref<1x32xf32, #tpu.memory_space<vmem>>, vector<1x32xf32>
    %c0_3 = arith.constant 0 : index
    %c0_4 = arith.constant 0 : index
    %2 = vector.load %arg4[%c0_3, %c0_4] : memref<32x64xbf16, #tpu.memory_space<vmem>>, vector<32x64xbf16>
    %c0_5 = arith.constant 0 : index
    %c0_6 = arith.constant 0 : index
    %3 = vector.load %arg5[%c0_5, %c0_6] : memref<1x64xf32, #tpu.memory_space<vmem>>, vector<1x64xf32>
    %c0_7 = arith.constant 0 : index
    %c0_8 = arith.constant 0 : index
    %4 = vector.load %arg6[%c0_7, %c0_8] : memref<64x32xbf16, #tpu.memory_space<vmem>>, vector<64x32xbf16>
    %c0_9 = arith.constant 0 : index
    %c0_10 = arith.constant 0 : index
    %5 = vector.load %arg7[%c0_9, %c0_10] : memref<1x32xf32, #tpu.memory_space<vmem>>, vector<1x32xf32>
    %c0_11 = arith.constant 0 : index
    %c0_12 = arith.constant 0 : index
    %c0_13 = arith.constant 0 : index
    %6 = vector.load %arg1[%c0_11, %c0_12, %c0_13] : memref<2x9x32xf32, #tpu.memory_space<vmem>>, vector<1x9x32xf32>
    %7 = vector.shape_cast %6 : vector<1x9x32xf32> to vector<9x32xf32>
    %cst = arith.constant dense<0.000000e+00> : vector<9xf32>
    %8 = vector.multi_reduction <add>, %7, %cst [1] : vector<9x32xf32> to vector<9xf32>
    %9 = vector.shape_cast %8 : vector<9xf32> to vector<9x1xf32>
    %cst_14 = arith.constant 3.200000e+01 : f32
    %10 = vector.broadcast %cst_14 : f32 to vector<9x1xf32>
    %11 = arith.divf %9, %10 : vector<9x1xf32>
    %12 = vector.broadcast %11 : vector<9x1xf32> to vector<9x32xf32>
    %13 = arith.subf %7, %12 : vector<9x32xf32>
    %14 = arith.mulf %13, %13 : vector<9x32xf32>
    %cst_15 = arith.constant dense<0.000000e+00> : vector<9xf32>
    %15 = vector.multi_reduction <add>, %14, %cst_15 [1] : vector<9x32xf32> to vector<9xf32>
    %16 = vector.shape_cast %15 : vector<9xf32> to vector<9x1xf32>
    %cst_16 = arith.constant 3.200000e+01 : f32
    %17 = vector.broadcast %cst_16 : f32 to vector<9x1xf32>
    %18 = arith.divf %16, %17 : vector<9x1xf32>
    %19 = vector.broadcast %11 : vector<9x1xf32> to vector<9x32xf32>
    %20 = arith.subf %7, %19 : vector<9x32xf32>
    %cst_17 = arith.constant 9.99999974E-6 : f32
    %21 = vector.broadcast %cst_17 : f32 to vector<9x1xf32>
    %22 = arith.addf %18, %21 : vector<9x1xf32>
    %23 = math.rsqrt %22 : vector<9x1xf32>
    %24 = vector.broadcast %23 : vector<9x1xf32> to vector<9x32xf32>
    %25 = arith.mulf %20, %24 : vector<9x32xf32>
    %26 = vector.broadcast %0 : vector<1x32xf32> to vector<9x32xf32>
    %27 = arith.mulf %25, %26 : vector<9x32xf32>
    %28 = vector.broadcast %1 : vector<1x32xf32> to vector<9x32xf32>
    %29 = arith.addf %27, %28 : vector<9x32xf32>
    %30 = arith.truncf %29 : vector<9x32xf32> to vector<9x32xbf16>
    %cst_18 = arith.constant dense<0.000000e+00> : vector<9x64xf32>
    %31 = tpu.matmul %30, %2, %cst_18 {dimension_numbers = #tpu.dot_dimension_numbers<[1], [0], [0], [1], [0, 0, 1, 1], [], []>} : vector<9x32xbf16>, vector<32x64xbf16>, vector<9x64xf32> -> vector<9x64xf32>
    %32 = vector.broadcast %3 : vector<1x64xf32> to vector<9x64xf32>
    %33 = arith.addf %31, %32 : vector<9x64xf32>
    %cst_19 = arith.constant 5.000000e-01 : f32
    %34 = vector.broadcast %cst_19 : f32 to vector<9x64xf32>
    %35 = arith.mulf %34, %33 : vector<9x64xf32>
    %cst_20 = arith.constant 0.707106769 : f32
    %36 = vector.broadcast %cst_20 : f32 to vector<9x64xf32>
    %37 = arith.mulf %33, %36 : vector<9x64xf32>
    %38 = math.absf %37 : vector<9x64xf32>
    %cst_21 = arith.constant 0.327591091 : f32
    %39 = vector.broadcast %cst_21 : f32 to vector<9x64xf32>
    %40 = arith.mulf %39, %38 : vector<9x64xf32>
    %cst_22 = arith.constant 1.000000e+00 : f32
    %41 = vector.broadcast %cst_22 : f32 to vector<9x64xf32>
    %42 = arith.addf %41, %40 : vector<9x64xf32>
    %cst_23 = arith.constant 1.000000e+00 : f32
    %43 = vector.broadcast %cst_23 : f32 to vector<9x64xf32>
    %44 = arith.divf %43, %42 : vector<9x64xf32>
    %cst_24 = arith.constant 1.06140542 : f32
    %45 = vector.broadcast %cst_24 : f32 to vector<9x64xf32>
    %46 = arith.mulf %45, %44 : vector<9x64xf32>
    %cst_25 = arith.constant -1.45315206 : f32
    %47 = vector.broadcast %cst_25 : f32 to vector<9x64xf32>
    %48 = arith.addf %46, %47 : vector<9x64xf32>
    %49 = arith.mulf %48, %44 : vector<9x64xf32>
    %cst_26 = arith.constant 1.42141378 : f32
    %50 = vector.broadcast %cst_26 : f32 to vector<9x64xf32>
    %51 = arith.addf %49, %50 : vector<9x64xf32>
    %52 = arith.mulf %51, %44 : vector<9x64xf32>
    %cst_27 = arith.constant -0.284496725 : f32
    %53 = vector.broadcast %cst_27 : f32 to vector<9x64xf32>
    %54 = arith.addf %52, %53 : vector<9x64xf32>
    %55 = arith.mulf %54, %44 : vector<9x64xf32>
    %cst_28 = arith.constant 0.254829586 : f32
    %56 = vector.broadcast %cst_28 : f32 to vector<9x64xf32>
    %57 = arith.addf %55, %56 : vector<9x64xf32>
    %58 = arith.mulf %57, %44 : vector<9x64xf32>
    %cst_29 = arith.constant 0.000000e+00 : f32
    %59 = vector.broadcast %cst_29 : f32 to vector<9x64xf32>
    %60 = arith.subf %59, %38 : vector<9x64xf32>
    %61 = arith.mulf %60, %38 : vector<9x64xf32>
    %62 = math.exp %61 : vector<9x64xf32>
    %63 = arith.mulf %58, %62 : vector<9x64xf32>
    %cst_30 = arith.constant 1.000000e+00 : f32
    %64 = vector.broadcast %cst_30 : f32 to vector<9x64xf32>
    %65 = arith.subf %64, %63 : vector<9x64xf32>
    %cst_31 = arith.constant 0.000000e+00 : f32
    %66 = vector.broadcast %cst_31 : f32 to vector<9x64xf32>
    %67 = arith.cmpf oge, %37, %66 : vector<9x64xf32>
    %cst_32 = arith.constant 0.000000e+00 : f32
    %68 = vector.broadcast %cst_32 : f32 to vector<9x64xf32>
    %69 = arith.subf %68, %65 : vector<9x64xf32>
    %70 = arith.select %67, %65, %69 : vector<9x64xi1>, vector<9x64xf32>
    %cst_33 = arith.constant 1.000000e+00 : f32
    %71 = vector.broadcast %cst_33 : f32 to vector<9x64xf32>
    %72 = arith.addf %71, %70 : vector<9x64xf32>
    %73 = arith.mulf %35, %72 : vector<9x64xf32>
    %74 = arith.truncf %73 : vector<9x64xf32> to vector<9x64xbf16>
    %cst_34 = arith.constant dense<0.000000e+00> : vector<9x32xf32>
    %75 = tpu.matmul %74, %4, %cst_34 {dimension_numbers = #tpu.dot_dimension_numbers<[1], [0], [0], [1], [0, 0, 1, 1], [], []>} : vector<9x64xbf16>, vector<64x32xbf16>, vector<9x32xf32> -> vector<9x32xf32>
    %76 = vector.broadcast %5 : vector<1x32xf32> to vector<9x32xf32>
    %77 = arith.addf %75, %76 : vector<9x32xf32>
    %78 = arith.addf %7, %77 : vector<9x32xf32>
    %c0_35 = arith.constant 0 : index
    %c0_36 = arith.constant 0 : index
    %c0_37 = arith.constant 0 : index
    %79 = vector.load %arg8[%c0_35, %c0_36, %c0_37] : memref<2x9x32xf32, #tpu.memory_space<vmem>>, vector<1x9x32xf32>
    %80 = vector.shape_cast %79 : vector<1x9x32xf32> to vector<9x32xf32>
    %81 = vector.shape_cast %78 : vector<9x32xf32> to vector<1x9x32xf32>
    tpu.vector_store %arg8[%c0_35, %c0_36, %c0_37], %81 {strides = array<i32>} : memref<2x9x32xf32, #tpu.memory_space<vmem>>, vector<1x9x32xf32>,
    %c1 = arith.constant 1 : index
    %c0_38 = arith.constant 0 : index
    %c0_39 = arith.constant 0 : index
    %82 = vector.load %arg1[%c1, %c0_38, %c0_39] : memref<2x9x32xf32, #tpu.memory_space<vmem>>, vector<1x9x32xf32>
    %83 = vector.shape_cast %82 : vector<1x9x32xf32> to vector<9x32xf32>
    %cst_40 = arith.constant dense<0.000000e+00> : vector<9xf32>
    %84 = vector.multi_reduction <add>, %83, %cst_40 [1] : vector<9x32xf32> to vector<9xf32>
    %85 = vector.shape_cast %84 : vector<9xf32> to vector<9x1xf32>
    %cst_41 = arith.constant 3.200000e+01 : f32
    %86 = vector.broadcast %cst_41 : f32 to vector<9x1xf32>
    %87 = arith.divf %85, %86 : vector<9x1xf32>
    %88 = vector.broadcast %87 : vector<9x1xf32> to vector<9x32xf32>
    %89 = arith.subf %83, %88 : vector<9x32xf32>
    %90 = arith.mulf %89, %89 : vector<9x32xf32>
    %cst_42 = arith.constant dense<0.000000e+00> : vector<9xf32>
    %91 = vector.multi_reduction <add>, %90, %cst_42 [1] : vector<9x32xf32> to vector<9xf32>
    %92 = vector.shape_cast %91 : vector<9xf32> to vector<9x1xf32>
    %cst_43 = arith.constant 3.200000e+01 : f32
    %93 = vector.broadcast %cst_43 : f32 to vector<9x1xf32>
    %94 = arith.divf %92, %93 : vector<9x1xf32>
    %95 = vector.broadcast %87 : vector<9x1xf32> to vector<9x32xf32>
    %96 = arith.subf %83, %95 : vector<9x32xf32>
    %cst_44 = arith.constant 9.99999974E-6 : f32
    %97 = vector.broadcast %cst_44 : f32 to vector<9x1xf32>
    %98 = arith.addf %94, %97 : vector<9x1xf32>
    %99 = math.rsqrt %98 : vector<9x1xf32>
    %100 = vector.broadcast %99 : vector<9x1xf32> to vector<9x32xf32>
    %101 = arith.mulf %96, %100 : vector<9x32xf32>
    %102 = vector.broadcast %0 : vector<1x32xf32> to vector<9x32xf32>
    %103 = arith.mulf %101, %102 : vector<9x32xf32>
    %104 = vector.broadcast %1 : vector<1x32xf32> to vector<9x32xf32>
    %105 = arith.addf %103, %104 : vector<9x32xf32>
    %106 = arith.truncf %105 : vector<9x32xf32> to vector<9x32xbf16>
    %cst_45 = arith.constant dense<0.000000e+00> : vector<9x64xf32>
    %107 = tpu.matmul %106, %2, %cst_45 {dimension_numbers = #tpu.dot_dimension_numbers<[1], [0], [0], [1], [0, 0, 1, 1], [], []>} : vector<9x32xbf16>, vector<32x64xbf16>, vector<9x64xf32> -> vector<9x64xf32>
    %108 = vector.broadcast %3 : vector<1x64xf32> to vector<9x64xf32>
    %109 = arith.addf %107, %108 : vector<9x64xf32>
    %cst_46 = arith.constant 5.000000e-01 : f32
    %110 = vector.broadcast %cst_46 : f32 to vector<9x64xf32>
    %111 = arith.mulf %110, %109 : vector<9x64xf32>
    %cst_47 = arith.constant 0.707106769 : f32
    %112 = vector.broadcast %cst_47 : f32 to vector<9x64xf32>
    %113 = arith.mulf %109, %112 : vector<9x64xf32>
    %114 = math.absf %113 : vector<9x64xf32>
    %cst_48 = arith.constant 0.327591091 : f32
    %115 = vector.broadcast %cst_48 : f32 to vector<9x64xf32>
    %116 = arith.mulf %115, %114 : vector<9x64xf32>
    %cst_49 = arith.constant 1.000000e+00 : f32
    %117 = vector.broadcast %cst_49 : f32 to vector<9x64xf32>
    %118 = arith.addf %117, %116 : vector<9x64xf32>
    %cst_50 = arith.constant 1.000000e+00 : f32
    %119 = vector.broadcast %cst_50 : f32 to vector<9x64xf32>
    %120 = arith.divf %119, %118 : vector<9x64xf32>
    %cst_51 = arith.constant 1.06140542 : f32
    %121 = vector.broadcast %cst_51 : f32 to vector<9x64xf32>
    %122 = arith.mulf %121, %120 : vector<9x64xf32>
    %cst_52 = arith.constant -1.45315206 : f32
    %123 = vector.broadcast %cst_52 : f32 to vector<9x64xf32>
    %124 = arith.addf %122, %123 : vector<9x64xf32>
    %125 = arith.mulf %124, %120 : vector<9x64xf32>
    %cst_53 = arith.constant 1.42141378 : f32
    %126 = vector.broadcast %cst_53 : f32 to vector<9x64xf32>
    %127 = arith.addf %125, %126 : vector<9x64xf32>
    %128 = arith.mulf %127, %120 : vector<9x64xf32>
    %cst_54 = arith.constant -0.284496725 : f32
    %129 = vector.broadcast %cst_54 : f32 to vector<9x64xf32>
    %130 = arith.addf %128, %129 : vector<9x64xf32>
    %131 = arith.mulf %130, %120 : vector<9x64xf32>
    %cst_55 = arith.constant 0.254829586 : f32
    %132 = vector.broadcast %cst_55 : f32 to vector<9x64xf32>
    %133 = arith.addf %131, %132 : vector<9x64xf32>
    %134 = arith.mulf %133, %120 : vector<9x64xf32>
    %cst_56 = arith.constant 0.000000e+00 : f32
    %135 = vector.broadcast %cst_56 : f32 to vector<9x64xf32>
    %136 = arith.subf %135, %114 : vector<9x64xf32>
    %137 = arith.mulf %136, %114 : vector<9x64xf32>
    %138 = math.exp %137 : vector<9x64xf32>
    %139 = arith.mulf %134, %138 : vector<9x64xf32>
    %cst_57 = arith.constant 1.000000e+00 : f32
    %140 = vector.broadcast %cst_57 : f32 to vector<9x64xf32>
    %141 = arith.subf %140, %139 : vector<9x64xf32>
    %cst_58 = arith.constant 0.000000e+00 : f32
    %142 = vector.broadcast %cst_58 : f32 to vector<9x64xf32>
    %143 = arith.cmpf oge, %113, %142 : vector<9x64xf32>
    %cst_59 = arith.constant 0.000000e+00 : f32
    %144 = vector.broadcast %cst_59 : f32 to vector<9x64xf32>
    %145 = arith.subf %144, %141 : vector<9x64xf32>
    %146 = arith.select %143, %141, %145 : vector<9x64xi1>, vector<9x64xf32>
    %cst_60 = arith.constant 1.000000e+00 : f32
    %147 = vector.broadcast %cst_60 : f32 to vector<9x64xf32>
    %148 = arith.addf %147, %146 : vector<9x64xf32>
    %149 = arith.mulf %111, %148 : vector<9x64xf32>
    %150 = arith.truncf %149 : vector<9x64xf32> to vector<9x64xbf16>
    %cst_61 = arith.constant dense<0.000000e+00> : vector<9x32xf32>
    %151 = tpu.matmul %150, %4, %cst_61 {dimension_numbers = #tpu.dot_dimension_numbers<[1], [0], [0], [1], [0, 0, 1, 1], [], []>} : vector<9x64xbf16>, vector<64x32xbf16>, vector<9x32xf32> -> vector<9x32xf32>
    %152 = vector.broadcast %5 : vector<1x32xf32> to vector<9x32xf32>
    %153 = arith.addf %151, %152 : vector<9x32xf32>
    %154 = arith.addf %83, %153 : vector<9x32xf32>
    %c1_62 = arith.constant 1 : index
    %c0_63 = arith.constant 0 : index
    %c0_64 = arith.constant 0 : index
    %155 = vector.load %arg8[%c1_62, %c0_63, %c0_64] : memref<2x9x32xf32, #tpu.memory_space<vmem>>, vector<1x9x32xf32>
    %156 = vector.shape_cast %155 : vector<1x9x32xf32> to vector<9x32xf32>
    %157 = vector.shape_cast %154 : vector<9x32xf32> to vector<1x9x32xf32>
    tpu.vector_store %arg8[%c1_62, %c0_63, %c0_64], %157 {strides = array<i32>} : memref<2x9x32xf32, #tpu.memory_space<vmem>>, vector<1x9x32xf32>,
    return
  }
  func.func @transform_0(%arg0: i32) -> (i32, i32, i32) {
    %c0_i32 = arith.constant 0 : i32
    %c0_i32_0 = arith.constant 0 : i32
    %c0_i32_1 = arith.constant 0 : i32
    return %arg0, %c0_i32, %c0_i32_0 : i32, i32, i32
  }
  func.func @transform_1(%arg0: i32) -> (i32, i32) {
    %c0_i32 = arith.constant 0 : i32
    %c0_i32_0 = arith.constant 0 : i32
    %c0_i32_1 = arith.constant 0 : i32
    return %c0_i32, %c0_i32_0 : i32, i32
  }
  func.func @transform_2(%arg0: i32) -> (i32, i32) {
    %c0_i32 = arith.constant 0 : i32
    %c0_i32_0 = arith.constant 0 : i32
    %c0_i32_1 = arith.constant 0 : i32
    return %c0_i32, %c0_i32_0 : i32, i32
  }
  func.func @transform_3(%arg0: i32) -> (i32, i32) {
    %c0_i32 = arith.constant 0 : i32
    %c0_i32_0 = arith.constant 0 : i32
    %c0_i32_1 = arith.constant 0 : i32
    return %c0_i32, %c0_i32_0 : i32, i32
  }
  func.func @transform_4(%arg0: i32) -> (i32, i32) {
    %c0_i32 = arith.constant 0 : i32
    %c0_i32_0 = arith.constant 0 : i32
    %c0_i32_1 = arith.constant 0 : i32
    return %c0_i32, %c0_i32_0 : i32, i32
  }
  func.func @transform_5(%arg0: i32) -> (i32, i32) {
    %c0_i32 = arith.constant 0 : i32
    %c0_i32_0 = arith.constant 0 : i32
    %c0_i32_1 = arith.constant 0 : i32
    return %c0_i32, %c0_i32_0 : i32, i32
  }
  func.func @transform_6(%arg0: i32) -> (i32, i32) {
    %c0_i32 = arith.constant 0 : i32
    %c0_i32_0 = arith.constant 0 : i32
    %c0_i32_1 = arith.constant 0 : i32
    return %c0_i32, %c0_i32_0 : i32, i32
  }
  func.func @transform_7(%arg0: i32) -> (i32, i32, i32) {
    %c0_i32 = arith.constant 0 : i32
    %c0_i32_0 = arith.constant 0 : i32
    %c0_i32_1 = arith.constant 0 : i32
    return %arg0, %c0_i32, %c0_i32_0 : i32, i32, i32
  }
}

module attributes {stable_mosaic.version = 11 : i64} {
  func.func @_attn_block_kernel(%arg0: i32, %arg1: memref<2x5x64xf32, #tpu.memory_space<vmem>>, %arg2: memref<1x64xf32, #tpu.memory_space<vmem>>, %arg3: memref<1x64xf32, #tpu.memory_space<vmem>>, %arg4: memref<64x192xbf16, #tpu.memory_space<vmem>>, %arg5: memref<64x64xbf16, #tpu.memory_space<vmem>>, %arg6: memref<1x64xf32, #tpu.memory_space<vmem>>, %arg7: memref<2x5x64xf32, #tpu.memory_space<vmem>>) attributes {dimension_semantics = [#tpu.dimension_semantics<parallel>], iteration_bounds = array<i64: 1>, scalar_prefetch = 0 : i64, scratch_operands = 0 : i64, tpu.core_type = #tpu.core_type<tc>, window_params = [{transform_indices = @transform_0, window_bounds = array<i64: 2, 5, 64>}, {pipeline_mode = #tpu.pipeline_mode<synchronous>, transform_indices = @transform_1, window_bounds = array<i64: 1, 64>}, {pipeline_mode = #tpu.pipeline_mode<synchronous>, transform_indices = @transform_2, window_bounds = array<i64: 1, 64>}, {pipeline_mode = #tpu.pipeline_mode<synchronous>, transform_indices = @transform_3, window_bounds = array<i64: 64, 192>}, {pipeline_mode = #tpu.pipeline_mode<synchronous>, transform_indices = @transform_4, window_bounds = array<i64: 64, 64>}, {pipeline_mode = #tpu.pipeline_mode<synchronous>, transform_indices = @transform_5, window_bounds = array<i64: 1, 64>}, {transform_indices = @transform_6, window_bounds = array<i64: 2, 5, 64>}]} {
    %c0 = arith.constant 0 : index
    %c0_0 = arith.constant 0 : index
    %0 = vector.load %arg2[%c0, %c0_0] : memref<1x64xf32, #tpu.memory_space<vmem>>, vector<1x64xf32>
    %c0_1 = arith.constant 0 : index
    %c0_2 = arith.constant 0 : index
    %1 = vector.load %arg3[%c0_1, %c0_2] : memref<1x64xf32, #tpu.memory_space<vmem>>, vector<1x64xf32>
    %c0_3 = arith.constant 0 : index
    %c0_4 = arith.constant 0 : index
    %2 = vector.load %arg4[%c0_3, %c0_4] : memref<64x192xbf16, #tpu.memory_space<vmem>>, vector<64x192xbf16>
    %c0_5 = arith.constant 0 : index
    %c0_6 = arith.constant 0 : index
    %3 = vector.load %arg5[%c0_5, %c0_6] : memref<64x64xbf16, #tpu.memory_space<vmem>>, vector<64x64xbf16>
    %c0_7 = arith.constant 0 : index
    %c0_8 = arith.constant 0 : index
    %4 = vector.load %arg6[%c0_7, %c0_8] : memref<1x64xf32, #tpu.memory_space<vmem>>, vector<1x64xf32>
    %c0_9 = arith.constant 0 : index
    %c0_10 = arith.constant 0 : index
    %c0_11 = arith.constant 0 : index
    %5 = vector.load %arg1[%c0_9, %c0_10, %c0_11] : memref<2x5x64xf32, #tpu.memory_space<vmem>>, vector<1x5x64xf32>
    %6 = vector.shape_cast %5 : vector<1x5x64xf32> to vector<5x64xf32>
    %cst = arith.constant dense<0.000000e+00> : vector<5xf32>
    %7 = vector.multi_reduction <add>, %6, %cst [1] : vector<5x64xf32> to vector<5xf32>
    %8 = vector.shape_cast %7 : vector<5xf32> to vector<5x1xf32>
    %cst_12 = arith.constant 6.400000e+01 : f32
    %9 = vector.broadcast %cst_12 : f32 to vector<5x1xf32>
    %10 = arith.divf %8, %9 : vector<5x1xf32>
    %11 = vector.broadcast %10 : vector<5x1xf32> to vector<5x64xf32>
    %12 = arith.subf %6, %11 : vector<5x64xf32>
    %13 = arith.mulf %12, %12 : vector<5x64xf32>
    %cst_13 = arith.constant dense<0.000000e+00> : vector<5xf32>
    %14 = vector.multi_reduction <add>, %13, %cst_13 [1] : vector<5x64xf32> to vector<5xf32>
    %15 = vector.shape_cast %14 : vector<5xf32> to vector<5x1xf32>
    %cst_14 = arith.constant 6.400000e+01 : f32
    %16 = vector.broadcast %cst_14 : f32 to vector<5x1xf32>
    %17 = arith.divf %15, %16 : vector<5x1xf32>
    %18 = vector.broadcast %10 : vector<5x1xf32> to vector<5x64xf32>
    %19 = arith.subf %6, %18 : vector<5x64xf32>
    %cst_15 = arith.constant 9.99999974E-6 : f32
    %20 = vector.broadcast %cst_15 : f32 to vector<5x1xf32>
    %21 = arith.addf %17, %20 : vector<5x1xf32>
    %22 = math.rsqrt %21 : vector<5x1xf32>
    %23 = vector.broadcast %22 : vector<5x1xf32> to vector<5x64xf32>
    %24 = arith.mulf %19, %23 : vector<5x64xf32>
    %25 = vector.broadcast %0 : vector<1x64xf32> to vector<5x64xf32>
    %26 = arith.mulf %24, %25 : vector<5x64xf32>
    %27 = vector.broadcast %1 : vector<1x64xf32> to vector<5x64xf32>
    %28 = arith.addf %26, %27 : vector<5x64xf32>
    %29 = arith.truncf %28 : vector<5x64xf32> to vector<5x64xbf16>
    %cst_16 = arith.constant dense<0.000000e+00> : vector<5x192xf32>
    %30 = tpu.matmul %29, %2, %cst_16 {dimension_numbers = #tpu.dot_dimension_numbers<[1], [0], [0], [1], [0, 0, 1, 1], [], []>} : vector<5x64xbf16>, vector<64x192xbf16>, vector<5x192xf32> -> vector<5x192xf32>
    %31 = vector.extract_strided_slice %30 {offsets = [0, 0], sizes = [5, 32], strides = [1, 1]} : vector<5x192xf32> to vector<5x32xf32>
    %32 = vector.extract_strided_slice %30 {offsets = [0, 64], sizes = [5, 32], strides = [1, 1]} : vector<5x192xf32> to vector<5x32xf32>
    %33 = vector.extract_strided_slice %30 {offsets = [0, 128], sizes = [5, 32], strides = [1, 1]} : vector<5x192xf32> to vector<5x32xf32>
    %34 = arith.truncf %31 : vector<5x32xf32> to vector<5x32xbf16>
    %35 = arith.truncf %32 : vector<5x32xf32> to vector<5x32xbf16>
    %cst_17 = arith.constant dense<0.000000e+00> : vector<5x5xf32>
    %36 = tpu.matmul %34, %35, %cst_17 {dimension_numbers = #tpu.dot_dimension_numbers<[1], [1], [0], [0], [0, 0, 1, 0], [], []>} : vector<5x32xbf16>, vector<5x32xbf16>, vector<5x5xf32> -> vector<5x5xf32>
    %cst_18 = arith.constant 0.176776692 : f32
    %37 = vector.broadcast %cst_18 : f32 to vector<5x5xf32>
    %38 = arith.mulf %36, %37 : vector<5x5xf32>
    %cst_19 = arith.constant dense<0xFF800000> : vector<5xf32>
    %39 = vector.multi_reduction <maximumf>, %38, %cst_19 [1] : vector<5x5xf32> to vector<5xf32>
    %40 = vector.shape_cast %39 : vector<5xf32> to vector<5x1xf32>
    %41 = vector.broadcast %40 : vector<5x1xf32> to vector<5x5xf32>
    %42 = arith.subf %38, %41 : vector<5x5xf32>
    %43 = math.exp %42 : vector<5x5xf32>
    %cst_20 = arith.constant dense<0.000000e+00> : vector<5xf32>
    %44 = vector.multi_reduction <add>, %43, %cst_20 [1] : vector<5x5xf32> to vector<5xf32>
    %45 = vector.shape_cast %44 : vector<5xf32> to vector<5x1xf32>
    %46 = tpu.reciprocal %45 {approx = true} : vector<5x1xf32> -> vector<5x1xf32>
    %47 = vector.broadcast %46 : vector<5x1xf32> to vector<5x5xf32>
    %48 = arith.mulf %43, %47 : vector<5x5xf32>
    %49 = arith.truncf %48 : vector<5x5xf32> to vector<5x5xbf16>
    %50 = arith.truncf %33 : vector<5x32xf32> to vector<5x32xbf16>
    %cst_21 = arith.constant dense<0.000000e+00> : vector<5x32xf32>
    %51 = tpu.matmul %49, %50, %cst_21 {dimension_numbers = #tpu.dot_dimension_numbers<[1], [0], [0], [1], [0, 0, 1, 1], [], []>} : vector<5x5xbf16>, vector<5x32xbf16>, vector<5x32xf32> -> vector<5x32xf32>
    %52 = vector.extract_strided_slice %30 {offsets = [0, 32], sizes = [5, 32], strides = [1, 1]} : vector<5x192xf32> to vector<5x32xf32>
    %53 = vector.extract_strided_slice %30 {offsets = [0, 96], sizes = [5, 32], strides = [1, 1]} : vector<5x192xf32> to vector<5x32xf32>
    %54 = vector.extract_strided_slice %30 {offsets = [0, 160], sizes = [5, 32], strides = [1, 1]} : vector<5x192xf32> to vector<5x32xf32>
    %55 = arith.truncf %52 : vector<5x32xf32> to vector<5x32xbf16>
    %56 = arith.truncf %53 : vector<5x32xf32> to vector<5x32xbf16>
    %cst_22 = arith.constant dense<0.000000e+00> : vector<5x5xf32>
    %57 = tpu.matmul %55, %56, %cst_22 {dimension_numbers = #tpu.dot_dimension_numbers<[1], [1], [0], [0], [0, 0, 1, 0], [], []>} : vector<5x32xbf16>, vector<5x32xbf16>, vector<5x5xf32> -> vector<5x5xf32>
    %cst_23 = arith.constant 0.176776692 : f32
    %58 = vector.broadcast %cst_23 : f32 to vector<5x5xf32>
    %59 = arith.mulf %57, %58 : vector<5x5xf32>
    %cst_24 = arith.constant dense<0xFF800000> : vector<5xf32>
    %60 = vector.multi_reduction <maximumf>, %59, %cst_24 [1] : vector<5x5xf32> to vector<5xf32>
    %61 = vector.shape_cast %60 : vector<5xf32> to vector<5x1xf32>
    %62 = vector.broadcast %61 : vector<5x1xf32> to vector<5x5xf32>
    %63 = arith.subf %59, %62 : vector<5x5xf32>
    %64 = math.exp %63 : vector<5x5xf32>
    %cst_25 = arith.constant dense<0.000000e+00> : vector<5xf32>
    %65 = vector.multi_reduction <add>, %64, %cst_25 [1] : vector<5x5xf32> to vector<5xf32>
    %66 = vector.shape_cast %65 : vector<5xf32> to vector<5x1xf32>
    %67 = tpu.reciprocal %66 {approx = true} : vector<5x1xf32> -> vector<5x1xf32>
    %68 = vector.broadcast %67 : vector<5x1xf32> to vector<5x5xf32>
    %69 = arith.mulf %64, %68 : vector<5x5xf32>
    %70 = arith.truncf %69 : vector<5x5xf32> to vector<5x5xbf16>
    %71 = arith.truncf %54 : vector<5x32xf32> to vector<5x32xbf16>
    %cst_26 = arith.constant dense<0.000000e+00> : vector<5x32xf32>
    %72 = tpu.matmul %70, %71, %cst_26 {dimension_numbers = #tpu.dot_dimension_numbers<[1], [0], [0], [1], [0, 0, 1, 1], [], []>} : vector<5x5xbf16>, vector<5x32xbf16>, vector<5x32xf32> -> vector<5x32xf32>
    %73 = tpu.concatenate %51, %72 in 1 : vector<5x32xf32>, vector<5x32xf32> -> vector<5x64xf32>
    %74 = arith.truncf %73 : vector<5x64xf32> to vector<5x64xbf16>
    %cst_27 = arith.constant dense<0.000000e+00> : vector<5x64xf32>
    %75 = tpu.matmul %74, %3, %cst_27 {dimension_numbers = #tpu.dot_dimension_numbers<[1], [0], [0], [1], [0, 0, 1, 1], [], []>} : vector<5x64xbf16>, vector<64x64xbf16>, vector<5x64xf32> -> vector<5x64xf32>
    %76 = vector.broadcast %4 : vector<1x64xf32> to vector<5x64xf32>
    %77 = arith.addf %75, %76 : vector<5x64xf32>
    %78 = arith.addf %6, %77 : vector<5x64xf32>
    %c0_28 = arith.constant 0 : index
    %c0_29 = arith.constant 0 : index
    %c0_30 = arith.constant 0 : index
    %79 = vector.load %arg7[%c0_28, %c0_29, %c0_30] : memref<2x5x64xf32, #tpu.memory_space<vmem>>, vector<1x5x64xf32>
    %80 = vector.shape_cast %79 : vector<1x5x64xf32> to vector<5x64xf32>
    %81 = vector.shape_cast %78 : vector<5x64xf32> to vector<1x5x64xf32>
    tpu.vector_store %arg7[%c0_28, %c0_29, %c0_30], %81 {strides = array<i32>} : memref<2x5x64xf32, #tpu.memory_space<vmem>>, vector<1x5x64xf32>,
    %c1 = arith.constant 1 : index
    %c0_31 = arith.constant 0 : index
    %c0_32 = arith.constant 0 : index
    %82 = vector.load %arg1[%c1, %c0_31, %c0_32] : memref<2x5x64xf32, #tpu.memory_space<vmem>>, vector<1x5x64xf32>
    %83 = vector.shape_cast %82 : vector<1x5x64xf32> to vector<5x64xf32>
    %cst_33 = arith.constant dense<0.000000e+00> : vector<5xf32>
    %84 = vector.multi_reduction <add>, %83, %cst_33 [1] : vector<5x64xf32> to vector<5xf32>
    %85 = vector.shape_cast %84 : vector<5xf32> to vector<5x1xf32>
    %cst_34 = arith.constant 6.400000e+01 : f32
    %86 = vector.broadcast %cst_34 : f32 to vector<5x1xf32>
    %87 = arith.divf %85, %86 : vector<5x1xf32>
    %88 = vector.broadcast %87 : vector<5x1xf32> to vector<5x64xf32>
    %89 = arith.subf %83, %88 : vector<5x64xf32>
    %90 = arith.mulf %89, %89 : vector<5x64xf32>
    %cst_35 = arith.constant dense<0.000000e+00> : vector<5xf32>
    %91 = vector.multi_reduction <add>, %90, %cst_35 [1] : vector<5x64xf32> to vector<5xf32>
    %92 = vector.shape_cast %91 : vector<5xf32> to vector<5x1xf32>
    %cst_36 = arith.constant 6.400000e+01 : f32
    %93 = vector.broadcast %cst_36 : f32 to vector<5x1xf32>
    %94 = arith.divf %92, %93 : vector<5x1xf32>
    %95 = vector.broadcast %87 : vector<5x1xf32> to vector<5x64xf32>
    %96 = arith.subf %83, %95 : vector<5x64xf32>
    %cst_37 = arith.constant 9.99999974E-6 : f32
    %97 = vector.broadcast %cst_37 : f32 to vector<5x1xf32>
    %98 = arith.addf %94, %97 : vector<5x1xf32>
    %99 = math.rsqrt %98 : vector<5x1xf32>
    %100 = vector.broadcast %99 : vector<5x1xf32> to vector<5x64xf32>
    %101 = arith.mulf %96, %100 : vector<5x64xf32>
    %102 = vector.broadcast %0 : vector<1x64xf32> to vector<5x64xf32>
    %103 = arith.mulf %101, %102 : vector<5x64xf32>
    %104 = vector.broadcast %1 : vector<1x64xf32> to vector<5x64xf32>
    %105 = arith.addf %103, %104 : vector<5x64xf32>
    %106 = arith.truncf %105 : vector<5x64xf32> to vector<5x64xbf16>
    %cst_38 = arith.constant dense<0.000000e+00> : vector<5x192xf32>
    %107 = tpu.matmul %106, %2, %cst_38 {dimension_numbers = #tpu.dot_dimension_numbers<[1], [0], [0], [1], [0, 0, 1, 1], [], []>} : vector<5x64xbf16>, vector<64x192xbf16>, vector<5x192xf32> -> vector<5x192xf32>
    %108 = vector.extract_strided_slice %107 {offsets = [0, 0], sizes = [5, 32], strides = [1, 1]} : vector<5x192xf32> to vector<5x32xf32>
    %109 = vector.extract_strided_slice %107 {offsets = [0, 64], sizes = [5, 32], strides = [1, 1]} : vector<5x192xf32> to vector<5x32xf32>
    %110 = vector.extract_strided_slice %107 {offsets = [0, 128], sizes = [5, 32], strides = [1, 1]} : vector<5x192xf32> to vector<5x32xf32>
    %111 = arith.truncf %108 : vector<5x32xf32> to vector<5x32xbf16>
    %112 = arith.truncf %109 : vector<5x32xf32> to vector<5x32xbf16>
    %cst_39 = arith.constant dense<0.000000e+00> : vector<5x5xf32>
    %113 = tpu.matmul %111, %112, %cst_39 {dimension_numbers = #tpu.dot_dimension_numbers<[1], [1], [0], [0], [0, 0, 1, 0], [], []>} : vector<5x32xbf16>, vector<5x32xbf16>, vector<5x5xf32> -> vector<5x5xf32>
    %cst_40 = arith.constant 0.176776692 : f32
    %114 = vector.broadcast %cst_40 : f32 to vector<5x5xf32>
    %115 = arith.mulf %113, %114 : vector<5x5xf32>
    %cst_41 = arith.constant dense<0xFF800000> : vector<5xf32>
    %116 = vector.multi_reduction <maximumf>, %115, %cst_41 [1] : vector<5x5xf32> to vector<5xf32>
    %117 = vector.shape_cast %116 : vector<5xf32> to vector<5x1xf32>
    %118 = vector.broadcast %117 : vector<5x1xf32> to vector<5x5xf32>
    %119 = arith.subf %115, %118 : vector<5x5xf32>
    %120 = math.exp %119 : vector<5x5xf32>
    %cst_42 = arith.constant dense<0.000000e+00> : vector<5xf32>
    %121 = vector.multi_reduction <add>, %120, %cst_42 [1] : vector<5x5xf32> to vector<5xf32>
    %122 = vector.shape_cast %121 : vector<5xf32> to vector<5x1xf32>
    %123 = tpu.reciprocal %122 {approx = true} : vector<5x1xf32> -> vector<5x1xf32>
    %124 = vector.broadcast %123 : vector<5x1xf32> to vector<5x5xf32>
    %125 = arith.mulf %120, %124 : vector<5x5xf32>
    %126 = arith.truncf %125 : vector<5x5xf32> to vector<5x5xbf16>
    %127 = arith.truncf %110 : vector<5x32xf32> to vector<5x32xbf16>
    %cst_43 = arith.constant dense<0.000000e+00> : vector<5x32xf32>
    %128 = tpu.matmul %126, %127, %cst_43 {dimension_numbers = #tpu.dot_dimension_numbers<[1], [0], [0], [1], [0, 0, 1, 1], [], []>} : vector<5x5xbf16>, vector<5x32xbf16>, vector<5x32xf32> -> vector<5x32xf32>
    %129 = vector.extract_strided_slice %107 {offsets = [0, 32], sizes = [5, 32], strides = [1, 1]} : vector<5x192xf32> to vector<5x32xf32>
    %130 = vector.extract_strided_slice %107 {offsets = [0, 96], sizes = [5, 32], strides = [1, 1]} : vector<5x192xf32> to vector<5x32xf32>
    %131 = vector.extract_strided_slice %107 {offsets = [0, 160], sizes = [5, 32], strides = [1, 1]} : vector<5x192xf32> to vector<5x32xf32>
    %132 = arith.truncf %129 : vector<5x32xf32> to vector<5x32xbf16>
    %133 = arith.truncf %130 : vector<5x32xf32> to vector<5x32xbf16>
    %cst_44 = arith.constant dense<0.000000e+00> : vector<5x5xf32>
    %134 = tpu.matmul %132, %133, %cst_44 {dimension_numbers = #tpu.dot_dimension_numbers<[1], [1], [0], [0], [0, 0, 1, 0], [], []>} : vector<5x32xbf16>, vector<5x32xbf16>, vector<5x5xf32> -> vector<5x5xf32>
    %cst_45 = arith.constant 0.176776692 : f32
    %135 = vector.broadcast %cst_45 : f32 to vector<5x5xf32>
    %136 = arith.mulf %134, %135 : vector<5x5xf32>
    %cst_46 = arith.constant dense<0xFF800000> : vector<5xf32>
    %137 = vector.multi_reduction <maximumf>, %136, %cst_46 [1] : vector<5x5xf32> to vector<5xf32>
    %138 = vector.shape_cast %137 : vector<5xf32> to vector<5x1xf32>
    %139 = vector.broadcast %138 : vector<5x1xf32> to vector<5x5xf32>
    %140 = arith.subf %136, %139 : vector<5x5xf32>
    %141 = math.exp %140 : vector<5x5xf32>
    %cst_47 = arith.constant dense<0.000000e+00> : vector<5xf32>
    %142 = vector.multi_reduction <add>, %141, %cst_47 [1] : vector<5x5xf32> to vector<5xf32>
    %143 = vector.shape_cast %142 : vector<5xf32> to vector<5x1xf32>
    %144 = tpu.reciprocal %143 {approx = true} : vector<5x1xf32> -> vector<5x1xf32>
    %145 = vector.broadcast %144 : vector<5x1xf32> to vector<5x5xf32>
    %146 = arith.mulf %141, %145 : vector<5x5xf32>
    %147 = arith.truncf %146 : vector<5x5xf32> to vector<5x5xbf16>
    %148 = arith.truncf %131 : vector<5x32xf32> to vector<5x32xbf16>
    %cst_48 = arith.constant dense<0.000000e+00> : vector<5x32xf32>
    %149 = tpu.matmul %147, %148, %cst_48 {dimension_numbers = #tpu.dot_dimension_numbers<[1], [0], [0], [1], [0, 0, 1, 1], [], []>} : vector<5x5xbf16>, vector<5x32xbf16>, vector<5x32xf32> -> vector<5x32xf32>
    %150 = tpu.concatenate %128, %149 in 1 : vector<5x32xf32>, vector<5x32xf32> -> vector<5x64xf32>
    %151 = arith.truncf %150 : vector<5x64xf32> to vector<5x64xbf16>
    %cst_49 = arith.constant dense<0.000000e+00> : vector<5x64xf32>
    %152 = tpu.matmul %151, %3, %cst_49 {dimension_numbers = #tpu.dot_dimension_numbers<[1], [0], [0], [1], [0, 0, 1, 1], [], []>} : vector<5x64xbf16>, vector<64x64xbf16>, vector<5x64xf32> -> vector<5x64xf32>
    %153 = vector.broadcast %4 : vector<1x64xf32> to vector<5x64xf32>
    %154 = arith.addf %152, %153 : vector<5x64xf32>
    %155 = arith.addf %83, %154 : vector<5x64xf32>
    %c1_50 = arith.constant 1 : index
    %c0_51 = arith.constant 0 : index
    %c0_52 = arith.constant 0 : index
    %156 = vector.load %arg7[%c1_50, %c0_51, %c0_52] : memref<2x5x64xf32, #tpu.memory_space<vmem>>, vector<1x5x64xf32>
    %157 = vector.shape_cast %156 : vector<1x5x64xf32> to vector<5x64xf32>
    %158 = vector.shape_cast %155 : vector<5x64xf32> to vector<1x5x64xf32>
    tpu.vector_store %arg7[%c1_50, %c0_51, %c0_52], %158 {strides = array<i32>} : memref<2x5x64xf32, #tpu.memory_space<vmem>>, vector<1x5x64xf32>,
    return
  }
  func.func @transform_0(%arg0: i32) -> (i32, i32, i32) {
    %c0_i32 = arith.constant 0 : i32
    %c0_i32_0 = arith.constant 0 : i32
    %c0_i32_1 = arith.constant 0 : i32
    return %arg0, %c0_i32, %c0_i32_0 : i32, i32, i32
  }
  func.func @transform_1(%arg0: i32) -> (i32, i32) {
    %c0_i32 = arith.constant 0 : i32
    %c0_i32_0 = arith.constant 0 : i32
    %c0_i32_1 = arith.constant 0 : i32
    return %c0_i32, %c0_i32_0 : i32, i32
  }
  func.func @transform_2(%arg0: i32) -> (i32, i32) {
    %c0_i32 = arith.constant 0 : i32
    %c0_i32_0 = arith.constant 0 : i32
    %c0_i32_1 = arith.constant 0 : i32
    return %c0_i32, %c0_i32_0 : i32, i32
  }
  func.func @transform_3(%arg0: i32) -> (i32, i32) {
    %c0_i32 = arith.constant 0 : i32
    %c0_i32_0 = arith.constant 0 : i32
    %c0_i32_1 = arith.constant 0 : i32
    return %c0_i32, %c0_i32_0 : i32, i32
  }
  func.func @transform_4(%arg0: i32) -> (i32, i32) {
    %c0_i32 = arith.constant 0 : i32
    %c0_i32_0 = arith.constant 0 : i32
    %c0_i32_1 = arith.constant 0 : i32
    return %c0_i32, %c0_i32_0 : i32, i32
  }
  func.func @transform_5(%arg0: i32) -> (i32, i32) {
    %c0_i32 = arith.constant 0 : i32
    %c0_i32_0 = arith.constant 0 : i32
    %c0_i32_1 = arith.constant 0 : i32
    return %c0_i32, %c0_i32_0 : i32, i32
  }
  func.func @transform_6(%arg0: i32) -> (i32, i32, i32) {
    %c0_i32 = arith.constant 0 : i32
    %c0_i32_0 = arith.constant 0 : i32
    %c0_i32_1 = arith.constant 0 : i32
    return %arg0, %c0_i32, %c0_i32_0 : i32, i32, i32
  }
}

module attributes {stable_mosaic.version = 11 : i64} {
  func.func @_ffn_block_kernel(%arg0: i32, %arg1: memref<2x5x64xf32, #tpu.memory_space<vmem>>, %arg2: memref<1x64xf32, #tpu.memory_space<vmem>>, %arg3: memref<1x64xf32, #tpu.memory_space<vmem>>, %arg4: memref<64x128xbf16, #tpu.memory_space<vmem>>, %arg5: memref<1x128xf32, #tpu.memory_space<vmem>>, %arg6: memref<128x64xbf16, #tpu.memory_space<vmem>>, %arg7: memref<1x64xf32, #tpu.memory_space<vmem>>, %arg8: memref<2x5x64xf32, #tpu.memory_space<vmem>>) attributes {dimension_semantics = [#tpu.dimension_semantics<parallel>], iteration_bounds = array<i64: 1>, scalar_prefetch = 0 : i64, scratch_operands = 0 : i64, tpu.core_type = #tpu.core_type<tc>, window_params = [{transform_indices = @transform_0, window_bounds = array<i64: 2, 5, 64>}, {pipeline_mode = #tpu.pipeline_mode<synchronous>, transform_indices = @transform_1, window_bounds = array<i64: 1, 64>}, {pipeline_mode = #tpu.pipeline_mode<synchronous>, transform_indices = @transform_2, window_bounds = array<i64: 1, 64>}, {pipeline_mode = #tpu.pipeline_mode<synchronous>, transform_indices = @transform_3, window_bounds = array<i64: 64, 128>}, {pipeline_mode = #tpu.pipeline_mode<synchronous>, transform_indices = @transform_4, window_bounds = array<i64: 1, 128>}, {pipeline_mode = #tpu.pipeline_mode<synchronous>, transform_indices = @transform_5, window_bounds = array<i64: 128, 64>}, {pipeline_mode = #tpu.pipeline_mode<synchronous>, transform_indices = @transform_6, window_bounds = array<i64: 1, 64>}, {transform_indices = @transform_7, window_bounds = array<i64: 2, 5, 64>}]} {
    %c0 = arith.constant 0 : index
    %c0_0 = arith.constant 0 : index
    %0 = vector.load %arg2[%c0, %c0_0] : memref<1x64xf32, #tpu.memory_space<vmem>>, vector<1x64xf32>
    %c0_1 = arith.constant 0 : index
    %c0_2 = arith.constant 0 : index
    %1 = vector.load %arg3[%c0_1, %c0_2] : memref<1x64xf32, #tpu.memory_space<vmem>>, vector<1x64xf32>
    %c0_3 = arith.constant 0 : index
    %c0_4 = arith.constant 0 : index
    %2 = vector.load %arg4[%c0_3, %c0_4] : memref<64x128xbf16, #tpu.memory_space<vmem>>, vector<64x128xbf16>
    %c0_5 = arith.constant 0 : index
    %c0_6 = arith.constant 0 : index
    %3 = vector.load %arg5[%c0_5, %c0_6] : memref<1x128xf32, #tpu.memory_space<vmem>>, vector<1x128xf32>
    %c0_7 = arith.constant 0 : index
    %c0_8 = arith.constant 0 : index
    %4 = vector.load %arg6[%c0_7, %c0_8] : memref<128x64xbf16, #tpu.memory_space<vmem>>, vector<128x64xbf16>
    %c0_9 = arith.constant 0 : index
    %c0_10 = arith.constant 0 : index
    %5 = vector.load %arg7[%c0_9, %c0_10] : memref<1x64xf32, #tpu.memory_space<vmem>>, vector<1x64xf32>
    %c0_11 = arith.constant 0 : index
    %c0_12 = arith.constant 0 : index
    %c0_13 = arith.constant 0 : index
    %6 = vector.load %arg1[%c0_11, %c0_12, %c0_13] : memref<2x5x64xf32, #tpu.memory_space<vmem>>, vector<1x5x64xf32>
    %7 = vector.shape_cast %6 : vector<1x5x64xf32> to vector<5x64xf32>
    %cst = arith.constant dense<0.000000e+00> : vector<5xf32>
    %8 = vector.multi_reduction <add>, %7, %cst [1] : vector<5x64xf32> to vector<5xf32>
    %9 = vector.shape_cast %8 : vector<5xf32> to vector<5x1xf32>
    %cst_14 = arith.constant 6.400000e+01 : f32
    %10 = vector.broadcast %cst_14 : f32 to vector<5x1xf32>
    %11 = arith.divf %9, %10 : vector<5x1xf32>
    %12 = vector.broadcast %11 : vector<5x1xf32> to vector<5x64xf32>
    %13 = arith.subf %7, %12 : vector<5x64xf32>
    %14 = arith.mulf %13, %13 : vector<5x64xf32>
    %cst_15 = arith.constant dense<0.000000e+00> : vector<5xf32>
    %15 = vector.multi_reduction <add>, %14, %cst_15 [1] : vector<5x64xf32> to vector<5xf32>
    %16 = vector.shape_cast %15 : vector<5xf32> to vector<5x1xf32>
    %cst_16 = arith.constant 6.400000e+01 : f32
    %17 = vector.broadcast %cst_16 : f32 to vector<5x1xf32>
    %18 = arith.divf %16, %17 : vector<5x1xf32>
    %19 = vector.broadcast %11 : vector<5x1xf32> to vector<5x64xf32>
    %20 = arith.subf %7, %19 : vector<5x64xf32>
    %cst_17 = arith.constant 9.99999974E-6 : f32
    %21 = vector.broadcast %cst_17 : f32 to vector<5x1xf32>
    %22 = arith.addf %18, %21 : vector<5x1xf32>
    %23 = math.rsqrt %22 : vector<5x1xf32>
    %24 = vector.broadcast %23 : vector<5x1xf32> to vector<5x64xf32>
    %25 = arith.mulf %20, %24 : vector<5x64xf32>
    %26 = vector.broadcast %0 : vector<1x64xf32> to vector<5x64xf32>
    %27 = arith.mulf %25, %26 : vector<5x64xf32>
    %28 = vector.broadcast %1 : vector<1x64xf32> to vector<5x64xf32>
    %29 = arith.addf %27, %28 : vector<5x64xf32>
    %30 = arith.truncf %29 : vector<5x64xf32> to vector<5x64xbf16>
    %cst_18 = arith.constant dense<0.000000e+00> : vector<5x128xf32>
    %31 = tpu.matmul %30, %2, %cst_18 {dimension_numbers = #tpu.dot_dimension_numbers<[1], [0], [0], [1], [0, 0, 1, 1], [], []>} : vector<5x64xbf16>, vector<64x128xbf16>, vector<5x128xf32> -> vector<5x128xf32>
    %32 = vector.broadcast %3 : vector<1x128xf32> to vector<5x128xf32>
    %33 = arith.addf %31, %32 : vector<5x128xf32>
    %cst_19 = arith.constant 5.000000e-01 : f32
    %34 = vector.broadcast %cst_19 : f32 to vector<5x128xf32>
    %35 = arith.mulf %34, %33 : vector<5x128xf32>
    %cst_20 = arith.constant 0.707106769 : f32
    %36 = vector.broadcast %cst_20 : f32 to vector<5x128xf32>
    %37 = arith.mulf %33, %36 : vector<5x128xf32>
    %38 = math.absf %37 : vector<5x128xf32>
    %cst_21 = arith.constant 0.327591091 : f32
    %39 = vector.broadcast %cst_21 : f32 to vector<5x128xf32>
    %40 = arith.mulf %39, %38 : vector<5x128xf32>
    %cst_22 = arith.constant 1.000000e+00 : f32
    %41 = vector.broadcast %cst_22 : f32 to vector<5x128xf32>
    %42 = arith.addf %41, %40 : vector<5x128xf32>
    %cst_23 = arith.constant 1.000000e+00 : f32
    %43 = vector.broadcast %cst_23 : f32 to vector<5x128xf32>
    %44 = arith.divf %43, %42 : vector<5x128xf32>
    %cst_24 = arith.constant 1.06140542 : f32
    %45 = vector.broadcast %cst_24 : f32 to vector<5x128xf32>
    %46 = arith.mulf %45, %44 : vector<5x128xf32>
    %cst_25 = arith.constant -1.45315206 : f32
    %47 = vector.broadcast %cst_25 : f32 to vector<5x128xf32>
    %48 = arith.addf %46, %47 : vector<5x128xf32>
    %49 = arith.mulf %48, %44 : vector<5x128xf32>
    %cst_26 = arith.constant 1.42141378 : f32
    %50 = vector.broadcast %cst_26 : f32 to vector<5x128xf32>
    %51 = arith.addf %49, %50 : vector<5x128xf32>
    %52 = arith.mulf %51, %44 : vector<5x128xf32>
    %cst_27 = arith.constant -0.284496725 : f32
    %53 = vector.broadcast %cst_27 : f32 to vector<5x128xf32>
    %54 = arith.addf %52, %53 : vector<5x128xf32>
    %55 = arith.mulf %54, %44 : vector<5x128xf32>
    %cst_28 = arith.constant 0.254829586 : f32
    %56 = vector.broadcast %cst_28 : f32 to vector<5x128xf32>
    %57 = arith.addf %55, %56 : vector<5x128xf32>
    %58 = arith.mulf %57, %44 : vector<5x128xf32>
    %cst_29 = arith.constant 0.000000e+00 : f32
    %59 = vector.broadcast %cst_29 : f32 to vector<5x128xf32>
    %60 = arith.subf %59, %38 : vector<5x128xf32>
    %61 = arith.mulf %60, %38 : vector<5x128xf32>
    %62 = math.exp %61 : vector<5x128xf32>
    %63 = arith.mulf %58, %62 : vector<5x128xf32>
    %cst_30 = arith.constant 1.000000e+00 : f32
    %64 = vector.broadcast %cst_30 : f32 to vector<5x128xf32>
    %65 = arith.subf %64, %63 : vector<5x128xf32>
    %cst_31 = arith.constant 0.000000e+00 : f32
    %66 = vector.broadcast %cst_31 : f32 to vector<5x128xf32>
    %67 = arith.cmpf oge, %37, %66 : vector<5x128xf32>
    %cst_32 = arith.constant 0.000000e+00 : f32
    %68 = vector.broadcast %cst_32 : f32 to vector<5x128xf32>
    %69 = arith.subf %68, %65 : vector<5x128xf32>
    %70 = arith.select %67, %65, %69 : vector<5x128xi1>, vector<5x128xf32>
    %cst_33 = arith.constant 1.000000e+00 : f32
    %71 = vector.broadcast %cst_33 : f32 to vector<5x128xf32>
    %72 = arith.addf %71, %70 : vector<5x128xf32>
    %73 = arith.mulf %35, %72 : vector<5x128xf32>
    %74 = arith.truncf %73 : vector<5x128xf32> to vector<5x128xbf16>
    %cst_34 = arith.constant dense<0.000000e+00> : vector<5x64xf32>
    %75 = tpu.matmul %74, %4, %cst_34 {dimension_numbers = #tpu.dot_dimension_numbers<[1], [0], [0], [1], [0, 0, 1, 1], [], []>} : vector<5x128xbf16>, vector<128x64xbf16>, vector<5x64xf32> -> vector<5x64xf32>
    %76 = vector.broadcast %5 : vector<1x64xf32> to vector<5x64xf32>
    %77 = arith.addf %75, %76 : vector<5x64xf32>
    %78 = arith.addf %7, %77 : vector<5x64xf32>
    %c0_35 = arith.constant 0 : index
    %c0_36 = arith.constant 0 : index
    %c0_37 = arith.constant 0 : index
    %79 = vector.load %arg8[%c0_35, %c0_36, %c0_37] : memref<2x5x64xf32, #tpu.memory_space<vmem>>, vector<1x5x64xf32>
    %80 = vector.shape_cast %79 : vector<1x5x64xf32> to vector<5x64xf32>
    %81 = vector.shape_cast %78 : vector<5x64xf32> to vector<1x5x64xf32>
    tpu.vector_store %arg8[%c0_35, %c0_36, %c0_37], %81 {strides = array<i32>} : memref<2x5x64xf32, #tpu.memory_space<vmem>>, vector<1x5x64xf32>,
    %c1 = arith.constant 1 : index
    %c0_38 = arith.constant 0 : index
    %c0_39 = arith.constant 0 : index
    %82 = vector.load %arg1[%c1, %c0_38, %c0_39] : memref<2x5x64xf32, #tpu.memory_space<vmem>>, vector<1x5x64xf32>
    %83 = vector.shape_cast %82 : vector<1x5x64xf32> to vector<5x64xf32>
    %cst_40 = arith.constant dense<0.000000e+00> : vector<5xf32>
    %84 = vector.multi_reduction <add>, %83, %cst_40 [1] : vector<5x64xf32> to vector<5xf32>
    %85 = vector.shape_cast %84 : vector<5xf32> to vector<5x1xf32>
    %cst_41 = arith.constant 6.400000e+01 : f32
    %86 = vector.broadcast %cst_41 : f32 to vector<5x1xf32>
    %87 = arith.divf %85, %86 : vector<5x1xf32>
    %88 = vector.broadcast %87 : vector<5x1xf32> to vector<5x64xf32>
    %89 = arith.subf %83, %88 : vector<5x64xf32>
    %90 = arith.mulf %89, %89 : vector<5x64xf32>
    %cst_42 = arith.constant dense<0.000000e+00> : vector<5xf32>
    %91 = vector.multi_reduction <add>, %90, %cst_42 [1] : vector<5x64xf32> to vector<5xf32>
    %92 = vector.shape_cast %91 : vector<5xf32> to vector<5x1xf32>
    %cst_43 = arith.constant 6.400000e+01 : f32
    %93 = vector.broadcast %cst_43 : f32 to vector<5x1xf32>
    %94 = arith.divf %92, %93 : vector<5x1xf32>
    %95 = vector.broadcast %87 : vector<5x1xf32> to vector<5x64xf32>
    %96 = arith.subf %83, %95 : vector<5x64xf32>
    %cst_44 = arith.constant 9.99999974E-6 : f32
    %97 = vector.broadcast %cst_44 : f32 to vector<5x1xf32>
    %98 = arith.addf %94, %97 : vector<5x1xf32>
    %99 = math.rsqrt %98 : vector<5x1xf32>
    %100 = vector.broadcast %99 : vector<5x1xf32> to vector<5x64xf32>
    %101 = arith.mulf %96, %100 : vector<5x64xf32>
    %102 = vector.broadcast %0 : vector<1x64xf32> to vector<5x64xf32>
    %103 = arith.mulf %101, %102 : vector<5x64xf32>
    %104 = vector.broadcast %1 : vector<1x64xf32> to vector<5x64xf32>
    %105 = arith.addf %103, %104 : vector<5x64xf32>
    %106 = arith.truncf %105 : vector<5x64xf32> to vector<5x64xbf16>
    %cst_45 = arith.constant dense<0.000000e+00> : vector<5x128xf32>
    %107 = tpu.matmul %106, %2, %cst_45 {dimension_numbers = #tpu.dot_dimension_numbers<[1], [0], [0], [1], [0, 0, 1, 1], [], []>} : vector<5x64xbf16>, vector<64x128xbf16>, vector<5x128xf32> -> vector<5x128xf32>
    %108 = vector.broadcast %3 : vector<1x128xf32> to vector<5x128xf32>
    %109 = arith.addf %107, %108 : vector<5x128xf32>
    %cst_46 = arith.constant 5.000000e-01 : f32
    %110 = vector.broadcast %cst_46 : f32 to vector<5x128xf32>
    %111 = arith.mulf %110, %109 : vector<5x128xf32>
    %cst_47 = arith.constant 0.707106769 : f32
    %112 = vector.broadcast %cst_47 : f32 to vector<5x128xf32>
    %113 = arith.mulf %109, %112 : vector<5x128xf32>
    %114 = math.absf %113 : vector<5x128xf32>
    %cst_48 = arith.constant 0.327591091 : f32
    %115 = vector.broadcast %cst_48 : f32 to vector<5x128xf32>
    %116 = arith.mulf %115, %114 : vector<5x128xf32>
    %cst_49 = arith.constant 1.000000e+00 : f32
    %117 = vector.broadcast %cst_49 : f32 to vector<5x128xf32>
    %118 = arith.addf %117, %116 : vector<5x128xf32>
    %cst_50 = arith.constant 1.000000e+00 : f32
    %119 = vector.broadcast %cst_50 : f32 to vector<5x128xf32>
    %120 = arith.divf %119, %118 : vector<5x128xf32>
    %cst_51 = arith.constant 1.06140542 : f32
    %121 = vector.broadcast %cst_51 : f32 to vector<5x128xf32>
    %122 = arith.mulf %121, %120 : vector<5x128xf32>
    %cst_52 = arith.constant -1.45315206 : f32
    %123 = vector.broadcast %cst_52 : f32 to vector<5x128xf32>
    %124 = arith.addf %122, %123 : vector<5x128xf32>
    %125 = arith.mulf %124, %120 : vector<5x128xf32>
    %cst_53 = arith.constant 1.42141378 : f32
    %126 = vector.broadcast %cst_53 : f32 to vector<5x128xf32>
    %127 = arith.addf %125, %126 : vector<5x128xf32>
    %128 = arith.mulf %127, %120 : vector<5x128xf32>
    %cst_54 = arith.constant -0.284496725 : f32
    %129 = vector.broadcast %cst_54 : f32 to vector<5x128xf32>
    %130 = arith.addf %128, %129 : vector<5x128xf32>
    %131 = arith.mulf %130, %120 : vector<5x128xf32>
    %cst_55 = arith.constant 0.254829586 : f32
    %132 = vector.broadcast %cst_55 : f32 to vector<5x128xf32>
    %133 = arith.addf %131, %132 : vector<5x128xf32>
    %134 = arith.mulf %133, %120 : vector<5x128xf32>
    %cst_56 = arith.constant 0.000000e+00 : f32
    %135 = vector.broadcast %cst_56 : f32 to vector<5x128xf32>
    %136 = arith.subf %135, %114 : vector<5x128xf32>
    %137 = arith.mulf %136, %114 : vector<5x128xf32>
    %138 = math.exp %137 : vector<5x128xf32>
    %139 = arith.mulf %134, %138 : vector<5x128xf32>
    %cst_57 = arith.constant 1.000000e+00 : f32
    %140 = vector.broadcast %cst_57 : f32 to vector<5x128xf32>
    %141 = arith.subf %140, %139 : vector<5x128xf32>
    %cst_58 = arith.constant 0.000000e+00 : f32
    %142 = vector.broadcast %cst_58 : f32 to vector<5x128xf32>
    %143 = arith.cmpf oge, %113, %142 : vector<5x128xf32>
    %cst_59 = arith.constant 0.000000e+00 : f32
    %144 = vector.broadcast %cst_59 : f32 to vector<5x128xf32>
    %145 = arith.subf %144, %141 : vector<5x128xf32>
    %146 = arith.select %143, %141, %145 : vector<5x128xi1>, vector<5x128xf32>
    %cst_60 = arith.constant 1.000000e+00 : f32
    %147 = vector.broadcast %cst_60 : f32 to vector<5x128xf32>
    %148 = arith.addf %147, %146 : vector<5x128xf32>
    %149 = arith.mulf %111, %148 : vector<5x128xf32>
    %150 = arith.truncf %149 : vector<5x128xf32> to vector<5x128xbf16>
    %cst_61 = arith.constant dense<0.000000e+00> : vector<5x64xf32>
    %151 = tpu.matmul %150, %4, %cst_61 {dimension_numbers = #tpu.dot_dimension_numbers<[1], [0], [0], [1], [0, 0, 1, 1], [], []>} : vector<5x128xbf16>, vector<128x64xbf16>, vector<5x64xf32> -> vector<5x64xf32>
    %152 = vector.broadcast %5 : vector<1x64xf32> to vector<5x64xf32>
    %153 = arith.addf %151, %152 : vector<5x64xf32>
    %154 = arith.addf %83, %153 : vector<5x64xf32>
    %c1_62 = arith.constant 1 : index
    %c0_63 = arith.constant 0 : index
    %c0_64 = arith.constant 0 : index
    %155 = vector.load %arg8[%c1_62, %c0_63, %c0_64] : memref<2x5x64xf32, #tpu.memory_space<vmem>>, vector<1x5x64xf32>
    %156 = vector.shape_cast %155 : vector<1x5x64xf32> to vector<5x64xf32>
    %157 = vector.shape_cast %154 : vector<5x64xf32> to vector<1x5x64xf32>
    tpu.vector_store %arg8[%c1_62, %c0_63, %c0_64], %157 {strides = array<i32>} : memref<2x5x64xf32, #tpu.memory_space<vmem>>, vector<1x5x64xf32>,
    return
  }
  func.func @transform_0(%arg0: i32) -> (i32, i32, i32) {
    %c0_i32 = arith.constant 0 : i32
    %c0_i32_0 = arith.constant 0 : i32
    %c0_i32_1 = arith.constant 0 : i32
    return %arg0, %c0_i32, %c0_i32_0 : i32, i32, i32
  }
  func.func @transform_1(%arg0: i32) -> (i32, i32) {
    %c0_i32 = arith.constant 0 : i32
    %c0_i32_0 = arith.constant 0 : i32
    %c0_i32_1 = arith.constant 0 : i32
    return %c0_i32, %c0_i32_0 : i32, i32
  }
  func.func @transform_2(%arg0: i32) -> (i32, i32) {
    %c0_i32 = arith.constant 0 : i32
    %c0_i32_0 = arith.constant 0 : i32
    %c0_i32_1 = arith.constant 0 : i32
    return %c0_i32, %c0_i32_0 : i32, i32
  }
  func.func @transform_3(%arg0: i32) -> (i32, i32) {
    %c0_i32 = arith.constant 0 : i32
    %c0_i32_0 = arith.constant 0 : i32
    %c0_i32_1 = arith.constant 0 : i32
    return %c0_i32, %c0_i32_0 : i32, i32
  }
  func.func @transform_4(%arg0: i32) -> (i32, i32) {
    %c0_i32 = arith.constant 0 : i32
    %c0_i32_0 = arith.constant 0 : i32
    %c0_i32_1 = arith.constant 0 : i32
    return %c0_i32, %c0_i32_0 : i32, i32
  }
  func.func @transform_5(%arg0: i32) -> (i32, i32) {
    %c0_i32 = arith.constant 0 : i32
    %c0_i32_0 = arith.constant 0 : i32
    %c0_i32_1 = arith.constant 0 : i32
    return %c0_i32, %c0_i32_0 : i32, i32
  }
  func.func @transform_6(%arg0: i32) -> (i32, i32) {
    %c0_i32 = arith.constant 0 : i32
    %c0_i32_0 = arith.constant 0 : i32
    %c0_i32_1 = arith.constant 0 : i32
    return %c0_i32, %c0_i32_0 : i32, i32
  }
  func.func @transform_7(%arg0: i32) -> (i32, i32, i32) {
    %c0_i32 = arith.constant 0 : i32
    %c0_i32_0 = arith.constant 0 : i32
    %c0_i32_1 = arith.constant 0 : i32
    return %arg0, %c0_i32, %c0_i32_0 : i32, i32, i32
  }
}

module attributes {stable_mosaic.version = 11 : i64} {
  func.func @_cross_attn_kernel(%arg0: i32, %arg1: memref<2x1x64xf32, #tpu.memory_space<vmem>>, %arg2: memref<2x8x32xf32, #tpu.memory_space<vmem>>, %arg3: memref<64x32xbf16, #tpu.memory_space<vmem>>, %arg4: memref<1x32xf32, #tpu.memory_space<vmem>>, %arg5: memref<1x32xf32, #tpu.memory_space<vmem>>, %arg6: memref<1x32xf32, #tpu.memory_space<vmem>>, %arg7: memref<32x64xbf16, #tpu.memory_space<vmem>>, %arg8: memref<32x32xbf16, #tpu.memory_space<vmem>>, %arg9: memref<32x32xbf16, #tpu.memory_space<vmem>>, %arg10: memref<1x32xf32, #tpu.memory_space<vmem>>, %arg11: memref<32x64xbf16, #tpu.memory_space<vmem>>, %arg12: memref<1x64xf32, #tpu.memory_space<vmem>>, %arg13: memref<2x1x64xf32, #tpu.memory_space<vmem>>) attributes {dimension_semantics = [#tpu.dimension_semantics<parallel>], iteration_bounds = array<i64: 1>, scalar_prefetch = 0 : i64, scratch_operands = 0 : i64, tpu.core_type = #tpu.core_type<tc>, window_params = [{transform_indices = @transform_0, window_bounds = array<i64: 2, 1, 64>}, {transform_indices = @transform_1, window_bounds = array<i64: 2, 8, 32>}, {pipeline_mode = #tpu.pipeline_mode<synchronous>, transform_indices = @transform_2, window_bounds = array<i64: 64, 32>}, {pipeline_mode = #tpu.pipeline_mode<synchronous>, transform_indices = @transform_3, window_bounds = array<i64: 1, 32>}, {pipeline_mode = #tpu.pipeline_mode<synchronous>, transform_indices = @transform_4, window_bounds = array<i64: 1, 32>}, {pipeline_mode = #tpu.pipeline_mode<synchronous>, transform_indices = @transform_5, window_bounds = array<i64: 1, 32>}, {pipeline_mode = #tpu.pipeline_mode<synchronous>, transform_indices = @transform_6, window_bounds = array<i64: 32, 64>}, {pipeline_mode = #tpu.pipeline_mode<synchronous>, transform_indices = @transform_7, window_bounds = array<i64: 32, 32>}, {pipeline_mode = #tpu.pipeline_mode<synchronous>, transform_indices = @transform_8, window_bounds = array<i64: 32, 32>}, {pipeline_mode = #tpu.pipeline_mode<synchronous>, transform_indices = @transform_9, window_bounds = array<i64: 1, 32>}, {pipeline_mode = #tpu.pipeline_mode<synchronous>, transform_indices = @transform_10, window_bounds = array<i64: 32, 64>}, {pipeline_mode = #tpu.pipeline_mode<synchronous>, transform_indices = @transform_11, window_bounds = array<i64: 1, 64>}, {transform_indices = @transform_12, window_bounds = array<i64: 2, 1, 64>}]} {
    %c0 = arith.constant 0 : index
    %c0_0 = arith.constant 0 : index
    %0 = vector.load %arg5[%c0, %c0_0] : memref<1x32xf32, #tpu.memory_space<vmem>>, vector<1x32xf32>
    %c0_1 = arith.constant 0 : index
    %c0_2 = arith.constant 0 : index
    %1 = vector.load %arg6[%c0_1, %c0_2] : memref<1x32xf32, #tpu.memory_space<vmem>>, vector<1x32xf32>
    %c0_3 = arith.constant 0 : index
    %c0_4 = arith.constant 0 : index
    %2 = vector.load %arg3[%c0_3, %c0_4] : memref<64x32xbf16, #tpu.memory_space<vmem>>, vector<64x32xbf16>
    %c0_5 = arith.constant 0 : index
    %c0_6 = arith.constant 0 : index
    %3 = vector.load %arg4[%c0_5, %c0_6] : memref<1x32xf32, #tpu.memory_space<vmem>>, vector<1x32xf32>
    %c0_7 = arith.constant 0 : index
    %c0_8 = arith.constant 0 : index
    %4 = vector.load %arg7[%c0_7, %c0_8] : memref<32x64xbf16, #tpu.memory_space<vmem>>, vector<32x64xbf16>
    %c0_9 = arith.constant 0 : index
    %c0_10 = arith.constant 0 : index
    %5 = vector.load %arg8[%c0_9, %c0_10] : memref<32x32xbf16, #tpu.memory_space<vmem>>, vector<32x32xbf16>
    %c0_11 = arith.constant 0 : index
    %c0_12 = arith.constant 0 : index
    %6 = vector.load %arg9[%c0_11, %c0_12] : memref<32x32xbf16, #tpu.memory_space<vmem>>, vector<32x32xbf16>
    %c0_13 = arith.constant 0 : index
    %c0_14 = arith.constant 0 : index
    %7 = vector.load %arg10[%c0_13, %c0_14] : memref<1x32xf32, #tpu.memory_space<vmem>>, vector<1x32xf32>
    %c0_15 = arith.constant 0 : index
    %c0_16 = arith.constant 0 : index
    %8 = vector.load %arg11[%c0_15, %c0_16] : memref<32x64xbf16, #tpu.memory_space<vmem>>, vector<32x64xbf16>
    %c0_17 = arith.constant 0 : index
    %c0_18 = arith.constant 0 : index
    %9 = vector.load %arg12[%c0_17, %c0_18] : memref<1x64xf32, #tpu.memory_space<vmem>>, vector<1x64xf32>
    %c0_19 = arith.constant 0 : index
    %c0_20 = arith.constant 0 : index
    %c0_21 = arith.constant 0 : index
    %10 = vector.load %arg1[%c0_19, %c0_20, %c0_21] : memref<2x1x64xf32, #tpu.memory_space<vmem>>, vector<1x1x64xf32>
    %11 = vector.shape_cast %10 : vector<1x1x64xf32> to vector<1x64xf32>
    %c0_22 = arith.constant 0 : index
    %c0_23 = arith.constant 0 : index
    %c0_24 = arith.constant 0 : index
    %12 = vector.load %arg2[%c0_22, %c0_23, %c0_24] : memref<2x8x32xf32, #tpu.memory_space<vmem>>, vector<1x8x32xf32>
    %13 = vector.shape_cast %12 : vector<1x8x32xf32> to vector<8x32xf32>
    %14 = arith.truncf %11 : vector<1x64xf32> to vector<1x64xbf16>
    %cst = arith.constant dense<0.000000e+00> : vector<1x32xf32>
    %15 = tpu.matmul %14, %2, %cst {dimension_numbers = #tpu.dot_dimension_numbers<[1], [0], [0], [1], [0, 0, 1, 1], [], []>} : vector<1x64xbf16>, vector<64x32xbf16>, vector<1x32xf32> -> vector<1x32xf32>
    %16 = arith.addf %15, %3 : vector<1x32xf32>
    %cst_25 = arith.constant dense<0.000000e+00> : vector<1xf32>
    %17 = vector.multi_reduction <add>, %16, %cst_25 [1] : vector<1x32xf32> to vector<1xf32>
    %18 = vector.shape_cast %17 : vector<1xf32> to vector<1x1xf32>
    %cst_26 = arith.constant 3.200000e+01 : f32
    %19 = vector.broadcast %cst_26 : f32 to vector<1x1xf32>
    %20 = arith.divf %18, %19 : vector<1x1xf32>
    %21 = vector.broadcast %20 : vector<1x1xf32> to vector<1x32xf32>
    %22 = arith.subf %16, %21 : vector<1x32xf32>
    %23 = arith.mulf %22, %22 : vector<1x32xf32>
    %cst_27 = arith.constant dense<0.000000e+00> : vector<1xf32>
    %24 = vector.multi_reduction <add>, %23, %cst_27 [1] : vector<1x32xf32> to vector<1xf32>
    %25 = vector.shape_cast %24 : vector<1xf32> to vector<1x1xf32>
    %cst_28 = arith.constant 3.200000e+01 : f32
    %26 = vector.broadcast %cst_28 : f32 to vector<1x1xf32>
    %27 = arith.divf %25, %26 : vector<1x1xf32>
    %28 = vector.broadcast %20 : vector<1x1xf32> to vector<1x32xf32>
    %29 = arith.subf %16, %28 : vector<1x32xf32>
    %cst_29 = arith.constant 9.99999974E-6 : f32
    %30 = vector.broadcast %cst_29 : f32 to vector<1x1xf32>
    %31 = arith.addf %27, %30 : vector<1x1xf32>
    %32 = math.rsqrt %31 : vector<1x1xf32>
    %33 = vector.broadcast %32 : vector<1x1xf32> to vector<1x32xf32>
    %34 = arith.mulf %29, %33 : vector<1x32xf32>
    %35 = arith.mulf %34, %0 : vector<1x32xf32>
    %36 = arith.addf %35, %1 : vector<1x32xf32>
    %cst_30 = arith.constant dense<0.000000e+00> : vector<8xf32>
    %37 = vector.multi_reduction <add>, %13, %cst_30 [1] : vector<8x32xf32> to vector<8xf32>
    %38 = vector.shape_cast %37 : vector<8xf32> to vector<8x1xf32>
    %cst_31 = arith.constant 3.200000e+01 : f32
    %39 = vector.broadcast %cst_31 : f32 to vector<8x1xf32>
    %40 = arith.divf %38, %39 : vector<8x1xf32>
    %41 = vector.broadcast %40 : vector<8x1xf32> to vector<8x32xf32>
    %42 = arith.subf %13, %41 : vector<8x32xf32>
    %43 = arith.mulf %42, %42 : vector<8x32xf32>
    %cst_32 = arith.constant dense<0.000000e+00> : vector<8xf32>
    %44 = vector.multi_reduction <add>, %43, %cst_32 [1] : vector<8x32xf32> to vector<8xf32>
    %45 = vector.shape_cast %44 : vector<8xf32> to vector<8x1xf32>
    %cst_33 = arith.constant 3.200000e+01 : f32
    %46 = vector.broadcast %cst_33 : f32 to vector<8x1xf32>
    %47 = arith.divf %45, %46 : vector<8x1xf32>
    %48 = vector.broadcast %40 : vector<8x1xf32> to vector<8x32xf32>
    %49 = arith.subf %13, %48 : vector<8x32xf32>
    %cst_34 = arith.constant 9.99999974E-6 : f32
    %50 = vector.broadcast %cst_34 : f32 to vector<8x1xf32>
    %51 = arith.addf %47, %50 : vector<8x1xf32>
    %52 = math.rsqrt %51 : vector<8x1xf32>
    %53 = vector.broadcast %52 : vector<8x1xf32> to vector<8x32xf32>
    %54 = arith.mulf %49, %53 : vector<8x32xf32>
    %55 = vector.broadcast %0 : vector<1x32xf32> to vector<8x32xf32>
    %56 = arith.mulf %54, %55 : vector<8x32xf32>
    %57 = vector.broadcast %1 : vector<1x32xf32> to vector<8x32xf32>
    %58 = arith.addf %56, %57 : vector<8x32xf32>
    %59 = arith.truncf %36 : vector<1x32xf32> to vector<1x32xbf16>
    %cst_35 = arith.constant dense<0.000000e+00> : vector<1x64xf32>
    %60 = tpu.matmul %59, %4, %cst_35 {dimension_numbers = #tpu.dot_dimension_numbers<[1], [0], [0], [1], [0, 0, 1, 1], [], []>} : vector<1x32xbf16>, vector<32x64xbf16>, vector<1x64xf32> -> vector<1x64xf32>
    %61 = arith.truncf %36 : vector<1x32xf32> to vector<1x32xbf16>
    %cst_36 = arith.constant dense<0.000000e+00> : vector<1x32xf32>
    %62 = tpu.matmul %61, %5, %cst_36 {dimension_numbers = #tpu.dot_dimension_numbers<[1], [0], [0], [1], [0, 0, 1, 1], [], []>} : vector<1x32xbf16>, vector<32x32xbf16>, vector<1x32xf32> -> vector<1x32xf32>
    %63 = arith.truncf %58 : vector<8x32xf32> to vector<8x32xbf16>
    %cst_37 = arith.constant dense<0.000000e+00> : vector<8x64xf32>
    %64 = tpu.matmul %63, %4, %cst_37 {dimension_numbers = #tpu.dot_dimension_numbers<[1], [0], [0], [1], [0, 0, 1, 1], [], []>} : vector<8x32xbf16>, vector<32x64xbf16>, vector<8x64xf32> -> vector<8x64xf32>
    %65 = vector.extract_strided_slice %62 {offsets = [0, 0], sizes = [1, 16], strides = [1, 1]} : vector<1x32xf32> to vector<1x16xf32>
    %66 = vector.extract_strided_slice %60 {offsets = [0, 0], sizes = [1, 16], strides = [1, 1]} : vector<1x64xf32> to vector<1x16xf32>
    %67 = vector.extract_strided_slice %60 {offsets = [0, 32], sizes = [1, 16], strides = [1, 1]} : vector<1x64xf32> to vector<1x16xf32>
    %68 = vector.extract_strided_slice %64 {offsets = [0, 0], sizes = [8, 16], strides = [1, 1]} : vector<8x64xf32> to vector<8x16xf32>
    %69 = vector.extract_strided_slice %64 {offsets = [0, 32], sizes = [8, 16], strides = [1, 1]} : vector<8x64xf32> to vector<8x16xf32>
    %70 = arith.truncf %65 : vector<1x16xf32> to vector<1x16xbf16>
    %71 = arith.extf %70 : vector<1x16xbf16> to vector<1x16xf32>
    %72 = arith.truncf %66 : vector<1x16xf32> to vector<1x16xbf16>
    %73 = arith.extf %72 : vector<1x16xbf16> to vector<1x16xf32>
    %74 = arith.mulf %71, %73 : vector<1x16xf32>
    %cst_38 = arith.constant dense<0.000000e+00> : vector<1xf32>
    %75 = vector.multi_reduction <add>, %74, %cst_38 [1] : vector<1x16xf32> to vector<1xf32>
    %76 = vector.shape_cast %75 : vector<1xf32> to vector<1x1xf32>
    %cst_39 = arith.constant 2.500000e-01 : f32
    %77 = vector.broadcast %cst_39 : f32 to vector<1x1xf32>
    %78 = arith.mulf %76, %77 : vector<1x1xf32>
    %79 = arith.truncf %65 : vector<1x16xf32> to vector<1x16xbf16>
    %80 = arith.truncf %68 : vector<8x16xf32> to vector<8x16xbf16>
    %cst_40 = arith.constant dense<0.000000e+00> : vector<1x8xf32>
    %81 = tpu.matmul %79, %80, %cst_40 {dimension_numbers = #tpu.dot_dimension_numbers<[1], [1], [0], [0], [0, 0, 1, 0], [], []>} : vector<1x16xbf16>, vector<8x16xbf16>, vector<1x8xf32> -> vector<1x8xf32>
    %cst_41 = arith.constant 2.500000e-01 : f32
    %82 = vector.broadcast %cst_41 : f32 to vector<1x8xf32>
    %83 = arith.mulf %81, %82 : vector<1x8xf32>
    %cst_42 = arith.constant dense<0xFF800000> : vector<1xf32>
    %84 = vector.multi_reduction <maximumf>, %83, %cst_42 [1] : vector<1x8xf32> to vector<1xf32>
    %85 = vector.shape_cast %84 : vector<1xf32> to vector<1x1xf32>
    %86 = arith.maximumf %78, %85 : vector<1x1xf32>
    %87 = arith.subf %78, %86 : vector<1x1xf32>
    %88 = math.exp %87 : vector<1x1xf32>
    %89 = vector.broadcast %86 : vector<1x1xf32> to vector<1x8xf32>
    %90 = arith.subf %83, %89 : vector<1x8xf32>
    %91 = math.exp %90 : vector<1x8xf32>
    %cst_43 = arith.constant dense<0.000000e+00> : vector<1xf32>
    %92 = vector.multi_reduction <add>, %91, %cst_43 [1] : vector<1x8xf32> to vector<1xf32>
    %93 = vector.shape_cast %92 : vector<1xf32> to vector<1x1xf32>
    %94 = arith.addf %88, %93 : vector<1x1xf32>
    %95 = tpu.reciprocal %94 {approx = true} : vector<1x1xf32> -> vector<1x1xf32>
    %96 = arith.mulf %88, %95 : vector<1x1xf32>
    %97 = vector.broadcast %96 : vector<1x1xf32> to vector<1x16xf32>
    %98 = arith.mulf %97, %67 : vector<1x16xf32>
    %99 = vector.broadcast %95 : vector<1x1xf32> to vector<1x8xf32>
    %100 = arith.mulf %91, %99 : vector<1x8xf32>
    %101 = arith.truncf %100 : vector<1x8xf32> to vector<1x8xbf16>
    %102 = arith.truncf %69 : vector<8x16xf32> to vector<8x16xbf16>
    %cst_44 = arith.constant dense<0.000000e+00> : vector<1x16xf32>
    %103 = tpu.matmul %101, %102, %cst_44 {dimension_numbers = #tpu.dot_dimension_numbers<[1], [0], [0], [1], [0, 0, 1, 1], [], []>} : vector<1x8xbf16>, vector<8x16xbf16>, vector<1x16xf32> -> vector<1x16xf32>
    %104 = arith.addf %98, %103 : vector<1x16xf32>
    %105 = vector.extract_strided_slice %62 {offsets = [0, 16], sizes = [1, 16], strides = [1, 1]} : vector<1x32xf32> to vector<1x16xf32>
    %106 = vector.extract_strided_slice %60 {offsets = [0, 16], sizes = [1, 16], strides = [1, 1]} : vector<1x64xf32> to vector<1x16xf32>
    %107 = vector.extract_strided_slice %60 {offsets = [0, 48], sizes = [1, 16], strides = [1, 1]} : vector<1x64xf32> to vector<1x16xf32>
    %108 = vector.extract_strided_slice %64 {offsets = [0, 16], sizes = [8, 16], strides = [1, 1]} : vector<8x64xf32> to vector<8x16xf32>
    %109 = vector.extract_strided_slice %64 {offsets = [0, 48], sizes = [8, 16], strides = [1, 1]} : vector<8x64xf32> to vector<8x16xf32>
    %110 = arith.truncf %105 : vector<1x16xf32> to vector<1x16xbf16>
    %111 = arith.extf %110 : vector<1x16xbf16> to vector<1x16xf32>
    %112 = arith.truncf %106 : vector<1x16xf32> to vector<1x16xbf16>
    %113 = arith.extf %112 : vector<1x16xbf16> to vector<1x16xf32>
    %114 = arith.mulf %111, %113 : vector<1x16xf32>
    %cst_45 = arith.constant dense<0.000000e+00> : vector<1xf32>
    %115 = vector.multi_reduction <add>, %114, %cst_45 [1] : vector<1x16xf32> to vector<1xf32>
    %116 = vector.shape_cast %115 : vector<1xf32> to vector<1x1xf32>
    %cst_46 = arith.constant 2.500000e-01 : f32
    %117 = vector.broadcast %cst_46 : f32 to vector<1x1xf32>
    %118 = arith.mulf %116, %117 : vector<1x1xf32>
    %119 = arith.truncf %105 : vector<1x16xf32> to vector<1x16xbf16>
    %120 = arith.truncf %108 : vector<8x16xf32> to vector<8x16xbf16>
    %cst_47 = arith.constant dense<0.000000e+00> : vector<1x8xf32>
    %121 = tpu.matmul %119, %120, %cst_47 {dimension_numbers = #tpu.dot_dimension_numbers<[1], [1], [0], [0], [0, 0, 1, 0], [], []>} : vector<1x16xbf16>, vector<8x16xbf16>, vector<1x8xf32> -> vector<1x8xf32>
    %cst_48 = arith.constant 2.500000e-01 : f32
    %122 = vector.broadcast %cst_48 : f32 to vector<1x8xf32>
    %123 = arith.mulf %121, %122 : vector<1x8xf32>
    %cst_49 = arith.constant dense<0xFF800000> : vector<1xf32>
    %124 = vector.multi_reduction <maximumf>, %123, %cst_49 [1] : vector<1x8xf32> to vector<1xf32>
    %125 = vector.shape_cast %124 : vector<1xf32> to vector<1x1xf32>
    %126 = arith.maximumf %118, %125 : vector<1x1xf32>
    %127 = arith.subf %118, %126 : vector<1x1xf32>
    %128 = math.exp %127 : vector<1x1xf32>
    %129 = vector.broadcast %126 : vector<1x1xf32> to vector<1x8xf32>
    %130 = arith.subf %123, %129 : vector<1x8xf32>
    %131 = math.exp %130 : vector<1x8xf32>
    %cst_50 = arith.constant dense<0.000000e+00> : vector<1xf32>
    %132 = vector.multi_reduction <add>, %131, %cst_50 [1] : vector<1x8xf32> to vector<1xf32>
    %133 = vector.shape_cast %132 : vector<1xf32> to vector<1x1xf32>
    %134 = arith.addf %128, %133 : vector<1x1xf32>
    %135 = tpu.reciprocal %134 {approx = true} : vector<1x1xf32> -> vector<1x1xf32>
    %136 = arith.mulf %128, %135 : vector<1x1xf32>
    %137 = vector.broadcast %136 : vector<1x1xf32> to vector<1x16xf32>
    %138 = arith.mulf %137, %107 : vector<1x16xf32>
    %139 = vector.broadcast %135 : vector<1x1xf32> to vector<1x8xf32>
    %140 = arith.mulf %131, %139 : vector<1x8xf32>
    %141 = arith.truncf %140 : vector<1x8xf32> to vector<1x8xbf16>
    %142 = arith.truncf %109 : vector<8x16xf32> to vector<8x16xbf16>
    %cst_51 = arith.constant dense<0.000000e+00> : vector<1x16xf32>
    %143 = tpu.matmul %141, %142, %cst_51 {dimension_numbers = #tpu.dot_dimension_numbers<[1], [0], [0], [1], [0, 0, 1, 1], [], []>} : vector<1x8xbf16>, vector<8x16xbf16>, vector<1x16xf32> -> vector<1x16xf32>
    %144 = arith.addf %138, %143 : vector<1x16xf32>
    %145 = tpu.concatenate %104, %144 in 1 : vector<1x16xf32>, vector<1x16xf32> -> vector<1x32xf32>
    %146 = arith.truncf %145 : vector<1x32xf32> to vector<1x32xbf16>
    %cst_52 = arith.constant dense<0.000000e+00> : vector<1x32xf32>
    %147 = tpu.matmul %146, %6, %cst_52 {dimension_numbers = #tpu.dot_dimension_numbers<[1], [0], [0], [1], [0, 0, 1, 1], [], []>} : vector<1x32xbf16>, vector<32x32xbf16>, vector<1x32xf32> -> vector<1x32xf32>
    %148 = arith.addf %147, %7 : vector<1x32xf32>
    %149 = arith.addf %16, %148 : vector<1x32xf32>
    %150 = arith.truncf %149 : vector<1x32xf32> to vector<1x32xbf16>
    %cst_53 = arith.constant dense<0.000000e+00> : vector<1x64xf32>
    %151 = tpu.matmul %150, %8, %cst_53 {dimension_numbers = #tpu.dot_dimension_numbers<[1], [0], [0], [1], [0, 0, 1, 1], [], []>} : vector<1x32xbf16>, vector<32x64xbf16>, vector<1x64xf32> -> vector<1x64xf32>
    %152 = arith.addf %151, %9 : vector<1x64xf32>
    %c0_54 = arith.constant 0 : index
    %c0_55 = arith.constant 0 : index
    %c0_56 = arith.constant 0 : index
    %153 = vector.load %arg13[%c0_54, %c0_55, %c0_56] : memref<2x1x64xf32, #tpu.memory_space<vmem>>, vector<1x1x64xf32>
    %154 = vector.shape_cast %153 : vector<1x1x64xf32> to vector<1x64xf32>
    %155 = vector.shape_cast %152 : vector<1x64xf32> to vector<1x1x64xf32>
    tpu.vector_store %arg13[%c0_54, %c0_55, %c0_56], %155 {strides = array<i32>} : memref<2x1x64xf32, #tpu.memory_space<vmem>>, vector<1x1x64xf32>,
    %c1 = arith.constant 1 : index
    %c0_57 = arith.constant 0 : index
    %c0_58 = arith.constant 0 : index
    %156 = vector.load %arg1[%c1, %c0_57, %c0_58] : memref<2x1x64xf32, #tpu.memory_space<vmem>>, vector<1x1x64xf32>
    %157 = vector.shape_cast %156 : vector<1x1x64xf32> to vector<1x64xf32>
    %c1_59 = arith.constant 1 : index
    %c0_60 = arith.constant 0 : index
    %c0_61 = arith.constant 0 : index
    %158 = vector.load %arg2[%c1_59, %c0_60, %c0_61] : memref<2x8x32xf32, #tpu.memory_space<vmem>>, vector<1x8x32xf32>
    %159 = vector.shape_cast %158 : vector<1x8x32xf32> to vector<8x32xf32>
    %160 = arith.truncf %157 : vector<1x64xf32> to vector<1x64xbf16>
    %cst_62 = arith.constant dense<0.000000e+00> : vector<1x32xf32>
    %161 = tpu.matmul %160, %2, %cst_62 {dimension_numbers = #tpu.dot_dimension_numbers<[1], [0], [0], [1], [0, 0, 1, 1], [], []>} : vector<1x64xbf16>, vector<64x32xbf16>, vector<1x32xf32> -> vector<1x32xf32>
    %162 = arith.addf %161, %3 : vector<1x32xf32>
    %cst_63 = arith.constant dense<0.000000e+00> : vector<1xf32>
    %163 = vector.multi_reduction <add>, %162, %cst_63 [1] : vector<1x32xf32> to vector<1xf32>
    %164 = vector.shape_cast %163 : vector<1xf32> to vector<1x1xf32>
    %cst_64 = arith.constant 3.200000e+01 : f32
    %165 = vector.broadcast %cst_64 : f32 to vector<1x1xf32>
    %166 = arith.divf %164, %165 : vector<1x1xf32>
    %167 = vector.broadcast %166 : vector<1x1xf32> to vector<1x32xf32>
    %168 = arith.subf %162, %167 : vector<1x32xf32>
    %169 = arith.mulf %168, %168 : vector<1x32xf32>
    %cst_65 = arith.constant dense<0.000000e+00> : vector<1xf32>
    %170 = vector.multi_reduction <add>, %169, %cst_65 [1] : vector<1x32xf32> to vector<1xf32>
    %171 = vector.shape_cast %170 : vector<1xf32> to vector<1x1xf32>
    %cst_66 = arith.constant 3.200000e+01 : f32
    %172 = vector.broadcast %cst_66 : f32 to vector<1x1xf32>
    %173 = arith.divf %171, %172 : vector<1x1xf32>
    %174 = vector.broadcast %166 : vector<1x1xf32> to vector<1x32xf32>
    %175 = arith.subf %162, %174 : vector<1x32xf32>
    %cst_67 = arith.constant 9.99999974E-6 : f32
    %176 = vector.broadcast %cst_67 : f32 to vector<1x1xf32>
    %177 = arith.addf %173, %176 : vector<1x1xf32>
    %178 = math.rsqrt %177 : vector<1x1xf32>
    %179 = vector.broadcast %178 : vector<1x1xf32> to vector<1x32xf32>
    %180 = arith.mulf %175, %179 : vector<1x32xf32>
    %181 = arith.mulf %180, %0 : vector<1x32xf32>
    %182 = arith.addf %181, %1 : vector<1x32xf32>
    %cst_68 = arith.constant dense<0.000000e+00> : vector<8xf32>
    %183 = vector.multi_reduction <add>, %159, %cst_68 [1] : vector<8x32xf32> to vector<8xf32>
    %184 = vector.shape_cast %183 : vector<8xf32> to vector<8x1xf32>
    %cst_69 = arith.constant 3.200000e+01 : f32
    %185 = vector.broadcast %cst_69 : f32 to vector<8x1xf32>
    %186 = arith.divf %184, %185 : vector<8x1xf32>
    %187 = vector.broadcast %186 : vector<8x1xf32> to vector<8x32xf32>
    %188 = arith.subf %159, %187 : vector<8x32xf32>
    %189 = arith.mulf %188, %188 : vector<8x32xf32>
    %cst_70 = arith.constant dense<0.000000e+00> : vector<8xf32>
    %190 = vector.multi_reduction <add>, %189, %cst_70 [1] : vector<8x32xf32> to vector<8xf32>
    %191 = vector.shape_cast %190 : vector<8xf32> to vector<8x1xf32>
    %cst_71 = arith.constant 3.200000e+01 : f32
    %192 = vector.broadcast %cst_71 : f32 to vector<8x1xf32>
    %193 = arith.divf %191, %192 : vector<8x1xf32>
    %194 = vector.broadcast %186 : vector<8x1xf32> to vector<8x32xf32>
    %195 = arith.subf %159, %194 : vector<8x32xf32>
    %cst_72 = arith.constant 9.99999974E-6 : f32
    %196 = vector.broadcast %cst_72 : f32 to vector<8x1xf32>
    %197 = arith.addf %193, %196 : vector<8x1xf32>
    %198 = math.rsqrt %197 : vector<8x1xf32>
    %199 = vector.broadcast %198 : vector<8x1xf32> to vector<8x32xf32>
    %200 = arith.mulf %195, %199 : vector<8x32xf32>
    %201 = vector.broadcast %0 : vector<1x32xf32> to vector<8x32xf32>
    %202 = arith.mulf %200, %201 : vector<8x32xf32>
    %203 = vector.broadcast %1 : vector<1x32xf32> to vector<8x32xf32>
    %204 = arith.addf %202, %203 : vector<8x32xf32>
    %205 = arith.truncf %182 : vector<1x32xf32> to vector<1x32xbf16>
    %cst_73 = arith.constant dense<0.000000e+00> : vector<1x64xf32>
    %206 = tpu.matmul %205, %4, %cst_73 {dimension_numbers = #tpu.dot_dimension_numbers<[1], [0], [0], [1], [0, 0, 1, 1], [], []>} : vector<1x32xbf16>, vector<32x64xbf16>, vector<1x64xf32> -> vector<1x64xf32>
    %207 = arith.truncf %182 : vector<1x32xf32> to vector<1x32xbf16>
    %cst_74 = arith.constant dense<0.000000e+00> : vector<1x32xf32>
    %208 = tpu.matmul %207, %5, %cst_74 {dimension_numbers = #tpu.dot_dimension_numbers<[1], [0], [0], [1], [0, 0, 1, 1], [], []>} : vector<1x32xbf16>, vector<32x32xbf16>, vector<1x32xf32> -> vector<1x32xf32>
    %209 = arith.truncf %204 : vector<8x32xf32> to vector<8x32xbf16>
    %cst_75 = arith.constant dense<0.000000e+00> : vector<8x64xf32>
    %210 = tpu.matmul %209, %4, %cst_75 {dimension_numbers = #tpu.dot_dimension_numbers<[1], [0], [0], [1], [0, 0, 1, 1], [], []>} : vector<8x32xbf16>, vector<32x64xbf16>, vector<8x64xf32> -> vector<8x64xf32>
    %211 = vector.extract_strided_slice %208 {offsets = [0, 0], sizes = [1, 16], strides = [1, 1]} : vector<1x32xf32> to vector<1x16xf32>
    %212 = vector.extract_strided_slice %206 {offsets = [0, 0], sizes = [1, 16], strides = [1, 1]} : vector<1x64xf32> to vector<1x16xf32>
    %213 = vector.extract_strided_slice %206 {offsets = [0, 32], sizes = [1, 16], strides = [1, 1]} : vector<1x64xf32> to vector<1x16xf32>
    %214 = vector.extract_strided_slice %210 {offsets = [0, 0], sizes = [8, 16], strides = [1, 1]} : vector<8x64xf32> to vector<8x16xf32>
    %215 = vector.extract_strided_slice %210 {offsets = [0, 32], sizes = [8, 16], strides = [1, 1]} : vector<8x64xf32> to vector<8x16xf32>
    %216 = arith.truncf %211 : vector<1x16xf32> to vector<1x16xbf16>
    %217 = arith.extf %216 : vector<1x16xbf16> to vector<1x16xf32>
    %218 = arith.truncf %212 : vector<1x16xf32> to vector<1x16xbf16>
    %219 = arith.extf %218 : vector<1x16xbf16> to vector<1x16xf32>
    %220 = arith.mulf %217, %219 : vector<1x16xf32>
    %cst_76 = arith.constant dense<0.000000e+00> : vector<1xf32>
    %221 = vector.multi_reduction <add>, %220, %cst_76 [1] : vector<1x16xf32> to vector<1xf32>
    %222 = vector.shape_cast %221 : vector<1xf32> to vector<1x1xf32>
    %cst_77 = arith.constant 2.500000e-01 : f32
    %223 = vector.broadcast %cst_77 : f32 to vector<1x1xf32>
    %224 = arith.mulf %222, %223 : vector<1x1xf32>
    %225 = arith.truncf %211 : vector<1x16xf32> to vector<1x16xbf16>
    %226 = arith.truncf %214 : vector<8x16xf32> to vector<8x16xbf16>
    %cst_78 = arith.constant dense<0.000000e+00> : vector<1x8xf32>
    %227 = tpu.matmul %225, %226, %cst_78 {dimension_numbers = #tpu.dot_dimension_numbers<[1], [1], [0], [0], [0, 0, 1, 0], [], []>} : vector<1x16xbf16>, vector<8x16xbf16>, vector<1x8xf32> -> vector<1x8xf32>
    %cst_79 = arith.constant 2.500000e-01 : f32
    %228 = vector.broadcast %cst_79 : f32 to vector<1x8xf32>
    %229 = arith.mulf %227, %228 : vector<1x8xf32>
    %cst_80 = arith.constant dense<0xFF800000> : vector<1xf32>
    %230 = vector.multi_reduction <maximumf>, %229, %cst_80 [1] : vector<1x8xf32> to vector<1xf32>
    %231 = vector.shape_cast %230 : vector<1xf32> to vector<1x1xf32>
    %232 = arith.maximumf %224, %231 : vector<1x1xf32>
    %233 = arith.subf %224, %232 : vector<1x1xf32>
    %234 = math.exp %233 : vector<1x1xf32>
    %235 = vector.broadcast %232 : vector<1x1xf32> to vector<1x8xf32>
    %236 = arith.subf %229, %235 : vector<1x8xf32>
    %237 = math.exp %236 : vector<1x8xf32>
    %cst_81 = arith.constant dense<0.000000e+00> : vector<1xf32>
    %238 = vector.multi_reduction <add>, %237, %cst_81 [1] : vector<1x8xf32> to vector<1xf32>
    %239 = vector.shape_cast %238 : vector<1xf32> to vector<1x1xf32>
    %240 = arith.addf %234, %239 : vector<1x1xf32>
    %241 = tpu.reciprocal %240 {approx = true} : vector<1x1xf32> -> vector<1x1xf32>
    %242 = arith.mulf %234, %241 : vector<1x1xf32>
    %243 = vector.broadcast %242 : vector<1x1xf32> to vector<1x16xf32>
    %244 = arith.mulf %243, %213 : vector<1x16xf32>
    %245 = vector.broadcast %241 : vector<1x1xf32> to vector<1x8xf32>
    %246 = arith.mulf %237, %245 : vector<1x8xf32>
    %247 = arith.truncf %246 : vector<1x8xf32> to vector<1x8xbf16>
    %248 = arith.truncf %215 : vector<8x16xf32> to vector<8x16xbf16>
    %cst_82 = arith.constant dense<0.000000e+00> : vector<1x16xf32>
    %249 = tpu.matmul %247, %248, %cst_82 {dimension_numbers = #tpu.dot_dimension_numbers<[1], [0], [0], [1], [0, 0, 1, 1], [], []>} : vector<1x8xbf16>, vector<8x16xbf16>, vector<1x16xf32> -> vector<1x16xf32>
    %250 = arith.addf %244, %249 : vector<1x16xf32>
    %251 = vector.extract_strided_slice %208 {offsets = [0, 16], sizes = [1, 16], strides = [1, 1]} : vector<1x32xf32> to vector<1x16xf32>
    %252 = vector.extract_strided_slice %206 {offsets = [0, 16], sizes = [1, 16], strides = [1, 1]} : vector<1x64xf32> to vector<1x16xf32>
    %253 = vector.extract_strided_slice %206 {offsets = [0, 48], sizes = [1, 16], strides = [1, 1]} : vector<1x64xf32> to vector<1x16xf32>
    %254 = vector.extract_strided_slice %210 {offsets = [0, 16], sizes = [8, 16], strides = [1, 1]} : vector<8x64xf32> to vector<8x16xf32>
    %255 = vector.extract_strided_slice %210 {offsets = [0, 48], sizes = [8, 16], strides = [1, 1]} : vector<8x64xf32> to vector<8x16xf32>
    %256 = arith.truncf %251 : vector<1x16xf32> to vector<1x16xbf16>
    %257 = arith.extf %256 : vector<1x16xbf16> to vector<1x16xf32>
    %258 = arith.truncf %252 : vector<1x16xf32> to vector<1x16xbf16>
    %259 = arith.extf %258 : vector<1x16xbf16> to vector<1x16xf32>
    %260 = arith.mulf %257, %259 : vector<1x16xf32>
    %cst_83 = arith.constant dense<0.000000e+00> : vector<1xf32>
    %261 = vector.multi_reduction <add>, %260, %cst_83 [1] : vector<1x16xf32> to vector<1xf32>
    %262 = vector.shape_cast %261 : vector<1xf32> to vector<1x1xf32>
    %cst_84 = arith.constant 2.500000e-01 : f32
    %263 = vector.broadcast %cst_84 : f32 to vector<1x1xf32>
    %264 = arith.mulf %262, %263 : vector<1x1xf32>
    %265 = arith.truncf %251 : vector<1x16xf32> to vector<1x16xbf16>
    %266 = arith.truncf %254 : vector<8x16xf32> to vector<8x16xbf16>
    %cst_85 = arith.constant dense<0.000000e+00> : vector<1x8xf32>
    %267 = tpu.matmul %265, %266, %cst_85 {dimension_numbers = #tpu.dot_dimension_numbers<[1], [1], [0], [0], [0, 0, 1, 0], [], []>} : vector<1x16xbf16>, vector<8x16xbf16>, vector<1x8xf32> -> vector<1x8xf32>
    %cst_86 = arith.constant 2.500000e-01 : f32
    %268 = vector.broadcast %cst_86 : f32 to vector<1x8xf32>
    %269 = arith.mulf %267, %268 : vector<1x8xf32>
    %cst_87 = arith.constant dense<0xFF800000> : vector<1xf32>
    %270 = vector.multi_reduction <maximumf>, %269, %cst_87 [1] : vector<1x8xf32> to vector<1xf32>
    %271 = vector.shape_cast %270 : vector<1xf32> to vector<1x1xf32>
    %272 = arith.maximumf %264, %271 : vector<1x1xf32>
    %273 = arith.subf %264, %272 : vector<1x1xf32>
    %274 = math.exp %273 : vector<1x1xf32>
    %275 = vector.broadcast %272 : vector<1x1xf32> to vector<1x8xf32>
    %276 = arith.subf %269, %275 : vector<1x8xf32>
    %277 = math.exp %276 : vector<1x8xf32>
    %cst_88 = arith.constant dense<0.000000e+00> : vector<1xf32>
    %278 = vector.multi_reduction <add>, %277, %cst_88 [1] : vector<1x8xf32> to vector<1xf32>
    %279 = vector.shape_cast %278 : vector<1xf32> to vector<1x1xf32>
    %280 = arith.addf %274, %279 : vector<1x1xf32>
    %281 = tpu.reciprocal %280 {approx = true} : vector<1x1xf32> -> vector<1x1xf32>
    %282 = arith.mulf %274, %281 : vector<1x1xf32>
    %283 = vector.broadcast %282 : vector<1x1xf32> to vector<1x16xf32>
    %284 = arith.mulf %283, %253 : vector<1x16xf32>
    %285 = vector.broadcast %281 : vector<1x1xf32> to vector<1x8xf32>
    %286 = arith.mulf %277, %285 : vector<1x8xf32>
    %287 = arith.truncf %286 : vector<1x8xf32> to vector<1x8xbf16>
    %288 = arith.truncf %255 : vector<8x16xf32> to vector<8x16xbf16>
    %cst_89 = arith.constant dense<0.000000e+00> : vector<1x16xf32>
    %289 = tpu.matmul %287, %288, %cst_89 {dimension_numbers = #tpu.dot_dimension_numbers<[1], [0], [0], [1], [0, 0, 1, 1], [], []>} : vector<1x8xbf16>, vector<8x16xbf16>, vector<1x16xf32> -> vector<1x16xf32>
    %290 = arith.addf %284, %289 : vector<1x16xf32>
    %291 = tpu.concatenate %250, %290 in 1 : vector<1x16xf32>, vector<1x16xf32> -> vector<1x32xf32>
    %292 = arith.truncf %291 : vector<1x32xf32> to vector<1x32xbf16>
    %cst_90 = arith.constant dense<0.000000e+00> : vector<1x32xf32>
    %293 = tpu.matmul %292, %6, %cst_90 {dimension_numbers = #tpu.dot_dimension_numbers<[1], [0], [0], [1], [0, 0, 1, 1], [], []>} : vector<1x32xbf16>, vector<32x32xbf16>, vector<1x32xf32> -> vector<1x32xf32>
    %294 = arith.addf %293, %7 : vector<1x32xf32>
    %295 = arith.addf %162, %294 : vector<1x32xf32>
    %296 = arith.truncf %295 : vector<1x32xf32> to vector<1x32xbf16>
    %cst_91 = arith.constant dense<0.000000e+00> : vector<1x64xf32>
    %297 = tpu.matmul %296, %8, %cst_91 {dimension_numbers = #tpu.dot_dimension_numbers<[1], [0], [0], [1], [0, 0, 1, 1], [], []>} : vector<1x32xbf16>, vector<32x64xbf16>, vector<1x64xf32> -> vector<1x64xf32>
    %298 = arith.addf %297, %9 : vector<1x64xf32>
    %c1_92 = arith.constant 1 : index
    %c0_93 = arith.constant 0 : index
    %c0_94 = arith.constant 0 : index
    %299 = vector.load %arg13[%c1_92, %c0_93, %c0_94] : memref<2x1x64xf32, #tpu.memory_space<vmem>>, vector<1x1x64xf32>
    %300 = vector.shape_cast %299 : vector<1x1x64xf32> to vector<1x64xf32>
    %301 = vector.shape_cast %298 : vector<1x64xf32> to vector<1x1x64xf32>
    tpu.vector_store %arg13[%c1_92, %c0_93, %c0_94], %301 {strides = array<i32>} : memref<2x1x64xf32, #tpu.memory_space<vmem>>, vector<1x1x64xf32>,
    return
  }
  func.func @transform_0(%arg0: i32) -> (i32, i32, i32) {
    %c0_i32 = arith.constant 0 : i32
    %c0_i32_0 = arith.constant 0 : i32
    %c0_i32_1 = arith.constant 0 : i32
    return %arg0, %c0_i32, %c0_i32_0 : i32, i32, i32
  }
  func.func @transform_1(%arg0: i32) -> (i32, i32, i32) {
    %c0_i32 = arith.constant 0 : i32
    %c0_i32_0 = arith.constant 0 : i32
    %c0_i32_1 = arith.constant 0 : i32
    return %arg0, %c0_i32, %c0_i32_0 : i32, i32, i32
  }
  func.func @transform_2(%arg0: i32) -> (i32, i32) {
    %c0_i32 = arith.constant 0 : i32
    %c0_i32_0 = arith.constant 0 : i32
    %c0_i32_1 = arith.constant 0 : i32
    return %c0_i32, %c0_i32_0 : i32, i32
  }
  func.func @transform_3(%arg0: i32) -> (i32, i32) {
    %c0_i32 = arith.constant 0 : i32
    %c0_i32_0 = arith.constant 0 : i32
    %c0_i32_1 = arith.constant 0 : i32
    return %c0_i32, %c0_i32_0 : i32, i32
  }
  func.func @transform_4(%arg0: i32) -> (i32, i32) {
    %c0_i32 = arith.constant 0 : i32
    %c0_i32_0 = arith.constant 0 : i32
    %c0_i32_1 = arith.constant 0 : i32
    return %c0_i32, %c0_i32_0 : i32, i32
  }
  func.func @transform_5(%arg0: i32) -> (i32, i32) {
    %c0_i32 = arith.constant 0 : i32
    %c0_i32_0 = arith.constant 0 : i32
    %c0_i32_1 = arith.constant 0 : i32
    return %c0_i32, %c0_i32_0 : i32, i32
  }
  func.func @transform_6(%arg0: i32) -> (i32, i32) {
    %c0_i32 = arith.constant 0 : i32
    %c0_i32_0 = arith.constant 0 : i32
    %c0_i32_1 = arith.constant 0 : i32
    return %c0_i32, %c0_i32_0 : i32, i32
  }
  func.func @transform_7(%arg0: i32) -> (i32, i32) {
    %c0_i32 = arith.constant 0 : i32
    %c0_i32_0 = arith.constant 0 : i32
    %c0_i32_1 = arith.constant 0 : i32
    return %c0_i32, %c0_i32_0 : i32, i32
  }
  func.func @transform_8(%arg0: i32) -> (i32, i32) {
    %c0_i32 = arith.constant 0 : i32
    %c0_i32_0 = arith.constant 0 : i32
    %c0_i32_1 = arith.constant 0 : i32
    return %c0_i32, %c0_i32_0 : i32, i32
  }
  func.func @transform_9(%arg0: i32) -> (i32, i32) {
    %c0_i32 = arith.constant 0 : i32
    %c0_i32_0 = arith.constant 0 : i32
    %c0_i32_1 = arith.constant 0 : i32
    return %c0_i32, %c0_i32_0 : i32, i32
  }
  func.func @transform_10(%arg0: i32) -> (i32, i32) {
    %c0_i32 = arith.constant 0 : i32
    %c0_i32_0 = arith.constant 0 : i32
    %c0_i32_1 = arith.constant 0 : i32
    return %c0_i32, %c0_i32_0 : i32, i32
  }
  func.func @transform_11(%arg0: i32) -> (i32, i32) {
    %c0_i32 = arith.constant 0 : i32
    %c0_i32_0 = arith.constant 0 : i32
    %c0_i32_1 = arith.constant 0 : i32
    return %c0_i32, %c0_i32_0 : i32, i32
  }
  func.func @transform_12(%arg0: i32) -> (i32, i32, i32) {
    %c0_i32 = arith.constant 0 : i32
    %c0_i32_0 = arith.constant 0 : i32
    %c0_i32_1 = arith.constant 0 : i32
    return %arg0, %c0_i32, %c0_i32_0 : i32, i32, i32
  }
}

module attributes {stable_mosaic.version = 11 : i64} {
  func.func @_cross_attn_kernel(%arg0: i32, %arg1: memref<2x1x32xf32, #tpu.memory_space<vmem>>, %arg2: memref<2x4x64xf32, #tpu.memory_space<vmem>>, %arg3: memref<32x64xbf16, #tpu.memory_space<vmem>>, %arg4: memref<1x64xf32, #tpu.memory_space<vmem>>, %arg5: memref<1x64xf32, #tpu.memory_space<vmem>>, %arg6: memref<1x64xf32, #tpu.memory_space<vmem>>, %arg7: memref<64x128xbf16, #tpu.memory_space<vmem>>, %arg8: memref<64x64xbf16, #tpu.memory_space<vmem>>, %arg9: memref<64x64xbf16, #tpu.memory_space<vmem>>, %arg10: memref<1x64xf32, #tpu.memory_space<vmem>>, %arg11: memref<64x32xbf16, #tpu.memory_space<vmem>>, %arg12: memref<1x32xf32, #tpu.memory_space<vmem>>, %arg13: memref<2x1x32xf32, #tpu.memory_space<vmem>>) attributes {dimension_semantics = [#tpu.dimension_semantics<parallel>], iteration_bounds = array<i64: 1>, scalar_prefetch = 0 : i64, scratch_operands = 0 : i64, tpu.core_type = #tpu.core_type<tc>, window_params = [{transform_indices = @transform_0, window_bounds = array<i64: 2, 1, 32>}, {transform_indices = @transform_1, window_bounds = array<i64: 2, 4, 64>}, {pipeline_mode = #tpu.pipeline_mode<synchronous>, transform_indices = @transform_2, window_bounds = array<i64: 32, 64>}, {pipeline_mode = #tpu.pipeline_mode<synchronous>, transform_indices = @transform_3, window_bounds = array<i64: 1, 64>}, {pipeline_mode = #tpu.pipeline_mode<synchronous>, transform_indices = @transform_4, window_bounds = array<i64: 1, 64>}, {pipeline_mode = #tpu.pipeline_mode<synchronous>, transform_indices = @transform_5, window_bounds = array<i64: 1, 64>}, {pipeline_mode = #tpu.pipeline_mode<synchronous>, transform_indices = @transform_6, window_bounds = array<i64: 64, 128>}, {pipeline_mode = #tpu.pipeline_mode<synchronous>, transform_indices = @transform_7, window_bounds = array<i64: 64, 64>}, {pipeline_mode = #tpu.pipeline_mode<synchronous>, transform_indices = @transform_8, window_bounds = array<i64: 64, 64>}, {pipeline_mode = #tpu.pipeline_mode<synchronous>, transform_indices = @transform_9, window_bounds = array<i64: 1, 64>}, {pipeline_mode = #tpu.pipeline_mode<synchronous>, transform_indices = @transform_10, window_bounds = array<i64: 64, 32>}, {pipeline_mode = #tpu.pipeline_mode<synchronous>, transform_indices = @transform_11, window_bounds = array<i64: 1, 32>}, {transform_indices = @transform_12, window_bounds = array<i64: 2, 1, 32>}]} {
    %c0 = arith.constant 0 : index
    %c0_0 = arith.constant 0 : index
    %0 = vector.load %arg5[%c0, %c0_0] : memref<1x64xf32, #tpu.memory_space<vmem>>, vector<1x64xf32>
    %c0_1 = arith.constant 0 : index
    %c0_2 = arith.constant 0 : index
    %1 = vector.load %arg6[%c0_1, %c0_2] : memref<1x64xf32, #tpu.memory_space<vmem>>, vector<1x64xf32>
    %c0_3 = arith.constant 0 : index
    %c0_4 = arith.constant 0 : index
    %2 = vector.load %arg3[%c0_3, %c0_4] : memref<32x64xbf16, #tpu.memory_space<vmem>>, vector<32x64xbf16>
    %c0_5 = arith.constant 0 : index
    %c0_6 = arith.constant 0 : index
    %3 = vector.load %arg4[%c0_5, %c0_6] : memref<1x64xf32, #tpu.memory_space<vmem>>, vector<1x64xf32>
    %c0_7 = arith.constant 0 : index
    %c0_8 = arith.constant 0 : index
    %4 = vector.load %arg7[%c0_7, %c0_8] : memref<64x128xbf16, #tpu.memory_space<vmem>>, vector<64x128xbf16>
    %c0_9 = arith.constant 0 : index
    %c0_10 = arith.constant 0 : index
    %5 = vector.load %arg8[%c0_9, %c0_10] : memref<64x64xbf16, #tpu.memory_space<vmem>>, vector<64x64xbf16>
    %c0_11 = arith.constant 0 : index
    %c0_12 = arith.constant 0 : index
    %6 = vector.load %arg9[%c0_11, %c0_12] : memref<64x64xbf16, #tpu.memory_space<vmem>>, vector<64x64xbf16>
    %c0_13 = arith.constant 0 : index
    %c0_14 = arith.constant 0 : index
    %7 = vector.load %arg10[%c0_13, %c0_14] : memref<1x64xf32, #tpu.memory_space<vmem>>, vector<1x64xf32>
    %c0_15 = arith.constant 0 : index
    %c0_16 = arith.constant 0 : index
    %8 = vector.load %arg11[%c0_15, %c0_16] : memref<64x32xbf16, #tpu.memory_space<vmem>>, vector<64x32xbf16>
    %c0_17 = arith.constant 0 : index
    %c0_18 = arith.constant 0 : index
    %9 = vector.load %arg12[%c0_17, %c0_18] : memref<1x32xf32, #tpu.memory_space<vmem>>, vector<1x32xf32>
    %c0_19 = arith.constant 0 : index
    %c0_20 = arith.constant 0 : index
    %c0_21 = arith.constant 0 : index
    %10 = vector.load %arg1[%c0_19, %c0_20, %c0_21] : memref<2x1x32xf32, #tpu.memory_space<vmem>>, vector<1x1x32xf32>
    %11 = vector.shape_cast %10 : vector<1x1x32xf32> to vector<1x32xf32>
    %c0_22 = arith.constant 0 : index
    %c0_23 = arith.constant 0 : index
    %c0_24 = arith.constant 0 : index
    %12 = vector.load %arg2[%c0_22, %c0_23, %c0_24] : memref<2x4x64xf32, #tpu.memory_space<vmem>>, vector<1x4x64xf32>
    %13 = vector.shape_cast %12 : vector<1x4x64xf32> to vector<4x64xf32>
    %14 = arith.truncf %11 : vector<1x32xf32> to vector<1x32xbf16>
    %cst = arith.constant dense<0.000000e+00> : vector<1x64xf32>
    %15 = tpu.matmul %14, %2, %cst {dimension_numbers = #tpu.dot_dimension_numbers<[1], [0], [0], [1], [0, 0, 1, 1], [], []>} : vector<1x32xbf16>, vector<32x64xbf16>, vector<1x64xf32> -> vector<1x64xf32>
    %16 = arith.addf %15, %3 : vector<1x64xf32>
    %cst_25 = arith.constant dense<0.000000e+00> : vector<1xf32>
    %17 = vector.multi_reduction <add>, %16, %cst_25 [1] : vector<1x64xf32> to vector<1xf32>
    %18 = vector.shape_cast %17 : vector<1xf32> to vector<1x1xf32>
    %cst_26 = arith.constant 6.400000e+01 : f32
    %19 = vector.broadcast %cst_26 : f32 to vector<1x1xf32>
    %20 = arith.divf %18, %19 : vector<1x1xf32>
    %21 = vector.broadcast %20 : vector<1x1xf32> to vector<1x64xf32>
    %22 = arith.subf %16, %21 : vector<1x64xf32>
    %23 = arith.mulf %22, %22 : vector<1x64xf32>
    %cst_27 = arith.constant dense<0.000000e+00> : vector<1xf32>
    %24 = vector.multi_reduction <add>, %23, %cst_27 [1] : vector<1x64xf32> to vector<1xf32>
    %25 = vector.shape_cast %24 : vector<1xf32> to vector<1x1xf32>
    %cst_28 = arith.constant 6.400000e+01 : f32
    %26 = vector.broadcast %cst_28 : f32 to vector<1x1xf32>
    %27 = arith.divf %25, %26 : vector<1x1xf32>
    %28 = vector.broadcast %20 : vector<1x1xf32> to vector<1x64xf32>
    %29 = arith.subf %16, %28 : vector<1x64xf32>
    %cst_29 = arith.constant 9.99999974E-6 : f32
    %30 = vector.broadcast %cst_29 : f32 to vector<1x1xf32>
    %31 = arith.addf %27, %30 : vector<1x1xf32>
    %32 = math.rsqrt %31 : vector<1x1xf32>
    %33 = vector.broadcast %32 : vector<1x1xf32> to vector<1x64xf32>
    %34 = arith.mulf %29, %33 : vector<1x64xf32>
    %35 = arith.mulf %34, %0 : vector<1x64xf32>
    %36 = arith.addf %35, %1 : vector<1x64xf32>
    %cst_30 = arith.constant dense<0.000000e+00> : vector<4xf32>
    %37 = vector.multi_reduction <add>, %13, %cst_30 [1] : vector<4x64xf32> to vector<4xf32>
    %38 = vector.shape_cast %37 : vector<4xf32> to vector<4x1xf32>
    %cst_31 = arith.constant 6.400000e+01 : f32
    %39 = vector.broadcast %cst_31 : f32 to vector<4x1xf32>
    %40 = arith.divf %38, %39 : vector<4x1xf32>
    %41 = vector.broadcast %40 : vector<4x1xf32> to vector<4x64xf32>
    %42 = arith.subf %13, %41 : vector<4x64xf32>
    %43 = arith.mulf %42, %42 : vector<4x64xf32>
    %cst_32 = arith.constant dense<0.000000e+00> : vector<4xf32>
    %44 = vector.multi_reduction <add>, %43, %cst_32 [1] : vector<4x64xf32> to vector<4xf32>
    %45 = vector.shape_cast %44 : vector<4xf32> to vector<4x1xf32>
    %cst_33 = arith.constant 6.400000e+01 : f32
    %46 = vector.broadcast %cst_33 : f32 to vector<4x1xf32>
    %47 = arith.divf %45, %46 : vector<4x1xf32>
    %48 = vector.broadcast %40 : vector<4x1xf32> to vector<4x64xf32>
    %49 = arith.subf %13, %48 : vector<4x64xf32>
    %cst_34 = arith.constant 9.99999974E-6 : f32
    %50 = vector.broadcast %cst_34 : f32 to vector<4x1xf32>
    %51 = arith.addf %47, %50 : vector<4x1xf32>
    %52 = math.rsqrt %51 : vector<4x1xf32>
    %53 = vector.broadcast %52 : vector<4x1xf32> to vector<4x64xf32>
    %54 = arith.mulf %49, %53 : vector<4x64xf32>
    %55 = vector.broadcast %0 : vector<1x64xf32> to vector<4x64xf32>
    %56 = arith.mulf %54, %55 : vector<4x64xf32>
    %57 = vector.broadcast %1 : vector<1x64xf32> to vector<4x64xf32>
    %58 = arith.addf %56, %57 : vector<4x64xf32>
    %59 = arith.truncf %36 : vector<1x64xf32> to vector<1x64xbf16>
    %cst_35 = arith.constant dense<0.000000e+00> : vector<1x128xf32>
    %60 = tpu.matmul %59, %4, %cst_35 {dimension_numbers = #tpu.dot_dimension_numbers<[1], [0], [0], [1], [0, 0, 1, 1], [], []>} : vector<1x64xbf16>, vector<64x128xbf16>, vector<1x128xf32> -> vector<1x128xf32>
    %61 = arith.truncf %36 : vector<1x64xf32> to vector<1x64xbf16>
    %cst_36 = arith.constant dense<0.000000e+00> : vector<1x64xf32>
    %62 = tpu.matmul %61, %5, %cst_36 {dimension_numbers = #tpu.dot_dimension_numbers<[1], [0], [0], [1], [0, 0, 1, 1], [], []>} : vector<1x64xbf16>, vector<64x64xbf16>, vector<1x64xf32> -> vector<1x64xf32>
    %63 = arith.truncf %58 : vector<4x64xf32> to vector<4x64xbf16>
    %cst_37 = arith.constant dense<0.000000e+00> : vector<4x128xf32>
    %64 = tpu.matmul %63, %4, %cst_37 {dimension_numbers = #tpu.dot_dimension_numbers<[1], [0], [0], [1], [0, 0, 1, 1], [], []>} : vector<4x64xbf16>, vector<64x128xbf16>, vector<4x128xf32> -> vector<4x128xf32>
    %65 = vector.extract_strided_slice %62 {offsets = [0, 0], sizes = [1, 32], strides = [1, 1]} : vector<1x64xf32> to vector<1x32xf32>
    %66 = vector.extract_strided_slice %60 {offsets = [0, 0], sizes = [1, 32], strides = [1, 1]} : vector<1x128xf32> to vector<1x32xf32>
    %67 = vector.extract_strided_slice %60 {offsets = [0, 64], sizes = [1, 32], strides = [1, 1]} : vector<1x128xf32> to vector<1x32xf32>
    %68 = vector.extract_strided_slice %64 {offsets = [0, 0], sizes = [4, 32], strides = [1, 1]} : vector<4x128xf32> to vector<4x32xf32>
    %69 = vector.extract_strided_slice %64 {offsets = [0, 64], sizes = [4, 32], strides = [1, 1]} : vector<4x128xf32> to vector<4x32xf32>
    %70 = arith.truncf %65 : vector<1x32xf32> to vector<1x32xbf16>
    %71 = arith.extf %70 : vector<1x32xbf16> to vector<1x32xf32>
    %72 = arith.truncf %66 : vector<1x32xf32> to vector<1x32xbf16>
    %73 = arith.extf %72 : vector<1x32xbf16> to vector<1x32xf32>
    %74 = arith.mulf %71, %73 : vector<1x32xf32>
    %cst_38 = arith.constant dense<0.000000e+00> : vector<1xf32>
    %75 = vector.multi_reduction <add>, %74, %cst_38 [1] : vector<1x32xf32> to vector<1xf32>
    %76 = vector.shape_cast %75 : vector<1xf32> to vector<1x1xf32>
    %cst_39 = arith.constant 0.176776692 : f32
    %77 = vector.broadcast %cst_39 : f32 to vector<1x1xf32>
    %78 = arith.mulf %76, %77 : vector<1x1xf32>
    %79 = arith.truncf %65 : vector<1x32xf32> to vector<1x32xbf16>
    %80 = arith.truncf %68 : vector<4x32xf32> to vector<4x32xbf16>
    %cst_40 = arith.constant dense<0.000000e+00> : vector<1x4xf32>
    %81 = tpu.matmul %79, %80, %cst_40 {dimension_numbers = #tpu.dot_dimension_numbers<[1], [1], [0], [0], [0, 0, 1, 0], [], []>} : vector<1x32xbf16>, vector<4x32xbf16>, vector<1x4xf32> -> vector<1x4xf32>
    %cst_41 = arith.constant 0.176776692 : f32
    %82 = vector.broadcast %cst_41 : f32 to vector<1x4xf32>
    %83 = arith.mulf %81, %82 : vector<1x4xf32>
    %cst_42 = arith.constant dense<0xFF800000> : vector<1xf32>
    %84 = vector.multi_reduction <maximumf>, %83, %cst_42 [1] : vector<1x4xf32> to vector<1xf32>
    %85 = vector.shape_cast %84 : vector<1xf32> to vector<1x1xf32>
    %86 = arith.maximumf %78, %85 : vector<1x1xf32>
    %87 = arith.subf %78, %86 : vector<1x1xf32>
    %88 = math.exp %87 : vector<1x1xf32>
    %89 = vector.broadcast %86 : vector<1x1xf32> to vector<1x4xf32>
    %90 = arith.subf %83, %89 : vector<1x4xf32>
    %91 = math.exp %90 : vector<1x4xf32>
    %cst_43 = arith.constant dense<0.000000e+00> : vector<1xf32>
    %92 = vector.multi_reduction <add>, %91, %cst_43 [1] : vector<1x4xf32> to vector<1xf32>
    %93 = vector.shape_cast %92 : vector<1xf32> to vector<1x1xf32>
    %94 = arith.addf %88, %93 : vector<1x1xf32>
    %95 = tpu.reciprocal %94 {approx = true} : vector<1x1xf32> -> vector<1x1xf32>
    %96 = arith.mulf %88, %95 : vector<1x1xf32>
    %97 = vector.broadcast %96 : vector<1x1xf32> to vector<1x32xf32>
    %98 = arith.mulf %97, %67 : vector<1x32xf32>
    %99 = vector.broadcast %95 : vector<1x1xf32> to vector<1x4xf32>
    %100 = arith.mulf %91, %99 : vector<1x4xf32>
    %101 = arith.truncf %100 : vector<1x4xf32> to vector<1x4xbf16>
    %102 = arith.truncf %69 : vector<4x32xf32> to vector<4x32xbf16>
    %cst_44 = arith.constant dense<0.000000e+00> : vector<1x32xf32>
    %103 = tpu.matmul %101, %102, %cst_44 {dimension_numbers = #tpu.dot_dimension_numbers<[1], [0], [0], [1], [0, 0, 1, 1], [], []>} : vector<1x4xbf16>, vector<4x32xbf16>, vector<1x32xf32> -> vector<1x32xf32>
    %104 = arith.addf %98, %103 : vector<1x32xf32>
    %105 = vector.extract_strided_slice %62 {offsets = [0, 32], sizes = [1, 32], strides = [1, 1]} : vector<1x64xf32> to vector<1x32xf32>
    %106 = vector.extract_strided_slice %60 {offsets = [0, 32], sizes = [1, 32], strides = [1, 1]} : vector<1x128xf32> to vector<1x32xf32>
    %107 = vector.extract_strided_slice %60 {offsets = [0, 96], sizes = [1, 32], strides = [1, 1]} : vector<1x128xf32> to vector<1x32xf32>
    %108 = vector.extract_strided_slice %64 {offsets = [0, 32], sizes = [4, 32], strides = [1, 1]} : vector<4x128xf32> to vector<4x32xf32>
    %109 = vector.extract_strided_slice %64 {offsets = [0, 96], sizes = [4, 32], strides = [1, 1]} : vector<4x128xf32> to vector<4x32xf32>
    %110 = arith.truncf %105 : vector<1x32xf32> to vector<1x32xbf16>
    %111 = arith.extf %110 : vector<1x32xbf16> to vector<1x32xf32>
    %112 = arith.truncf %106 : vector<1x32xf32> to vector<1x32xbf16>
    %113 = arith.extf %112 : vector<1x32xbf16> to vector<1x32xf32>
    %114 = arith.mulf %111, %113 : vector<1x32xf32>
    %cst_45 = arith.constant dense<0.000000e+00> : vector<1xf32>
    %115 = vector.multi_reduction <add>, %114, %cst_45 [1] : vector<1x32xf32> to vector<1xf32>
    %116 = vector.shape_cast %115 : vector<1xf32> to vector<1x1xf32>
    %cst_46 = arith.constant 0.176776692 : f32
    %117 = vector.broadcast %cst_46 : f32 to vector<1x1xf32>
    %118 = arith.mulf %116, %117 : vector<1x1xf32>
    %119 = arith.truncf %105 : vector<1x32xf32> to vector<1x32xbf16>
    %120 = arith.truncf %108 : vector<4x32xf32> to vector<4x32xbf16>
    %cst_47 = arith.constant dense<0.000000e+00> : vector<1x4xf32>
    %121 = tpu.matmul %119, %120, %cst_47 {dimension_numbers = #tpu.dot_dimension_numbers<[1], [1], [0], [0], [0, 0, 1, 0], [], []>} : vector<1x32xbf16>, vector<4x32xbf16>, vector<1x4xf32> -> vector<1x4xf32>
    %cst_48 = arith.constant 0.176776692 : f32
    %122 = vector.broadcast %cst_48 : f32 to vector<1x4xf32>
    %123 = arith.mulf %121, %122 : vector<1x4xf32>
    %cst_49 = arith.constant dense<0xFF800000> : vector<1xf32>
    %124 = vector.multi_reduction <maximumf>, %123, %cst_49 [1] : vector<1x4xf32> to vector<1xf32>
    %125 = vector.shape_cast %124 : vector<1xf32> to vector<1x1xf32>
    %126 = arith.maximumf %118, %125 : vector<1x1xf32>
    %127 = arith.subf %118, %126 : vector<1x1xf32>
    %128 = math.exp %127 : vector<1x1xf32>
    %129 = vector.broadcast %126 : vector<1x1xf32> to vector<1x4xf32>
    %130 = arith.subf %123, %129 : vector<1x4xf32>
    %131 = math.exp %130 : vector<1x4xf32>
    %cst_50 = arith.constant dense<0.000000e+00> : vector<1xf32>
    %132 = vector.multi_reduction <add>, %131, %cst_50 [1] : vector<1x4xf32> to vector<1xf32>
    %133 = vector.shape_cast %132 : vector<1xf32> to vector<1x1xf32>
    %134 = arith.addf %128, %133 : vector<1x1xf32>
    %135 = tpu.reciprocal %134 {approx = true} : vector<1x1xf32> -> vector<1x1xf32>
    %136 = arith.mulf %128, %135 : vector<1x1xf32>
    %137 = vector.broadcast %136 : vector<1x1xf32> to vector<1x32xf32>
    %138 = arith.mulf %137, %107 : vector<1x32xf32>
    %139 = vector.broadcast %135 : vector<1x1xf32> to vector<1x4xf32>
    %140 = arith.mulf %131, %139 : vector<1x4xf32>
    %141 = arith.truncf %140 : vector<1x4xf32> to vector<1x4xbf16>
    %142 = arith.truncf %109 : vector<4x32xf32> to vector<4x32xbf16>
    %cst_51 = arith.constant dense<0.000000e+00> : vector<1x32xf32>
    %143 = tpu.matmul %141, %142, %cst_51 {dimension_numbers = #tpu.dot_dimension_numbers<[1], [0], [0], [1], [0, 0, 1, 1], [], []>} : vector<1x4xbf16>, vector<4x32xbf16>, vector<1x32xf32> -> vector<1x32xf32>
    %144 = arith.addf %138, %143 : vector<1x32xf32>
    %145 = tpu.concatenate %104, %144 in 1 : vector<1x32xf32>, vector<1x32xf32> -> vector<1x64xf32>
    %146 = arith.truncf %145 : vector<1x64xf32> to vector<1x64xbf16>
    %cst_52 = arith.constant dense<0.000000e+00> : vector<1x64xf32>
    %147 = tpu.matmul %146, %6, %cst_52 {dimension_numbers = #tpu.dot_dimension_numbers<[1], [0], [0], [1], [0, 0, 1, 1], [], []>} : vector<1x64xbf16>, vector<64x64xbf16>, vector<1x64xf32> -> vector<1x64xf32>
    %148 = arith.addf %147, %7 : vector<1x64xf32>
    %149 = arith.addf %16, %148 : vector<1x64xf32>
    %150 = arith.truncf %149 : vector<1x64xf32> to vector<1x64xbf16>
    %cst_53 = arith.constant dense<0.000000e+00> : vector<1x32xf32>
    %151 = tpu.matmul %150, %8, %cst_53 {dimension_numbers = #tpu.dot_dimension_numbers<[1], [0], [0], [1], [0, 0, 1, 1], [], []>} : vector<1x64xbf16>, vector<64x32xbf16>, vector<1x32xf32> -> vector<1x32xf32>
    %152 = arith.addf %151, %9 : vector<1x32xf32>
    %c0_54 = arith.constant 0 : index
    %c0_55 = arith.constant 0 : index
    %c0_56 = arith.constant 0 : index
    %153 = vector.load %arg13[%c0_54, %c0_55, %c0_56] : memref<2x1x32xf32, #tpu.memory_space<vmem>>, vector<1x1x32xf32>
    %154 = vector.shape_cast %153 : vector<1x1x32xf32> to vector<1x32xf32>
    %155 = vector.shape_cast %152 : vector<1x32xf32> to vector<1x1x32xf32>
    tpu.vector_store %arg13[%c0_54, %c0_55, %c0_56], %155 {strides = array<i32>} : memref<2x1x32xf32, #tpu.memory_space<vmem>>, vector<1x1x32xf32>,
    %c1 = arith.constant 1 : index
    %c0_57 = arith.constant 0 : index
    %c0_58 = arith.constant 0 : index
    %156 = vector.load %arg1[%c1, %c0_57, %c0_58] : memref<2x1x32xf32, #tpu.memory_space<vmem>>, vector<1x1x32xf32>
    %157 = vector.shape_cast %156 : vector<1x1x32xf32> to vector<1x32xf32>
    %c1_59 = arith.constant 1 : index
    %c0_60 = arith.constant 0 : index
    %c0_61 = arith.constant 0 : index
    %158 = vector.load %arg2[%c1_59, %c0_60, %c0_61] : memref<2x4x64xf32, #tpu.memory_space<vmem>>, vector<1x4x64xf32>
    %159 = vector.shape_cast %158 : vector<1x4x64xf32> to vector<4x64xf32>
    %160 = arith.truncf %157 : vector<1x32xf32> to vector<1x32xbf16>
    %cst_62 = arith.constant dense<0.000000e+00> : vector<1x64xf32>
    %161 = tpu.matmul %160, %2, %cst_62 {dimension_numbers = #tpu.dot_dimension_numbers<[1], [0], [0], [1], [0, 0, 1, 1], [], []>} : vector<1x32xbf16>, vector<32x64xbf16>, vector<1x64xf32> -> vector<1x64xf32>
    %162 = arith.addf %161, %3 : vector<1x64xf32>
    %cst_63 = arith.constant dense<0.000000e+00> : vector<1xf32>
    %163 = vector.multi_reduction <add>, %162, %cst_63 [1] : vector<1x64xf32> to vector<1xf32>
    %164 = vector.shape_cast %163 : vector<1xf32> to vector<1x1xf32>
    %cst_64 = arith.constant 6.400000e+01 : f32
    %165 = vector.broadcast %cst_64 : f32 to vector<1x1xf32>
    %166 = arith.divf %164, %165 : vector<1x1xf32>
    %167 = vector.broadcast %166 : vector<1x1xf32> to vector<1x64xf32>
    %168 = arith.subf %162, %167 : vector<1x64xf32>
    %169 = arith.mulf %168, %168 : vector<1x64xf32>
    %cst_65 = arith.constant dense<0.000000e+00> : vector<1xf32>
    %170 = vector.multi_reduction <add>, %169, %cst_65 [1] : vector<1x64xf32> to vector<1xf32>
    %171 = vector.shape_cast %170 : vector<1xf32> to vector<1x1xf32>
    %cst_66 = arith.constant 6.400000e+01 : f32
    %172 = vector.broadcast %cst_66 : f32 to vector<1x1xf32>
    %173 = arith.divf %171, %172 : vector<1x1xf32>
    %174 = vector.broadcast %166 : vector<1x1xf32> to vector<1x64xf32>
    %175 = arith.subf %162, %174 : vector<1x64xf32>
    %cst_67 = arith.constant 9.99999974E-6 : f32
    %176 = vector.broadcast %cst_67 : f32 to vector<1x1xf32>
    %177 = arith.addf %173, %176 : vector<1x1xf32>
    %178 = math.rsqrt %177 : vector<1x1xf32>
    %179 = vector.broadcast %178 : vector<1x1xf32> to vector<1x64xf32>
    %180 = arith.mulf %175, %179 : vector<1x64xf32>
    %181 = arith.mulf %180, %0 : vector<1x64xf32>
    %182 = arith.addf %181, %1 : vector<1x64xf32>
    %cst_68 = arith.constant dense<0.000000e+00> : vector<4xf32>
    %183 = vector.multi_reduction <add>, %159, %cst_68 [1] : vector<4x64xf32> to vector<4xf32>
    %184 = vector.shape_cast %183 : vector<4xf32> to vector<4x1xf32>
    %cst_69 = arith.constant 6.400000e+01 : f32
    %185 = vector.broadcast %cst_69 : f32 to vector<4x1xf32>
    %186 = arith.divf %184, %185 : vector<4x1xf32>
    %187 = vector.broadcast %186 : vector<4x1xf32> to vector<4x64xf32>
    %188 = arith.subf %159, %187 : vector<4x64xf32>
    %189 = arith.mulf %188, %188 : vector<4x64xf32>
    %cst_70 = arith.constant dense<0.000000e+00> : vector<4xf32>
    %190 = vector.multi_reduction <add>, %189, %cst_70 [1] : vector<4x64xf32> to vector<4xf32>
    %191 = vector.shape_cast %190 : vector<4xf32> to vector<4x1xf32>
    %cst_71 = arith.constant 6.400000e+01 : f32
    %192 = vector.broadcast %cst_71 : f32 to vector<4x1xf32>
    %193 = arith.divf %191, %192 : vector<4x1xf32>
    %194 = vector.broadcast %186 : vector<4x1xf32> to vector<4x64xf32>
    %195 = arith.subf %159, %194 : vector<4x64xf32>
    %cst_72 = arith.constant 9.99999974E-6 : f32
    %196 = vector.broadcast %cst_72 : f32 to vector<4x1xf32>
    %197 = arith.addf %193, %196 : vector<4x1xf32>
    %198 = math.rsqrt %197 : vector<4x1xf32>
    %199 = vector.broadcast %198 : vector<4x1xf32> to vector<4x64xf32>
    %200 = arith.mulf %195, %199 : vector<4x64xf32>
    %201 = vector.broadcast %0 : vector<1x64xf32> to vector<4x64xf32>
    %202 = arith.mulf %200, %201 : vector<4x64xf32>
    %203 = vector.broadcast %1 : vector<1x64xf32> to vector<4x64xf32>
    %204 = arith.addf %202, %203 : vector<4x64xf32>
    %205 = arith.truncf %182 : vector<1x64xf32> to vector<1x64xbf16>
    %cst_73 = arith.constant dense<0.000000e+00> : vector<1x128xf32>
    %206 = tpu.matmul %205, %4, %cst_73 {dimension_numbers = #tpu.dot_dimension_numbers<[1], [0], [0], [1], [0, 0, 1, 1], [], []>} : vector<1x64xbf16>, vector<64x128xbf16>, vector<1x128xf32> -> vector<1x128xf32>
    %207 = arith.truncf %182 : vector<1x64xf32> to vector<1x64xbf16>
    %cst_74 = arith.constant dense<0.000000e+00> : vector<1x64xf32>
    %208 = tpu.matmul %207, %5, %cst_74 {dimension_numbers = #tpu.dot_dimension_numbers<[1], [0], [0], [1], [0, 0, 1, 1], [], []>} : vector<1x64xbf16>, vector<64x64xbf16>, vector<1x64xf32> -> vector<1x64xf32>
    %209 = arith.truncf %204 : vector<4x64xf32> to vector<4x64xbf16>
    %cst_75 = arith.constant dense<0.000000e+00> : vector<4x128xf32>
    %210 = tpu.matmul %209, %4, %cst_75 {dimension_numbers = #tpu.dot_dimension_numbers<[1], [0], [0], [1], [0, 0, 1, 1], [], []>} : vector<4x64xbf16>, vector<64x128xbf16>, vector<4x128xf32> -> vector<4x128xf32>
    %211 = vector.extract_strided_slice %208 {offsets = [0, 0], sizes = [1, 32], strides = [1, 1]} : vector<1x64xf32> to vector<1x32xf32>
    %212 = vector.extract_strided_slice %206 {offsets = [0, 0], sizes = [1, 32], strides = [1, 1]} : vector<1x128xf32> to vector<1x32xf32>
    %213 = vector.extract_strided_slice %206 {offsets = [0, 64], sizes = [1, 32], strides = [1, 1]} : vector<1x128xf32> to vector<1x32xf32>
    %214 = vector.extract_strided_slice %210 {offsets = [0, 0], sizes = [4, 32], strides = [1, 1]} : vector<4x128xf32> to vector<4x32xf32>
    %215 = vector.extract_strided_slice %210 {offsets = [0, 64], sizes = [4, 32], strides = [1, 1]} : vector<4x128xf32> to vector<4x32xf32>
    %216 = arith.truncf %211 : vector<1x32xf32> to vector<1x32xbf16>
    %217 = arith.extf %216 : vector<1x32xbf16> to vector<1x32xf32>
    %218 = arith.truncf %212 : vector<1x32xf32> to vector<1x32xbf16>
    %219 = arith.extf %218 : vector<1x32xbf16> to vector<1x32xf32>
    %220 = arith.mulf %217, %219 : vector<1x32xf32>
    %cst_76 = arith.constant dense<0.000000e+00> : vector<1xf32>
    %221 = vector.multi_reduction <add>, %220, %cst_76 [1] : vector<1x32xf32> to vector<1xf32>
    %222 = vector.shape_cast %221 : vector<1xf32> to vector<1x1xf32>
    %cst_77 = arith.constant 0.176776692 : f32
    %223 = vector.broadcast %cst_77 : f32 to vector<1x1xf32>
    %224 = arith.mulf %222, %223 : vector<1x1xf32>
    %225 = arith.truncf %211 : vector<1x32xf32> to vector<1x32xbf16>
    %226 = arith.truncf %214 : vector<4x32xf32> to vector<4x32xbf16>
    %cst_78 = arith.constant dense<0.000000e+00> : vector<1x4xf32>
    %227 = tpu.matmul %225, %226, %cst_78 {dimension_numbers = #tpu.dot_dimension_numbers<[1], [1], [0], [0], [0, 0, 1, 0], [], []>} : vector<1x32xbf16>, vector<4x32xbf16>, vector<1x4xf32> -> vector<1x4xf32>
    %cst_79 = arith.constant 0.176776692 : f32
    %228 = vector.broadcast %cst_79 : f32 to vector<1x4xf32>
    %229 = arith.mulf %227, %228 : vector<1x4xf32>
    %cst_80 = arith.constant dense<0xFF800000> : vector<1xf32>
    %230 = vector.multi_reduction <maximumf>, %229, %cst_80 [1] : vector<1x4xf32> to vector<1xf32>
    %231 = vector.shape_cast %230 : vector<1xf32> to vector<1x1xf32>
    %232 = arith.maximumf %224, %231 : vector<1x1xf32>
    %233 = arith.subf %224, %232 : vector<1x1xf32>
    %234 = math.exp %233 : vector<1x1xf32>
    %235 = vector.broadcast %232 : vector<1x1xf32> to vector<1x4xf32>
    %236 = arith.subf %229, %235 : vector<1x4xf32>
    %237 = math.exp %236 : vector<1x4xf32>
    %cst_81 = arith.constant dense<0.000000e+00> : vector<1xf32>
    %238 = vector.multi_reduction <add>, %237, %cst_81 [1] : vector<1x4xf32> to vector<1xf32>
    %239 = vector.shape_cast %238 : vector<1xf32> to vector<1x1xf32>
    %240 = arith.addf %234, %239 : vector<1x1xf32>
    %241 = tpu.reciprocal %240 {approx = true} : vector<1x1xf32> -> vector<1x1xf32>
    %242 = arith.mulf %234, %241 : vector<1x1xf32>
    %243 = vector.broadcast %242 : vector<1x1xf32> to vector<1x32xf32>
    %244 = arith.mulf %243, %213 : vector<1x32xf32>
    %245 = vector.broadcast %241 : vector<1x1xf32> to vector<1x4xf32>
    %246 = arith.mulf %237, %245 : vector<1x4xf32>
    %247 = arith.truncf %246 : vector<1x4xf32> to vector<1x4xbf16>
    %248 = arith.truncf %215 : vector<4x32xf32> to vector<4x32xbf16>
    %cst_82 = arith.constant dense<0.000000e+00> : vector<1x32xf32>
    %249 = tpu.matmul %247, %248, %cst_82 {dimension_numbers = #tpu.dot_dimension_numbers<[1], [0], [0], [1], [0, 0, 1, 1], [], []>} : vector<1x4xbf16>, vector<4x32xbf16>, vector<1x32xf32> -> vector<1x32xf32>
    %250 = arith.addf %244, %249 : vector<1x32xf32>
    %251 = vector.extract_strided_slice %208 {offsets = [0, 32], sizes = [1, 32], strides = [1, 1]} : vector<1x64xf32> to vector<1x32xf32>
    %252 = vector.extract_strided_slice %206 {offsets = [0, 32], sizes = [1, 32], strides = [1, 1]} : vector<1x128xf32> to vector<1x32xf32>
    %253 = vector.extract_strided_slice %206 {offsets = [0, 96], sizes = [1, 32], strides = [1, 1]} : vector<1x128xf32> to vector<1x32xf32>
    %254 = vector.extract_strided_slice %210 {offsets = [0, 32], sizes = [4, 32], strides = [1, 1]} : vector<4x128xf32> to vector<4x32xf32>
    %255 = vector.extract_strided_slice %210 {offsets = [0, 96], sizes = [4, 32], strides = [1, 1]} : vector<4x128xf32> to vector<4x32xf32>
    %256 = arith.truncf %251 : vector<1x32xf32> to vector<1x32xbf16>
    %257 = arith.extf %256 : vector<1x32xbf16> to vector<1x32xf32>
    %258 = arith.truncf %252 : vector<1x32xf32> to vector<1x32xbf16>
    %259 = arith.extf %258 : vector<1x32xbf16> to vector<1x32xf32>
    %260 = arith.mulf %257, %259 : vector<1x32xf32>
    %cst_83 = arith.constant dense<0.000000e+00> : vector<1xf32>
    %261 = vector.multi_reduction <add>, %260, %cst_83 [1] : vector<1x32xf32> to vector<1xf32>
    %262 = vector.shape_cast %261 : vector<1xf32> to vector<1x1xf32>
    %cst_84 = arith.constant 0.176776692 : f32
    %263 = vector.broadcast %cst_84 : f32 to vector<1x1xf32>
    %264 = arith.mulf %262, %263 : vector<1x1xf32>
    %265 = arith.truncf %251 : vector<1x32xf32> to vector<1x32xbf16>
    %266 = arith.truncf %254 : vector<4x32xf32> to vector<4x32xbf16>
    %cst_85 = arith.constant dense<0.000000e+00> : vector<1x4xf32>
    %267 = tpu.matmul %265, %266, %cst_85 {dimension_numbers = #tpu.dot_dimension_numbers<[1], [1], [0], [0], [0, 0, 1, 0], [], []>} : vector<1x32xbf16>, vector<4x32xbf16>, vector<1x4xf32> -> vector<1x4xf32>
    %cst_86 = arith.constant 0.176776692 : f32
    %268 = vector.broadcast %cst_86 : f32 to vector<1x4xf32>
    %269 = arith.mulf %267, %268 : vector<1x4xf32>
    %cst_87 = arith.constant dense<0xFF800000> : vector<1xf32>
    %270 = vector.multi_reduction <maximumf>, %269, %cst_87 [1] : vector<1x4xf32> to vector<1xf32>
    %271 = vector.shape_cast %270 : vector<1xf32> to vector<1x1xf32>
    %272 = arith.maximumf %264, %271 : vector<1x1xf32>
    %273 = arith.subf %264, %272 : vector<1x1xf32>
    %274 = math.exp %273 : vector<1x1xf32>
    %275 = vector.broadcast %272 : vector<1x1xf32> to vector<1x4xf32>
    %276 = arith.subf %269, %275 : vector<1x4xf32>
    %277 = math.exp %276 : vector<1x4xf32>
    %cst_88 = arith.constant dense<0.000000e+00> : vector<1xf32>
    %278 = vector.multi_reduction <add>, %277, %cst_88 [1] : vector<1x4xf32> to vector<1xf32>
    %279 = vector.shape_cast %278 : vector<1xf32> to vector<1x1xf32>
    %280 = arith.addf %274, %279 : vector<1x1xf32>
    %281 = tpu.reciprocal %280 {approx = true} : vector<1x1xf32> -> vector<1x1xf32>
    %282 = arith.mulf %274, %281 : vector<1x1xf32>
    %283 = vector.broadcast %282 : vector<1x1xf32> to vector<1x32xf32>
    %284 = arith.mulf %283, %253 : vector<1x32xf32>
    %285 = vector.broadcast %281 : vector<1x1xf32> to vector<1x4xf32>
    %286 = arith.mulf %277, %285 : vector<1x4xf32>
    %287 = arith.truncf %286 : vector<1x4xf32> to vector<1x4xbf16>
    %288 = arith.truncf %255 : vector<4x32xf32> to vector<4x32xbf16>
    %cst_89 = arith.constant dense<0.000000e+00> : vector<1x32xf32>
    %289 = tpu.matmul %287, %288, %cst_89 {dimension_numbers = #tpu.dot_dimension_numbers<[1], [0], [0], [1], [0, 0, 1, 1], [], []>} : vector<1x4xbf16>, vector<4x32xbf16>, vector<1x32xf32> -> vector<1x32xf32>
    %290 = arith.addf %284, %289 : vector<1x32xf32>
    %291 = tpu.concatenate %250, %290 in 1 : vector<1x32xf32>, vector<1x32xf32> -> vector<1x64xf32>
    %292 = arith.truncf %291 : vector<1x64xf32> to vector<1x64xbf16>
    %cst_90 = arith.constant dense<0.000000e+00> : vector<1x64xf32>
    %293 = tpu.matmul %292, %6, %cst_90 {dimension_numbers = #tpu.dot_dimension_numbers<[1], [0], [0], [1], [0, 0, 1, 1], [], []>} : vector<1x64xbf16>, vector<64x64xbf16>, vector<1x64xf32> -> vector<1x64xf32>
    %294 = arith.addf %293, %7 : vector<1x64xf32>
    %295 = arith.addf %162, %294 : vector<1x64xf32>
    %296 = arith.truncf %295 : vector<1x64xf32> to vector<1x64xbf16>
    %cst_91 = arith.constant dense<0.000000e+00> : vector<1x32xf32>
    %297 = tpu.matmul %296, %8, %cst_91 {dimension_numbers = #tpu.dot_dimension_numbers<[1], [0], [0], [1], [0, 0, 1, 1], [], []>} : vector<1x64xbf16>, vector<64x32xbf16>, vector<1x32xf32> -> vector<1x32xf32>
    %298 = arith.addf %297, %9 : vector<1x32xf32>
    %c1_92 = arith.constant 1 : index
    %c0_93 = arith.constant 0 : index
    %c0_94 = arith.constant 0 : index
    %299 = vector.load %arg13[%c1_92, %c0_93, %c0_94] : memref<2x1x32xf32, #tpu.memory_space<vmem>>, vector<1x1x32xf32>
    %300 = vector.shape_cast %299 : vector<1x1x32xf32> to vector<1x32xf32>
    %301 = vector.shape_cast %298 : vector<1x32xf32> to vector<1x1x32xf32>
    tpu.vector_store %arg13[%c1_92, %c0_93, %c0_94], %301 {strides = array<i32>} : memref<2x1x32xf32, #tpu.memory_space<vmem>>, vector<1x1x32xf32>,
    return
  }
  func.func @transform_0(%arg0: i32) -> (i32, i32, i32) {
    %c0_i32 = arith.constant 0 : i32
    %c0_i32_0 = arith.constant 0 : i32
    %c0_i32_1 = arith.constant 0 : i32
    return %arg0, %c0_i32, %c0_i32_0 : i32, i32, i32
  }
  func.func @transform_1(%arg0: i32) -> (i32, i32, i32) {
    %c0_i32 = arith.constant 0 : i32
    %c0_i32_0 = arith.constant 0 : i32
    %c0_i32_1 = arith.constant 0 : i32
    return %arg0, %c0_i32, %c0_i32_0 : i32, i32, i32
  }
  func.func @transform_2(%arg0: i32) -> (i32, i32) {
    %c0_i32 = arith.constant 0 : i32
    %c0_i32_0 = arith.constant 0 : i32
    %c0_i32_1 = arith.constant 0 : i32
    return %c0_i32, %c0_i32_0 : i32, i32
  }
  func.func @transform_3(%arg0: i32) -> (i32, i32) {
    %c0_i32 = arith.constant 0 : i32
    %c0_i32_0 = arith.constant 0 : i32
    %c0_i32_1 = arith.constant 0 : i32
    return %c0_i32, %c0_i32_0 : i32, i32
  }
  func.func @transform_4(%arg0: i32) -> (i32, i32) {
    %c0_i32 = arith.constant 0 : i32
    %c0_i32_0 = arith.constant 0 : i32
    %c0_i32_1 = arith.constant 0 : i32
    return %c0_i32, %c0_i32_0 : i32, i32
  }
  func.func @transform_5(%arg0: i32) -> (i32, i32) {
    %c0_i32 = arith.constant 0 : i32
    %c0_i32_0 = arith.constant 0 : i32
    %c0_i32_1 = arith.constant 0 : i32
    return %c0_i32, %c0_i32_0 : i32, i32
  }
  func.func @transform_6(%arg0: i32) -> (i32, i32) {
    %c0_i32 = arith.constant 0 : i32
    %c0_i32_0 = arith.constant 0 : i32
    %c0_i32_1 = arith.constant 0 : i32
    return %c0_i32, %c0_i32_0 : i32, i32
  }
  func.func @transform_7(%arg0: i32) -> (i32, i32) {
    %c0_i32 = arith.constant 0 : i32
    %c0_i32_0 = arith.constant 0 : i32
    %c0_i32_1 = arith.constant 0 : i32
    return %c0_i32, %c0_i32_0 : i32, i32
  }
  func.func @transform_8(%arg0: i32) -> (i32, i32) {
    %c0_i32 = arith.constant 0 : i32
    %c0_i32_0 = arith.constant 0 : i32
    %c0_i32_1 = arith.constant 0 : i32
    return %c0_i32, %c0_i32_0 : i32, i32
  }
  func.func @transform_9(%arg0: i32) -> (i32, i32) {
    %c0_i32 = arith.constant 0 : i32
    %c0_i32_0 = arith.constant 0 : i32
    %c0_i32_1 = arith.constant 0 : i32
    return %c0_i32, %c0_i32_0 : i32, i32
  }
  func.func @transform_10(%arg0: i32) -> (i32, i32) {
    %c0_i32 = arith.constant 0 : i32
    %c0_i32_0 = arith.constant 0 : i32
    %c0_i32_1 = arith.constant 0 : i32
    return %c0_i32, %c0_i32_0 : i32, i32
  }
  func.func @transform_11(%arg0: i32) -> (i32, i32) {
    %c0_i32 = arith.constant 0 : i32
    %c0_i32_0 = arith.constant 0 : i32
    %c0_i32_1 = arith.constant 0 : i32
    return %c0_i32, %c0_i32_0 : i32, i32
  }
  func.func @transform_12(%arg0: i32) -> (i32, i32, i32) {
    %c0_i32 = arith.constant 0 : i32
    %c0_i32_0 = arith.constant 0 : i32
    %c0_i32_1 = arith.constant 0 : i32
    return %arg0, %c0_i32, %c0_i32_0 : i32, i32, i32
  }
}

</mosaic_0001>

<llo_original>
// kernel: multiscale_apply.9
$region0: #{multiscale_apply.9}
  #allocation0 [shape = 'u32[]', space=smem, size = 0x4, offset = 0x4, fixed_abs, tag = 'smem constant byte address 0x4 - core index']
  #allocation1 [shape = 'u32[144,128]{1,0:T(1,128)}', space=vmem, size = 0x12000, scoped, tag = 'internal scratch']
  %s0 = inlined_call_operand.vmem [shape: f32[2,9,32], index: 0, kind: input, shape index: {}]
  %s1 = inlined_call_operand.vmem [shape: f32[1,32], index: 1, kind: input, shape index: {}]
  %s2 = inlined_call_operand.vmem [shape: f32[1,32], index: 2, kind: input, shape index: {}]
  %s3 = inlined_call_operand.vmem [shape: bf16[32,64], index: 3, kind: input, shape index: {}]
  %s4 = inlined_call_operand.vmem [shape: f32[1,64], index: 4, kind: input, shape index: {}]
  %s5 = inlined_call_operand.vmem [shape: bf16[64,32], index: 5, kind: input, shape index: {}]
  %s6 = inlined_call_operand.vmem [shape: f32[1,32], index: 6, kind: input, shape index: {}]
  %s7 = inlined_call_operand.vmem [shape: f32[2,9,32], index: 7, kind: output, shape index: {}]
  %s8 = sld [smem:[#allocation0]]
  $region38: #{multiscale_apply.9} parent=0
    _
  %s10 = ssub.s32 1, %s8
  %s11 = scalar_select 0, %s10, %s8
  // Predicated region
  $region2: #{multiscale_apply.9} parent=0 // pred_check
    _
  $region3: #{multiscale_apply.9} parent=0 // pred_check_branch
    %13 = sbr.rel (0) target = $region5
  $region4: #{multiscale_apply.9} parent=0 // pred_region
    _
  $region5: #{multiscale_apply.9} parent=0 // pred_fallthru
    _
  // Predicated region
  $region6: #{multiscale_apply.9} parent=0 // pred_check
    _
  $region7: #{multiscale_apply.9} parent=0 // pred_check_branch
    %15 = sbr.rel (0) target = $region9
  $region8: #{multiscale_apply.9} parent=0 // pred_region
    _
  $region9: #{multiscale_apply.9} parent=0 // pred_fallthru
    _
  // Predicated region
  $region10: #{multiscale_apply.9} parent=0 // pred_check
    _
  $region11: #{multiscale_apply.9} parent=0 // pred_check_branch
    %17 = sbr.rel (0) target = $region13
  $region12: #{multiscale_apply.9} parent=0 // pred_region
    _
  $region13: #{multiscale_apply.9} parent=0 // pred_fallthru
    _
  // Predicated region
  $region14: #{multiscale_apply.9} parent=0 // pred_check
    _
  $region15: #{multiscale_apply.9} parent=0 // pred_check_branch
    %19 = sbr.rel (0) target = $region17
  $region16: #{multiscale_apply.9} parent=0 // pred_region
    _
  $region17: #{multiscale_apply.9} parent=0 // pred_fallthru
    _
  // Predicated region
  $region18: #{multiscale_apply.9} parent=0 // pred_check
    _
  $region19: #{multiscale_apply.9} parent=0 // pred_check_branch
    %21 = sbr.rel (0) target = $region21
  $region20: #{multiscale_apply.9} parent=0 // pred_region
    _
  $region21: #{multiscale_apply.9} parent=0 // pred_fallthru
    _
  // Predicated region
  $region22: #{multiscale_apply.9} parent=0 // pred_check
    _
  $region23: #{multiscale_apply.9} parent=0 // pred_check_branch
    %23 = sbr.rel (0) target = $region25
  $region24: #{multiscale_apply.9} parent=0 // pred_region
    _
  $region25: #{multiscale_apply.9} parent=0 // pred_fallthru
    _
  // Predicated region
  $region26: #{multiscale_apply.9} parent=0 // pred_check
    _
  $region27: #{multiscale_apply.9} parent=0 // pred_check_branch
    %25 = sbr.rel (0) target = $region29
  $region28: #{multiscale_apply.9} parent=0 // pred_region
    _
  $region29: #{multiscale_apply.9} parent=0 // pred_fallthru
    _
  %v27 = vld [vmem:[%s1] sm:$0x1]
  %v28 = vld [vmem:[%s2] sm:$0x1]
  %v29 = vld [vmem:[%s3] sm:$0xf]
  %v30 = vld [vmem:[%s3 + $0x4] sm:$0xf]
  %v31 = vld [vmem:[%s3 + $0x8] sm:$0xf]
  %v32 = vld [vmem:[%s3 + $0xc] sm:$0xf]
  %v33 = vld [vmem:[%s4] sm:$0x1]
  %v34 = vld [vmem:[%s5] sm:$0xf]
  %v35 = vld [vmem:[%s5 + $0x4] sm:$0xf]
  %v36 = vld [vmem:[%s5 + $0x8] sm:$0xf]
  %v37 = vld [vmem:[%s5 + $0xc] sm:$0xf]
  %v38 = vld [vmem:[%s5 + $0x10] sm:$0xf]
  %v39 = vld [vmem:[%s5 + $0x14] sm:$0xf]
  %v40 = vld [vmem:[%s5 + $0x18] sm:$0xf]
  %v41 = vld [vmem:[%s5 + $0x1c] sm:$0xf]
  %v42 = vld [vmem:[%s6] sm:$0x1]
  %v43 = vld [vmem:[%s0] sm:$0xff]
  %v44 = vld [vmem:[%s0 + $0x8] sm:$0x1]
  %vm45 = vcmask 261120
  %v46 = vsel %vm45, %v43, 0.0
  %47 = vadd.xlane.f32.xlu0 %v46
  %v48 = vpop.xlane.xlu0 %47
  %vm49 = vcmask 253952
  %v50 = vsel %vm49, %v44, 0.0
  %51 = vadd.xlane.f32.xlu0 %v50
  %v52 = vpop.xlane.xlu0 %51
  %v53 = vrcp.pop 32.0
  %v54 = vmul.f32 %v48, %v53
  %v55 = vmul.f32 %v52, %v53
  %v56 = vsub.f32 %v43, %v54
  %v57 = vsub.f32 %v44, %v55
  %v58 = vmul.f32 %v56, %v56
  %v59 = vmul.f32 %v57, %v57
  %v60 = vsel %vm45, %v58, 0.0
  %61 = vadd.xlane.f32.xlu0 %v60
  %v62 = vpop.xlane.xlu0 %61
  %v63 = vsel %vm49, %v59, 0.0
  %64 = vadd.xlane.f32.xlu0 %v63
  %v65 = vpop.xlane.xlu0 %64
  %v66 = vmul.f32 %v62, %v53
  %v67 = vmul.f32 %v65, %v53
  %v68 = vadd.f32 %v66, 1e-05
  %v69 = vadd.f32 %v67, 1e-05
  %v70 = vrsqrt.pop %v68
  %v71 = vrsqrt.pop %v69
  %v72 = vmul.f32 %v56, %v70
  %v73 = vmul.f32 %v57, %v71
  %v75 = vlaneseq
  %v76 = vshrl.u32 %v75, 7
  %v77 = vsub.s32 0, %v76
  %v78 = vrot.slane %v27, %v77
  %v80 = vmul.f32 %v72, %v78
  %v81 = vmul.f32 %v73, %v78
  %v83 = vlaneseq
  %v84 = vshrl.u32 %v83, 7
  %v85 = vsub.s32 0, %v84
  %v86 = vrot.slane %v28, %v85
  %v88 = vadd.f32 %v80, %v86
  %v89 = vadd.f32 %v81, %v86
  %v90 = vpack.c.bf16 %v89, %v88
  %v92 = vlaneseq
  %v93 = vshrl.u32 %v92, 7
  %v94 = vsub.s32 0, %v93
  %v95 = vrot.slane %v33, %v94
  %v101 = vunpack.c.l.b16 %v29
  %v102 = vunpack.c.l.b16 %v30
  %v103 = vunpack.c.l.b16 %v31
  %v104 = vunpack.c.l.b16 %v32
  %v105 = vpack.c.b16 %v102, %v101
  %v106 = vpack.c.b16 %v104, %v103
  %v110 = vsel %vm45, %v90, 0
  %112 = vmatprep.subr.bf16.mxu0 0
  %113 = vmatpush1.bf16.msra.mxu0 %v105
  %114 = vmatprep.subr.bf16.mxu0 0
  %115 = vmatpush1.bf16.msra.mxu0 %v106
  %116 = vmatprep.subr.bf16.mxu0 0
  %117 = vmatpush1.bf16.msra.mxu0 0
  %118 = vmatprep.subr.bf16.mxu0 0
  %119 = vmatpush1.bf16.msra.mxu0 0
  %120 = vmatprep.subr.bf16.mxu0 0
  %121 = vmatpush1.bf16.msra.mxu0 0
  %122 = vmatprep.subr.bf16.mxu0 0
  %123 = vmatpush1.bf16.msra.mxu0 0
  %124 = vmatprep.subr.bf16.mxu0 0
  %125 = vmatpush1.bf16.msra.mxu0 0
  %126 = vmatprep.subr.bf16.mxu0 0
  %127 = vmatpush1.bf16.msra.mxu0 0
  %128 = vmatprep.subr.bf16.mxu0 0
  %129 = vmatpush1.bf16.msra.mxu0 0
  %130 = vmatprep.subr.bf16.mxu0 0
  %131 = vmatpush1.bf16.msra.mxu0 0
  %132 = vmatprep.subr.bf16.mxu0 0
  %133 = vmatpush1.bf16.msra.mxu0 0
  %134 = vmatprep.subr.bf16.mxu0 0
  %135 = vmatpush1.bf16.msra.mxu0 0
  %136 = vmatprep.subr.bf16.mxu0 0
  %137 = vmatpush1.bf16.msra.mxu0 0
  %138 = vmatprep.subr.bf16.mxu0 0
  %139 = vmatpush1.bf16.msra.mxu0 0
  %140 = vmatprep.subr.bf16.mxu0 0
  %141 = vmatpush1.bf16.msra.mxu0 0
  %142 = vmatprep.subr.bf16.mxu0 0
  %143 = vmatpush1.bf16.msra.mxu0 0
  %144 = vmatprep.mubr.bf16.mxu0 0
  %145 = vmatmul.mubr.bf16.gmra.mrb[0].mxu0 %v110
  %v146 = vpop.f32.mrb[0].mxu0
  %v147 = vadd.f32 %v95, %v146
  %v148 = vpop.f32.mrb[0].mxu0
  %v149 = vpop.f32.mrb[0].mxu0
  %v150 = vadd.f32 %v95, %v149
  %v151 = vpop.f32.mrb[0].mxu0
  %152 = vdwg.mxu0
  %v153 = vmul.f32 %v147, 0.5
  %v154 = vmul.f32 %v150, 0.5
  %v155 = vmul.f32 %v147, 0.70710677
  %v156 = vmul.f32 %v150, 0.70710677
  %v157 = vand.u32 2147483647, %v155
  %v158 = vand.u32 2147483647, %v156
  %v159 = vmul.f32 %v157, 0.3275911
  %v160 = vmul.f32 %v158, 0.3275911
  %v161 = vadd.f32 %v159, 1.0
  %v162 = vadd.f32 %v160, 1.0
  %v163 = vrcp.pop %v161
  %v164 = vmul.f32 1.0, %v163
  %v165 = vrcp.pop %v162
  %v166 = vmul.f32 1.0, %v165
  %v167 = vmul.f32 %v164, 1.0614054
  %v168 = vmul.f32 %v166, 1.0614054
  %v169 = vadd.f32 %v167, -1.4531521
  %v170 = vadd.f32 %v168, -1.4531521
  %v171 = vmul.f32 %v169, %v164
  %v172 = vmul.f32 %v170, %v166
  %v173 = vadd.f32 %v171, 1.4214138
  %v174 = vadd.f32 %v172, 1.4214138
  %v175 = vmul.f32 %v173, %v164
  %v176 = vmul.f32 %v174, %v166
  %v177 = vadd.f32 %v175, -0.28449672
  %v178 = vadd.f32 %v176, -0.28449672
  %v179 = vmul.f32 %v177, %v164
  %v180 = vmul.f32 %v178, %v166
  %v181 = vadd.f32 %v179, 0.2548296
  %v182 = vadd.f32 %v180, 0.2548296
  %v183 = vmul.f32 %v181, %v164
  %v184 = vmul.f32 %v182, %v166
  %v185 = vsub.f32 0.0, %v157
  %v186 = vsub.f32 0.0, %v158
  %v187 = vmul.f32 %v185, %v157
  %v188 = vmul.f32 %v186, %v158
  %v189 = vmul.f32 %v187, 1.442695
  %v190 = vpow.pop %v189
  %v191 = vmul.f32 %v188, 1.442695
  %v192 = vpow.pop %v191
  %v193 = vmul.f32 %v183, %v190
  %v194 = vmul.f32 %v184, %v192
  %v195 = vsub.f32 1.0, %v193
  %v196 = vsub.f32 1.0, %v194
  %vm197 = vcmp.ge.f32.partialorder %v155, 0.0
  %vm198 = vcmp.ge.f32.partialorder %v156, 0.0
  %v199 = vsub.f32 0.0, %v195
  %v200 = vsub.f32 0.0, %v196
  %v201 = vsel %vm197, %v195, %v199
  %v202 = vsel %vm198, %v196, %v200
  %v203 = vadd.f32 %v201, 1.0
  %v204 = vadd.f32 %v202, 1.0
  %v205 = vmul.f32 %v153, %v203
  %v206 = vmul.f32 %v154, %v204
  %v207 = vpack.c.bf16 %v206, %v205
  %v209 = vlaneseq
  %v210 = vshrl.u32 %v209, 7
  %v211 = vsub.s32 0, %v210
  %v212 = vrot.slane %v42, %v211
  %v222 = vunpack.c.l.b16 %v34
  %v223 = vunpack.c.l.b16 %v35
  %v224 = vunpack.c.l.b16 %v36
  %v225 = vunpack.c.l.b16 %v37
  %v226 = vunpack.c.l.b16 %v38
  %v227 = vunpack.c.l.b16 %v39
  %v228 = vunpack.c.l.b16 %v40
  %v229 = vunpack.c.l.b16 %v41
  %v230 = vpack.c.b16 %v223, %v222
  %v231 = vpack.c.b16 %v225, %v224
  %v232 = vpack.c.b16 %v227, %v226
  %v233 = vpack.c.b16 %v229, %v228
  %vm238 = vcmask 523264
  %v240 = vsel %vm238, %v207, 0
  %242 = vmatprep.subr.bf16.mxu0 0
  %243 = vmatpush1.bf16.msra.mxu0 %v230
  %244 = vmatprep.subr.bf16.mxu0 0
  %245 = vmatpush1.bf16.msra.mxu0 %v231
  %246 = vmatprep.subr.bf16.mxu0 0
  %247 = vmatpush1.bf16.msra.mxu0 %v232
  %248 = vmatprep.subr.bf16.mxu0 0
  %249 = vmatpush1.bf16.msra.mxu0 %v233
  %250 = vmatprep.subr.bf16.mxu0 0
  %251 = vmatpush1.bf16.msra.mxu0 0
  %252 = vmatprep.subr.bf16.mxu0 0
  %253 = vmatpush1.bf16.msra.mxu0 0
  %254 = vmatprep.subr.bf16.mxu0 0
  %255 = vmatpush1.bf16.msra.mxu0 0
  %256 = vmatprep.subr.bf16.mxu0 0
  %257 = vmatpush1.bf16.msra.mxu0 0
  %258 = vmatprep.subr.bf16.mxu0 0
  %259 = vmatpush1.bf16.msra.mxu0 0
  %260 = vmatprep.subr.bf16.mxu0 0
  %261 = vmatpush1.bf16.msra.mxu0 0
  %262 = vmatprep.subr.bf16.mxu0 0
  %263 = vmatpush1.bf16.msra.mxu0 0
  %264 = vmatprep.subr.bf16.mxu0 0
  %265 = vmatpush1.bf16.msra.mxu0 0
  %266 = vmatprep.subr.bf16.mxu0 0
  %267 = vmatpush1.bf16.msra.mxu0 0
  %268 = vmatprep.subr.bf16.mxu0 0
  %269 = vmatpush1.bf16.msra.mxu0 0
  %270 = vmatprep.subr.bf16.mxu0 0
  %271 = vmatpush1.bf16.msra.mxu0 0
  %272 = vmatprep.subr.bf16.mxu0 0
  %273 = vmatpush1.bf16.msra.mxu0 0
  %274 = vmatprep.mubr.bf16.mxu0 0
  %275 = vmatmul.mubr.bf16.gmra.mrb[0].mxu0 %v240
  %v276 = vpop.f32.mrb[0].mxu0
  %v277 = vadd.f32 %v212, %v276
  %v278 = vpop.f32.mrb[0].mxu0
  %v279 = vpop.f32.mrb[0].mxu0
  %v280 = vadd.f32 %v212, %v279
  %v281 = vpop.f32.mrb[0].mxu0
  %282 = vdwg.mxu0
  %v283 = vadd.f32 %v43, %v277
  %v284 = vadd.f32 %v44, %v280
  %285 = vst.msk [vmem:[%s7] sm:$0xff] %vm45, %v283
  %286 = vst.msk [vmem:[%s7 + $0x8] sm:$0x1] %vm49, %v284
  %s287 = scalar_lea.vmem %s0, 16
  %v288 = vld [vmem:[%s287] sm:$0xff]
  %v289 = vld [vmem:[%s287 + $0x8] sm:$0x1]
  %v290 = vsel %vm45, %v288, 0.0
  %291 = vadd.xlane.f32.xlu0 %v290
  %v292 = vpop.xlane.xlu0 %291
  %v293 = vsel %vm49, %v289, 0.0
  %294 = vadd.xlane.f32.xlu0 %v293
  %v295 = vpop.xlane.xlu0 %294
  %v296 = vmul.f32 %v292, %v53
  %v297 = vmul.f32 %v295, %v53
  %v298 = vsub.f32 %v288, %v296
  %v299 = vsub.f32 %v289, %v297
  %v300 = vmul.f32 %v298, %v298
  %v301 = vmul.f32 %v299, %v299
  %v302 = vsel %vm45, %v300, 0.0
  %303 = vadd.xlane.f32.xlu0 %v302
  %v304 = vpop.xlane.xlu0 %303
  %v305 = vsel %vm49, %v301, 0.0
  %306 = vadd.xlane.f32.xlu0 %v305
  %v307 = vpop.xlane.xlu0 %306
  %v308 = vmul.f32 %v304, %v53
  %v309 = vmul.f32 %v307, %v53
  %v310 = vadd.f32 %v308, 1e-05
  %v311 = vadd.f32 %v309, 1e-05
  %v312 = vrsqrt.pop %v310
  %v313 = vrsqrt.pop %v311
  %v314 = vmul.f32 %v298, %v312
  %v315 = vmul.f32 %v299, %v313
  %v316 = vmul.f32 %v314, %v78
  %v317 = vmul.f32 %v315, %v78
  %v318 = vadd.f32 %v316, %v86
  %v319 = vadd.f32 %v317, %v86
  %v320 = vpack.c.bf16 %v319, %v318
  %v322 = vsel %vm45, %v320, 0
  %324 = vmatprep.subr.bf16.mxu0 0
  %325 = vmatpush1.bf16.msra.mxu0 %v105
  %326 = vmatprep.subr.bf16.mxu0 0
  %327 = vmatpush1.bf16.msra.mxu0 %v106
  %328 = vmatprep.subr.bf16.mxu0 0
  %329 = vmatpush1.bf16.msra.mxu0 0
  %330 = vmatprep.subr.bf16.mxu0 0
  %331 = vmatpush1.bf16.msra.mxu0 0
  %332 = vmatprep.subr.bf16.mxu0 0
  %333 = vmatpush1.bf16.msra.mxu0 0
  %334 = vmatprep.subr.bf16.mxu0 0
  %335 = vmatpush1.bf16.msra.mxu0 0
  %336 = vmatprep.subr.bf16.mxu0 0
  %337 = vmatpush1.bf16.msra.mxu0 0
  %338 = vmatprep.subr.bf16.mxu0 0
  %339 = vmatpush1.bf16.msra.mxu0 0
  %340 = vmatprep.subr.bf16.mxu0 0
  %341 = vmatpush1.bf16.msra.mxu0 0
  %342 = vmatprep.subr.bf16.mxu0 0
  %343 = vmatpush1.bf16.msra.mxu0 0
  %344 = vmatprep.subr.bf16.mxu0 0
  %345 = vmatpush1.bf16.msra.mxu0 0
  %346 = vmatprep.subr.bf16.mxu0 0
  %347 = vmatpush1.bf16.msra.mxu0 0
  %348 = vmatprep.subr.bf16.mxu0 0
  %349 = vmatpush1.bf16.msra.mxu0 0
  %350 = vmatprep.subr.bf16.mxu0 0
  %351 = vmatpush1.bf16.msra.mxu0 0
  %352 = vmatprep.subr.bf16.mxu0 0
  %353 = vmatpush1.bf16.msra.mxu0 0
  %354 = vmatprep.subr.bf16.mxu0 0
  %355 = vmatpush1.bf16.msra.mxu0 0
  %356 = vmatprep.mubr.bf16.mxu0 0
  %357 = vmatmul.mubr.bf16.gmra.mrb[0].mxu0 %v322
  %v358 = vpop.f32.mrb[0].mxu0
  %v359 = vadd.f32 %v95, %v358
  %v360 = vpop.f32.mrb[0].mxu0
  %v361 = vpop.f32.mrb[0].mxu0
  %v362 = vadd.f32 %v95, %v361
  %v363 = vpop.f32.mrb[0].mxu0
  %364 = vdwg.mxu0
  %v365 = vmul.f32 %v359, 0.5
  %v366 = vmul.f32 %v362, 0.5
  %v367 = vmul.f32 %v359, 0.70710677
  %v368 = vmul.f32 %v362, 0.70710677
  %v369 = vand.u32 2147483647, %v367
  %v370 = vand.u32 2147483647, %v368
  %v371 = vmul.f32 %v369, 0.3275911
  %v372 = vmul.f32 %v370, 0.3275911
  %v373 = vadd.f32 %v371, 1.0
  %v374 = vadd.f32 %v372, 1.0
  %v375 = vrcp.pop %v373
  %v376 = vmul.f32 1.0, %v375
  %v377 = vrcp.pop %v374
  %v378 = vmul.f32 1.0, %v377
  %v379 = vmul.f32 %v376, 1.0614054
  %v380 = vmul.f32 %v378, 1.0614054
  %v381 = vadd.f32 %v379, -1.4531521
  %v382 = vadd.f32 %v380, -1.4531521
  %v383 = vmul.f32 %v381, %v376
  %v384 = vmul.f32 %v382, %v378
  %v385 = vadd.f32 %v383, 1.4214138
  %v386 = vadd.f32 %v384, 1.4214138
  %v387 = vmul.f32 %v385, %v376
  %v388 = vmul.f32 %v386, %v378
  %v389 = vadd.f32 %v387, -0.28449672
  %v390 = vadd.f32 %v388, -0.28449672
  %v391 = vmul.f32 %v389, %v376
  %v392 = vmul.f32 %v390, %v378
  %v393 = vadd.f32 %v391, 0.2548296
  %v394 = vadd.f32 %v392, 0.2548296
  %v395 = vmul.f32 %v393, %v376
  %v396 = vmul.f32 %v394, %v378
  %v397 = vsub.f32 0.0, %v369
  %v398 = vsub.f32 0.0, %v370
  %v399 = vmul.f32 %v397, %v369
  %v400 = vmul.f32 %v398, %v370
  %v401 = vmul.f32 %v399, 1.442695
  %v402 = vpow.pop %v401
  %v403 = vmul.f32 %v400, 1.442695
  %v404 = vpow.pop %v403
  %v405 = vmul.f32 %v395, %v402
  %v406 = vmul.f32 %v396, %v404
  %v407 = vsub.f32 1.0, %v405
  %v408 = vsub.f32 1.0, %v406
  %vm409 = vcmp.ge.f32.partialorder %v367, 0.0
  %vm410 = vcmp.ge.f32.partialorder %v368, 0.0
  %v411 = vsub.f32 0.0, %v407
  %v412 = vsub.f32 0.0, %v408
  %v413 = vsel %vm409, %v407, %v411
  %v414 = vsel %vm410, %v408, %v412
  %v415 = vadd.f32 %v413, 1.0
  %v416 = vadd.f32 %v414, 1.0
  %v417 = vmul.f32 %v365, %v415
  %v418 = vmul.f32 %v366, %v416
  %v419 = vpack.c.bf16 %v418, %v417
  %v421 = vsel %vm238, %v419, 0
  %423 = vmatprep.subr.bf16.mxu0 0
  %424 = vmatpush1.bf16.msra.mxu0 %v230
  %425 = vmatprep.subr.bf16.mxu0 0
  %426 = vmatpush1.bf16.msra.mxu0 %v231
  %427 = vmatprep.subr.bf16.mxu0 0
  %428 = vmatpush1.bf16.msra.mxu0 %v232
  %429 = vmatprep.subr.bf16.mxu0 0
  %430 = vmatpush1.bf16.msra.mxu0 %v233
  %431 = vmatprep.subr.bf16.mxu0 0
  %432 = vmatpush1.bf16.msra.mxu0 0
  %433 = vmatprep.subr.bf16.mxu0 0
  %434 = vmatpush1.bf16.msra.mxu0 0
  %435 = vmatprep.subr.bf16.mxu0 0
  %436 = vmatpush1.bf16.msra.mxu0 0
  %437 = vmatprep.subr.bf16.mxu0 0
  %438 = vmatpush1.bf16.msra.mxu0 0
  %439 = vmatprep.subr.bf16.mxu0 0
  %440 = vmatpush1.bf16.msra.mxu0 0
  %441 = vmatprep.subr.bf16.mxu0 0
  %442 = vmatpush1.bf16.msra.mxu0 0
  %443 = vmatprep.subr.bf16.mxu0 0
  %444 = vmatpush1.bf16.msra.mxu0 0
  %445 = vmatprep.subr.bf16.mxu0 0
  %446 = vmatpush1.bf16.msra.mxu0 0
  %447 = vmatprep.subr.bf16.mxu0 0
  %448 = vmatpush1.bf16.msra.mxu0 0
  %449 = vmatprep.subr.bf16.mxu0 0
  %450 = vmatpush1.bf16.msra.mxu0 0
  %451 = vmatprep.subr.bf16.mxu0 0
  %452 = vmatpush1.bf16.msra.mxu0 0
  %453 = vmatprep.subr.bf16.mxu0 0
  %454 = vmatpush1.bf16.msra.mxu0 0
  %455 = vmatprep.mubr.bf16.mxu0 0
  %456 = vmatmul.mubr.bf16.gmra.mrb[0].mxu0 %v421
  %v457 = vpop.f32.mrb[0].mxu0
  %v458 = vadd.f32 %v212, %v457
  %v459 = vpop.f32.mrb[0].mxu0
  %v460 = vpop.f32.mrb[0].mxu0
  %v461 = vadd.f32 %v212, %v460
  %v462 = vpop.f32.mrb[0].mxu0
  %463 = vdwg.mxu0
  %v464 = vadd.f32 %v288, %v458
  %v465 = vadd.f32 %v289, %v461
  %s466 = scalar_lea.vmem %s7, 16
  %467 = vst.msk [vmem:[%s466] sm:$0xff] %vm45, %v464
  %468 = vst.msk [vmem:[%s466 + $0x8] sm:$0x1] %vm49, %v465
  // Predicated region
  $region30: #{multiscale_apply.9} parent=0 // pred_check
    _
  $region31: #{multiscale_apply.9} parent=0 // pred_check_branch
    %470 = sbr.rel (0) target = $region33
  $region32: #{multiscale_apply.9} parent=0 // pred_region
    _
  $region33: #{multiscale_apply.9} parent=0 // pred_fallthru
    _
  // Predicated region
  $region34: #{multiscale_apply.9} parent=0 // pred_check
    _
  $region35: #{multiscale_apply.9} parent=0 // pred_check_branch
    %472 = sbr.rel (0) target = $region37
  $region36: #{multiscale_apply.9} parent=0 // pred_region
    _
  $region37: #{multiscale_apply.9} parent=0 // pred_fallthru
    _

// kernel: multiscale_apply.8
$region0: #{multiscale_apply.8}
  #allocation0 [shape = 'u32[]', space=smem, size = 0x4, offset = 0x4, fixed_abs, tag = 'smem constant byte address 0x4 - core index']
  #allocation1 [shape = 'u32[144,128]{1,0:T(1,128)}', space=vmem, size = 0x12000, scoped, tag = 'internal scratch']
  %s0 = inlined_call_operand.vmem [shape: f32[2,9,32], index: 0, kind: input, shape index: {}]
  %s1 = inlined_call_operand.vmem [shape: f32[1,32], index: 1, kind: input, shape index: {}]
  %s2 = inlined_call_operand.vmem [shape: f32[1,32], index: 2, kind: input, shape index: {}]
  %s3 = inlined_call_operand.vmem [shape: bf16[32,96], index: 3, kind: input, shape index: {}]
  %s4 = inlined_call_operand.vmem [shape: bf16[32,32], index: 4, kind: input, shape index: {}]
  %s5 = inlined_call_operand.vmem [shape: f32[1,32], index: 5, kind: input, shape index: {}]
  %s6 = inlined_call_operand.vmem [shape: f32[2,9,32], index: 6, kind: output, shape index: {}]
  %s7 = sld [smem:[#allocation0]]
  $region34: #{multiscale_apply.8} parent=0
    _
  %s9 = ssub.s32 1, %s7
  %s10 = scalar_select 0, %s9, %s7
  // Predicated region
  $region2: #{multiscale_apply.8} parent=0 // pred_check
    _
  $region3: #{multiscale_apply.8} parent=0 // pred_check_branch
    %12 = sbr.rel (0) target = $region5
  $region4: #{multiscale_apply.8} parent=0 // pred_region
    _
  $region5: #{multiscale_apply.8} parent=0 // pred_fallthru
    _
  // Predicated region
  $region6: #{multiscale_apply.8} parent=0 // pred_check
    _
  $region7: #{multiscale_apply.8} parent=0 // pred_check_branch
    %14 = sbr.rel (0) target = $region9
  $region8: #{multiscale_apply.8} parent=0 // pred_region
    _
  $region9: #{multiscale_apply.8} parent=0 // pred_fallthru
    _
  // Predicated region
  $region10: #{multiscale_apply.8} parent=0 // pred_check
    _
  $region11: #{multiscale_apply.8} parent=0 // pred_check_branch
    %16 = sbr.rel (0) target = $region13
  $region12: #{multiscale_apply.8} parent=0 // pred_region
    _
  $region13: #{multiscale_apply.8} parent=0 // pred_fallthru
    _
  // Predicated region
  $region14: #{multiscale_apply.8} parent=0 // pred_check
    _
  $region15: #{multiscale_apply.8} parent=0 // pred_check_branch
    %18 = sbr.rel (0) target = $region17
  $region16: #{multiscale_apply.8} parent=0 // pred_region
    _
  $region17: #{multiscale_apply.8} parent=0 // pred_fallthru
    _
  // Predicated region
  $region18: #{multiscale_apply.8} parent=0 // pred_check
    _
  $region19: #{multiscale_apply.8} parent=0 // pred_check_branch
    %20 = sbr.rel (0) target = $region21
  $region20: #{multiscale_apply.8} parent=0 // pred_region
    _
  $region21: #{multiscale_apply.8} parent=0 // pred_fallthru
    _
  // Predicated region
  $region22: #{multiscale_apply.8} parent=0 // pred_check
    _
  $region23: #{multiscale_apply.8} parent=0 // pred_check_branch
    %22 = sbr.rel (0) target = $region25
  $region24: #{multiscale_apply.8} parent=0 // pred_region
    _
  $region25: #{multiscale_apply.8} parent=0 // pred_fallthru
    _
  %v24 = vld [vmem:[%s1] sm:$0x1]
  %v25 = vld [vmem:[%s2] sm:$0x1]
  %v26 = vld [vmem:[%s3] sm:$0xf]
  %v27 = vld [vmem:[%s3 + $0x4] sm:$0xf]
  %v28 = vld [vmem:[%s3 + $0x8] sm:$0xf]
  %v29 = vld [vmem:[%s3 + $0xc] sm:$0xf]
  %v30 = vld [vmem:[%s4] sm:$0xf]
  %v31 = vld [vmem:[%s4 + $0x4] sm:$0xf]
  %v32 = vld [vmem:[%s4 + $0x8] sm:$0xf]
  %v33 = vld [vmem:[%s4 + $0xc] sm:$0xf]
  %v34 = vld [vmem:[%s5] sm:$0x1]
  %v35 = vld [vmem:[%s0] sm:$0xff]
  %v36 = vld [vmem:[%s0 + $0x8] sm:$0x1]
  %vm37 = vcmask 261120
  %v38 = vsel %vm37, %v35, 0.0
  %39 = vadd.xlane.f32.xlu0 %v38
  %v40 = vpop.xlane.xlu0 %39
  %vm41 = vcmask 253952
  %v42 = vsel %vm41, %v36, 0.0
  %43 = vadd.xlane.f32.xlu0 %v42
  %v44 = vpop.xlane.xlu0 %43
  %v45 = vrcp.pop 32.0
  %v46 = vmul.f32 %v40, %v45
  %v47 = vmul.f32 %v44, %v45
  %v48 = vsub.f32 %v35, %v46
  %v49 = vsub.f32 %v36, %v47
  %v50 = vmul.f32 %v48, %v48
  %v51 = vmul.f32 %v49, %v49
  %v52 = vsel %vm37, %v50, 0.0
  %53 = vadd.xlane.f32.xlu0 %v52
  %v54 = vpop.xlane.xlu0 %53
  %v55 = vsel %vm41, %v51, 0.0
  %56 = vadd.xlane.f32.xlu0 %v55
  %v57 = vpop.xlane.xlu0 %56
  %v58 = vmul.f32 %v54, %v45
  %v59 = vmul.f32 %v57, %v45
  %v60 = vadd.f32 %v58, 1e-05
  %v61 = vadd.f32 %v59, 1e-05
  %v62 = vrsqrt.pop %v60
  %v63 = vrsqrt.pop %v61
  %v64 = vmul.f32 %v48, %v62
  %v65 = vmul.f32 %v49, %v63
  %v67 = vlaneseq
  %v68 = vshrl.u32 %v67, 7
  %v69 = vsub.s32 0, %v68
  %v70 = vrot.slane %v24, %v69
  %v72 = vmul.f32 %v64, %v70
  %v73 = vmul.f32 %v65, %v70
  %v75 = vlaneseq
  %v76 = vshrl.u32 %v75, 7
  %v77 = vsub.s32 0, %v76
  %v78 = vrot.slane %v25, %v77
  %v80 = vadd.f32 %v72, %v78
  %v81 = vadd.f32 %v73, %v78
  %v82 = vpack.c.bf16 %v81, %v80
  %v87 = vunpack.c.l.b16 %v26
  %v88 = vunpack.c.l.b16 %v27
  %v89 = vunpack.c.l.b16 %v28
  %v90 = vunpack.c.l.b16 %v29
  %v91 = vpack.c.b16 %v88, %v87
  %v92 = vpack.c.b16 %v90, %v89
  %v96 = vsel %vm37, %v82, 0
  %98 = vmatprep.subr.bf16.mxu0 0
  %99 = vmatpush1.bf16.msra.mxu0 %v91
  %100 = vmatprep.subr.bf16.mxu0 0
  %101 = vmatpush1.bf16.msra.mxu0 %v92
  %102 = vmatprep.subr.bf16.mxu0 0
  %103 = vmatpush1.bf16.msra.mxu0 0
  %104 = vmatprep.subr.bf16.mxu0 0
  %105 = vmatpush1.bf16.msra.mxu0 0
  %106 = vmatprep.subr.bf16.mxu0 0
  %107 = vmatpush1.bf16.msra.mxu0 0
  %108 = vmatprep.subr.bf16.mxu0 0
  %109 = vmatpush1.bf16.msra.mxu0 0
  %110 = vmatprep.subr.bf16.mxu0 0
  %111 = vmatpush1.bf16.msra.mxu0 0
  %112 = vmatprep.subr.bf16.mxu0 0
  %113 = vmatpush1.bf16.msra.mxu0 0
  %114 = vmatprep.subr.bf16.mxu0 0
  %115 = vmatpush1.bf16.msra.mxu0 0
  %116 = vmatprep.subr.bf16.mxu0 0
  %117 = vmatpush1.bf16.msra.mxu0 0
  %118 = vmatprep.subr.bf16.mxu0 0
  %119 = vmatpush1.bf16.msra.mxu0 0
  %120 = vmatprep.subr.bf16.mxu0 0
  %121 = vmatpush1.bf16.msra.mxu0 0
  %122 = vmatprep.subr.bf16.mxu0 0
  %123 = vmatpush1.bf16.msra.mxu0 0
  %124 = vmatprep.subr.bf16.mxu0 0
  %125 = vmatpush1.bf16.msra.mxu0 0
  %126 = vmatprep.subr.bf16.mxu0 0
  %127 = vmatpush1.bf16.msra.mxu0 0
  %128 = vmatprep.subr.bf16.mxu0 0
  %129 = vmatpush1.bf16.msra.mxu0 0
  %130 = vmatprep.mubr.bf16.mxu0 0
  %131 = vmatmul.mubr.bf16.gmra.mrb[0].mxu0 %v96
  %v132 = vpop.f32.mrb[0].mxu0
  %v133 = vadd.f32 0.0, %v132
  %v134 = vpop.f32.mrb[0].mxu0
  %v135 = vpop.f32.mrb[0].mxu0
  %v136 = vadd.f32 0.0, %v135
  %v137 = vpop.f32.mrb[0].mxu0
  %138 = vdwg.mxu0
  %v139 = vpack.c.bf16 %v136, %v133
  %141 = vrot.lane.b32.xlu0 %v139, 96
  %v142 = vpop.permute.xlu0 %141
  %vm143 = vcmask 130048
  %v145 = vsel %vm143, %v139, 0
  %v148 = vsel %vm143, %v142, 0
  %150 = vmatprep.subr.bf16.mxu0 0
  %151 = vmatpush1.bf16.xpose.msra.mxu0 %v148
  %152 = vmatprep.subr.bf16.mxu0 0
  %153 = vmatpush1.bf16.xpose.msra.mxu0 0
  %154 = vmatprep.subr.bf16.mxu0 0
  %155 = vmatpush1.bf16.xpose.msra.mxu0 0
  %156 = vmatprep.subr.bf16.mxu0 0
  %157 = vmatpush1.bf16.xpose.msra.mxu0 0
  %158 = vmatprep.subr.bf16.mxu0 0
  %159 = vmatpush1.bf16.xpose.msra.mxu0 0
  %160 = vmatprep.subr.bf16.mxu0 0
  %161 = vmatpush1.bf16.xpose.msra.mxu0 0
  %162 = vmatprep.subr.bf16.mxu0 0
  %163 = vmatpush1.bf16.xpose.msra.mxu0 0
  %164 = vmatprep.subr.bf16.mxu0 0
  %165 = vmatpush1.bf16.xpose.msra.mxu0 0
  %166 = vmatprep.subr.bf16.mxu0 0
  %167 = vmatpush1.bf16.xpose.msra.mxu0 0
  %168 = vmatprep.subr.bf16.mxu0 0
  %169 = vmatpush1.bf16.xpose.msra.mxu0 0
  %170 = vmatprep.subr.bf16.mxu0 0
  %171 = vmatpush1.bf16.xpose.msra.mxu0 0
  %172 = vmatprep.subr.bf16.mxu0 0
  %173 = vmatpush1.bf16.xpose.msra.mxu0 0
  %174 = vmatprep.subr.bf16.mxu0 0
  %175 = vmatpush1.bf16.xpose.msra.mxu0 0
  %176 = vmatprep.subr.bf16.mxu0 0
  %177 = vmatpush1.bf16.xpose.msra.mxu0 0
  %178 = vmatprep.subr.bf16.mxu0 0
  %179 = vmatpush1.bf16.xpose.msra.mxu0 0
  %180 = vmatprep.subr.bf16.mxu0 0
  %181 = vmatpush1.bf16.xpose.msra.mxu0 0
  %182 = vmatprep.mubr.bf16.mxu0 0
  %183 = vmatmul.mubr.bf16.gmra.mrb[0].mxu0 %v145
  %v184 = vpop.f32.mrb[0].mxu0
  %v185 = vadd.f32 0.0, %v184
  %v186 = vpop.f32.mrb[0].mxu0
  %v187 = vpop.f32.mrb[0].mxu0
  %v188 = vadd.f32 0.0, %v187
  %v189 = vpop.f32.mrb[0].mxu0
  %190 = vdwg.mxu0
  %v191 = vmul.f32 %v185, 0.25
  %v192 = vmul.f32 %v188, 0.25
  %vm193 = vcmask 72704
  %v194 = vsel %vm193, %v191, -inf
  %195 = vmax.xlane.f32.xlu0 %v194
  %v196 = vpop.xlane.xlu0 %195
  %vm197 = vcmask 65536
  %v198 = vsel %vm197, %v192, -inf
  %199 = vmax.xlane.f32.xlu0 %v198
  %v200 = vpop.xlane.xlu0 %199
  %v201 = vsub.f32 %v191, %v196
  %v202 = vsub.f32 %v192, %v200
  %v203 = vmul.f32 %v201, 1.442695
  %v204 = vpow.pop %v203
  %v205 = vmul.f32 %v202, 1.442695
  %v206 = vpow.pop %v205
  %v207 = vsel %vm193, %v204, 0.0
  %208 = vadd.xlane.f32.xlu0 %v207
  %v209 = vpop.xlane.xlu0 %208
  %v210 = vsel %vm197, %v206, 0.0
  %211 = vadd.xlane.f32.xlu0 %v210
  %v212 = vpop.xlane.xlu0 %211
  %v213 = vrcp.pop %v209
  %v214 = vrcp.pop %v212
  %v215 = vmul.f32 %v204, %v213
  %v216 = vmul.f32 %v206, %v214
  %v217 = vpack.c.bf16 %v216, %v215
  %218 = vrot.lane.b32.xlu0 %v139, 64
  %v219 = vpop.permute.xlu0 %218
  %v221 = vsel %vm193, %v217, 0
  %vm223 = vcmask 1043456
  %vm224 = vcmask 1044480
  %v225 = vsel %vm223, 4294967295, 65535
  %v226 = vsel %vm224, %v225, 0
  %v228 = vand.u32 %v219, %v226
  %230 = vmatprep.subr.bf16.mxu0 0
  %231 = vmatpush1.bf16.msra.mxu0 %v228
  %232 = vmatprep.subr.bf16.mxu0 0
  %233 = vmatpush1.bf16.msra.mxu0 0
  %234 = vmatprep.subr.bf16.mxu0 0
  %235 = vmatpush1.bf16.msra.mxu0 0
  %236 = vmatprep.subr.bf16.mxu0 0
  %237 = vmatpush1.bf16.msra.mxu0 0
  %238 = vmatprep.subr.bf16.mxu0 0
  %239 = vmatpush1.bf16.msra.mxu0 0
  %240 = vmatprep.subr.bf16.mxu0 0
  %241 = vmatpush1.bf16.msra.mxu0 0
  %242 = vmatprep.subr.bf16.mxu0 0
  %243 = vmatpush1.bf16.msra.mxu0 0
  %244 = vmatprep.subr.bf16.mxu0 0
  %245 = vmatpush1.bf16.msra.mxu0 0
  %246 = vmatprep.subr.bf16.mxu0 0
  %247 = vmatpush1.bf16.msra.mxu0 0
  %248 = vmatprep.subr.bf16.mxu0 0
  %249 = vmatpush1.bf16.msra.mxu0 0
  %250 = vmatprep.subr.bf16.mxu0 0
  %251 = vmatpush1.bf16.msra.mxu0 0
  %252 = vmatprep.subr.bf16.mxu0 0
  %253 = vmatpush1.bf16.msra.mxu0 0
  %254 = vmatprep.subr.bf16.mxu0 0
  %255 = vmatpush1.bf16.msra.mxu0 0
  %256 = vmatprep.subr.bf16.mxu0 0
  %257 = vmatpush1.bf16.msra.mxu0 0
  %258 = vmatprep.subr.bf16.mxu0 0
  %259 = vmatpush1.bf16.msra.mxu0 0
  %260 = vmatprep.subr.bf16.mxu0 0
  %261 = vmatpush1.bf16.msra.mxu0 0
  %262 = vmatprep.mubr.bf16.mxu0 0
  %263 = vmatmul.mubr.bf16.gmra.mrb[0].mxu0 %v221
  %v264 = vpop.f32.mrb[0].mxu0
  %v265 = vadd.f32 0.0, %v264
  %v266 = vpop.f32.mrb[0].mxu0
  %v267 = vpop.f32.mrb[0].mxu0
  %v268 = vadd.f32 0.0, %v267
  %v269 = vpop.f32.mrb[0].mxu0
  %270 = vdwg.mxu0
  %271 = vrot.lane.b32.xlu0 %v139, 112
  %v272 = vpop.permute.xlu0 %271
  %273 = vrot.lane.b32.xlu0 %v139, 80
  %v274 = vpop.permute.xlu0 %273
  %v276 = vsel %vm143, %v272, 0
  %v279 = vsel %vm143, %v274, 0
  %281 = vmatprep.subr.bf16.mxu0 0
  %282 = vmatpush1.bf16.xpose.msra.mxu0 %v279
  %283 = vmatprep.subr.bf16.mxu0 0
  %284 = vmatpush1.bf16.xpose.msra.mxu0 0
  %285 = vmatprep.subr.bf16.mxu0 0
  %286 = vmatpush1.bf16.xpose.msra.mxu0 0
  %287 = vmatprep.subr.bf16.mxu0 0
  %288 = vmatpush1.bf16.xpose.msra.mxu0 0
  %289 = vmatprep.subr.bf16.mxu0 0
  %290 = vmatpush1.bf16.xpose.msra.mxu0 0
  %291 = vmatprep.subr.bf16.mxu0 0
  %292 = vmatpush1.bf16.xpose.msra.mxu0 0
  %293 = vmatprep.subr.bf16.mxu0 0
  %294 = vmatpush1.bf16.xpose.msra.mxu0 0
  %295 = vmatprep.subr.bf16.mxu0 0
  %296 = vmatpush1.bf16.xpose.msra.mxu0 0
  %297 = vmatprep.subr.bf16.mxu0 0
  %298 = vmatpush1.bf16.xpose.msra.mxu0 0
  %299 = vmatprep.subr.bf16.mxu0 0
  %300 = vmatpush1.bf16.xpose.msra.mxu0 0
  %301 = vmatprep.subr.bf16.mxu0 0
  %302 = vmatpush1.bf16.xpose.msra.mxu0 0
  %303 = vmatprep.subr.bf16.mxu0 0
  %304 = vmatpush1.bf16.xpose.msra.mxu0 0
  %305 = vmatprep.subr.bf16.mxu0 0
  %306 = vmatpush1.bf16.xpose.msra.mxu0 0
  %307 = vmatprep.subr.bf16.mxu0 0
  %308 = vmatpush1.bf16.xpose.msra.mxu0 0
  %309 = vmatprep.subr.bf16.mxu0 0
  %310 = vmatpush1.bf16.xpose.msra.mxu0 0
  %311 = vmatprep.subr.bf16.mxu0 0
  %312 = vmatpush1.bf16.xpose.msra.mxu0 0
  %313 = vmatprep.mubr.bf16.mxu0 0
  %314 = vmatmul.mubr.bf16.gmra.mrb[0].mxu0 %v276
  %v315 = vpop.f32.mrb[0].mxu0
  %v316 = vadd.f32 0.0, %v315
  %v317 = vpop.f32.mrb[0].mxu0
  %v318 = vpop.f32.mrb[0].mxu0
  %v319 = vadd.f32 0.0, %v318
  %v320 = vpop.f32.mrb[0].mxu0
  %321 = vdwg.mxu0
  %v322 = vmul.f32 %v316, 0.25
  %v323 = vmul.f32 %v319, 0.25
  %v324 = vsel %vm193, %v322, -inf
  %325 = vmax.xlane.f32.xlu0 %v324
  %v326 = vpop.xlane.xlu0 %325
  %v327 = vsel %vm197, %v323, -inf
  %328 = vmax.xlane.f32.xlu0 %v327
  %v329 = vpop.xlane.xlu0 %328
  %v330 = vsub.f32 %v322, %v326
  %v331 = vsub.f32 %v323, %v329
  %v332 = vmul.f32 %v330, 1.442695
  %v333 = vpow.pop %v332
  %v334 = vmul.f32 %v331, 1.442695
  %v335 = vpow.pop %v334
  %v336 = vsel %vm193, %v333, 0.0
  %337 = vadd.xlane.f32.xlu0 %v336
  %v338 = vpop.xlane.xlu0 %337
  %v339 = vsel %vm197, %v335, 0.0
  %340 = vadd.xlane.f32.xlu0 %v339
  %v341 = vpop.xlane.xlu0 %340
  %v342 = vrcp.pop %v338
  %v343 = vrcp.pop %v341
  %v344 = vmul.f32 %v333, %v342
  %v345 = vmul.f32 %v335, %v343
  %v346 = vpack.c.bf16 %v345, %v344
  %347 = vrot.lane.b32.xlu0 %v139, 48
  %v348 = vpop.permute.xlu0 %347
  %v350 = vsel %vm193, %v346, 0
  %v353 = vand.u32 %v348, %v226
  %355 = vmatprep.subr.bf16.mxu0 0
  %356 = vmatpush1.bf16.msra.mxu0 %v353
  %357 = vmatprep.subr.bf16.mxu0 0
  %358 = vmatpush1.bf16.msra.mxu0 0
  %359 = vmatprep.subr.bf16.mxu0 0
  %360 = vmatpush1.bf16.msra.mxu0 0
  %361 = vmatprep.subr.bf16.mxu0 0
  %362 = vmatpush1.bf16.msra.mxu0 0
  %363 = vmatprep.subr.bf16.mxu0 0
  %364 = vmatpush1.bf16.msra.mxu0 0
  %365 = vmatprep.subr.bf16.mxu0 0
  %366 = vmatpush1.bf16.msra.mxu0 0
  %367 = vmatprep.subr.bf16.mxu0 0
  %368 = vmatpush1.bf16.msra.mxu0 0
  %369 = vmatprep.subr.bf16.mxu0 0
  %370 = vmatpush1.bf16.msra.mxu0 0
  %371 = vmatprep.subr.bf16.mxu0 0
  %372 = vmatpush1.bf16.msra.mxu0 0
  %373 = vmatprep.subr.bf16.mxu0 0
  %374 = vmatpush1.bf16.msra.mxu0 0
  %375 = vmatprep.subr.bf16.mxu0 0
  %376 = vmatpush1.bf16.msra.mxu0 0
  %377 = vmatprep.subr.bf16.mxu0 0
  %378 = vmatpush1.bf16.msra.mxu0 0
  %379 = vmatprep.subr.bf16.mxu0 0
  %380 = vmatpush1.bf16.msra.mxu0 0
  %381 = vmatprep.subr.bf16.mxu0 0
  %382 = vmatpush1.bf16.msra.mxu0 0
  %383 = vmatprep.subr.bf16.mxu0 0
  %384 = vmatpush1.bf16.msra.mxu0 0
  %385 = vmatprep.subr.bf16.mxu0 0
  %386 = vmatpush1.bf16.msra.mxu0 0
  %387 = vmatprep.mubr.bf16.mxu0 0
  %388 = vmatmul.mubr.bf16.gmra.mrb[0].mxu0 %v350
  %v389 = vpop.f32.mrb[0].mxu0
  %v390 = vadd.f32 0.0, %v389
  %v391 = vpop.f32.mrb[0].mxu0
  %v392 = vpop.f32.mrb[0].mxu0
  %v393 = vadd.f32 0.0, %v392
  %v394 = vpop.f32.mrb[0].mxu0
  %395 = vdwg.mxu0
  %398 = vrot.lane.b32.xlu0 %v390, 16
  %v399 = vpop.permute.xlu0 %398
  %400 = vrot.lane.b32.xlu0 %v393, 16
  %v401 = vpop.permute.xlu0 %400
  %v404 = vsel %vm143, %v265, %v399
  %v405 = vsel %vm143, %v268, %v401
  %v406 = vpack.c.bf16 %v405, %v404
  %v408 = vlaneseq
  %v409 = vshrl.u32 %v408, 7
  %v410 = vsub.s32 0, %v409
  %v411 = vrot.slane %v34, %v410
  %v417 = vunpack.c.l.b16 %v30
  %v418 = vunpack.c.l.b16 %v31
  %v419 = vunpack.c.l.b16 %v32
  %v420 = vunpack.c.l.b16 %v33
  %v421 = vpack.c.b16 %v418, %v417
  %v422 = vpack.c.b16 %v420, %v419
  %v426 = vsel %vm37, %v406, 0
  %428 = vmatprep.subr.bf16.mxu0 0
  %429 = vmatpush1.bf16.msra.mxu0 %v421
  %430 = vmatprep.subr.bf16.mxu0 0
  %431 = vmatpush1.bf16.msra.mxu0 %v422
  %432 = vmatprep.subr.bf16.mxu0 0
  %433 = vmatpush1.bf16.msra.mxu0 0
  %434 = vmatprep.subr.bf16.mxu0 0
  %435 = vmatpush1.bf16.msra.mxu0 0
  %436 = vmatprep.subr.bf16.mxu0 0
  %437 = vmatpush1.bf16.msra.mxu0 0
  %438 = vmatprep.subr.bf16.mxu0 0
  %439 = vmatpush1.bf16.msra.mxu0 0
  %440 = vmatprep.subr.bf16.mxu0 0
  %441 = vmatpush1.bf16.msra.mxu0 0
  %442 = vmatprep.subr.bf16.mxu0 0
  %443 = vmatpush1.bf16.msra.mxu0 0
  %444 = vmatprep.subr.bf16.mxu0 0
  %445 = vmatpush1.bf16.msra.mxu0 0
  %446 = vmatprep.subr.bf16.mxu0 0
  %447 = vmatpush1.bf16.msra.mxu0 0
  %448 = vmatprep.subr.bf16.mxu0 0
  %449 = vmatpush1.bf16.msra.mxu0 0
  %450 = vmatprep.subr.bf16.mxu0 0
  %451 = vmatpush1.bf16.msra.mxu0 0
  %452 = vmatprep.subr.bf16.mxu0 0
  %453 = vmatpush1.bf16.msra.mxu0 0
  %454 = vmatprep.subr.bf16.mxu0 0
  %455 = vmatpush1.bf16.msra.mxu0 0
  %456 = vmatprep.subr.bf16.mxu0 0
  %457 = vmatpush1.bf16.msra.mxu0 0
  %458 = vmatprep.subr.bf16.mxu0 0
  %459 = vmatpush1.bf16.msra.mxu0 0
  %460 = vmatprep.mubr.bf16.mxu0 0
  %461 = vmatmul.mubr.bf16.gmra.mrb[0].mxu0 %v426
  %v462 = vpop.f32.mrb[0].mxu0
  %v463 = vadd.f32 %v411, %v462
  %v464 = vpop.f32.mrb[0].mxu0
  %v465 = vpop.f32.mrb[0].mxu0
  %v466 = vadd.f32 %v411, %v465
  %v467 = vpop.f32.mrb[0].mxu0
  %468 = vdwg.mxu0
  %v469 = vadd.f32 %v35, %v463
  %v470 = vadd.f32 %v36, %v466
  %471 = vst.msk [vmem:[%s6] sm:$0xff] %vm37, %v469
  %472 = vst.msk [vmem:[%s6 + $0x8] sm:$0x1] %vm41, %v470
  %s473 = scalar_lea.vmem %s0, 16
  %v474 = vld [vmem:[%s473] sm:$0xff]
  %v475 = vld [vmem:[%s473 + $0x8] sm:$0x1]
  %v476 = vsel %vm37, %v474, 0.0
  %477 = vadd.xlane.f32.xlu0 %v476
  %v478 = vpop.xlane.xlu0 %477
  %v479 = vsel %vm41, %v475, 0.0
  %480 = vadd.xlane.f32.xlu0 %v479
  %v481 = vpop.xlane.xlu0 %480
  %v482 = vmul.f32 %v478, %v45
  %v483 = vmul.f32 %v481, %v45
  %v484 = vsub.f32 %v474, %v482
  %v485 = vsub.f32 %v475, %v483
  %v486 = vmul.f32 %v484, %v484
  %v487 = vmul.f32 %v485, %v485
  %v488 = vsel %vm37, %v486, 0.0
  %489 = vadd.xlane.f32.xlu0 %v488
  %v490 = vpop.xlane.xlu0 %489
  %v491 = vsel %vm41, %v487, 0.0
  %492 = vadd.xlane.f32.xlu0 %v491
  %v493 = vpop.xlane.xlu0 %492
  %v494 = vmul.f32 %v490, %v45
  %v495 = vmul.f32 %v493, %v45
  %v496 = vadd.f32 %v494, 1e-05
  %v497 = vadd.f32 %v495, 1e-05
  %v498 = vrsqrt.pop %v496
  %v499 = vrsqrt.pop %v497
  %v500 = vmul.f32 %v484, %v498
  %v501 = vmul.f32 %v485, %v499
  %v502 = vmul.f32 %v500, %v70
  %v503 = vmul.f32 %v501, %v70
  %v504 = vadd.f32 %v502, %v78
  %v505 = vadd.f32 %v503, %v78
  %v506 = vpack.c.bf16 %v505, %v504
  %v508 = vsel %vm37, %v506, 0
  %510 = vmatprep.subr.bf16.mxu0 0
  %511 = vmatpush1.bf16.msra.mxu0 %v91
  %512 = vmatprep.subr.bf16.mxu0 0
  %513 = vmatpush1.bf16.msra.mxu0 %v92
  %514 = vmatprep.subr.bf16.mxu0 0
  %515 = vmatpush1.bf16.msra.mxu0 0
  %516 = vmatprep.subr.bf16.mxu0 0
  %517 = vmatpush1.bf16.msra.mxu0 0
  %518 = vmatprep.subr.bf16.mxu0 0
  %519 = vmatpush1.bf16.msra.mxu0 0
  %520 = vmatprep.subr.bf16.mxu0 0
  %521 = vmatpush1.bf16.msra.mxu0 0
  %522 = vmatprep.subr.bf16.mxu0 0
  %523 = vmatpush1.bf16.msra.mxu0 0
  %524 = vmatprep.subr.bf16.mxu0 0
  %525 = vmatpush1.bf16.msra.mxu0 0
  %526 = vmatprep.subr.bf16.mxu0 0
  %527 = vmatpush1.bf16.msra.mxu0 0
  %528 = vmatprep.subr.bf16.mxu0 0
  %529 = vmatpush1.bf16.msra.mxu0 0
  %530 = vmatprep.subr.bf16.mxu0 0
  %531 = vmatpush1.bf16.msra.mxu0 0
  %532 = vmatprep.subr.bf16.mxu0 0
  %533 = vmatpush1.bf16.msra.mxu0 0
  %534 = vmatprep.subr.bf16.mxu0 0
  %535 = vmatpush1.bf16.msra.mxu0 0
  %536 = vmatprep.subr.bf16.mxu0 0
  %537 = vmatpush1.bf16.msra.mxu0 0
  %538 = vmatprep.subr.bf16.mxu0 0
  %539 = vmatpush1.bf16.msra.mxu0 0
  %540 = vmatprep.subr.bf16.mxu0 0
  %541 = vmatpush1.bf16.msra.mxu0 0
  %542 = vmatprep.mubr.bf16.mxu0 0
  %543 = vmatmul.mubr.bf16.gmra.mrb[0].mxu0 %v508
  %v544 = vpop.f32.mrb[0].mxu0
  %v545 = vadd.f32 0.0, %v544
  %v546 = vpop.f32.mrb[0].mxu0
  %v547 = vpop.f32.mrb[0].mxu0
  %v548 = vadd.f32 0.0, %v547
  %v549 = vpop.f32.mrb[0].mxu0
  %550 = vdwg.mxu0
  %v551 = vpack.c.bf16 %v548, %v545
  %553 = vrot.lane.b32.xlu0 %v551, 96
  %v554 = vpop.permute.xlu0 %553
  %v556 = vsel %vm143, %v551, 0
  %v559 = vsel %vm143, %v554, 0
  %561 = vmatprep.subr.bf16.mxu0 0
  %562 = vmatpush1.bf16.xpose.msra.mxu0 %v559
  %563 = vmatprep.subr.bf16.mxu0 0
  %564 = vmatpush1.bf16.xpose.msra.mxu0 0
  %565 = vmatprep.subr.bf16.mxu0 0
  %566 = vmatpush1.bf16.xpose.msra.mxu0 0
  %567 = vmatprep.subr.bf16.mxu0 0
  %568 = vmatpush1.bf16.xpose.msra.mxu0 0
  %569 = vmatprep.subr.bf16.mxu0 0
  %570 = vmatpush1.bf16.xpose.msra.mxu0 0
  %571 = vmatprep.subr.bf16.mxu0 0
  %572 = vmatpush1.bf16.xpose.msra.mxu0 0
  %573 = vmatprep.subr.bf16.mxu0 0
  %574 = vmatpush1.bf16.xpose.msra.mxu0 0
  %575 = vmatprep.subr.bf16.mxu0 0
  %576 = vmatpush1.bf16.xpose.msra.mxu0 0
  %577 = vmatprep.subr.bf16.mxu0 0
  %578 = vmatpush1.bf16.xpose.msra.mxu0 0
  %579 = vmatprep.subr.bf16.mxu0 0
  %580 = vmatpush1.bf16.xpose.msra.mxu0 0
  %581 = vmatprep.subr.bf16.mxu0 0
  %582 = vmatpush1.bf16.xpose.msra.mxu0 0
  %583 = vmatprep.subr.bf16.mxu0 0
  %584 = vmatpush1.bf16.xpose.msra.mxu0 0
  %585 = vmatprep.subr.bf16.mxu0 0
  %586 = vmatpush1.bf16.xpose.msra.mxu0 0
  %587 = vmatprep.subr.bf16.mxu0 0
  %588 = vmatpush1.bf16.xpose.msra.mxu0 0
  %589 = vmatprep.subr.bf16.mxu0 0
  %590 = vmatpush1.bf16.xpose.msra.mxu0 0
  %591 = vmatprep.subr.bf16.mxu0 0
  %592 = vmatpush1.bf16.xpose.msra.mxu0 0
  %593 = vmatprep.mubr.bf16.mxu0 0
  %594 = vmatmul.mubr.bf16.gmra.mrb[0].mxu0 %v556
  %v595 = vpop.f32.mrb[0].mxu0
  %v596 = vadd.f32 0.0, %v595
  %v597 = vpop.f32.mrb[0].mxu0
  %v598 = vpop.f32.mrb[0].mxu0
  %v599 = vadd.f32 0.0, %v598
  %v600 = vpop.f32.mrb[0].mxu0
  %601 = vdwg.mxu0
  %v602 = vmul.f32 %v596, 0.25
  %v603 = vmul.f32 %v599, 0.25
  %v604 = vsel %vm193, %v602, -inf
  %605 = vmax.xlane.f32.xlu0 %v604
  %v606 = vpop.xlane.xlu0 %605
  %v607 = vsel %vm197, %v603, -inf
  %608 = vmax.xlane.f32.xlu0 %v607
  %v609 = vpop.xlane.xlu0 %608
  %v610 = vsub.f32 %v602, %v606
  %v611 = vsub.f32 %v603, %v609
  %v612 = vmul.f32 %v610, 1.442695
  %v613 = vpow.pop %v612
  %v614 = vmul.f32 %v611, 1.442695
  %v615 = vpow.pop %v614
  %v616 = vsel %vm193, %v613, 0.0
  %617 = vadd.xlane.f32.xlu0 %v616
  %v618 = vpop.xlane.xlu0 %617
  %v619 = vsel %vm197, %v615, 0.0
  %620 = vadd.xlane.f32.xlu0 %v619
  %v621 = vpop.xlane.xlu0 %620
  %v622 = vrcp.pop %v618
  %v623 = vrcp.pop %v621
  %v624 = vmul.f32 %v613, %v622
  %v625 = vmul.f32 %v615, %v623
  %v626 = vpack.c.bf16 %v625, %v624
  %627 = vrot.lane.b32.xlu0 %v551, 64
  %v628 = vpop.permute.xlu0 %627
  %v630 = vsel %vm193, %v626, 0
  %v633 = vand.u32 %v628, %v226
  %635 = vmatprep.subr.bf16.mxu0 0
  %636 = vmatpush1.bf16.msra.mxu0 %v633
  %637 = vmatprep.subr.bf16.mxu0 0
  %638 = vmatpush1.bf16.msra.mxu0 0
  %639 = vmatprep.subr.bf16.mxu0 0
  %640 = vmatpush1.bf16.msra.mxu0 0
  %641 = vmatprep.subr.bf16.mxu0 0
  %642 = vmatpush1.bf16.msra.mxu0 0
  %643 = vmatprep.subr.bf16.mxu0 0
  %644 = vmatpush1.bf16.msra.mxu0 0
  %645 = vmatprep.subr.bf16.mxu0 0
  %646 = vmatpush1.bf16.msra.mxu0 0
  %647 = vmatprep.subr.bf16.mxu0 0
  %648 = vmatpush1.bf16.msra.mxu0 0
  %649 = vmatprep.subr.bf16.mxu0 0
  %650 = vmatpush1.bf16.msra.mxu0 0
  %651 = vmatprep.subr.bf16.mxu0 0
  %652 = vmatpush1.bf16.msra.mxu0 0
  %653 = vmatprep.subr.bf16.mxu0 0
  %654 = vmatpush1.bf16.msra.mxu0 0
  %655 = vmatprep.subr.bf16.mxu0 0
  %656 = vmatpush1.bf16.msra.mxu0 0
  %657 = vmatprep.subr.bf16.mxu0 0
  %658 = vmatpush1.bf16.msra.mxu0 0
  %659 = vmatprep.subr.bf16.mxu0 0
  %660 = vmatpush1.bf16.msra.mxu0 0
  %661 = vmatprep.subr.bf16.mxu0 0
  %662 = vmatpush1.bf16.msra.mxu0 0
  %663 = vmatprep.subr.bf16.mxu0 0
  %664 = vmatpush1.bf16.msra.mxu0 0
  %665 = vmatprep.subr.bf16.mxu0 0
  %666 = vmatpush1.bf16.msra.mxu0 0
  %667 = vmatprep.mubr.bf16.mxu0 0
  %668 = vmatmul.mubr.bf16.gmra.mrb[0].mxu0 %v630
  %v669 = vpop.f32.mrb[0].mxu0
  %v670 = vadd.f32 0.0, %v669
  %v671 = vpop.f32.mrb[0].mxu0
  %v672 = vpop.f32.mrb[0].mxu0
  %v673 = vadd.f32 0.0, %v672
  %v674 = vpop.f32.mrb[0].mxu0
  %675 = vdwg.mxu0
  %676 = vrot.lane.b32.xlu0 %v551, 112
  %v677 = vpop.permute.xlu0 %676
  %678 = vrot.lane.b32.xlu0 %v551, 80
  %v679 = vpop.permute.xlu0 %678
  %v681 = vsel %vm143, %v677, 0
  %v684 = vsel %vm143, %v679, 0
  %686 = vmatprep.subr.bf16.mxu0 0
  %687 = vmatpush1.bf16.xpose.msra.mxu0 %v684
  %688 = vmatprep.subr.bf16.mxu0 0
  %689 = vmatpush1.bf16.xpose.msra.mxu0 0
  %690 = vmatprep.subr.bf16.mxu0 0
  %691 = vmatpush1.bf16.xpose.msra.mxu0 0
  %692 = vmatprep.subr.bf16.mxu0 0
  %693 = vmatpush1.bf16.xpose.msra.mxu0 0
  %694 = vmatprep.subr.bf16.mxu0 0
  %695 = vmatpush1.bf16.xpose.msra.mxu0 0
  %696 = vmatprep.subr.bf16.mxu0 0
  %697 = vmatpush1.bf16.xpose.msra.mxu0 0
  %698 = vmatprep.subr.bf16.mxu0 0
  %699 = vmatpush1.bf16.xpose.msra.mxu0 0
  %700 = vmatprep.subr.bf16.mxu0 0
  %701 = vmatpush1.bf16.xpose.msra.mxu0 0
  %702 = vmatprep.subr.bf16.mxu0 0
  %703 = vmatpush1.bf16.xpose.msra.mxu0 0
  %704 = vmatprep.subr.bf16.mxu0 0
  %705 = vmatpush1.bf16.xpose.msra.mxu0 0
  %706 = vmatprep.subr.bf16.mxu0 0
  %707 = vmatpush1.bf16.xpose.msra.mxu0 0
  %708 = vmatprep.subr.bf16.mxu0 0
  %709 = vmatpush1.bf16.xpose.msra.mxu0 0
  %710 = vmatprep.subr.bf16.mxu0 0
  %711 = vmatpush1.bf16.xpose.msra.mxu0 0
  %712 = vmatprep.subr.bf16.mxu0 0
  %713 = vmatpush1.bf16.xpose.msra.mxu0 0
  %714 = vmatprep.subr.bf16.mxu0 0
  %715 = vmatpush1.bf16.xpose.msra.mxu0 0
  %716 = vmatprep.subr.bf16.mxu0 0
  %717 = vmatpush1.bf16.xpose.msra.mxu0 0
  %718 = vmatprep.mubr.bf16.mxu0 0
  %719 = vmatmul.mubr.bf16.gmra.mrb[0].mxu0 %v681
  %v720 = vpop.f32.mrb[0].mxu0
  %v721 = vadd.f32 0.0, %v720
  %v722 = vpop.f32.mrb[0].mxu0
  %v723 = vpop.f32.mrb[0].mxu0
  %v724 = vadd.f32 0.0, %v723
  %v725 = vpop.f32.mrb[0].mxu0
  %726 = vdwg.mxu0
  %v727 = vmul.f32 %v721, 0.25
  %v728 = vmul.f32 %v724, 0.25
  %v729 = vsel %vm193, %v727, -inf
  %730 = vmax.xlane.f32.xlu0 %v729
  %v731 = vpop.xlane.xlu0 %730
  %v732 = vsel %vm197, %v728, -inf
  %733 = vmax.xlane.f32.xlu0 %v732
  %v734 = vpop.xlane.xlu0 %733
  %v735 = vsub.f32 %v727, %v731
  %v736 = vsub.f32 %v728, %v734
  %v737 = vmul.f32 %v735, 1.442695
  %v738 = vpow.pop %v737
  %v739 = vmul.f32 %v736, 1.442695
  %v740 = vpow.pop %v739
  %v741 = vsel %vm193, %v738, 0.0
  %742 = vadd.xlane.f32.xlu0 %v741
  %v743 = vpop.xlane.xlu0 %742
  %v744 = vsel %vm197, %v740, 0.0
  %745 = vadd.xlane.f32.xlu0 %v744
  %v746 = vpop.xlane.xlu0 %745
  %v747 = vrcp.pop %v743
  %v748 = vrcp.pop %v746
  %v749 = vmul.f32 %v738, %v747
  %v750 = vmul.f32 %v740, %v748
  %v751 = vpack.c.bf16 %v750, %v749
  %752 = vrot.lane.b32.xlu0 %v551, 48
  %v753 = vpop.permute.xlu0 %752
  %v755 = vsel %vm193, %v751, 0
  %v758 = vand.u32 %v753, %v226
  %760 = vmatprep.subr.bf16.mxu0 0
  %761 = vmatpush1.bf16.msra.mxu0 %v758
  %762 = vmatprep.subr.bf16.mxu0 0
  %763 = vmatpush1.bf16.msra.mxu0 0
  %764 = vmatprep.subr.bf16.mxu0 0
  %765 = vmatpush1.bf16.msra.mxu0 0
  %766 = vmatprep.subr.bf16.mxu0 0
  %767 = vmatpush1.bf16.msra.mxu0 0
  %768 = vmatprep.subr.bf16.mxu0 0
  %769 = vmatpush1.bf16.msra.mxu0 0
  %770 = vmatprep.subr.bf16.mxu0 0
  %771 = vmatpush1.bf16.msra.mxu0 0
  %772 = vmatprep.subr.bf16.mxu0 0
  %773 = vmatpush1.bf16.msra.mxu0 0
  %774 = vmatprep.subr.bf16.mxu0 0
  %775 = vmatpush1.bf16.msra.mxu0 0
  %776 = vmatprep.subr.bf16.mxu0 0
  %777 = vmatpush1.bf16.msra.mxu0 0
  %778 = vmatprep.subr.bf16.mxu0 0
  %779 = vmatpush1.bf16.msra.mxu0 0
  %780 = vmatprep.subr.bf16.mxu0 0
  %781 = vmatpush1.bf16.msra.mxu0 0
  %782 = vmatprep.subr.bf16.mxu0 0
  %783 = vmatpush1.bf16.msra.mxu0 0
  %784 = vmatprep.subr.bf16.mxu0 0
  %785 = vmatpush1.bf16.msra.mxu0 0
  %786 = vmatprep.subr.bf16.mxu0 0
  %787 = vmatpush1.bf16.msra.mxu0 0
  %788 = vmatprep.subr.bf16.mxu0 0
  %789 = vmatpush1.bf16.msra.mxu0 0
  %790 = vmatprep.subr.bf16.mxu0 0
  %791 = vmatpush1.bf16.msra.mxu0 0
  %792 = vmatprep.mubr.bf16.mxu0 0
  %793 = vmatmul.mubr.bf16.gmra.mrb[0].mxu0 %v755
  %v794 = vpop.f32.mrb[0].mxu0
  %v795 = vadd.f32 0.0, %v794
  %v796 = vpop.f32.mrb[0].mxu0
  %v797 = vpop.f32.mrb[0].mxu0
  %v798 = vadd.f32 0.0, %v797
  %v799 = vpop.f32.mrb[0].mxu0
  %800 = vdwg.mxu0
  %803 = vrot.lane.b32.xlu0 %v795, 16
  %v804 = vpop.permute.xlu0 %803
  %805 = vrot.lane.b32.xlu0 %v798, 16
  %v806 = vpop.permute.xlu0 %805
  %v809 = vsel %vm143, %v670, %v804
  %v810 = vsel %vm143, %v673, %v806
  %v811 = vpack.c.bf16 %v810, %v809
  %v813 = vsel %vm37, %v811, 0
  %815 = vmatprep.subr.bf16.mxu0 0
  %816 = vmatpush1.bf16.msra.mxu0 %v421
  %817 = vmatprep.subr.bf16.mxu0 0
  %818 = vmatpush1.bf16.msra.mxu0 %v422
  %819 = vmatprep.subr.bf16.mxu0 0
  %820 = vmatpush1.bf16.msra.mxu0 0
  %821 = vmatprep.subr.bf16.mxu0 0
  %822 = vmatpush1.bf16.msra.mxu0 0
  %823 = vmatprep.subr.bf16.mxu0 0
  %824 = vmatpush1.bf16.msra.mxu0 0
  %825 = vmatprep.subr.bf16.mxu0 0
  %826 = vmatpush1.bf16.msra.mxu0 0
  %827 = vmatprep.subr.bf16.mxu0 0
  %828 = vmatpush1.bf16.msra.mxu0 0
  %829 = vmatprep.subr.bf16.mxu0 0
  %830 = vmatpush1.bf16.msra.mxu0 0
  %831 = vmatprep.subr.bf16.mxu0 0
  %832 = vmatpush1.bf16.msra.mxu0 0
  %833 = vmatprep.subr.bf16.mxu0 0
  %834 = vmatpush1.bf16.msra.mxu0 0
  %835 = vmatprep.subr.bf16.mxu0 0
  %836 = vmatpush1.bf16.msra.mxu0 0
  %837 = vmatprep.subr.bf16.mxu0 0
  %838 = vmatpush1.bf16.msra.mxu0 0
  %839 = vmatprep.subr.bf16.mxu0 0
  %840 = vmatpush1.bf16.msra.mxu0 0
  %841 = vmatprep.subr.bf16.mxu0 0
  %842 = vmatpush1.bf16.msra.mxu0 0
  %843 = vmatprep.subr.bf16.mxu0 0
  %844 = vmatpush1.bf16.msra.mxu0 0
  %845 = vmatprep.subr.bf16.mxu0 0
  %846 = vmatpush1.bf16.msra.mxu0 0
  %847 = vmatprep.mubr.bf16.mxu0 0
  %848 = vmatmul.mubr.bf16.gmra.mrb[0].mxu0 %v813
  %v849 = vpop.f32.mrb[0].mxu0
  %v850 = vadd.f32 %v411, %v849
  %v851 = vpop.f32.mrb[0].mxu0
  %v852 = vpop.f32.mrb[0].mxu0
  %v853 = vadd.f32 %v411, %v852
  %v854 = vpop.f32.mrb[0].mxu0
  %855 = vdwg.mxu0
  %v856 = vadd.f32 %v474, %v850
  %v857 = vadd.f32 %v475, %v853
  %s858 = scalar_lea.vmem %s6, 16
  %859 = vst.msk [vmem:[%s858] sm:$0xff] %vm37, %v856
  %860 = vst.msk [vmem:[%s858 + $0x8] sm:$0x1] %vm41, %v857
  // Predicated region
  $region26: #{multiscale_apply.8} parent=0 // pred_check
    _
  $region27: #{multiscale_apply.8} parent=0 // pred_check_branch
    %862 = sbr.rel (0) target = $region29
  $region28: #{multiscale_apply.8} parent=0 // pred_region
    _
  $region29: #{multiscale_apply.8} parent=0 // pred_fallthru
    _
  // Predicated region
  $region30: #{multiscale_apply.8} parent=0 // pred_check
    _
  $region31: #{multiscale_apply.8} parent=0 // pred_check_branch
    %864 = sbr.rel (0) target = $region33
  $region32: #{multiscale_apply.8} parent=0 // pred_region
    _
  $region33: #{multiscale_apply.8} parent=0 // pred_fallthru
    _

// kernel: multiscale_apply.12
$region0: #{multiscale_apply.12}
  #allocation0 [shape = 'u32[]', space=smem, size = 0x4, offset = 0x4, fixed_abs, tag = 'smem constant byte address 0x4 - core index']
  #allocation1 [shape = 'u32[144,128]{1,0:T(1,128)}', space=vmem, size = 0x12000, scoped, tag = 'internal scratch']
  %s0 = inlined_call_operand.vmem [shape: f32[2,5,64], index: 0, kind: input, shape index: {}]
  %s1 = inlined_call_operand.vmem [shape: f32[1,64], index: 1, kind: input, shape index: {}]
  %s2 = inlined_call_operand.vmem [shape: f32[1,64], index: 2, kind: input, shape index: {}]
  %s3 = inlined_call_operand.vmem [shape: bf16[64,192], index: 3, kind: input, shape index: {}]
  %s4 = inlined_call_operand.vmem [shape: bf16[64,64], index: 4, kind: input, shape index: {}]
  %s5 = inlined_call_operand.vmem [shape: f32[1,64], index: 5, kind: input, shape index: {}]
  %s6 = inlined_call_operand.vmem [shape: f32[2,5,64], index: 6, kind: output, shape index: {}]
  %s7 = sld [smem:[#allocation0]]
  $region34: #{multiscale_apply.12} parent=0
    _
  %s9 = ssub.s32 1, %s7
  %s10 = scalar_select 0, %s9, %s7
  // Predicated region
  $region2: #{multiscale_apply.12} parent=0 // pred_check
    _
  $region3: #{multiscale_apply.12} parent=0 // pred_check_branch
    %12 = sbr.rel (0) target = $region5
  $region4: #{multiscale_apply.12} parent=0 // pred_region
    _
  $region5: #{multiscale_apply.12} parent=0 // pred_fallthru
    _
  // Predicated region
  $region6: #{multiscale_apply.12} parent=0 // pred_check
    _
  $region7: #{multiscale_apply.12} parent=0 // pred_check_branch
    %14 = sbr.rel (0) target = $region9
  $region8: #{multiscale_apply.12} parent=0 // pred_region
    _
  $region9: #{multiscale_apply.12} parent=0 // pred_fallthru
    _
  // Predicated region
  $region10: #{multiscale_apply.12} parent=0 // pred_check
    _
  $region11: #{multiscale_apply.12} parent=0 // pred_check_branch
    %16 = sbr.rel (0) target = $region13
  $region12: #{multiscale_apply.12} parent=0 // pred_region
    _
  $region13: #{multiscale_apply.12} parent=0 // pred_fallthru
    _
  // Predicated region
  $region14: #{multiscale_apply.12} parent=0 // pred_check
    _
  $region15: #{multiscale_apply.12} parent=0 // pred_check_branch
    %18 = sbr.rel (0) target = $region17
  $region16: #{multiscale_apply.12} parent=0 // pred_region
    _
  $region17: #{multiscale_apply.12} parent=0 // pred_fallthru
    _
  // Predicated region
  $region18: #{multiscale_apply.12} parent=0 // pred_check
    _
  $region19: #{multiscale_apply.12} parent=0 // pred_check_branch
    %20 = sbr.rel (0) target = $region21
  $region20: #{multiscale_apply.12} parent=0 // pred_region
    _
  $region21: #{multiscale_apply.12} parent=0 // pred_fallthru
    _
  // Predicated region
  $region22: #{multiscale_apply.12} parent=0 // pred_check
    _
  $region23: #{multiscale_apply.12} parent=0 // pred_check_branch
    %22 = sbr.rel (0) target = $region25
  $region24: #{multiscale_apply.12} parent=0 // pred_region
    _
  $region25: #{multiscale_apply.12} parent=0 // pred_fallthru
    _
  %v24 = vld [vmem:[%s1] sm:$0x1]
  %v25 = vld [vmem:[%s2] sm:$0x1]
  %v26 = vld [vmem:[%s3] sm:$0xff]
  %v27 = vld [vmem:[%s3 + $0x8] sm:$0xff]
  %v28 = vld [vmem:[%s3 + $0x10] sm:$0xff]
  %v29 = vld [vmem:[%s3 + $0x18] sm:$0xff]
  %v30 = vld [vmem:[%s3 + $0x20] sm:$0xff]
  %v31 = vld [vmem:[%s3 + $0x28] sm:$0xff]
  %v32 = vld [vmem:[%s3 + $0x30] sm:$0xff]
  %v33 = vld [vmem:[%s3 + $0x38] sm:$0xff]
  %v34 = vld [vmem:[%s4] sm:$0xf]
  %v35 = vld [vmem:[%s4 + $0x4] sm:$0xf]
  %v36 = vld [vmem:[%s4 + $0x8] sm:$0xf]
  %v37 = vld [vmem:[%s4 + $0xc] sm:$0xf]
  %v38 = vld [vmem:[%s4 + $0x10] sm:$0xf]
  %v39 = vld [vmem:[%s4 + $0x14] sm:$0xf]
  %v40 = vld [vmem:[%s4 + $0x18] sm:$0xf]
  %v41 = vld [vmem:[%s4 + $0x1c] sm:$0xf]
  %v42 = vld [vmem:[%s5] sm:$0x1]
  %v43 = vld [vmem:[%s0] sm:$0x1f]
  %vm44 = vcmask 520192
  %v45 = vsel %vm44, %v43, 0.0
  %46 = vadd.xlane.f32.xlu0 %v45
  %v47 = vpop.xlane.xlu0 %46
  %v48 = vrcp.pop 64.0
  %v49 = vmul.f32 %v47, %v48
  %v50 = vsub.f32 %v43, %v49
  %v51 = vmul.f32 %v50, %v50
  %v52 = vsel %vm44, %v51, 0.0
  %53 = vadd.xlane.f32.xlu0 %v52
  %v54 = vpop.xlane.xlu0 %53
  %v55 = vmul.f32 %v54, %v48
  %v56 = vadd.f32 %v55, 1e-05
  %v57 = vrsqrt.pop %v56
  %v58 = vmul.f32 %v50, %v57
  %v60 = vlaneseq
  %v61 = vshrl.u32 %v60, 7
  %v62 = vsub.s32 0, %v61
  %v63 = vrot.slane %v24, %v62
  %v65 = vmul.f32 %v58, %v63
  %v67 = vlaneseq
  %v68 = vshrl.u32 %v67, 7
  %v69 = vsub.s32 0, %v68
  %v70 = vrot.slane %v25, %v69
  %v72 = vadd.f32 %v65, %v70
  %v73 = vpack.c.bf16 %v72, %v72
  %v82 = vunpack.c.l.b16 %v26
  %v83 = vunpack.c.h.b16 %v26
  %v84 = vunpack.c.l.b16 %v27
  %v85 = vunpack.c.h.b16 %v27
  %v86 = vunpack.c.l.b16 %v28
  %v87 = vunpack.c.h.b16 %v28
  %v88 = vunpack.c.l.b16 %v29
  %v89 = vunpack.c.h.b16 %v29
  %v90 = vunpack.c.l.b16 %v30
  %v91 = vunpack.c.h.b16 %v30
  %v92 = vunpack.c.l.b16 %v31
  %v93 = vunpack.c.h.b16 %v31
  %v94 = vunpack.c.l.b16 %v32
  %v95 = vunpack.c.h.b16 %v32
  %v96 = vunpack.c.l.b16 %v33
  %v97 = vunpack.c.h.b16 %v33
  %v98 = vpack.c.b16 %v84, %v82
  %v99 = vpack.c.b16 %v85, %v83
  %v100 = vpack.c.b16 %v88, %v86
  %v101 = vpack.c.b16 %v89, %v87
  %v102 = vpack.c.b16 %v92, %v90
  %v103 = vpack.c.b16 %v93, %v91
  %v104 = vpack.c.b16 %v96, %v94
  %v105 = vpack.c.b16 %v97, %v95
  %vm114 = vcmask 523264
  %v116 = vsel %vm114, %v73, 0
  %118 = vmatprep.subr.bf16.mxu0 %v99
  %119 = vmatpush1.bf16.msra.mxu0 %v98
  %120 = vmatprep.subr.bf16.mxu0 %v101
  %121 = vmatpush1.bf16.msra.mxu0 %v100
  %122 = vmatprep.subr.bf16.mxu0 %v103
  %123 = vmatpush1.bf16.msra.mxu0 %v102
  %124 = vmatprep.subr.bf16.mxu0 %v105
  %125 = vmatpush1.bf16.msra.mxu0 %v104
  %126 = vmatprep.subr.bf16.mxu0 0
  %127 = vmatpush1.bf16.msra.mxu0 0
  %128 = vmatprep.subr.bf16.mxu0 0
  %129 = vmatpush1.bf16.msra.mxu0 0
  %130 = vmatprep.subr.bf16.mxu0 0
  %131 = vmatpush1.bf16.msra.mxu0 0
  %132 = vmatprep.subr.bf16.mxu0 0
  %133 = vmatpush1.bf16.msra.mxu0 0
  %134 = vmatprep.subr.bf16.mxu0 0
  %135 = vmatpush1.bf16.msra.mxu0 0
  %136 = vmatprep.subr.bf16.mxu0 0
  %137 = vmatpush1.bf16.msra.mxu0 0
  %138 = vmatprep.subr.bf16.mxu0 0
  %139 = vmatpush1.bf16.msra.mxu0 0
  %140 = vmatprep.subr.bf16.mxu0 0
  %141 = vmatpush1.bf16.msra.mxu0 0
  %142 = vmatprep.subr.bf16.mxu0 0
  %143 = vmatpush1.bf16.msra.mxu0 0
  %144 = vmatprep.subr.bf16.mxu0 0
  %145 = vmatpush1.bf16.msra.mxu0 0
  %146 = vmatprep.subr.bf16.mxu0 0
  %147 = vmatpush1.bf16.msra.mxu0 0
  %148 = vmatprep.subr.bf16.mxu0 0
  %149 = vmatpush1.bf16.msra.mxu0 0
  %150 = vmatprep.mubr.bf16.mxu0 0
  %151 = vmatmul.mubr.bf16.gmra.mrb[0].mxu0 %v116
  %v152 = vpop.f32.mrb[0].mxu0
  %v153 = vadd.f32 0.0, %v152
  %v154 = vpop.f32.mrb[0].mxu0
  %v155 = vadd.f32 0.0, %v154
  %v156 = vpop.f32.mrb[0].mxu0
  %v157 = vpop.f32.mrb[0].mxu0
  %158 = vdwg.mxu0
  %v159 = vpack.c.bf16 %v153, %v153
  %161 = vrot.lane.b32.xlu0 %v159, 64
  %v162 = vpop.permute.xlu0 %161
  %vm163 = vcmask 261120
  %v165 = vsel %vm163, %v159, 0
  %v168 = vsel %vm163, %v162, 0
  %170 = vmatprep.subr.bf16.mxu0 0
  %171 = vmatpush1.bf16.xpose.msra.mxu0 %v168
  %172 = vmatprep.subr.bf16.mxu0 0
  %173 = vmatpush1.bf16.xpose.msra.mxu0 0
  %174 = vmatprep.subr.bf16.mxu0 0
  %175 = vmatpush1.bf16.xpose.msra.mxu0 0
  %176 = vmatprep.subr.bf16.mxu0 0
  %177 = vmatpush1.bf16.xpose.msra.mxu0 0
  %178 = vmatprep.subr.bf16.mxu0 0
  %179 = vmatpush1.bf16.xpose.msra.mxu0 0
  %180 = vmatprep.subr.bf16.mxu0 0
  %181 = vmatpush1.bf16.xpose.msra.mxu0 0
  %182 = vmatprep.subr.bf16.mxu0 0
  %183 = vmatpush1.bf16.xpose.msra.mxu0 0
  %184 = vmatprep.subr.bf16.mxu0 0
  %185 = vmatpush1.bf16.xpose.msra.mxu0 0
  %186 = vmatprep.subr.bf16.mxu0 0
  %187 = vmatpush1.bf16.xpose.msra.mxu0 0
  %188 = vmatprep.subr.bf16.mxu0 0
  %189 = vmatpush1.bf16.xpose.msra.mxu0 0
  %190 = vmatprep.subr.bf16.mxu0 0
  %191 = vmatpush1.bf16.xpose.msra.mxu0 0
  %192 = vmatprep.subr.bf16.mxu0 0
  %193 = vmatpush1.bf16.xpose.msra.mxu0 0
  %194 = vmatprep.subr.bf16.mxu0 0
  %195 = vmatpush1.bf16.xpose.msra.mxu0 0
  %196 = vmatprep.subr.bf16.mxu0 0
  %197 = vmatpush1.bf16.xpose.msra.mxu0 0
  %198 = vmatprep.subr.bf16.mxu0 0
  %199 = vmatpush1.bf16.xpose.msra.mxu0 0
  %200 = vmatprep.subr.bf16.mxu0 0
  %201 = vmatpush1.bf16.xpose.msra.mxu0 0
  %202 = vmatprep.mubr.bf16.mxu0 0
  %203 = vmatmul.mubr.bf16.gmra.mrb[0].mxu0 %v165
  %v204 = vpop.f32.mrb[0].mxu0
  %v205 = vadd.f32 0.0, %v204
  %v206 = vpop.f32.mrb[0].mxu0
  %v207 = vpop.f32.mrb[0].mxu0
  %v208 = vpop.f32.mrb[0].mxu0
  %209 = vdwg.mxu0
  %v210 = vmul.f32 %v205, 0.17677669
  %vm211 = vcmask 36864
  %v212 = vsel %vm211, %v210, -inf
  %213 = vmax.xlane.f32.xlu0 %v212
  %v214 = vpop.xlane.xlu0 %213
  %v215 = vsub.f32 %v210, %v214
  %v216 = vmul.f32 %v215, 1.442695
  %v217 = vpow.pop %v216
  %v218 = vsel %vm211, %v217, 0.0
  %219 = vadd.xlane.f32.xlu0 %v218
  %v220 = vpop.xlane.xlu0 %219
  %v221 = vrcp.pop %v220
  %v222 = vmul.f32 %v217, %v221
  %v223 = vpack.c.bf16 %v222, %v222
  %v224 = vpack.c.bf16 %v155, %v155
  %vm225 = vcmask 39936
  %v227 = vsel %vm225, %v223, 0
  %vm229 = vcmask 1041408
  %vm230 = vcmask 1042432
  %v231 = vsel %vm229, 4294967295, 65535
  %v232 = vsel %vm230, %v231, 0
  %v234 = vand.u32 %v224, %v232
  %236 = vmatprep.subr.bf16.mxu0 0
  %237 = vmatpush1.bf16.msra.mxu0 %v234
  %238 = vmatprep.subr.bf16.mxu0 0
  %239 = vmatpush1.bf16.msra.mxu0 0
  %240 = vmatprep.subr.bf16.mxu0 0
  %241 = vmatpush1.bf16.msra.mxu0 0
  %242 = vmatprep.subr.bf16.mxu0 0
  %243 = vmatpush1.bf16.msra.mxu0 0
  %244 = vmatprep.subr.bf16.mxu0 0
  %245 = vmatpush1.bf16.msra.mxu0 0
  %246 = vmatprep.subr.bf16.mxu0 0
  %247 = vmatpush1.bf16.msra.mxu0 0
  %248 = vmatprep.subr.bf16.mxu0 0
  %249 = vmatpush1.bf16.msra.mxu0 0
  %250 = vmatprep.subr.bf16.mxu0 0
  %251 = vmatpush1.bf16.msra.mxu0 0
  %252 = vmatprep.subr.bf16.mxu0 0
  %253 = vmatpush1.bf16.msra.mxu0 0
  %254 = vmatprep.subr.bf16.mxu0 0
  %255 = vmatpush1.bf16.msra.mxu0 0
  %256 = vmatprep.subr.bf16.mxu0 0
  %257 = vmatpush1.bf16.msra.mxu0 0
  %258 = vmatprep.subr.bf16.mxu0 0
  %259 = vmatpush1.bf16.msra.mxu0 0
  %260 = vmatprep.subr.bf16.mxu0 0
  %261 = vmatpush1.bf16.msra.mxu0 0
  %262 = vmatprep.subr.bf16.mxu0 0
  %263 = vmatpush1.bf16.msra.mxu0 0
  %264 = vmatprep.subr.bf16.mxu0 0
  %265 = vmatpush1.bf16.msra.mxu0 0
  %266 = vmatprep.subr.bf16.mxu0 0
  %267 = vmatpush1.bf16.msra.mxu0 0
  %268 = vmatprep.mubr.bf16.mxu0 0
  %269 = vmatmul.mubr.bf16.gmra.mrb[0].mxu0 %v227
  %v270 = vpop.f32.mrb[0].mxu0
  %v271 = vadd.f32 0.0, %v270
  %v272 = vpop.f32.mrb[0].mxu0
  %v273 = vpop.f32.mrb[0].mxu0
  %v274 = vpop.f32.mrb[0].mxu0
  %275 = vdwg.mxu0
  %276 = vrot.lane.b32.xlu0 %v159, 96
  %v277 = vpop.permute.xlu0 %276
  %278 = vrot.lane.b32.xlu0 %v159, 32
  %v279 = vpop.permute.xlu0 %278
  %v281 = vsel %vm163, %v277, 0
  %v284 = vsel %vm163, %v279, 0
  %286 = vmatprep.subr.bf16.mxu0 0
  %287 = vmatpush1.bf16.xpose.msra.mxu0 %v284
  %288 = vmatprep.subr.bf16.mxu0 0
  %289 = vmatpush1.bf16.xpose.msra.mxu0 0
  %290 = vmatprep.subr.bf16.mxu0 0
  %291 = vmatpush1.bf16.xpose.msra.mxu0 0
  %292 = vmatprep.subr.bf16.mxu0 0
  %293 = vmatpush1.bf16.xpose.msra.mxu0 0
  %294 = vmatprep.subr.bf16.mxu0 0
  %295 = vmatpush1.bf16.xpose.msra.mxu0 0
  %296 = vmatprep.subr.bf16.mxu0 0
  %297 = vmatpush1.bf16.xpose.msra.mxu0 0
  %298 = vmatprep.subr.bf16.mxu0 0
  %299 = vmatpush1.bf16.xpose.msra.mxu0 0
  %300 = vmatprep.subr.bf16.mxu0 0
  %301 = vmatpush1.bf16.xpose.msra.mxu0 0
  %302 = vmatprep.subr.bf16.mxu0 0
  %303 = vmatpush1.bf16.xpose.msra.mxu0 0
  %304 = vmatprep.subr.bf16.mxu0 0
  %305 = vmatpush1.bf16.xpose.msra.mxu0 0
  %306 = vmatprep.subr.bf16.mxu0 0
  %307 = vmatpush1.bf16.xpose.msra.mxu0 0
  %308 = vmatprep.subr.bf16.mxu0 0
  %309 = vmatpush1.bf16.xpose.msra.mxu0 0
  %310 = vmatprep.subr.bf16.mxu0 0
  %311 = vmatpush1.bf16.xpose.msra.mxu0 0
  %312 = vmatprep.subr.bf16.mxu0 0
  %313 = vmatpush1.bf16.xpose.msra.mxu0 0
  %314 = vmatprep.subr.bf16.mxu0 0
  %315 = vmatpush1.bf16.xpose.msra.mxu0 0
  %316 = vmatprep.subr.bf16.mxu0 0
  %317 = vmatpush1.bf16.xpose.msra.mxu0 0
  %318 = vmatprep.mubr.bf16.mxu0 0
  %319 = vmatmul.mubr.bf16.gmra.mrb[0].mxu0 %v281
  %v320 = vpop.f32.mrb[0].mxu0
  %v321 = vadd.f32 0.0, %v320
  %v322 = vpop.f32.mrb[0].mxu0
  %v323 = vpop.f32.mrb[0].mxu0
  %v324 = vpop.f32.mrb[0].mxu0
  %325 = vdwg.mxu0
  %v326 = vmul.f32 %v321, 0.17677669
  %v327 = vsel %vm211, %v326, -inf
  %328 = vmax.xlane.f32.xlu0 %v327
  %v329 = vpop.xlane.xlu0 %328
  %v330 = vsub.f32 %v326, %v329
  %v331 = vmul.f32 %v330, 1.442695
  %v332 = vpow.pop %v331
  %v333 = vsel %vm211, %v332, 0.0
  %334 = vadd.xlane.f32.xlu0 %v333
  %v335 = vpop.xlane.xlu0 %334
  %v336 = vrcp.pop %v335
  %v337 = vmul.f32 %v332, %v336
  %v338 = vpack.c.bf16 %v337, %v337
  %340 = vrot.lane.b32.xlu0 %v224, 96
  %v341 = vpop.permute.xlu0 %340
  %v343 = vsel %vm225, %v338, 0
  %v346 = vand.u32 %v341, %v232
  %348 = vmatprep.subr.bf16.mxu0 0
  %349 = vmatpush1.bf16.msra.mxu0 %v346
  %350 = vmatprep.subr.bf16.mxu0 0
  %351 = vmatpush1.bf16.msra.mxu0 0
  %352 = vmatprep.subr.bf16.mxu0 0
  %353 = vmatpush1.bf16.msra.mxu0 0
  %354 = vmatprep.subr.bf16.mxu0 0
  %355 = vmatpush1.bf16.msra.mxu0 0
  %356 = vmatprep.subr.bf16.mxu0 0
  %357 = vmatpush1.bf16.msra.mxu0 0
  %358 = vmatprep.subr.bf16.mxu0 0
  %359 = vmatpush1.bf16.msra.mxu0 0
  %360 = vmatprep.subr.bf16.mxu0 0
  %361 = vmatpush1.bf16.msra.mxu0 0
  %362 = vmatprep.subr.bf16.mxu0 0
  %363 = vmatpush1.bf16.msra.mxu0 0
  %364 = vmatprep.subr.bf16.mxu0 0
  %365 = vmatpush1.bf16.msra.mxu0 0
  %366 = vmatprep.subr.bf16.mxu0 0
  %367 = vmatpush1.bf16.msra.mxu0 0
  %368 = vmatprep.subr.bf16.mxu0 0
  %369 = vmatpush1.bf16.msra.mxu0 0
  %370 = vmatprep.subr.bf16.mxu0 0
  %371 = vmatpush1.bf16.msra.mxu0 0
  %372 = vmatprep.subr.bf16.mxu0 0
  %373 = vmatpush1.bf16.msra.mxu0 0
  %374 = vmatprep.subr.bf16.mxu0 0
  %375 = vmatpush1.bf16.msra.mxu0 0
  %376 = vmatprep.subr.bf16.mxu0 0
  %377 = vmatpush1.bf16.msra.mxu0 0
  %378 = vmatprep.subr.bf16.mxu0 0
  %379 = vmatpush1.bf16.msra.mxu0 0
  %380 = vmatprep.mubr.bf16.mxu0 0
  %381 = vmatmul.mubr.bf16.gmra.mrb[0].mxu0 %v343
  %v382 = vpop.f32.mrb[0].mxu0
  %v383 = vadd.f32 0.0, %v382
  %v384 = vpop.f32.mrb[0].mxu0
  %v385 = vpop.f32.mrb[0].mxu0
  %v386 = vpop.f32.mrb[0].mxu0
  %387 = vdwg.mxu0
  %389 = vrot.lane.b32.xlu0 %v383, 32
  %v390 = vpop.permute.xlu0 %389
  %v392 = vsel %vm163, %v271, %v390
  %v393 = vpack.c.bf16 %v392, %v392
  %v395 = vlaneseq
  %v396 = vshrl.u32 %v395, 7
  %v397 = vsub.s32 0, %v396
  %v398 = vrot.slane %v42, %v397
  %v408 = vunpack.c.l.b16 %v34
  %v409 = vunpack.c.l.b16 %v35
  %v410 = vunpack.c.l.b16 %v36
  %v411 = vunpack.c.l.b16 %v37
  %v412 = vunpack.c.l.b16 %v38
  %v413 = vunpack.c.l.b16 %v39
  %v414 = vunpack.c.l.b16 %v40
  %v415 = vunpack.c.l.b16 %v41
  %v416 = vpack.c.b16 %v409, %v408
  %v417 = vpack.c.b16 %v411, %v410
  %v418 = vpack.c.b16 %v413, %v412
  %v419 = vpack.c.b16 %v415, %v414
  %v425 = vsel %vm114, %v393, 0
  %427 = vmatprep.subr.bf16.mxu0 0
  %428 = vmatpush1.bf16.msra.mxu0 %v416
  %429 = vmatprep.subr.bf16.mxu0 0
  %430 = vmatpush1.bf16.msra.mxu0 %v417
  %431 = vmatprep.subr.bf16.mxu0 0
  %432 = vmatpush1.bf16.msra.mxu0 %v418
  %433 = vmatprep.subr.bf16.mxu0 0
  %434 = vmatpush1.bf16.msra.mxu0 %v419
  %435 = vmatprep.subr.bf16.mxu0 0
  %436 = vmatpush1.bf16.msra.mxu0 0
  %437 = vmatprep.subr.bf16.mxu0 0
  %438 = vmatpush1.bf16.msra.mxu0 0
  %439 = vmatprep.subr.bf16.mxu0 0
  %440 = vmatpush1.bf16.msra.mxu0 0
  %441 = vmatprep.subr.bf16.mxu0 0
  %442 = vmatpush1.bf16.msra.mxu0 0
  %443 = vmatprep.subr.bf16.mxu0 0
  %444 = vmatpush1.bf16.msra.mxu0 0
  %445 = vmatprep.subr.bf16.mxu0 0
  %446 = vmatpush1.bf16.msra.mxu0 0
  %447 = vmatprep.subr.bf16.mxu0 0
  %448 = vmatpush1.bf16.msra.mxu0 0
  %449 = vmatprep.subr.bf16.mxu0 0
  %450 = vmatpush1.bf16.msra.mxu0 0
  %451 = vmatprep.subr.bf16.mxu0 0
  %452 = vmatpush1.bf16.msra.mxu0 0
  %453 = vmatprep.subr.bf16.mxu0 0
  %454 = vmatpush1.bf16.msra.mxu0 0
  %455 = vmatprep.subr.bf16.mxu0 0
  %456 = vmatpush1.bf16.msra.mxu0 0
  %457 = vmatprep.subr.bf16.mxu0 0
  %458 = vmatpush1.bf16.msra.mxu0 0
  %459 = vmatprep.mubr.bf16.mxu0 0
  %460 = vmatmul.mubr.bf16.gmra.mrb[0].mxu0 %v425
  %v461 = vpop.f32.mrb[0].mxu0
  %v462 = vadd.f32 %v398, %v461
  %v463 = vpop.f32.mrb[0].mxu0
  %v464 = vpop.f32.mrb[0].mxu0
  %v465 = vpop.f32.mrb[0].mxu0
  %466 = vdwg.mxu0
  %v467 = vadd.f32 %v43, %v462
  %468 = vst.msk [vmem:[%s6] sm:$0x1f] %vm44, %v467
  %s469 = scalar_lea.vmem %s0, 8
  %v470 = vld [vmem:[%s469] sm:$0x1f]
  %v471 = vsel %vm44, %v470, 0.0
  %472 = vadd.xlane.f32.xlu0 %v471
  %v473 = vpop.xlane.xlu0 %472
  %v474 = vmul.f32 %v473, %v48
  %v475 = vsub.f32 %v470, %v474
  %v476 = vmul.f32 %v475, %v475
  %v477 = vsel %vm44, %v476, 0.0
  %478 = vadd.xlane.f32.xlu0 %v477
  %v479 = vpop.xlane.xlu0 %478
  %v480 = vmul.f32 %v479, %v48
  %v481 = vadd.f32 %v480, 1e-05
  %v482 = vrsqrt.pop %v481
  %v483 = vmul.f32 %v475, %v482
  %v484 = vmul.f32 %v483, %v63
  %v485 = vadd.f32 %v484, %v70
  %v486 = vpack.c.bf16 %v485, %v485
  %v488 = vsel %vm114, %v486, 0
  %490 = vmatprep.subr.bf16.mxu0 %v99
  %491 = vmatpush1.bf16.msra.mxu0 %v98
  %492 = vmatprep.subr.bf16.mxu0 %v101
  %493 = vmatpush1.bf16.msra.mxu0 %v100
  %494 = vmatprep.subr.bf16.mxu0 %v103
  %495 = vmatpush1.bf16.msra.mxu0 %v102
  %496 = vmatprep.subr.bf16.mxu0 %v105
  %497 = vmatpush1.bf16.msra.mxu0 %v104
  %498 = vmatprep.subr.bf16.mxu0 0
  %499 = vmatpush1.bf16.msra.mxu0 0
  %500 = vmatprep.subr.bf16.mxu0 0
  %501 = vmatpush1.bf16.msra.mxu0 0
  %502 = vmatprep.subr.bf16.mxu0 0
  %503 = vmatpush1.bf16.msra.mxu0 0
  %504 = vmatprep.subr.bf16.mxu0 0
  %505 = vmatpush1.bf16.msra.mxu0 0
  %506 = vmatprep.subr.bf16.mxu0 0
  %507 = vmatpush1.bf16.msra.mxu0 0
  %508 = vmatprep.subr.bf16.mxu0 0
  %509 = vmatpush1.bf16.msra.mxu0 0
  %510 = vmatprep.subr.bf16.mxu0 0
  %511 = vmatpush1.bf16.msra.mxu0 0
  %512 = vmatprep.subr.bf16.mxu0 0
  %513 = vmatpush1.bf16.msra.mxu0 0
  %514 = vmatprep.subr.bf16.mxu0 0
  %515 = vmatpush1.bf16.msra.mxu0 0
  %516 = vmatprep.subr.bf16.mxu0 0
  %517 = vmatpush1.bf16.msra.mxu0 0
  %518 = vmatprep.subr.bf16.mxu0 0
  %519 = vmatpush1.bf16.msra.mxu0 0
  %520 = vmatprep.subr.bf16.mxu0 0
  %521 = vmatpush1.bf16.msra.mxu0 0
  %522 = vmatprep.mubr.bf16.mxu0 0
  %523 = vmatmul.mubr.bf16.gmra.mrb[0].mxu0 %v488
  %v524 = vpop.f32.mrb[0].mxu0
  %v525 = vadd.f32 0.0, %v524
  %v526 = vpop.f32.mrb[0].mxu0
  %v527 = vadd.f32 0.0, %v526
  %v528 = vpop.f32.mrb[0].mxu0
  %v529 = vpop.f32.mrb[0].mxu0
  %530 = vdwg.mxu0
  %v531 = vpack.c.bf16 %v525, %v525
  %533 = vrot.lane.b32.xlu0 %v531, 64
  %v534 = vpop.permute.xlu0 %533
  %v536 = vsel %vm163, %v531, 0
  %v539 = vsel %vm163, %v534, 0
  %541 = vmatprep.subr.bf16.mxu0 0
  %542 = vmatpush1.bf16.xpose.msra.mxu0 %v539
  %543 = vmatprep.subr.bf16.mxu0 0
  %544 = vmatpush1.bf16.xpose.msra.mxu0 0
  %545 = vmatprep.subr.bf16.mxu0 0
  %546 = vmatpush1.bf16.xpose.msra.mxu0 0
  %547 = vmatprep.subr.bf16.mxu0 0
  %548 = vmatpush1.bf16.xpose.msra.mxu0 0
  %549 = vmatprep.subr.bf16.mxu0 0
  %550 = vmatpush1.bf16.xpose.msra.mxu0 0
  %551 = vmatprep.subr.bf16.mxu0 0
  %552 = vmatpush1.bf16.xpose.msra.mxu0 0
  %553 = vmatprep.subr.bf16.mxu0 0
  %554 = vmatpush1.bf16.xpose.msra.mxu0 0
  %555 = vmatprep.subr.bf16.mxu0 0
  %556 = vmatpush1.bf16.xpose.msra.mxu0 0
  %557 = vmatprep.subr.bf16.mxu0 0
  %558 = vmatpush1.bf16.xpose.msra.mxu0 0
  %559 = vmatprep.subr.bf16.mxu0 0
  %560 = vmatpush1.bf16.xpose.msra.mxu0 0
  %561 = vmatprep.subr.bf16.mxu0 0
  %562 = vmatpush1.bf16.xpose.msra.mxu0 0
  %563 = vmatprep.subr.bf16.mxu0 0
  %564 = vmatpush1.bf16.xpose.msra.mxu0 0
  %565 = vmatprep.subr.bf16.mxu0 0
  %566 = vmatpush1.bf16.xpose.msra.mxu0 0
  %567 = vmatprep.subr.bf16.mxu0 0
  %568 = vmatpush1.bf16.xpose.msra.mxu0 0
  %569 = vmatprep.subr.bf16.mxu0 0
  %570 = vmatpush1.bf16.xpose.msra.mxu0 0
  %571 = vmatprep.subr.bf16.mxu0 0
  %572 = vmatpush1.bf16.xpose.msra.mxu0 0
  %573 = vmatprep.mubr.bf16.mxu0 0
  %574 = vmatmul.mubr.bf16.gmra.mrb[0].mxu0 %v536
  %v575 = vpop.f32.mrb[0].mxu0
  %v576 = vadd.f32 0.0, %v575
  %v577 = vpop.f32.mrb[0].mxu0
  %v578 = vpop.f32.mrb[0].mxu0
  %v579 = vpop.f32.mrb[0].mxu0
  %580 = vdwg.mxu0
  %v581 = vmul.f32 %v576, 0.17677669
  %v582 = vsel %vm211, %v581, -inf
  %583 = vmax.xlane.f32.xlu0 %v582
  %v584 = vpop.xlane.xlu0 %583
  %v585 = vsub.f32 %v581, %v584
  %v586 = vmul.f32 %v585, 1.442695
  %v587 = vpow.pop %v586
  %v588 = vsel %vm211, %v587, 0.0
  %589 = vadd.xlane.f32.xlu0 %v588
  %v590 = vpop.xlane.xlu0 %589
  %v591 = vrcp.pop %v590
  %v592 = vmul.f32 %v587, %v591
  %v593 = vpack.c.bf16 %v592, %v592
  %v594 = vpack.c.bf16 %v527, %v527
  %v596 = vsel %vm225, %v593, 0
  %v599 = vand.u32 %v594, %v232
  %601 = vmatprep.subr.bf16.mxu0 0
  %602 = vmatpush1.bf16.msra.mxu0 %v599
  %603 = vmatprep.subr.bf16.mxu0 0
  %604 = vmatpush1.bf16.msra.mxu0 0
  %605 = vmatprep.subr.bf16.mxu0 0
  %606 = vmatpush1.bf16.msra.mxu0 0
  %607 = vmatprep.subr.bf16.mxu0 0
  %608 = vmatpush1.bf16.msra.mxu0 0
  %609 = vmatprep.subr.bf16.mxu0 0
  %610 = vmatpush1.bf16.msra.mxu0 0
  %611 = vmatprep.subr.bf16.mxu0 0
  %612 = vmatpush1.bf16.msra.mxu0 0
  %613 = vmatprep.subr.bf16.mxu0 0
  %614 = vmatpush1.bf16.msra.mxu0 0
  %615 = vmatprep.subr.bf16.mxu0 0
  %616 = vmatpush1.bf16.msra.mxu0 0
  %617 = vmatprep.subr.bf16.mxu0 0
  %618 = vmatpush1.bf16.msra.mxu0 0
  %619 = vmatprep.subr.bf16.mxu0 0
  %620 = vmatpush1.bf16.msra.mxu0 0
  %621 = vmatprep.subr.bf16.mxu0 0
  %622 = vmatpush1.bf16.msra.mxu0 0
  %623 = vmatprep.subr.bf16.mxu0 0
  %624 = vmatpush1.bf16.msra.mxu0 0
  %625 = vmatprep.subr.bf16.mxu0 0
  %626 = vmatpush1.bf16.msra.mxu0 0
  %627 = vmatprep.subr.bf16.mxu0 0
  %628 = vmatpush1.bf16.msra.mxu0 0
  %629 = vmatprep.subr.bf16.mxu0 0
  %630 = vmatpush1.bf16.msra.mxu0 0
  %631 = vmatprep.subr.bf16.mxu0 0
  %632 = vmatpush1.bf16.msra.mxu0 0
  %633 = vmatprep.mubr.bf16.mxu0 0
  %634 = vmatmul.mubr.bf16.gmra.mrb[0].mxu0 %v596
  %v635 = vpop.f32.mrb[0].mxu0
  %v636 = vadd.f32 0.0, %v635
  %v637 = vpop.f32.mrb[0].mxu0
  %v638 = vpop.f32.mrb[0].mxu0
  %v639 = vpop.f32.mrb[0].mxu0
  %640 = vdwg.mxu0
  %641 = vrot.lane.b32.xlu0 %v531, 96
  %v642 = vpop.permute.xlu0 %641
  %643 = vrot.lane.b32.xlu0 %v531, 32
  %v644 = vpop.permute.xlu0 %643
  %v646 = vsel %vm163, %v642, 0
  %v649 = vsel %vm163, %v644, 0
  %651 = vmatprep.subr.bf16.mxu0 0
  %652 = vmatpush1.bf16.xpose.msra.mxu0 %v649
  %653 = vmatprep.subr.bf16.mxu0 0
  %654 = vmatpush1.bf16.xpose.msra.mxu0 0
  %655 = vmatprep.subr.bf16.mxu0 0
  %656 = vmatpush1.bf16.xpose.msra.mxu0 0
  %657 = vmatprep.subr.bf16.mxu0 0
  %658 = vmatpush1.bf16.xpose.msra.mxu0 0
  %659 = vmatprep.subr.bf16.mxu0 0
  %660 = vmatpush1.bf16.xpose.msra.mxu0 0
  %661 = vmatprep.subr.bf16.mxu0 0
  %662 = vmatpush1.bf16.xpose.msra.mxu0 0
  %663 = vmatprep.subr.bf16.mxu0 0
  %664 = vmatpush1.bf16.xpose.msra.mxu0 0
  %665 = vmatprep.subr.bf16.mxu0 0
  %666 = vmatpush1.bf16.xpose.msra.mxu0 0
  %667 = vmatprep.subr.bf16.mxu0 0
  %668 = vmatpush1.bf16.xpose.msra.mxu0 0
  %669 = vmatprep.subr.bf16.mxu0 0
  %670 = vmatpush1.bf16.xpose.msra.mxu0 0
  %671 = vmatprep.subr.bf16.mxu0 0
  %672 = vmatpush1.bf16.xpose.msra.mxu0 0
  %673 = vmatprep.subr.bf16.mxu0 0
  %674 = vmatpush1.bf16.xpose.msra.mxu0 0
  %675 = vmatprep.subr.bf16.mxu0 0
  %676 = vmatpush1.bf16.xpose.msra.mxu0 0
  %677 = vmatprep.subr.bf16.mxu0 0
  %678 = vmatpush1.bf16.xpose.msra.mxu0 0
  %679 = vmatprep.subr.bf16.mxu0 0
  %680 = vmatpush1.bf16.xpose.msra.mxu0 0
  %681 = vmatprep.subr.bf16.mxu0 0
  %682 = vmatpush1.bf16.xpose.msra.mxu0 0
  %683 = vmatprep.mubr.bf16.mxu0 0
  %684 = vmatmul.mubr.bf16.gmra.mrb[0].mxu0 %v646
  %v685 = vpop.f32.mrb[0].mxu0
  %v686 = vadd.f32 0.0, %v685
  %v687 = vpop.f32.mrb[0].mxu0
  %v688 = vpop.f32.mrb[0].mxu0
  %v689 = vpop.f32.mrb[0].mxu0
  %690 = vdwg.mxu0
  %v691 = vmul.f32 %v686, 0.17677669
  %v692 = vsel %vm211, %v691, -inf
  %693 = vmax.xlane.f32.xlu0 %v692
  %v694 = vpop.xlane.xlu0 %693
  %v695 = vsub.f32 %v691, %v694
  %v696 = vmul.f32 %v695, 1.442695
  %v697 = vpow.pop %v696
  %v698 = vsel %vm211, %v697, 0.0
  %699 = vadd.xlane.f32.xlu0 %v698
  %v700 = vpop.xlane.xlu0 %699
  %v701 = vrcp.pop %v700
  %v702 = vmul.f32 %v697, %v701
  %v703 = vpack.c.bf16 %v702, %v702
  %705 = vrot.lane.b32.xlu0 %v594, 96
  %v706 = vpop.permute.xlu0 %705
  %v708 = vsel %vm225, %v703, 0
  %v711 = vand.u32 %v706, %v232
  %713 = vmatprep.subr.bf16.mxu0 0
  %714 = vmatpush1.bf16.msra.mxu0 %v711
  %715 = vmatprep.subr.bf16.mxu0 0
  %716 = vmatpush1.bf16.msra.mxu0 0
  %717 = vmatprep.subr.bf16.mxu0 0
  %718 = vmatpush1.bf16.msra.mxu0 0
  %719 = vmatprep.subr.bf16.mxu0 0
  %720 = vmatpush1.bf16.msra.mxu0 0
  %721 = vmatprep.subr.bf16.mxu0 0
  %722 = vmatpush1.bf16.msra.mxu0 0
  %723 = vmatprep.subr.bf16.mxu0 0
  %724 = vmatpush1.bf16.msra.mxu0 0
  %725 = vmatprep.subr.bf16.mxu0 0
  %726 = vmatpush1.bf16.msra.mxu0 0
  %727 = vmatprep.subr.bf16.mxu0 0
  %728 = vmatpush1.bf16.msra.mxu0 0
  %729 = vmatprep.subr.bf16.mxu0 0
  %730 = vmatpush1.bf16.msra.mxu0 0
  %731 = vmatprep.subr.bf16.mxu0 0
  %732 = vmatpush1.bf16.msra.mxu0 0
  %733 = vmatprep.subr.bf16.mxu0 0
  %734 = vmatpush1.bf16.msra.mxu0 0
  %735 = vmatprep.subr.bf16.mxu0 0
  %736 = vmatpush1.bf16.msra.mxu0 0
  %737 = vmatprep.subr.bf16.mxu0 0
  %738 = vmatpush1.bf16.msra.mxu0 0
  %739 = vmatprep.subr.bf16.mxu0 0
  %740 = vmatpush1.bf16.msra.mxu0 0
  %741 = vmatprep.subr.bf16.mxu0 0
  %742 = vmatpush1.bf16.msra.mxu0 0
  %743 = vmatprep.subr.bf16.mxu0 0
  %744 = vmatpush1.bf16.msra.mxu0 0
  %745 = vmatprep.mubr.bf16.mxu0 0
  %746 = vmatmul.mubr.bf16.gmra.mrb[0].mxu0 %v708
  %v747 = vpop.f32.mrb[0].mxu0
  %v748 = vadd.f32 0.0, %v747
  %v749 = vpop.f32.mrb[0].mxu0
  %v750 = vpop.f32.mrb[0].mxu0
  %v751 = vpop.f32.mrb[0].mxu0
  %752 = vdwg.mxu0
  %754 = vrot.lane.b32.xlu0 %v748, 32
  %v755 = vpop.permute.xlu0 %754
  %v757 = vsel %vm163, %v636, %v755
  %v758 = vpack.c.bf16 %v757, %v757
  %v760 = vsel %vm114, %v758, 0
  %762 = vmatprep.subr.bf16.mxu0 0
  %763 = vmatpush1.bf16.msra.mxu0 %v416
  %764 = vmatprep.subr.bf16.mxu0 0
  %765 = vmatpush1.bf16.msra.mxu0 %v417
  %766 = vmatprep.subr.bf16.mxu0 0
  %767 = vmatpush1.bf16.msra.mxu0 %v418
  %768 = vmatprep.subr.bf16.mxu0 0
  %769 = vmatpush1.bf16.msra.mxu0 %v419
  %770 = vmatprep.subr.bf16.mxu0 0
  %771 = vmatpush1.bf16.msra.mxu0 0
  %772 = vmatprep.subr.bf16.mxu0 0
  %773 = vmatpush1.bf16.msra.mxu0 0
  %774 = vmatprep.subr.bf16.mxu0 0
  %775 = vmatpush1.bf16.msra.mxu0 0
  %776 = vmatprep.subr.bf16.mxu0 0
  %777 = vmatpush1.bf16.msra.mxu0 0
  %778 = vmatprep.subr.bf16.mxu0 0
  %779 = vmatpush1.bf16.msra.mxu0 0
  %780 = vmatprep.subr.bf16.mxu0 0
  %781 = vmatpush1.bf16.msra.mxu0 0
  %782 = vmatprep.subr.bf16.mxu0 0
  %783 = vmatpush1.bf16.msra.mxu0 0
  %784 = vmatprep.subr.bf16.mxu0 0
  %785 = vmatpush1.bf16.msra.mxu0 0
  %786 = vmatprep.subr.bf16.mxu0 0
  %787 = vmatpush1.bf16.msra.mxu0 0
  %788 = vmatprep.subr.bf16.mxu0 0
  %789 = vmatpush1.bf16.msra.mxu0 0
  %790 = vmatprep.subr.bf16.mxu0 0
  %791 = vmatpush1.bf16.msra.mxu0 0
  %792 = vmatprep.subr.bf16.mxu0 0
  %793 = vmatpush1.bf16.msra.mxu0 0
  %794 = vmatprep.mubr.bf16.mxu0 0
  %795 = vmatmul.mubr.bf16.gmra.mrb[0].mxu0 %v760
  %v796 = vpop.f32.mrb[0].mxu0
  %v797 = vadd.f32 %v398, %v796
  %v798 = vpop.f32.mrb[0].mxu0
  %v799 = vpop.f32.mrb[0].mxu0
  %v800 = vpop.f32.mrb[0].mxu0
  %801 = vdwg.mxu0
  %v802 = vadd.f32 %v470, %v797
  %s803 = scalar_lea.vmem %s6, 8
  %804 = vst.msk [vmem:[%s803] sm:$0x1f] %vm44, %v802
  // Predicated region
  $region26: #{multiscale_apply.12} parent=0 // pred_check
    _
  $region27: #{multiscale_apply.12} parent=0 // pred_check_branch
    %806 = sbr.rel (0) target = $region29
  $region28: #{multiscale_apply.12} parent=0 // pred_region
    _
  $region29: #{multiscale_apply.12} parent=0 // pred_fallthru
    _
  // Predicated region
  $region30: #{multiscale_apply.12} parent=0 // pred_check
    _
  $region31: #{multiscale_apply.12} parent=0 // pred_check_branch
    %808 = sbr.rel (0) target = $region33
  $region32: #{multiscale_apply.12} parent=0 // pred_region
    _
  $region33: #{multiscale_apply.12} parent=0 // pred_fallthru
    _

// kernel: multiscale_apply.13
$region0: #{multiscale_apply.13}
  #allocation0 [shape = 'u32[]', space=smem, size = 0x4, offset = 0x4, fixed_abs, tag = 'smem constant byte address 0x4 - core index']
  #allocation1 [shape = 'u32[144,128]{1,0:T(1,128)}', space=vmem, size = 0x12000, scoped, tag = 'internal scratch']
  %s0 = inlined_call_operand.vmem [shape: f32[2,5,64], index: 0, kind: input, shape index: {}]
  %s1 = inlined_call_operand.vmem [shape: f32[1,64], index: 1, kind: input, shape index: {}]
  %s2 = inlined_call_operand.vmem [shape: f32[1,64], index: 2, kind: input, shape index: {}]
  %s3 = inlined_call_operand.vmem [shape: bf16[64,128], index: 3, kind: input, shape index: {}]
  %s4 = inlined_call_operand.vmem [shape: f32[1,128], index: 4, kind: input, shape index: {}]
  %s5 = inlined_call_operand.vmem [shape: bf16[128,64], index: 5, kind: input, shape index: {}]
  %s6 = inlined_call_operand.vmem [shape: f32[1,64], index: 6, kind: input, shape index: {}]
  %s7 = inlined_call_operand.vmem [shape: f32[2,5,64], index: 7, kind: output, shape index: {}]
  %s8 = sld [smem:[#allocation0]]
  $region38: #{multiscale_apply.13} parent=0
    _
  %s10 = ssub.s32 1, %s8
  %s11 = scalar_select 0, %s10, %s8
  // Predicated region
  $region2: #{multiscale_apply.13} parent=0 // pred_check
    _
  $region3: #{multiscale_apply.13} parent=0 // pred_check_branch
    %13 = sbr.rel (0) target = $region5
  $region4: #{multiscale_apply.13} parent=0 // pred_region
    _
  $region5: #{multiscale_apply.13} parent=0 // pred_fallthru
    _
  // Predicated region
  $region6: #{multiscale_apply.13} parent=0 // pred_check
    _
  $region7: #{multiscale_apply.13} parent=0 // pred_check_branch
    %15 = sbr.rel (0) target = $region9
  $region8: #{multiscale_apply.13} parent=0 // pred_region
    _
  $region9: #{multiscale_apply.13} parent=0 // pred_fallthru
    _
  // Predicated region
  $region10: #{multiscale_apply.13} parent=0 // pred_check
    _
  $region11: #{multiscale_apply.13} parent=0 // pred_check_branch
    %17 = sbr.rel (0) target = $region13
  $region12: #{multiscale_apply.13} parent=0 // pred_region
    _
  $region13: #{multiscale_apply.13} parent=0 // pred_fallthru
    _
  // Predicated region
  $region14: #{multiscale_apply.13} parent=0 // pred_check
    _
  $region15: #{multiscale_apply.13} parent=0 // pred_check_branch
    %19 = sbr.rel (0) target = $region17
  $region16: #{multiscale_apply.13} parent=0 // pred_region
    _
  $region17: #{multiscale_apply.13} parent=0 // pred_fallthru
    _
  // Predicated region
  $region18: #{multiscale_apply.13} parent=0 // pred_check
    _
  $region19: #{multiscale_apply.13} parent=0 // pred_check_branch
    %21 = sbr.rel (0) target = $region21
  $region20: #{multiscale_apply.13} parent=0 // pred_region
    _
  $region21: #{multiscale_apply.13} parent=0 // pred_fallthru
    _
  // Predicated region
  $region22: #{multiscale_apply.13} parent=0 // pred_check
    _
  $region23: #{multiscale_apply.13} parent=0 // pred_check_branch
    %23 = sbr.rel (0) target = $region25
  $region24: #{multiscale_apply.13} parent=0 // pred_region
    _
  $region25: #{multiscale_apply.13} parent=0 // pred_fallthru
    _
  // Predicated region
  $region26: #{multiscale_apply.13} parent=0 // pred_check
    _
  $region27: #{multiscale_apply.13} parent=0 // pred_check_branch
    %25 = sbr.rel (0) target = $region29
  $region28: #{multiscale_apply.13} parent=0 // pred_region
    _
  $region29: #{multiscale_apply.13} parent=0 // pred_fallthru
    _
  %v27 = vld [vmem:[%s1] sm:$0x1]
  %v28 = vld [vmem:[%s2] sm:$0x1]
  %v29 = vld [vmem:[%s3] sm:$0xf]
  %v30 = vld [vmem:[%s3 + $0x4] sm:$0xf]
  %v31 = vld [vmem:[%s3 + $0x8] sm:$0xf]
  %v32 = vld [vmem:[%s3 + $0xc] sm:$0xf]
  %v33 = vld [vmem:[%s3 + $0x10] sm:$0xf]
  %v34 = vld [vmem:[%s3 + $0x14] sm:$0xf]
  %v35 = vld [vmem:[%s3 + $0x18] sm:$0xf]
  %v36 = vld [vmem:[%s3 + $0x1c] sm:$0xf]
  %v37 = vld [vmem:[%s4] sm:$0x1]
  %v38 = vld [vmem:[%s5] sm:$0xf]
  %v39 = vld [vmem:[%s5 + $0x4] sm:$0xf]
  %v40 = vld [vmem:[%s5 + $0x8] sm:$0xf]
  %v41 = vld [vmem:[%s5 + $0xc] sm:$0xf]
  %v42 = vld [vmem:[%s5 + $0x10] sm:$0xf]
  %v43 = vld [vmem:[%s5 + $0x14] sm:$0xf]
  %v44 = vld [vmem:[%s5 + $0x18] sm:$0xf]
  %v45 = vld [vmem:[%s5 + $0x1c] sm:$0xf]
  %v46 = vld [vmem:[%s5 + $0x20] sm:$0xf]
  %v47 = vld [vmem:[%s5 + $0x24] sm:$0xf]
  %v48 = vld [vmem:[%s5 + $0x28] sm:$0xf]
  %v49 = vld [vmem:[%s5 + $0x2c] sm:$0xf]
  %v50 = vld [vmem:[%s5 + $0x30] sm:$0xf]
  %v51 = vld [vmem:[%s5 + $0x34] sm:$0xf]
  %v52 = vld [vmem:[%s5 + $0x38] sm:$0xf]
  %v53 = vld [vmem:[%s5 + $0x3c] sm:$0xf]
  %v54 = vld [vmem:[%s6] sm:$0x1]
  %v55 = vld [vmem:[%s0] sm:$0x1f]
  %vm56 = vcmask 520192
  %v57 = vsel %vm56, %v55, 0.0
  %58 = vadd.xlane.f32.xlu0 %v57
  %v59 = vpop.xlane.xlu0 %58
  %v60 = vrcp.pop 64.0
  %v61 = vmul.f32 %v59, %v60
  %v62 = vsub.f32 %v55, %v61
  %v63 = vmul.f32 %v62, %v62
  %v64 = vsel %vm56, %v63, 0.0
  %65 = vadd.xlane.f32.xlu0 %v64
  %v66 = vpop.xlane.xlu0 %65
  %v67 = vmul.f32 %v66, %v60
  %v68 = vadd.f32 %v67, 1e-05
  %v69 = vrsqrt.pop %v68
  %v70 = vmul.f32 %v62, %v69
  %v72 = vlaneseq
  %v73 = vshrl.u32 %v72, 7
  %v74 = vsub.s32 0, %v73
  %v75 = vrot.slane %v27, %v74
  %v77 = vmul.f32 %v70, %v75
  %v79 = vlaneseq
  %v80 = vshrl.u32 %v79, 7
  %v81 = vsub.s32 0, %v80
  %v82 = vrot.slane %v28, %v81
  %v84 = vadd.f32 %v77, %v82
  %v85 = vpack.c.bf16 %v84, %v84
  %v87 = vlaneseq
  %v88 = vshrl.u32 %v87, 7
  %v89 = vsub.s32 0, %v88
  %v90 = vrot.slane %v37, %v89
  %v100 = vunpack.c.l.b16 %v29
  %v101 = vunpack.c.l.b16 %v30
  %v102 = vunpack.c.l.b16 %v31
  %v103 = vunpack.c.l.b16 %v32
  %v104 = vunpack.c.l.b16 %v33
  %v105 = vunpack.c.l.b16 %v34
  %v106 = vunpack.c.l.b16 %v35
  %v107 = vunpack.c.l.b16 %v36
  %v108 = vpack.c.b16 %v101, %v100
  %v109 = vpack.c.b16 %v103, %v102
  %v110 = vpack.c.b16 %v105, %v104
  %v111 = vpack.c.b16 %v107, %v106
  %vm116 = vcmask 523264
  %v118 = vsel %vm116, %v85, 0
  %120 = vmatprep.subr.bf16.mxu0 0
  %121 = vmatpush1.bf16.msra.mxu0 %v108
  %122 = vmatprep.subr.bf16.mxu0 0
  %123 = vmatpush1.bf16.msra.mxu0 %v109
  %124 = vmatprep.subr.bf16.mxu0 0
  %125 = vmatpush1.bf16.msra.mxu0 %v110
  %126 = vmatprep.subr.bf16.mxu0 0
  %127 = vmatpush1.bf16.msra.mxu0 %v111
  %128 = vmatprep.subr.bf16.mxu0 0
  %129 = vmatpush1.bf16.msra.mxu0 0
  %130 = vmatprep.subr.bf16.mxu0 0
  %131 = vmatpush1.bf16.msra.mxu0 0
  %132 = vmatprep.subr.bf16.mxu0 0
  %133 = vmatpush1.bf16.msra.mxu0 0
  %134 = vmatprep.subr.bf16.mxu0 0
  %135 = vmatpush1.bf16.msra.mxu0 0
  %136 = vmatprep.subr.bf16.mxu0 0
  %137 = vmatpush1.bf16.msra.mxu0 0
  %138 = vmatprep.subr.bf16.mxu0 0
  %139 = vmatpush1.bf16.msra.mxu0 0
  %140 = vmatprep.subr.bf16.mxu0 0
  %141 = vmatpush1.bf16.msra.mxu0 0
  %142 = vmatprep.subr.bf16.mxu0 0
  %143 = vmatpush1.bf16.msra.mxu0 0
  %144 = vmatprep.subr.bf16.mxu0 0
  %145 = vmatpush1.bf16.msra.mxu0 0
  %146 = vmatprep.subr.bf16.mxu0 0
  %147 = vmatpush1.bf16.msra.mxu0 0
  %148 = vmatprep.subr.bf16.mxu0 0
  %149 = vmatpush1.bf16.msra.mxu0 0
  %150 = vmatprep.subr.bf16.mxu0 0
  %151 = vmatpush1.bf16.msra.mxu0 0
  %152 = vmatprep.mubr.bf16.mxu0 0
  %153 = vmatmul.mubr.bf16.gmra.mrb[0].mxu0 %v118
  %v154 = vpop.f32.mrb[0].mxu0
  %v155 = vadd.f32 %v90, %v154
  %v156 = vpop.f32.mrb[0].mxu0
  %v157 = vpop.f32.mrb[0].mxu0
  %v158 = vpop.f32.mrb[0].mxu0
  %159 = vdwg.mxu0
  %v160 = vmul.f32 %v155, 0.5
  %v161 = vmul.f32 %v155, 0.70710677
  %v162 = vand.u32 2147483647, %v161
  %v163 = vmul.f32 %v162, 0.3275911
  %v164 = vadd.f32 %v163, 1.0
  %v165 = vrcp.pop %v164
  %v166 = vmul.f32 1.0, %v165
  %v167 = vmul.f32 %v166, 1.0614054
  %v168 = vadd.f32 %v167, -1.4531521
  %v169 = vmul.f32 %v168, %v166
  %v170 = vadd.f32 %v169, 1.4214138
  %v171 = vmul.f32 %v170, %v166
  %v172 = vadd.f32 %v171, -0.28449672
  %v173 = vmul.f32 %v172, %v166
  %v174 = vadd.f32 %v173, 0.2548296
  %v175 = vmul.f32 %v174, %v166
  %v176 = vsub.f32 0.0, %v162
  %v177 = vmul.f32 %v176, %v162
  %v178 = vmul.f32 %v177, 1.442695
  %v179 = vpow.pop %v178
  %v180 = vmul.f32 %v175, %v179
  %v181 = vsub.f32 1.0, %v180
  %vm182 = vcmp.ge.f32.partialorder %v161, 0.0
  %v183 = vsub.f32 0.0, %v181
  %v184 = vsel %vm182, %v181, %v183
  %v185 = vadd.f32 %v184, 1.0
  %v186 = vmul.f32 %v160, %v185
  %v187 = vpack.c.bf16 %v186, %v186
  %v189 = vlaneseq
  %v190 = vshrl.u32 %v189, 7
  %v191 = vsub.s32 0, %v190
  %v192 = vrot.slane %v54, %v191
  %v210 = vunpack.c.l.b16 %v38
  %v211 = vunpack.c.l.b16 %v39
  %v212 = vunpack.c.l.b16 %v40
  %v213 = vunpack.c.l.b16 %v41
  %v214 = vunpack.c.l.b16 %v42
  %v215 = vunpack.c.l.b16 %v43
  %v216 = vunpack.c.l.b16 %v44
  %v217 = vunpack.c.l.b16 %v45
  %v218 = vunpack.c.l.b16 %v46
  %v219 = vunpack.c.l.b16 %v47
  %v220 = vunpack.c.l.b16 %v48
  %v221 = vunpack.c.l.b16 %v49
  %v222 = vunpack.c.l.b16 %v50
  %v223 = vunpack.c.l.b16 %v51
  %v224 = vunpack.c.l.b16 %v52
  %v225 = vunpack.c.l.b16 %v53
  %v226 = vpack.c.b16 %v211, %v210
  %v227 = vpack.c.b16 %v213, %v212
  %v228 = vpack.c.b16 %v215, %v214
  %v229 = vpack.c.b16 %v217, %v216
  %v230 = vpack.c.b16 %v219, %v218
  %v231 = vpack.c.b16 %v221, %v220
  %v232 = vpack.c.b16 %v223, %v222
  %v233 = vpack.c.b16 %v225, %v224
  %242 = vmatprep.subr.bf16.mxu0 0
  %243 = vmatpush1.bf16.msra.mxu0 %v226
  %244 = vmatprep.subr.bf16.mxu0 0
  %245 = vmatpush1.bf16.msra.mxu0 %v227
  %246 = vmatprep.subr.bf16.mxu0 0
  %247 = vmatpush1.bf16.msra.mxu0 %v228
  %248 = vmatprep.subr.bf16.mxu0 0
  %249 = vmatpush1.bf16.msra.mxu0 %v229
  %250 = vmatprep.subr.bf16.mxu0 0
  %251 = vmatpush1.bf16.msra.mxu0 %v230
  %252 = vmatprep.subr.bf16.mxu0 0
  %253 = vmatpush1.bf16.msra.mxu0 %v231
  %254 = vmatprep.subr.bf16.mxu0 0
  %255 = vmatpush1.bf16.msra.mxu0 %v232
  %256 = vmatprep.subr.bf16.mxu0 0
  %257 = vmatpush1.bf16.msra.mxu0 %v233
  %258 = vmatprep.subr.bf16.mxu0 0
  %259 = vmatpush1.bf16.msra.mxu0 0
  %260 = vmatprep.subr.bf16.mxu0 0
  %261 = vmatpush1.bf16.msra.mxu0 0
  %262 = vmatprep.subr.bf16.mxu0 0
  %263 = vmatpush1.bf16.msra.mxu0 0
  %264 = vmatprep.subr.bf16.mxu0 0
  %265 = vmatpush1.bf16.msra.mxu0 0
  %266 = vmatprep.subr.bf16.mxu0 0
  %267 = vmatpush1.bf16.msra.mxu0 0
  %268 = vmatprep.subr.bf16.mxu0 0
  %269 = vmatpush1.bf16.msra.mxu0 0
  %270 = vmatprep.subr.bf16.mxu0 0
  %271 = vmatpush1.bf16.msra.mxu0 0
  %272 = vmatprep.subr.bf16.mxu0 0
  %273 = vmatpush1.bf16.msra.mxu0 0
  %274 = vmatprep.mubr.bf16.mxu0 0
  %275 = vmatmul.mubr.bf16.gmra.mrb[0].mxu0 %v187
  %v276 = vpop.f32.mrb[0].mxu0
  %v277 = vadd.f32 %v192, %v276
  %v278 = vpop.f32.mrb[0].mxu0
  %v279 = vpop.f32.mrb[0].mxu0
  %v280 = vpop.f32.mrb[0].mxu0
  %281 = vdwg.mxu0
  %v282 = vadd.f32 %v55, %v277
  %283 = vst.msk [vmem:[%s7] sm:$0x1f] %vm56, %v282
  %s284 = scalar_lea.vmem %s0, 8
  %v285 = vld [vmem:[%s284] sm:$0x1f]
  %v286 = vsel %vm56, %v285, 0.0
  %287 = vadd.xlane.f32.xlu0 %v286
  %v288 = vpop.xlane.xlu0 %287
  %v289 = vmul.f32 %v288, %v60
  %v290 = vsub.f32 %v285, %v289
  %v291 = vmul.f32 %v290, %v290
  %v292 = vsel %vm56, %v291, 0.0
  %293 = vadd.xlane.f32.xlu0 %v292
  %v294 = vpop.xlane.xlu0 %293
  %v295 = vmul.f32 %v294, %v60
  %v296 = vadd.f32 %v295, 1e-05
  %v297 = vrsqrt.pop %v296
  %v298 = vmul.f32 %v290, %v297
  %v299 = vmul.f32 %v298, %v75
  %v300 = vadd.f32 %v299, %v82
  %v301 = vpack.c.bf16 %v300, %v300
  %v303 = vsel %vm116, %v301, 0
  %305 = vmatprep.subr.bf16.mxu0 0
  %306 = vmatpush1.bf16.msra.mxu0 %v108
  %307 = vmatprep.subr.bf16.mxu0 0
  %308 = vmatpush1.bf16.msra.mxu0 %v109
  %309 = vmatprep.subr.bf16.mxu0 0
  %310 = vmatpush1.bf16.msra.mxu0 %v110
  %311 = vmatprep.subr.bf16.mxu0 0
  %312 = vmatpush1.bf16.msra.mxu0 %v111
  %313 = vmatprep.subr.bf16.mxu0 0
  %314 = vmatpush1.bf16.msra.mxu0 0
  %315 = vmatprep.subr.bf16.mxu0 0
  %316 = vmatpush1.bf16.msra.mxu0 0
  %317 = vmatprep.subr.bf16.mxu0 0
  %318 = vmatpush1.bf16.msra.mxu0 0
  %319 = vmatprep.subr.bf16.mxu0 0
  %320 = vmatpush1.bf16.msra.mxu0 0
  %321 = vmatprep.subr.bf16.mxu0 0
  %322 = vmatpush1.bf16.msra.mxu0 0
  %323 = vmatprep.subr.bf16.mxu0 0
  %324 = vmatpush1.bf16.msra.mxu0 0
  %325 = vmatprep.subr.bf16.mxu0 0
  %326 = vmatpush1.bf16.msra.mxu0 0
  %327 = vmatprep.subr.bf16.mxu0 0
  %328 = vmatpush1.bf16.msra.mxu0 0
  %329 = vmatprep.subr.bf16.mxu0 0
  %330 = vmatpush1.bf16.msra.mxu0 0
  %331 = vmatprep.subr.bf16.mxu0 0
  %332 = vmatpush1.bf16.msra.mxu0 0
  %333 = vmatprep.subr.bf16.mxu0 0
  %334 = vmatpush1.bf16.msra.mxu0 0
  %335 = vmatprep.subr.bf16.mxu0 0
  %336 = vmatpush1.bf16.msra.mxu0 0
  %337 = vmatprep.mubr.bf16.mxu0 0
  %338 = vmatmul.mubr.bf16.gmra.mrb[0].mxu0 %v303
  %v339 = vpop.f32.mrb[0].mxu0
  %v340 = vadd.f32 %v90, %v339
  %v341 = vpop.f32.mrb[0].mxu0
  %v342 = vpop.f32.mrb[0].mxu0
  %v343 = vpop.f32.mrb[0].mxu0
  %344 = vdwg.mxu0
  %v345 = vmul.f32 %v340, 0.5
  %v346 = vmul.f32 %v340, 0.70710677
  %v347 = vand.u32 2147483647, %v346
  %v348 = vmul.f32 %v347, 0.3275911
  %v349 = vadd.f32 %v348, 1.0
  %v350 = vrcp.pop %v349
  %v351 = vmul.f32 1.0, %v350
  %v352 = vmul.f32 %v351, 1.0614054
  %v353 = vadd.f32 %v352, -1.4531521
  %v354 = vmul.f32 %v353, %v351
  %v355 = vadd.f32 %v354, 1.4214138
  %v356 = vmul.f32 %v355, %v351
  %v357 = vadd.f32 %v356, -0.28449672
  %v358 = vmul.f32 %v357, %v351
  %v359 = vadd.f32 %v358, 0.2548296
  %v360 = vmul.f32 %v359, %v351
  %v361 = vsub.f32 0.0, %v347
  %v362 = vmul.f32 %v361, %v347
  %v363 = vmul.f32 %v362, 1.442695
  %v364 = vpow.pop %v363
  %v365 = vmul.f32 %v360, %v364
  %v366 = vsub.f32 1.0, %v365
  %vm367 = vcmp.ge.f32.partialorder %v346, 0.0
  %v368 = vsub.f32 0.0, %v366
  %v369 = vsel %vm367, %v366, %v368
  %v370 = vadd.f32 %v369, 1.0
  %v371 = vmul.f32 %v345, %v370
  %v372 = vpack.c.bf16 %v371, %v371
  %373 = vmatprep.subr.bf16.mxu0 0
  %374 = vmatpush1.bf16.msra.mxu0 %v226
  %375 = vmatprep.subr.bf16.mxu0 0
  %376 = vmatpush1.bf16.msra.mxu0 %v227
  %377 = vmatprep.subr.bf16.mxu0 0
  %378 = vmatpush1.bf16.msra.mxu0 %v228
  %379 = vmatprep.subr.bf16.mxu0 0
  %380 = vmatpush1.bf16.msra.mxu0 %v229
  %381 = vmatprep.subr.bf16.mxu0 0
  %382 = vmatpush1.bf16.msra.mxu0 %v230
  %383 = vmatprep.subr.bf16.mxu0 0
  %384 = vmatpush1.bf16.msra.mxu0 %v231
  %385 = vmatprep.subr.bf16.mxu0 0
  %386 = vmatpush1.bf16.msra.mxu0 %v232
  %387 = vmatprep.subr.bf16.mxu0 0
  %388 = vmatpush1.bf16.msra.mxu0 %v233
  %389 = vmatprep.subr.bf16.mxu0 0
  %390 = vmatpush1.bf16.msra.mxu0 0
  %391 = vmatprep.subr.bf16.mxu0 0
  %392 = vmatpush1.bf16.msra.mxu0 0
  %393 = vmatprep.subr.bf16.mxu0 0
  %394 = vmatpush1.bf16.msra.mxu0 0
  %395 = vmatprep.subr.bf16.mxu0 0
  %396 = vmatpush1.bf16.msra.mxu0 0
  %397 = vmatprep.subr.bf16.mxu0 0
  %398 = vmatpush1.bf16.msra.mxu0 0
  %399 = vmatprep.subr.bf16.mxu0 0
  %400 = vmatpush1.bf16.msra.mxu0 0
  %401 = vmatprep.subr.bf16.mxu0 0
  %402 = vmatpush1.bf16.msra.mxu0 0
  %403 = vmatprep.subr.bf16.mxu0 0
  %404 = vmatpush1.bf16.msra.mxu0 0
  %405 = vmatprep.mubr.bf16.mxu0 0
  %406 = vmatmul.mubr.bf16.gmra.mrb[0].mxu0 %v372
  %v407 = vpop.f32.mrb[0].mxu0
  %v408 = vadd.f32 %v192, %v407
  %v409 = vpop.f32.mrb[0].mxu0
  %v410 = vpop.f32.mrb[0].mxu0
  %v411 = vpop.f32.mrb[0].mxu0
  %412 = vdwg.mxu0
  %v413 = vadd.f32 %v285, %v408
  %s414 = scalar_lea.vmem %s7, 8
  %415 = vst.msk [vmem:[%s414] sm:$0x1f] %vm56, %v413
  // Predicated region
  $region30: #{multiscale_apply.13} parent=0 // pred_check
    _
  $region31: #{multiscale_apply.13} parent=0 // pred_check_branch
    %417 = sbr.rel (0) target = $region33
  $region32: #{multiscale_apply.13} parent=0 // pred_region
    _
  $region33: #{multiscale_apply.13} parent=0 // pred_fallthru
    _
  // Predicated region
  $region34: #{multiscale_apply.13} parent=0 // pred_check
    _
  $region35: #{multiscale_apply.13} parent=0 // pred_check_branch
    %419 = sbr.rel (0) target = $region37
  $region36: #{multiscale_apply.13} parent=0 // pred_region
    _
  $region37: #{multiscale_apply.13} parent=0 // pred_fallthru
    _

// kernel: multiscale_apply.14
$region0: #{multiscale_apply.14}
  #allocation0 [shape = 'u32[]', space=smem, size = 0x4, offset = 0x4, fixed_abs, tag = 'smem constant byte address 0x4 - core index']
  #allocation1 [shape = 'u32[144,128]{1,0:T(1,128)}', space=vmem, size = 0x12000, scoped, tag = 'internal scratch']
  %s0 = inlined_call_operand.vmem [shape: f32[2,1,64], index: 0, kind: input, shape index: {}]
  %s1 = inlined_call_operand.vmem [shape: f32[2,8,32], index: 1, kind: input, shape index: {}]
  %s2 = inlined_call_operand.vmem [shape: bf16[64,32], index: 2, kind: input, shape index: {}]
  %s3 = inlined_call_operand.vmem [shape: f32[1,32], index: 3, kind: input, shape index: {}]
  %s4 = inlined_call_operand.vmem [shape: f32[1,32], index: 4, kind: input, shape index: {}]
  %s5 = inlined_call_operand.vmem [shape: f32[1,32], index: 5, kind: input, shape index: {}]
  %s6 = inlined_call_operand.vmem [shape: bf16[32,64], index: 6, kind: input, shape index: {}]
  %s7 = inlined_call_operand.vmem [shape: bf16[32,32], index: 7, kind: input, shape index: {}]
  %s8 = inlined_call_operand.vmem [shape: bf16[32,32], index: 8, kind: input, shape index: {}]
  %s9 = inlined_call_operand.vmem [shape: f32[1,32], index: 9, kind: input, shape index: {}]
  %s10 = inlined_call_operand.vmem [shape: bf16[32,64], index: 10, kind: input, shape index: {}]
  %s11 = inlined_call_operand.vmem [shape: f32[1,64], index: 11, kind: input, shape index: {}]
  %s12 = inlined_call_operand.vmem [shape: f32[2,1,64], index: 12, kind: output, shape index: {}]
  %s13 = sld [smem:[#allocation0]]
  $region58: #{multiscale_apply.14} parent=0
    _
  %s15 = ssub.s32 1, %s13
  %s16 = scalar_select 0, %s15, %s13
  // Predicated region
  $region2: #{multiscale_apply.14} parent=0 // pred_check
    _
  $region3: #{multiscale_apply.14} parent=0 // pred_check_branch
    %18 = sbr.rel (0) target = $region5
  $region4: #{multiscale_apply.14} parent=0 // pred_region
    _
  $region5: #{multiscale_apply.14} parent=0 // pred_fallthru
    _
  // Predicated region
  $region6: #{multiscale_apply.14} parent=0 // pred_check
    _
  $region7: #{multiscale_apply.14} parent=0 // pred_check_branch
    %20 = sbr.rel (0) target = $region9
  $region8: #{multiscale_apply.14} parent=0 // pred_region
    _
  $region9: #{multiscale_apply.14} parent=0 // pred_fallthru
    _
  // Predicated region
  $region10: #{multiscale_apply.14} parent=0 // pred_check
    _
  $region11: #{multiscale_apply.14} parent=0 // pred_check_branch
    %22 = sbr.rel (0) target = $region13
  $region12: #{multiscale_apply.14} parent=0 // pred_region
    _
  $region13: #{multiscale_apply.14} parent=0 // pred_fallthru
    _
  // Predicated region
  $region14: #{multiscale_apply.14} parent=0 // pred_check
    _
  $region15: #{multiscale_apply.14} parent=0 // pred_check_branch
    %24 = sbr.rel (0) target = $region17
  $region16: #{multiscale_apply.14} parent=0 // pred_region
    _
  $region17: #{multiscale_apply.14} parent=0 // pred_fallthru
    _
  // Predicated region
  $region18: #{multiscale_apply.14} parent=0 // pred_check
    _
  $region19: #{multiscale_apply.14} parent=0 // pred_check_branch
    %26 = sbr.rel (0) target = $region21
  $region20: #{multiscale_apply.14} parent=0 // pred_region
    _
  $region21: #{multiscale_apply.14} parent=0 // pred_fallthru
    _
  // Predicated region
  $region22: #{multiscale_apply.14} parent=0 // pred_check
    _
  $region23: #{multiscale_apply.14} parent=0 // pred_check_branch
    %28 = sbr.rel (0) target = $region25
  $region24: #{multiscale_apply.14} parent=0 // pred_region
    _
  $region25: #{multiscale_apply.14} parent=0 // pred_fallthru
    _
  // Predicated region
  $region26: #{multiscale_apply.14} parent=0 // pred_check
    _
  $region27: #{multiscale_apply.14} parent=0 // pred_check_branch
    %30 = sbr.rel (0) target = $region29
  $region28: #{multiscale_apply.14} parent=0 // pred_region
    _
  $region29: #{multiscale_apply.14} parent=0 // pred_fallthru
    _
  // Predicated region
  $region30: #{multiscale_apply.14} parent=0 // pred_check
    _
  $region31: #{multiscale_apply.14} parent=0 // pred_check_branch
    %32 = sbr.rel (0) target = $region33
  $region32: #{multiscale_apply.14} parent=0 // pred_region
    _
  $region33: #{multiscale_apply.14} parent=0 // pred_fallthru
    _
  // Predicated region
  $region34: #{multiscale_apply.14} parent=0 // pred_check
    _
  $region35: #{multiscale_apply.14} parent=0 // pred_check_branch
    %34 = sbr.rel (0) target = $region37
  $region36: #{multiscale_apply.14} parent=0 // pred_region
    _
  $region37: #{multiscale_apply.14} parent=0 // pred_fallthru
    _
  // Predicated region
  $region38: #{multiscale_apply.14} parent=0 // pred_check
    _
  $region39: #{multiscale_apply.14} parent=0 // pred_check_branch
    %36 = sbr.rel (0) target = $region41
  $region40: #{multiscale_apply.14} parent=0 // pred_region
    _
  $region41: #{multiscale_apply.14} parent=0 // pred_fallthru
    _
  // Predicated region
  $region42: #{multiscale_apply.14} parent=0 // pred_check
    _
  $region43: #{multiscale_apply.14} parent=0 // pred_check_branch
    %38 = sbr.rel (0) target = $region45
  $region44: #{multiscale_apply.14} parent=0 // pred_region
    _
  $region45: #{multiscale_apply.14} parent=0 // pred_fallthru
    _
  // Predicated region
  $region46: #{multiscale_apply.14} parent=0 // pred_check
    _
  $region47: #{multiscale_apply.14} parent=0 // pred_check_branch
    %40 = sbr.rel (0) target = $region49
  $region48: #{multiscale_apply.14} parent=0 // pred_region
    _
  $region49: #{multiscale_apply.14} parent=0 // pred_fallthru
    _
  %v42 = vld [vmem:[%s4] sm:$0x1]
  %v43 = vld [vmem:[%s5] sm:$0x1]
  %v44 = vld [vmem:[%s2] sm:$0xf]
  %v45 = vld [vmem:[%s2 + $0x4] sm:$0xf]
  %v46 = vld [vmem:[%s2 + $0x8] sm:$0xf]
  %v47 = vld [vmem:[%s2 + $0xc] sm:$0xf]
  %v48 = vld [vmem:[%s2 + $0x10] sm:$0xf]
  %v49 = vld [vmem:[%s2 + $0x14] sm:$0xf]
  %v50 = vld [vmem:[%s2 + $0x18] sm:$0xf]
  %v51 = vld [vmem:[%s2 + $0x1c] sm:$0xf]
  %v52 = vld [vmem:[%s3] sm:$0x1]
  %v53 = vld [vmem:[%s6] sm:$0xf]
  %v54 = vld [vmem:[%s6 + $0x4] sm:$0xf]
  %v55 = vld [vmem:[%s6 + $0x8] sm:$0xf]
  %v56 = vld [vmem:[%s6 + $0xc] sm:$0xf]
  %v57 = vld [vmem:[%s7] sm:$0xf]
  %v58 = vld [vmem:[%s7 + $0x4] sm:$0xf]
  %v59 = vld [vmem:[%s7 + $0x8] sm:$0xf]
  %v60 = vld [vmem:[%s7 + $0xc] sm:$0xf]
  %v61 = vld [vmem:[%s8] sm:$0xf]
  %v62 = vld [vmem:[%s8 + $0x4] sm:$0xf]
  %v63 = vld [vmem:[%s8 + $0x8] sm:$0xf]
  %v64 = vld [vmem:[%s8 + $0xc] sm:$0xf]
  %v65 = vld [vmem:[%s9] sm:$0x1]
  %v66 = vld [vmem:[%s10] sm:$0xf]
  %v67 = vld [vmem:[%s10 + $0x4] sm:$0xf]
  %v68 = vld [vmem:[%s10 + $0x8] sm:$0xf]
  %v69 = vld [vmem:[%s10 + $0xc] sm:$0xf]
  %v70 = vld [vmem:[%s11] sm:$0x1]
  %v71 = vld [vmem:[%s0] sm:$0x1]
  %v72 = vld [vmem:[%s1] sm:$0xff]
  %v73 = vpack.c.bf16 %v71, %v71
  %v82 = vunpack.c.l.b16 %v44
  %v83 = vunpack.c.l.b16 %v45
  %v84 = vunpack.c.l.b16 %v46
  %v85 = vunpack.c.l.b16 %v47
  %v86 = vunpack.c.l.b16 %v48
  %v87 = vunpack.c.l.b16 %v49
  %v88 = vunpack.c.l.b16 %v50
  %v89 = vunpack.c.l.b16 %v51
  %v90 = vpack.c.b16 %v83, %v82
  %v91 = vpack.c.b16 %v85, %v84
  %v92 = vpack.c.b16 %v87, %v86
  %v93 = vpack.c.b16 %v89, %v88
  %vm98 = vcmask 523264
  %v100 = vsel %vm98, %v73, 0
  %102 = vmatprep.subr.bf16.mxu0 0
  %103 = vmatpush1.bf16.msra.mxu0 %v90
  %104 = vmatprep.subr.bf16.mxu0 0
  %105 = vmatpush1.bf16.msra.mxu0 %v91
  %106 = vmatprep.subr.bf16.mxu0 0
  %107 = vmatpush1.bf16.msra.mxu0 %v92
  %108 = vmatprep.subr.bf16.mxu0 0
  %109 = vmatpush1.bf16.msra.mxu0 %v93
  %110 = vmatprep.subr.bf16.mxu0 0
  %111 = vmatpush1.bf16.msra.mxu0 0
  %112 = vmatprep.subr.bf16.mxu0 0
  %113 = vmatpush1.bf16.msra.mxu0 0
  %114 = vmatprep.subr.bf16.mxu0 0
  %115 = vmatpush1.bf16.msra.mxu0 0
  %116 = vmatprep.subr.bf16.mxu0 0
  %117 = vmatpush1.bf16.msra.mxu0 0
  %118 = vmatprep.subr.bf16.mxu0 0
  %119 = vmatpush1.bf16.msra.mxu0 0
  %120 = vmatprep.subr.bf16.mxu0 0
  %121 = vmatpush1.bf16.msra.mxu0 0
  %122 = vmatprep.subr.bf16.mxu0 0
  %123 = vmatpush1.bf16.msra.mxu0 0
  %124 = vmatprep.subr.bf16.mxu0 0
  %125 = vmatpush1.bf16.msra.mxu0 0
  %126 = vmatprep.subr.bf16.mxu0 0
  %127 = vmatpush1.bf16.msra.mxu0 0
  %128 = vmatprep.subr.bf16.mxu0 0
  %129 = vmatpush1.bf16.msra.mxu0 0
  %130 = vmatprep.subr.bf16.mxu0 0
  %131 = vmatpush1.bf16.msra.mxu0 0
  %132 = vmatprep.subr.bf16.mxu0 0
  %133 = vmatpush1.bf16.msra.mxu0 0
  %134 = vmatprep.mubr.bf16.mxu0 0
  %135 = vmatmul.mubr.bf16.gmra.mrb[0].mxu0 %v100
  %v136 = vpop.f32.mrb[0].mxu0
  %v137 = vadd.f32 %v52, %v136
  %v138 = vpop.f32.mrb[0].mxu0
  %v139 = vpop.f32.mrb[0].mxu0
  %v140 = vpop.f32.mrb[0].mxu0
  %141 = vdwg.mxu0
  %vm142 = vcmask 253952
  %v143 = vsel %vm142, %v137, 0.0
  %144 = vadd.xlane.f32.xlu0 %v143
  %v145 = vpop.xlane.xlu0 %144
  %v146 = vrcp.pop 32.0
  %v147 = vmul.f32 %v145, %v146
  %v148 = vsub.f32 %v137, %v147
  %v149 = vmul.f32 %v148, %v148
  %v150 = vsel %vm142, %v149, 0.0
  %151 = vadd.xlane.f32.xlu0 %v150
  %v152 = vpop.xlane.xlu0 %151
  %v153 = vmul.f32 %v152, %v146
  %v154 = vadd.f32 %v153, 1e-05
  %v155 = vrsqrt.pop %v154
  %v156 = vmul.f32 %v148, %v155
  %v157 = vmul.f32 %v156, %v42
  %v158 = vadd.f32 %v157, %v43
  %vm159 = vcmask 261120
  %v160 = vsel %vm159, %v72, 0.0
  %161 = vadd.xlane.f32.xlu0 %v160
  %v162 = vpop.xlane.xlu0 %161
  %v163 = vmul.f32 %v162, %v146
  %v164 = vsub.f32 %v72, %v163
  %v165 = vmul.f32 %v164, %v164
  %v166 = vsel %vm159, %v165, 0.0
  %167 = vadd.xlane.f32.xlu0 %v166
  %v168 = vpop.xlane.xlu0 %167
  %v169 = vmul.f32 %v168, %v146
  %v170 = vadd.f32 %v169, 1e-05
  %v171 = vrsqrt.pop %v170
  %v172 = vmul.f32 %v164, %v171
  %v174 = vlaneseq
  %v175 = vshrl.u32 %v174, 7
  %v176 = vsub.s32 0, %v175
  %v177 = vrot.slane %v42, %v176
  %v179 = vmul.f32 %v172, %v177
  %v181 = vlaneseq
  %v182 = vshrl.u32 %v181, 7
  %v183 = vsub.s32 0, %v182
  %v184 = vrot.slane %v43, %v183
  %v186 = vadd.f32 %v179, %v184
  %v187 = vpack.c.bf16 %v158, %v158
  %v192 = vunpack.c.l.b16 %v53
  %v193 = vunpack.c.l.b16 %v54
  %v194 = vunpack.c.l.b16 %v55
  %v195 = vunpack.c.l.b16 %v56
  %v196 = vpack.c.b16 %v193, %v192
  %v197 = vpack.c.b16 %v195, %v194
  %v201 = vsel %vm159, %v187, 0
  %203 = vmatprep.subr.bf16.mxu0 0
  %204 = vmatpush1.bf16.msra.mxu0 %v196
  %205 = vmatprep.subr.bf16.mxu0 0
  %206 = vmatpush1.bf16.msra.mxu0 %v197
  %207 = vmatprep.subr.bf16.mxu0 0
  %208 = vmatpush1.bf16.msra.mxu0 0
  %209 = vmatprep.subr.bf16.mxu0 0
  %210 = vmatpush1.bf16.msra.mxu0 0
  %211 = vmatprep.subr.bf16.mxu0 0
  %212 = vmatpush1.bf16.msra.mxu0 0
  %213 = vmatprep.subr.bf16.mxu0 0
  %214 = vmatpush1.bf16.msra.mxu0 0
  %215 = vmatprep.subr.bf16.mxu0 0
  %216 = vmatpush1.bf16.msra.mxu0 0
  %217 = vmatprep.subr.bf16.mxu0 0
  %218 = vmatpush1.bf16.msra.mxu0 0
  %219 = vmatprep.subr.bf16.mxu0 0
  %220 = vmatpush1.bf16.msra.mxu0 0
  %221 = vmatprep.subr.bf16.mxu0 0
  %222 = vmatpush1.bf16.msra.mxu0 0
  %223 = vmatprep.subr.bf16.mxu0 0
  %224 = vmatpush1.bf16.msra.mxu0 0
  %225 = vmatprep.subr.bf16.mxu0 0
  %226 = vmatpush1.bf16.msra.mxu0 0
  %227 = vmatprep.subr.bf16.mxu0 0
  %228 = vmatpush1.bf16.msra.mxu0 0
  %229 = vmatprep.subr.bf16.mxu0 0
  %230 = vmatpush1.bf16.msra.mxu0 0
  %231 = vmatprep.subr.bf16.mxu0 0
  %232 = vmatpush1.bf16.msra.mxu0 0
  %233 = vmatprep.subr.bf16.mxu0 0
  %234 = vmatpush1.bf16.msra.mxu0 0
  %235 = vmatprep.mubr.bf16.mxu0 0
  %236 = vmatmul.mubr.bf16.gmra.mrb[0].mxu0 %v201
  %v237 = vpop.f32.mrb[0].mxu0
  %v238 = vadd.f32 0.0, %v237
  %v239 = vpop.f32.mrb[0].mxu0
  %v240 = vpop.f32.mrb[0].mxu0
  %v241 = vpop.f32.mrb[0].mxu0
  %242 = vdwg.mxu0
  %v247 = vunpack.c.l.b16 %v57
  %v248 = vunpack.c.l.b16 %v58
  %v249 = vunpack.c.l.b16 %v59
  %v250 = vunpack.c.l.b16 %v60
  %v251 = vpack.c.b16 %v248, %v247
  %v252 = vpack.c.b16 %v250, %v249
  %255 = vmatprep.subr.bf16.mxu0 0
  %256 = vmatpush1.bf16.msra.mxu0 %v251
  %257 = vmatprep.subr.bf16.mxu0 0
  %258 = vmatpush1.bf16.msra.mxu0 %v252
  %259 = vmatprep.subr.bf16.mxu0 0
  %260 = vmatpush1.bf16.msra.mxu0 0
  %261 = vmatprep.subr.bf16.mxu0 0
  %262 = vmatpush1.bf16.msra.mxu0 0
  %263 = vmatprep.subr.bf16.mxu0 0
  %264 = vmatpush1.bf16.msra.mxu0 0
  %265 = vmatprep.subr.bf16.mxu0 0
  %266 = vmatpush1.bf16.msra.mxu0 0
  %267 = vmatprep.subr.bf16.mxu0 0
  %268 = vmatpush1.bf16.msra.mxu0 0
  %269 = vmatprep.subr.bf16.mxu0 0
  %270 = vmatpush1.bf16.msra.mxu0 0
  %271 = vmatprep.subr.bf16.mxu0 0
  %272 = vmatpush1.bf16.msra.mxu0 0
  %273 = vmatprep.subr.bf16.mxu0 0
  %274 = vmatpush1.bf16.msra.mxu0 0
  %275 = vmatprep.subr.bf16.mxu0 0
  %276 = vmatpush1.bf16.msra.mxu0 0
  %277 = vmatprep.subr.bf16.mxu0 0
  %278 = vmatpush1.bf16.msra.mxu0 0
  %279 = vmatprep.subr.bf16.mxu0 0
  %280 = vmatpush1.bf16.msra.mxu0 0
  %281 = vmatprep.subr.bf16.mxu0 0
  %282 = vmatpush1.bf16.msra.mxu0 0
  %283 = vmatprep.subr.bf16.mxu0 0
  %284 = vmatpush1.bf16.msra.mxu0 0
  %285 = vmatprep.subr.bf16.mxu0 0
  %286 = vmatpush1.bf16.msra.mxu0 0
  %287 = vmatprep.mubr.bf16.mxu0 0
  %288 = vmatmul.mubr.bf16.gmra.mrb[0].mxu0 %v201
  %v289 = vpop.f32.mrb[0].mxu0
  %v290 = vadd.f32 0.0, %v289
  %v291 = vpop.f32.mrb[0].mxu0
  %v292 = vpop.f32.mrb[0].mxu0
  %v293 = vpop.f32.mrb[0].mxu0
  %294 = vdwg.mxu0
  %v295 = vpack.c.bf16 %v186, %v186
  %v297 = vsel %vm159, %v295, 0
  %299 = vmatprep.subr.bf16.mxu0 0
  %300 = vmatpush1.bf16.msra.mxu0 %v196
  %301 = vmatprep.subr.bf16.mxu0 0
  %302 = vmatpush1.bf16.msra.mxu0 %v197
  %303 = vmatprep.subr.bf16.mxu0 0
  %304 = vmatpush1.bf16.msra.mxu0 0
  %305 = vmatprep.subr.bf16.mxu0 0
  %306 = vmatpush1.bf16.msra.mxu0 0
  %307 = vmatprep.subr.bf16.mxu0 0
  %308 = vmatpush1.bf16.msra.mxu0 0
  %309 = vmatprep.subr.bf16.mxu0 0
  %310 = vmatpush1.bf16.msra.mxu0 0
  %311 = vmatprep.subr.bf16.mxu0 0
  %312 = vmatpush1.bf16.msra.mxu0 0
  %313 = vmatprep.subr.bf16.mxu0 0
  %314 = vmatpush1.bf16.msra.mxu0 0
  %315 = vmatprep.subr.bf16.mxu0 0
  %316 = vmatpush1.bf16.msra.mxu0 0
  %317 = vmatprep.subr.bf16.mxu0 0
  %318 = vmatpush1.bf16.msra.mxu0 0
  %319 = vmatprep.subr.bf16.mxu0 0
  %320 = vmatpush1.bf16.msra.mxu0 0
  %321 = vmatprep.subr.bf16.mxu0 0
  %322 = vmatpush1.bf16.msra.mxu0 0
  %323 = vmatprep.subr.bf16.mxu0 0
  %324 = vmatpush1.bf16.msra.mxu0 0
  %325 = vmatprep.subr.bf16.mxu0 0
  %326 = vmatpush1.bf16.msra.mxu0 0
  %327 = vmatprep.subr.bf16.mxu0 0
  %328 = vmatpush1.bf16.msra.mxu0 0
  %329 = vmatprep.subr.bf16.mxu0 0
  %330 = vmatpush1.bf16.msra.mxu0 0
  %331 = vmatprep.mubr.bf16.mxu0 0
  %332 = vmatmul.mubr.bf16.gmra.mrb[0].mxu0 %v297
  %v333 = vpop.f32.mrb[0].mxu0
  %v334 = vadd.f32 0.0, %v333
  %v335 = vpop.f32.mrb[0].mxu0
  %v336 = vpop.f32.mrb[0].mxu0
  %v337 = vpop.f32.mrb[0].mxu0
  %338 = vdwg.mxu0
  %v339 = vpack.c.bf16 %v290, %v290
  %v340 = vunpack.c.l.bf16 %v339
  %v341 = vpack.c.bf16 %v238, %v238
  %v342 = vunpack.c.l.bf16 %v341
  %v343 = vmul.f32 %v340, %v342
  %vm344 = vcmask 122880
  %v345 = vsel %vm344, %v343, 0.0
  %346 = vadd.xlane.f32.xlu0 %v345
  %v347 = vpop.xlane.xlu0 %346
  %v348 = vmul.f32 %v347, 0.25
  %v349 = vpack.c.bf16 %v334, %v334
  %vm350 = vcmask 130048
  %v352 = vsel %vm350, %v339, 0
  %v355 = vsel %vm350, %v349, 0
  %357 = vmatprep.subr.bf16.mxu0 0
  %358 = vmatpush1.bf16.xpose.msra.mxu0 %v355
  %359 = vmatprep.subr.bf16.mxu0 0
  %360 = vmatpush1.bf16.xpose.msra.mxu0 0
  %361 = vmatprep.subr.bf16.mxu0 0
  %362 = vmatpush1.bf16.xpose.msra.mxu0 0
  %363 = vmatprep.subr.bf16.mxu0 0
  %364 = vmatpush1.bf16.xpose.msra.mxu0 0
  %365 = vmatprep.subr.bf16.mxu0 0
  %366 = vmatpush1.bf16.xpose.msra.mxu0 0
  %367 = vmatprep.subr.bf16.mxu0 0
  %368 = vmatpush1.bf16.xpose.msra.mxu0 0
  %369 = vmatprep.subr.bf16.mxu0 0
  %370 = vmatpush1.bf16.xpose.msra.mxu0 0
  %371 = vmatprep.subr.bf16.mxu0 0
  %372 = vmatpush1.bf16.xpose.msra.mxu0 0
  %373 = vmatprep.subr.bf16.mxu0 0
  %374 = vmatpush1.bf16.xpose.msra.mxu0 0
  %375 = vmatprep.subr.bf16.mxu0 0
  %376 = vmatpush1.bf16.xpose.msra.mxu0 0
  %377 = vmatprep.subr.bf16.mxu0 0
  %378 = vmatpush1.bf16.xpose.msra.mxu0 0
  %379 = vmatprep.subr.bf16.mxu0 0
  %380 = vmatpush1.bf16.xpose.msra.mxu0 0
  %381 = vmatprep.subr.bf16.mxu0 0
  %382 = vmatpush1.bf16.xpose.msra.mxu0 0
  %383 = vmatprep.subr.bf16.mxu0 0
  %384 = vmatpush1.bf16.xpose.msra.mxu0 0
  %385 = vmatprep.subr.bf16.mxu0 0
  %386 = vmatpush1.bf16.xpose.msra.mxu0 0
  %387 = vmatprep.subr.bf16.mxu0 0
  %388 = vmatpush1.bf16.xpose.msra.mxu0 0
  %389 = vmatprep.mubr.bf16.mxu0 0
  %390 = vmatmul.mubr.bf16.gmra.mrb[0].mxu0 %v352
  %v391 = vpop.f32.mrb[0].mxu0
  %v392 = vadd.f32 0.0, %v391
  %v393 = vpop.f32.mrb[0].mxu0
  %v394 = vpop.f32.mrb[0].mxu0
  %v395 = vpop.f32.mrb[0].mxu0
  %396 = vdwg.mxu0
  %v397 = vmul.f32 %v392, 0.25
  %vm398 = vcmask 57344
  %v399 = vsel %vm398, %v397, -inf
  %400 = vmax.xlane.f32.xlu0 %v399
  %v401 = vpop.xlane.xlu0 %400
  %v402 = vmax.f32 %v348, %v401
  %v403 = vsub.f32 %v348, %v402
  %v404 = vmul.f32 %v403, 1.442695
  %v405 = vpow.pop %v404
  %v406 = vsub.f32 %v397, %v402
  %v407 = vmul.f32 %v406, 1.442695
  %v408 = vpow.pop %v407
  %v409 = vsel %vm398, %v408, 0.0
  %410 = vadd.xlane.f32.xlu0 %v409
  %v411 = vpop.xlane.xlu0 %410
  %v412 = vadd.f32 %v405, %v411
  %v413 = vrcp.pop %v412
  %v414 = vmul.f32 %v405, %v413
  %v415 = vmul.f32 %v414, %v238
  %v416 = vmul.f32 %v408, %v413
  %v417 = vpack.c.bf16 %v416, %v416
  %419 = vrot.lane.b32.xlu0 %v349, 96
  %v420 = vpop.permute.xlu0 %419
  %vm421 = vcmask 64512
  %v423 = vsel %vm421, %v417, 0
  %vm425 = vcmask 1043456
  %v427 = vsel %vm425, %v420, 0
  %429 = vmatprep.subr.bf16.mxu0 0
  %430 = vmatpush1.bf16.msra.mxu0 %v427
  %431 = vmatprep.subr.bf16.mxu0 0
  %432 = vmatpush1.bf16.msra.mxu0 0
  %433 = vmatprep.subr.bf16.mxu0 0
  %434 = vmatpush1.bf16.msra.mxu0 0
  %435 = vmatprep.subr.bf16.mxu0 0
  %436 = vmatpush1.bf16.msra.mxu0 0
  %437 = vmatprep.subr.bf16.mxu0 0
  %438 = vmatpush1.bf16.msra.mxu0 0
  %439 = vmatprep.subr.bf16.mxu0 0
  %440 = vmatpush1.bf16.msra.mxu0 0
  %441 = vmatprep.subr.bf16.mxu0 0
  %442 = vmatpush1.bf16.msra.mxu0 0
  %443 = vmatprep.subr.bf16.mxu0 0
  %444 = vmatpush1.bf16.msra.mxu0 0
  %445 = vmatprep.subr.bf16.mxu0 0
  %446 = vmatpush1.bf16.msra.mxu0 0
  %447 = vmatprep.subr.bf16.mxu0 0
  %448 = vmatpush1.bf16.msra.mxu0 0
  %449 = vmatprep.subr.bf16.mxu0 0
  %450 = vmatpush1.bf16.msra.mxu0 0
  %451 = vmatprep.subr.bf16.mxu0 0
  %452 = vmatpush1.bf16.msra.mxu0 0
  %453 = vmatprep.subr.bf16.mxu0 0
  %454 = vmatpush1.bf16.msra.mxu0 0
  %455 = vmatprep.subr.bf16.mxu0 0
  %456 = vmatpush1.bf16.msra.mxu0 0
  %457 = vmatprep.subr.bf16.mxu0 0
  %458 = vmatpush1.bf16.msra.mxu0 0
  %459 = vmatprep.subr.bf16.mxu0 0
  %460 = vmatpush1.bf16.msra.mxu0 0
  %461 = vmatprep.mubr.bf16.mxu0 0
  %462 = vmatmul.mubr.bf16.gmra.mrb[0].mxu0 %v423
  %v463 = vpop.f32.mrb[0].mxu0
  %v464 = vadd.f32 0.0, %v463
  %v465 = vpop.f32.mrb[0].mxu0
  %v466 = vpop.f32.mrb[0].mxu0
  %v467 = vpop.f32.mrb[0].mxu0
  %468 = vdwg.mxu0
  %470 = vrot.lane.b32.xlu0 %v464, 32
  %v471 = vpop.permute.xlu0 %470
  %v473 = vadd.f32 %v415, %v471
  %475 = vrot.lane.b32.xlu0 %v343, 112
  %v476 = vpop.permute.xlu0 %475
  %v478 = vsel %vm344, %v476, 0.0
  %479 = vadd.xlane.f32.xlu0 %v478
  %v480 = vpop.xlane.xlu0 %479
  %v481 = vmul.f32 %v480, 0.25
  %483 = vrot.lane.b32.xlu0 %v339, 112
  %v484 = vpop.permute.xlu0 %483
  %485 = vrot.lane.b32.xlu0 %v349, 112
  %v486 = vpop.permute.xlu0 %485
  %v488 = vsel %vm350, %v484, 0
  %v491 = vsel %vm350, %v486, 0
  %493 = vmatprep.subr.bf16.mxu0 0
  %494 = vmatpush1.bf16.xpose.msra.mxu0 %v491
  %495 = vmatprep.subr.bf16.mxu0 0
  %496 = vmatpush1.bf16.xpose.msra.mxu0 0
  %497 = vmatprep.subr.bf16.mxu0 0
  %498 = vmatpush1.bf16.xpose.msra.mxu0 0
  %499 = vmatprep.subr.bf16.mxu0 0
  %500 = vmatpush1.bf16.xpose.msra.mxu0 0
  %501 = vmatprep.subr.bf16.mxu0 0
  %502 = vmatpush1.bf16.xpose.msra.mxu0 0
  %503 = vmatprep.subr.bf16.mxu0 0
  %504 = vmatpush1.bf16.xpose.msra.mxu0 0
  %505 = vmatprep.subr.bf16.mxu0 0
  %506 = vmatpush1.bf16.xpose.msra.mxu0 0
  %507 = vmatprep.subr.bf16.mxu0 0
  %508 = vmatpush1.bf16.xpose.msra.mxu0 0
  %509 = vmatprep.subr.bf16.mxu0 0
  %510 = vmatpush1.bf16.xpose.msra.mxu0 0
  %511 = vmatprep.subr.bf16.mxu0 0
  %512 = vmatpush1.bf16.xpose.msra.mxu0 0
  %513 = vmatprep.subr.bf16.mxu0 0
  %514 = vmatpush1.bf16.xpose.msra.mxu0 0
  %515 = vmatprep.subr.bf16.mxu0 0
  %516 = vmatpush1.bf16.xpose.msra.mxu0 0
  %517 = vmatprep.subr.bf16.mxu0 0
  %518 = vmatpush1.bf16.xpose.msra.mxu0 0
  %519 = vmatprep.subr.bf16.mxu0 0
  %520 = vmatpush1.bf16.xpose.msra.mxu0 0
  %521 = vmatprep.subr.bf16.mxu0 0
  %522 = vmatpush1.bf16.xpose.msra.mxu0 0
  %523 = vmatprep.subr.bf16.mxu0 0
  %524 = vmatpush1.bf16.xpose.msra.mxu0 0
  %525 = vmatprep.mubr.bf16.mxu0 0
  %526 = vmatmul.mubr.bf16.gmra.mrb[0].mxu0 %v488
  %v527 = vpop.f32.mrb[0].mxu0
  %v528 = vadd.f32 0.0, %v527
  %v529 = vpop.f32.mrb[0].mxu0
  %v530 = vpop.f32.mrb[0].mxu0
  %v531 = vpop.f32.mrb[0].mxu0
  %532 = vdwg.mxu0
  %v533 = vmul.f32 %v528, 0.25
  %v534 = vsel %vm398, %v533, -inf
  %535 = vmax.xlane.f32.xlu0 %v534
  %v536 = vpop.xlane.xlu0 %535
  %v537 = vmax.f32 %v481, %v536
  %v538 = vsub.f32 %v481, %v537
  %v539 = vmul.f32 %v538, 1.442695
  %v540 = vpow.pop %v539
  %v541 = vsub.f32 %v533, %v537
  %v542 = vmul.f32 %v541, 1.442695
  %v543 = vpow.pop %v542
  %v544 = vsel %vm398, %v543, 0.0
  %545 = vadd.xlane.f32.xlu0 %v544
  %v546 = vpop.xlane.xlu0 %545
  %v547 = vadd.f32 %v540, %v546
  %v548 = vrcp.pop %v547
  %v549 = vmul.f32 %v540, %v548
  %v550 = vmul.f32 %v549, %v238
  %v551 = vmul.f32 %v543, %v548
  %v552 = vpack.c.bf16 %v551, %v551
  %553 = vrot.lane.b32.xlu0 %v349, 80
  %v554 = vpop.permute.xlu0 %553
  %v556 = vsel %vm421, %v552, 0
  %v559 = vsel %vm425, %v554, 0
  %561 = vmatprep.subr.bf16.mxu0 0
  %562 = vmatpush1.bf16.msra.mxu0 %v559
  %563 = vmatprep.subr.bf16.mxu0 0
  %564 = vmatpush1.bf16.msra.mxu0 0
  %565 = vmatprep.subr.bf16.mxu0 0
  %566 = vmatpush1.bf16.msra.mxu0 0
  %567 = vmatprep.subr.bf16.mxu0 0
  %568 = vmatpush1.bf16.msra.mxu0 0
  %569 = vmatprep.subr.bf16.mxu0 0
  %570 = vmatpush1.bf16.msra.mxu0 0
  %571 = vmatprep.subr.bf16.mxu0 0
  %572 = vmatpush1.bf16.msra.mxu0 0
  %573 = vmatprep.subr.bf16.mxu0 0
  %574 = vmatpush1.bf16.msra.mxu0 0
  %575 = vmatprep.subr.bf16.mxu0 0
  %576 = vmatpush1.bf16.msra.mxu0 0
  %577 = vmatprep.subr.bf16.mxu0 0
  %578 = vmatpush1.bf16.msra.mxu0 0
  %579 = vmatprep.subr.bf16.mxu0 0
  %580 = vmatpush1.bf16.msra.mxu0 0
  %581 = vmatprep.subr.bf16.mxu0 0
  %582 = vmatpush1.bf16.msra.mxu0 0
  %583 = vmatprep.subr.bf16.mxu0 0
  %584 = vmatpush1.bf16.msra.mxu0 0
  %585 = vmatprep.subr.bf16.mxu0 0
  %586 = vmatpush1.bf16.msra.mxu0 0
  %587 = vmatprep.subr.bf16.mxu0 0
  %588 = vmatpush1.bf16.msra.mxu0 0
  %589 = vmatprep.subr.bf16.mxu0 0
  %590 = vmatpush1.bf16.msra.mxu0 0
  %591 = vmatprep.subr.bf16.mxu0 0
  %592 = vmatpush1.bf16.msra.mxu0 0
  %593 = vmatprep.mubr.bf16.mxu0 0
  %594 = vmatmul.mubr.bf16.gmra.mrb[0].mxu0 %v556
  %v595 = vpop.f32.mrb[0].mxu0
  %v596 = vadd.f32 0.0, %v595
  %v597 = vpop.f32.mrb[0].mxu0
  %v598 = vpop.f32.mrb[0].mxu0
  %v599 = vpop.f32.mrb[0].mxu0
  %600 = vdwg.mxu0
  %602 = vrot.lane.b32.xlu0 %v596, 48
  %v603 = vpop.permute.xlu0 %602
  %v605 = vadd.f32 %v550, %v603
  %607 = vrot.lane.b32.xlu0 %v473, 96
  %v608 = vpop.permute.xlu0 %607
  %611 = vrot.lane.b32.xlu0 %v605, 96
  %v612 = vpop.permute.xlu0 %611
  %v614 = vsel %vm350, %v608, %v612
  %v615 = vpack.c.bf16 %v614, %v614
  %v620 = vunpack.c.l.b16 %v61
  %v621 = vunpack.c.l.b16 %v62
  %v622 = vunpack.c.l.b16 %v63
  %v623 = vunpack.c.l.b16 %v64
  %v624 = vpack.c.b16 %v621, %v620
  %v625 = vpack.c.b16 %v623, %v622
  %v629 = vsel %vm159, %v615, 0
  %631 = vmatprep.subr.bf16.mxu0 0
  %632 = vmatpush1.bf16.msra.mxu0 %v624
  %633 = vmatprep.subr.bf16.mxu0 0
  %634 = vmatpush1.bf16.msra.mxu0 %v625
  %635 = vmatprep.subr.bf16.mxu0 0
  %636 = vmatpush1.bf16.msra.mxu0 0
  %637 = vmatprep.subr.bf16.mxu0 0
  %638 = vmatpush1.bf16.msra.mxu0 0
  %639 = vmatprep.subr.bf16.mxu0 0
  %640 = vmatpush1.bf16.msra.mxu0 0
  %641 = vmatprep.subr.bf16.mxu0 0
  %642 = vmatpush1.bf16.msra.mxu0 0
  %643 = vmatprep.subr.bf16.mxu0 0
  %644 = vmatpush1.bf16.msra.mxu0 0
  %645 = vmatprep.subr.bf16.mxu0 0
  %646 = vmatpush1.bf16.msra.mxu0 0
  %647 = vmatprep.subr.bf16.mxu0 0
  %648 = vmatpush1.bf16.msra.mxu0 0
  %649 = vmatprep.subr.bf16.mxu0 0
  %650 = vmatpush1.bf16.msra.mxu0 0
  %651 = vmatprep.subr.bf16.mxu0 0
  %652 = vmatpush1.bf16.msra.mxu0 0
  %653 = vmatprep.subr.bf16.mxu0 0
  %654 = vmatpush1.bf16.msra.mxu0 0
  %655 = vmatprep.subr.bf16.mxu0 0
  %656 = vmatpush1.bf16.msra.mxu0 0
  %657 = vmatprep.subr.bf16.mxu0 0
  %658 = vmatpush1.bf16.msra.mxu0 0
  %659 = vmatprep.subr.bf16.mxu0 0
  %660 = vmatpush1.bf16.msra.mxu0 0
  %661 = vmatprep.subr.bf16.mxu0 0
  %662 = vmatpush1.bf16.msra.mxu0 0
  %663 = vmatprep.mubr.bf16.mxu0 0
  %664 = vmatmul.mubr.bf16.gmra.mrb[0].mxu0 %v629
  %v665 = vpop.f32.mrb[0].mxu0
  %v666 = vadd.f32 %v65, %v665
  %v667 = vpop.f32.mrb[0].mxu0
  %v668 = vpop.f32.mrb[0].mxu0
  %v669 = vpop.f32.mrb[0].mxu0
  %670 = vdwg.mxu0
  %v671 = vadd.f32 %v137, %v666
  %v672 = vpack.c.bf16 %v671, %v671
  %v677 = vunpack.c.l.b16 %v66
  %v678 = vunpack.c.l.b16 %v67
  %v679 = vunpack.c.l.b16 %v68
  %v680 = vunpack.c.l.b16 %v69
  %v681 = vpack.c.b16 %v678, %v677
  %v682 = vpack.c.b16 %v680, %v679
  %v686 = vsel %vm159, %v672, 0
  %688 = vmatprep.subr.bf16.mxu0 0
  %689 = vmatpush1.bf16.msra.mxu0 %v681
  %690 = vmatprep.subr.bf16.mxu0 0
  %691 = vmatpush1.bf16.msra.mxu0 %v682
  %692 = vmatprep.subr.bf16.mxu0 0
  %693 = vmatpush1.bf16.msra.mxu0 0
  %694 = vmatprep.subr.bf16.mxu0 0
  %695 = vmatpush1.bf16.msra.mxu0 0
  %696 = vmatprep.subr.bf16.mxu0 0
  %697 = vmatpush1.bf16.msra.mxu0 0
  %698 = vmatprep.subr.bf16.mxu0 0
  %699 = vmatpush1.bf16.msra.mxu0 0
  %700 = vmatprep.subr.bf16.mxu0 0
  %701 = vmatpush1.bf16.msra.mxu0 0
  %702 = vmatprep.subr.bf16.mxu0 0
  %703 = vmatpush1.bf16.msra.mxu0 0
  %704 = vmatprep.subr.bf16.mxu0 0
  %705 = vmatpush1.bf16.msra.mxu0 0
  %706 = vmatprep.subr.bf16.mxu0 0
  %707 = vmatpush1.bf16.msra.mxu0 0
  %708 = vmatprep.subr.bf16.mxu0 0
  %709 = vmatpush1.bf16.msra.mxu0 0
  %710 = vmatprep.subr.bf16.mxu0 0
  %711 = vmatpush1.bf16.msra.mxu0 0
  %712 = vmatprep.subr.bf16.mxu0 0
  %713 = vmatpush1.bf16.msra.mxu0 0
  %714 = vmatprep.subr.bf16.mxu0 0
  %715 = vmatpush1.bf16.msra.mxu0 0
  %716 = vmatprep.subr.bf16.mxu0 0
  %717 = vmatpush1.bf16.msra.mxu0 0
  %718 = vmatprep.subr.bf16.mxu0 0
  %719 = vmatpush1.bf16.msra.mxu0 0
  %720 = vmatprep.mubr.bf16.mxu0 0
  %721 = vmatmul.mubr.bf16.gmra.mrb[0].mxu0 %v686
  %v722 = vpop.f32.mrb[0].mxu0
  %v723 = vadd.f32 %v70, %v722
  %v724 = vpop.f32.mrb[0].mxu0
  %v725 = vpop.f32.mrb[0].mxu0
  %v726 = vpop.f32.mrb[0].mxu0
  %727 = vdwg.mxu0
  %vm728 = vcmask 516096
  %729 = vst.msk [vmem:[%s12] sm:$0x1] %vm728, %v723
  %s730 = scalar_lea.vmem %s0, 1
  %v731 = vld [vmem:[%s730] sm:$0x1]
  %s732 = scalar_lea.vmem %s1, 8
  %v733 = vld [vmem:[%s732] sm:$0xff]
  %v734 = vpack.c.bf16 %v731, %v731
  %v736 = vsel %vm98, %v734, 0
  %738 = vmatprep.subr.bf16.mxu0 0
  %739 = vmatpush1.bf16.msra.mxu0 %v90
  %740 = vmatprep.subr.bf16.mxu0 0
  %741 = vmatpush1.bf16.msra.mxu0 %v91
  %742 = vmatprep.subr.bf16.mxu0 0
  %743 = vmatpush1.bf16.msra.mxu0 %v92
  %744 = vmatprep.subr.bf16.mxu0 0
  %745 = vmatpush1.bf16.msra.mxu0 %v93
  %746 = vmatprep.subr.bf16.mxu0 0
  %747 = vmatpush1.bf16.msra.mxu0 0
  %748 = vmatprep.subr.bf16.mxu0 0
  %749 = vmatpush1.bf16.msra.mxu0 0
  %750 = vmatprep.subr.bf16.mxu0 0
  %751 = vmatpush1.bf16.msra.mxu0 0
  %752 = vmatprep.subr.bf16.mxu0 0
  %753 = vmatpush1.bf16.msra.mxu0 0
  %754 = vmatprep.subr.bf16.mxu0 0
  %755 = vmatpush1.bf16.msra.mxu0 0
  %756 = vmatprep.subr.bf16.mxu0 0
  %757 = vmatpush1.bf16.msra.mxu0 0
  %758 = vmatprep.subr.bf16.mxu0 0
  %759 = vmatpush1.bf16.msra.mxu0 0
  %760 = vmatprep.subr.bf16.mxu0 0
  %761 = vmatpush1.bf16.msra.mxu0 0
  %762 = vmatprep.subr.bf16.mxu0 0
  %763 = vmatpush1.bf16.msra.mxu0 0
  %764 = vmatprep.subr.bf16.mxu0 0
  %765 = vmatpush1.bf16.msra.mxu0 0
  %766 = vmatprep.subr.bf16.mxu0 0
  %767 = vmatpush1.bf16.msra.mxu0 0
  %768 = vmatprep.subr.bf16.mxu0 0
  %769 = vmatpush1.bf16.msra.mxu0 0
  %770 = vmatprep.mubr.bf16.mxu0 0
  %771 = vmatmul.mubr.bf16.gmra.mrb[0].mxu0 %v736
  %v772 = vpop.f32.mrb[0].mxu0
  %v773 = vadd.f32 %v52, %v772
  %v774 = vpop.f32.mrb[0].mxu0
  %v775 = vpop.f32.mrb[0].mxu0
  %v776 = vpop.f32.mrb[0].mxu0
  %777 = vdwg.mxu0
  %v778 = vsel %vm142, %v773, 0.0
  %779 = vadd.xlane.f32.xlu0 %v778
  %v780 = vpop.xlane.xlu0 %779
  %v781 = vmul.f32 %v780, %v146
  %v782 = vsub.f32 %v773, %v781
  %v783 = vmul.f32 %v782, %v782
  %v784 = vsel %vm142, %v783, 0.0
  %785 = vadd.xlane.f32.xlu0 %v784
  %v786 = vpop.xlane.xlu0 %785
  %v787 = vmul.f32 %v786, %v146
  %v788 = vadd.f32 %v787, 1e-05
  %v789 = vrsqrt.pop %v788
  %v790 = vmul.f32 %v782, %v789
  %v791 = vmul.f32 %v790, %v42
  %v792 = vadd.f32 %v791, %v43
  %v793 = vsel %vm159, %v733, 0.0
  %794 = vadd.xlane.f32.xlu0 %v793
  %v795 = vpop.xlane.xlu0 %794
  %v796 = vmul.f32 %v795, %v146
  %v797 = vsub.f32 %v733, %v796
  %v798 = vmul.f32 %v797, %v797
  %v799 = vsel %vm159, %v798, 0.0
  %800 = vadd.xlane.f32.xlu0 %v799
  %v801 = vpop.xlane.xlu0 %800
  %v802 = vmul.f32 %v801, %v146
  %v803 = vadd.f32 %v802, 1e-05
  %v804 = vrsqrt.pop %v803
  %v805 = vmul.f32 %v797, %v804
  %v806 = vmul.f32 %v805, %v177
  %v807 = vadd.f32 %v806, %v184
  %v808 = vpack.c.bf16 %v792, %v792
  %v810 = vsel %vm159, %v808, 0
  %812 = vmatprep.subr.bf16.mxu0 0
  %813 = vmatpush1.bf16.msra.mxu0 %v196
  %814 = vmatprep.subr.bf16.mxu0 0
  %815 = vmatpush1.bf16.msra.mxu0 %v197
  %816 = vmatprep.subr.bf16.mxu0 0
  %817 = vmatpush1.bf16.msra.mxu0 0
  %818 = vmatprep.subr.bf16.mxu0 0
  %819 = vmatpush1.bf16.msra.mxu0 0
  %820 = vmatprep.subr.bf16.mxu0 0
  %821 = vmatpush1.bf16.msra.mxu0 0
  %822 = vmatprep.subr.bf16.mxu0 0
  %823 = vmatpush1.bf16.msra.mxu0 0
  %824 = vmatprep.subr.bf16.mxu0 0
  %825 = vmatpush1.bf16.msra.mxu0 0
  %826 = vmatprep.subr.bf16.mxu0 0
  %827 = vmatpush1.bf16.msra.mxu0 0
  %828 = vmatprep.subr.bf16.mxu0 0
  %829 = vmatpush1.bf16.msra.mxu0 0
  %830 = vmatprep.subr.bf16.mxu0 0
  %831 = vmatpush1.bf16.msra.mxu0 0
  %832 = vmatprep.subr.bf16.mxu0 0
  %833 = vmatpush1.bf16.msra.mxu0 0
  %834 = vmatprep.subr.bf16.mxu0 0
  %835 = vmatpush1.bf16.msra.mxu0 0
  %836 = vmatprep.subr.bf16.mxu0 0
  %837 = vmatpush1.bf16.msra.mxu0 0
  %838 = vmatprep.subr.bf16.mxu0 0
  %839 = vmatpush1.bf16.msra.mxu0 0
  %840 = vmatprep.subr.bf16.mxu0 0
  %841 = vmatpush1.bf16.msra.mxu0 0
  %842 = vmatprep.subr.bf16.mxu0 0
  %843 = vmatpush1.bf16.msra.mxu0 0
  %844 = vmatprep.mubr.bf16.mxu0 0
  %845 = vmatmul.mubr.bf16.gmra.mrb[0].mxu0 %v810
  %v846 = vpop.f32.mrb[0].mxu0
  %v847 = vadd.f32 0.0, %v846
  %v848 = vpop.f32.mrb[0].mxu0
  %v849 = vpop.f32.mrb[0].mxu0
  %v850 = vpop.f32.mrb[0].mxu0
  %851 = vdwg.mxu0
  %852 = vmatprep.subr.bf16.mxu0 0
  %853 = vmatpush1.bf16.msra.mxu0 %v251
  %854 = vmatprep.subr.bf16.mxu0 0
  %855 = vmatpush1.bf16.msra.mxu0 %v252
  %856 = vmatprep.subr.bf16.mxu0 0
  %857 = vmatpush1.bf16.msra.mxu0 0
  %858 = vmatprep.subr.bf16.mxu0 0
  %859 = vmatpush1.bf16.msra.mxu0 0
  %860 = vmatprep.subr.bf16.mxu0 0
  %861 = vmatpush1.bf16.msra.mxu0 0
  %862 = vmatprep.subr.bf16.mxu0 0
  %863 = vmatpush1.bf16.msra.mxu0 0
  %864 = vmatprep.subr.bf16.mxu0 0
  %865 = vmatpush1.bf16.msra.mxu0 0
  %866 = vmatprep.subr.bf16.mxu0 0
  %867 = vmatpush1.bf16.msra.mxu0 0
  %868 = vmatprep.subr.bf16.mxu0 0
  %869 = vmatpush1.bf16.msra.mxu0 0
  %870 = vmatprep.subr.bf16.mxu0 0
  %871 = vmatpush1.bf16.msra.mxu0 0
  %872 = vmatprep.subr.bf16.mxu0 0
  %873 = vmatpush1.bf16.msra.mxu0 0
  %874 = vmatprep.subr.bf16.mxu0 0
  %875 = vmatpush1.bf16.msra.mxu0 0
  %876 = vmatprep.subr.bf16.mxu0 0
  %877 = vmatpush1.bf16.msra.mxu0 0
  %878 = vmatprep.subr.bf16.mxu0 0
  %879 = vmatpush1.bf16.msra.mxu0 0
  %880 = vmatprep.subr.bf16.mxu0 0
  %881 = vmatpush1.bf16.msra.mxu0 0
  %882 = vmatprep.subr.bf16.mxu0 0
  %883 = vmatpush1.bf16.msra.mxu0 0
  %884 = vmatprep.mubr.bf16.mxu0 0
  %885 = vmatmul.mubr.bf16.gmra.mrb[0].mxu0 %v810
  %v886 = vpop.f32.mrb[0].mxu0
  %v887 = vadd.f32 0.0, %v886
  %v888 = vpop.f32.mrb[0].mxu0
  %v889 = vpop.f32.mrb[0].mxu0
  %v890 = vpop.f32.mrb[0].mxu0
  %891 = vdwg.mxu0
  %v892 = vpack.c.bf16 %v807, %v807
  %v894 = vsel %vm159, %v892, 0
  %896 = vmatprep.subr.bf16.mxu0 0
  %897 = vmatpush1.bf16.msra.mxu0 %v196
  %898 = vmatprep.subr.bf16.mxu0 0
  %899 = vmatpush1.bf16.msra.mxu0 %v197
  %900 = vmatprep.subr.bf16.mxu0 0
  %901 = vmatpush1.bf16.msra.mxu0 0
  %902 = vmatprep.subr.bf16.mxu0 0
  %903 = vmatpush1.bf16.msra.mxu0 0
  %904 = vmatprep.subr.bf16.mxu0 0
  %905 = vmatpush1.bf16.msra.mxu0 0
  %906 = vmatprep.subr.bf16.mxu0 0
  %907 = vmatpush1.bf16.msra.mxu0 0
  %908 = vmatprep.subr.bf16.mxu0 0
  %909 = vmatpush1.bf16.msra.mxu0 0
  %910 = vmatprep.subr.bf16.mxu0 0
  %911 = vmatpush1.bf16.msra.mxu0 0
  %912 = vmatprep.subr.bf16.mxu0 0
  %913 = vmatpush1.bf16.msra.mxu0 0
  %914 = vmatprep.subr.bf16.mxu0 0
  %915 = vmatpush1.bf16.msra.mxu0 0
  %916 = vmatprep.subr.bf16.mxu0 0
  %917 = vmatpush1.bf16.msra.mxu0 0
  %918 = vmatprep.subr.bf16.mxu0 0
  %919 = vmatpush1.bf16.msra.mxu0 0
  %920 = vmatprep.subr.bf16.mxu0 0
  %921 = vmatpush1.bf16.msra.mxu0 0
  %922 = vmatprep.subr.bf16.mxu0 0
  %923 = vmatpush1.bf16.msra.mxu0 0
  %924 = vmatprep.subr.bf16.mxu0 0
  %925 = vmatpush1.bf16.msra.mxu0 0
  %926 = vmatprep.subr.bf16.mxu0 0
  %927 = vmatpush1.bf16.msra.mxu0 0
  %928 = vmatprep.mubr.bf16.mxu0 0
  %929 = vmatmul.mubr.bf16.gmra.mrb[0].mxu0 %v894
  %v930 = vpop.f32.mrb[0].mxu0
  %v931 = vadd.f32 0.0, %v930
  %v932 = vpop.f32.mrb[0].mxu0
  %v933 = vpop.f32.mrb[0].mxu0
  %v934 = vpop.f32.mrb[0].mxu0
  %935 = vdwg.mxu0
  %v936 = vpack.c.bf16 %v887, %v887
  %v937 = vunpack.c.l.bf16 %v936
  %v938 = vpack.c.bf16 %v847, %v847
  %v939 = vunpack.c.l.bf16 %v938
  %v940 = vmul.f32 %v937, %v939
  %v941 = vsel %vm344, %v940, 0.0
  %942 = vadd.xlane.f32.xlu0 %v941
  %v943 = vpop.xlane.xlu0 %942
  %v944 = vmul.f32 %v943, 0.25
  %v945 = vpack.c.bf16 %v931, %v931
  %v947 = vsel %vm350, %v936, 0
  %v950 = vsel %vm350, %v945, 0
  %952 = vmatprep.subr.bf16.mxu0 0
  %953 = vmatpush1.bf16.xpose.msra.mxu0 %v950
  %954 = vmatprep.subr.bf16.mxu0 0
  %955 = vmatpush1.bf16.xpose.msra.mxu0 0
  %956 = vmatprep.subr.bf16.mxu0 0
  %957 = vmatpush1.bf16.xpose.msra.mxu0 0
  %958 = vmatprep.subr.bf16.mxu0 0
  %959 = vmatpush1.bf16.xpose.msra.mxu0 0
  %960 = vmatprep.subr.bf16.mxu0 0
  %961 = vmatpush1.bf16.xpose.msra.mxu0 0
  %962 = vmatprep.subr.bf16.mxu0 0
  %963 = vmatpush1.bf16.xpose.msra.mxu0 0
  %964 = vmatprep.subr.bf16.mxu0 0
  %965 = vmatpush1.bf16.xpose.msra.mxu0 0
  %966 = vmatprep.subr.bf16.mxu0 0
  %967 = vmatpush1.bf16.xpose.msra.mxu0 0
  %968 = vmatprep.subr.bf16.mxu0 0
  %969 = vmatpush1.bf16.xpose.msra.mxu0 0
  %970 = vmatprep.subr.bf16.mxu0 0
  %971 = vmatpush1.bf16.xpose.msra.mxu0 0
  %972 = vmatprep.subr.bf16.mxu0 0
  %973 = vmatpush1.bf16.xpose.msra.mxu0 0
  %974 = vmatprep.subr.bf16.mxu0 0
  %975 = vmatpush1.bf16.xpose.msra.mxu0 0
  %976 = vmatprep.subr.bf16.mxu0 0
  %977 = vmatpush1.bf16.xpose.msra.mxu0 0
  %978 = vmatprep.subr.bf16.mxu0 0
  %979 = vmatpush1.bf16.xpose.msra.mxu0 0
  %980 = vmatprep.subr.bf16.mxu0 0
  %981 = vmatpush1.bf16.xpose.msra.mxu0 0
  %982 = vmatprep.subr.bf16.mxu0 0
  %983 = vmatpush1.bf16.xpose.msra.mxu0 0
  %984 = vmatprep.mubr.bf16.mxu0 0
  %985 = vmatmul.mubr.bf16.gmra.mrb[0].mxu0 %v947
  %v986 = vpop.f32.mrb[0].mxu0
  %v987 = vadd.f32 0.0, %v986
  %v988 = vpop.f32.mrb[0].mxu0
  %v989 = vpop.f32.mrb[0].mxu0
  %v990 = vpop.f32.mrb[0].mxu0
  %991 = vdwg.mxu0
  %v992 = vmul.f32 %v987, 0.25
  %v993 = vsel %vm398, %v992, -inf
  %994 = vmax.xlane.f32.xlu0 %v993
  %v995 = vpop.xlane.xlu0 %994
  %v996 = vmax.f32 %v944, %v995
  %v997 = vsub.f32 %v944, %v996
  %v998 = vmul.f32 %v997, 1.442695
  %v999 = vpow.pop %v998
  %v1000 = vsub.f32 %v992, %v996
  %v1001 = vmul.f32 %v1000, 1.442695
  %v1002 = vpow.pop %v1001
  %v1003 = vsel %vm398, %v1002, 0.0
  %1004 = vadd.xlane.f32.xlu0 %v1003
  %v1005 = vpop.xlane.xlu0 %1004
  %v1006 = vadd.f32 %v999, %v1005
  %v1007 = vrcp.pop %v1006
  %v1008 = vmul.f32 %v999, %v1007
  %v1009 = vmul.f32 %v1008, %v847
  %v1010 = vmul.f32 %v1002, %v1007
  %v1011 = vpack.c.bf16 %v1010, %v1010
  %1013 = vrot.lane.b32.xlu0 %v945, 96
  %v1014 = vpop.permute.xlu0 %1013
  %v1016 = vsel %vm421, %v1011, 0
  %v1019 = vsel %vm425, %v1014, 0
  %1021 = vmatprep.subr.bf16.mxu0 0
  %1022 = vmatpush1.bf16.msra.mxu0 %v1019
  %1023 = vmatprep.subr.bf16.mxu0 0
  %1024 = vmatpush1.bf16.msra.mxu0 0
  %1025 = vmatprep.subr.bf16.mxu0 0
  %1026 = vmatpush1.bf16.msra.mxu0 0
  %1027 = vmatprep.subr.bf16.mxu0 0
  %1028 = vmatpush1.bf16.msra.mxu0 0
  %1029 = vmatprep.subr.bf16.mxu0 0
  %1030 = vmatpush1.bf16.msra.mxu0 0
  %1031 = vmatprep.subr.bf16.mxu0 0
  %1032 = vmatpush1.bf16.msra.mxu0 0
  %1033 = vmatprep.subr.bf16.mxu0 0
  %1034 = vmatpush1.bf16.msra.mxu0 0
  %1035 = vmatprep.subr.bf16.mxu0 0
  %1036 = vmatpush1.bf16.msra.mxu0 0
  %1037 = vmatprep.subr.bf16.mxu0 0
  %1038 = vmatpush1.bf16.msra.mxu0 0
  %1039 = vmatprep.subr.bf16.mxu0 0
  %1040 = vmatpush1.bf16.msra.mxu0 0
  %1041 = vmatprep.subr.bf16.mxu0 0
  %1042 = vmatpush1.bf16.msra.mxu0 0
  %1043 = vmatprep.subr.bf16.mxu0 0
  %1044 = vmatpush1.bf16.msra.mxu0 0
  %1045 = vmatprep.subr.bf16.mxu0 0
  %1046 = vmatpush1.bf16.msra.mxu0 0
  %1047 = vmatprep.subr.bf16.mxu0 0
  %1048 = vmatpush1.bf16.msra.mxu0 0
  %1049 = vmatprep.subr.bf16.mxu0 0
  %1050 = vmatpush1.bf16.msra.mxu0 0
  %1051 = vmatprep.subr.bf16.mxu0 0
  %1052 = vmatpush1.bf16.msra.mxu0 0
  %1053 = vmatprep.mubr.bf16.mxu0 0
  %1054 = vmatmul.mubr.bf16.gmra.mrb[0].mxu0 %v1016
  %v1055 = vpop.f32.mrb[0].mxu0
  %v1056 = vadd.f32 0.0, %v1055
  %v1057 = vpop.f32.mrb[0].mxu0
  %v1058 = vpop.f32.mrb[0].mxu0
  %v1059 = vpop.f32.mrb[0].mxu0
  %1060 = vdwg.mxu0
  %1062 = vrot.lane.b32.xlu0 %v1056, 32
  %v1063 = vpop.permute.xlu0 %1062
  %v1065 = vadd.f32 %v1009, %v1063
  %1067 = vrot.lane.b32.xlu0 %v940, 112
  %v1068 = vpop.permute.xlu0 %1067
  %v1070 = vsel %vm344, %v1068, 0.0
  %1071 = vadd.xlane.f32.xlu0 %v1070
  %v1072 = vpop.xlane.xlu0 %1071
  %v1073 = vmul.f32 %v1072, 0.25
  %1075 = vrot.lane.b32.xlu0 %v936, 112
  %v1076 = vpop.permute.xlu0 %1075
  %1077 = vrot.lane.b32.xlu0 %v945, 112
  %v1078 = vpop.permute.xlu0 %1077
  %v1080 = vsel %vm350, %v1076, 0
  %v1083 = vsel %vm350, %v1078, 0
  %1085 = vmatprep.subr.bf16.mxu0 0
  %1086 = vmatpush1.bf16.xpose.msra.mxu0 %v1083
  %1087 = vmatprep.subr.bf16.mxu0 0
  %1088 = vmatpush1.bf16.xpose.msra.mxu0 0
  %1089 = vmatprep.subr.bf16.mxu0 0
  %1090 = vmatpush1.bf16.xpose.msra.mxu0 0
  %1091 = vmatprep.subr.bf16.mxu0 0
  %1092 = vmatpush1.bf16.xpose.msra.mxu0 0
  %1093 = vmatprep.subr.bf16.mxu0 0
  %1094 = vmatpush1.bf16.xpose.msra.mxu0 0
  %1095 = vmatprep.subr.bf16.mxu0 0
  %1096 = vmatpush1.bf16.xpose.msra.mxu0 0
  %1097 = vmatprep.subr.bf16.mxu0 0
  %1098 = vmatpush1.bf16.xpose.msra.mxu0 0
  %1099 = vmatprep.subr.bf16.mxu0 0
  %1100 = vmatpush1.bf16.xpose.msra.mxu0 0
  %1101 = vmatprep.subr.bf16.mxu0 0
  %1102 = vmatpush1.bf16.xpose.msra.mxu0 0
  %1103 = vmatprep.subr.bf16.mxu0 0
  %1104 = vmatpush1.bf16.xpose.msra.mxu0 0
  %1105 = vmatprep.subr.bf16.mxu0 0
  %1106 = vmatpush1.bf16.xpose.msra.mxu0 0
  %1107 = vmatprep.subr.bf16.mxu0 0
  %1108 = vmatpush1.bf16.xpose.msra.mxu0 0
  %1109 = vmatprep.subr.bf16.mxu0 0
  %1110 = vmatpush1.bf16.xpose.msra.mxu0 0
  %1111 = vmatprep.subr.bf16.mxu0 0
  %1112 = vmatpush1.bf16.xpose.msra.mxu0 0
  %1113 = vmatprep.subr.bf16.mxu0 0
  %1114 = vmatpush1.bf16.xpose.msra.mxu0 0
  %1115 = vmatprep.subr.bf16.mxu0 0
  %1116 = vmatpush1.bf16.xpose.msra.mxu0 0
  %1117 = vmatprep.mubr.bf16.mxu0 0
  %1118 = vmatmul.mubr.bf16.gmra.mrb[0].mxu0 %v1080
  %v1119 = vpop.f32.mrb[0].mxu0
  %v1120 = vadd.f32 0.0, %v1119
  %v1121 = vpop.f32.mrb[0].mxu0
  %v1122 = vpop.f32.mrb[0].mxu0
  %v1123 = vpop.f32.mrb[0].mxu0
  %1124 = vdwg.mxu0
  %v1125 = vmul.f32 %v1120, 0.25
  %v1126 = vsel %vm398, %v1125, -inf
  %1127 = vmax.xlane.f32.xlu0 %v1126
  %v1128 = vpop.xlane.xlu0 %1127
  %v1129 = vmax.f32 %v1073, %v1128
  %v1130 = vsub.f32 %v1073, %v1129
  %v1131 = vmul.f32 %v1130, 1.442695
  %v1132 = vpow.pop %v1131
  %v1133 = vsub.f32 %v1125, %v1129
  %v1134 = vmul.f32 %v1133, 1.442695
  %v1135 = vpow.pop %v1134
  %v1136 = vsel %vm398, %v1135, 0.0
  %1137 = vadd.xlane.f32.xlu0 %v1136
  %v1138 = vpop.xlane.xlu0 %1137
  %v1139 = vadd.f32 %v1132, %v1138
  %v1140 = vrcp.pop %v1139
  %v1141 = vmul.f32 %v1132, %v1140
  %v1142 = vmul.f32 %v1141, %v847
  %v1143 = vmul.f32 %v1135, %v1140
  %v1144 = vpack.c.bf16 %v1143, %v1143
  %1145 = vrot.lane.b32.xlu0 %v945, 80
  %v1146 = vpop.permute.xlu0 %1145
  %v1148 = vsel %vm421, %v1144, 0
  %v1151 = vsel %vm425, %v1146, 0
  %1153 = vmatprep.subr.bf16.mxu0 0
  %1154 = vmatpush1.bf16.msra.mxu0 %v1151
  %1155 = vmatprep.subr.bf16.mxu0 0
  %1156 = vmatpush1.bf16.msra.mxu0 0
  %1157 = vmatprep.subr.bf16.mxu0 0
  %1158 = vmatpush1.bf16.msra.mxu0 0
  %1159 = vmatprep.subr.bf16.mxu0 0
  %1160 = vmatpush1.bf16.msra.mxu0 0
  %1161 = vmatprep.subr.bf16.mxu0 0
  %1162 = vmatpush1.bf16.msra.mxu0 0
  %1163 = vmatprep.subr.bf16.mxu0 0
  %1164 = vmatpush1.bf16.msra.mxu0 0
  %1165 = vmatprep.subr.bf16.mxu0 0
  %1166 = vmatpush1.bf16.msra.mxu0 0
  %1167 = vmatprep.subr.bf16.mxu0 0
  %1168 = vmatpush1.bf16.msra.mxu0 0
  %1169 = vmatprep.subr.bf16.mxu0 0
  %1170 = vmatpush1.bf16.msra.mxu0 0
  %1171 = vmatprep.subr.bf16.mxu0 0
  %1172 = vmatpush1.bf16.msra.mxu0 0
  %1173 = vmatprep.subr.bf16.mxu0 0
  %1174 = vmatpush1.bf16.msra.mxu0 0
  %1175 = vmatprep.subr.bf16.mxu0 0
  %1176 = vmatpush1.bf16.msra.mxu0 0
  %1177 = vmatprep.subr.bf16.mxu0 0
  %1178 = vmatpush1.bf16.msra.mxu0 0
  %1179 = vmatprep.subr.bf16.mxu0 0
  %1180 = vmatpush1.bf16.msra.mxu0 0
  %1181 = vmatprep.subr.bf16.mxu0 0
  %1182 = vmatpush1.bf16.msra.mxu0 0
  %1183 = vmatprep.subr.bf16.mxu0 0
  %1184 = vmatpush1.bf16.msra.mxu0 0
  %1185 = vmatprep.mubr.bf16.mxu0 0
  %1186 = vmatmul.mubr.bf16.gmra.mrb[0].mxu0 %v1148
  %v1187 = vpop.f32.mrb[0].mxu0
  %v1188 = vadd.f32 0.0, %v1187
  %v1189 = vpop.f32.mrb[0].mxu0
  %v1190 = vpop.f32.mrb[0].mxu0
  %v1191 = vpop.f32.mrb[0].mxu0
  %1192 = vdwg.mxu0
  %1194 = vrot.lane.b32.xlu0 %v1188, 48
  %v1195 = vpop.permute.xlu0 %1194
  %v1197 = vadd.f32 %v1142, %v1195
  %1199 = vrot.lane.b32.xlu0 %v1065, 96
  %v1200 = vpop.permute.xlu0 %1199
  %1203 = vrot.lane.b32.xlu0 %v1197, 96
  %v1204 = vpop.permute.xlu0 %1203
  %v1206 = vsel %vm350, %v1200, %v1204
  %v1207 = vpack.c.bf16 %v1206, %v1206
  %v1209 = vsel %vm159, %v1207, 0
  %1211 = vmatprep.subr.bf16.mxu0 0
  %1212 = vmatpush1.bf16.msra.mxu0 %v624
  %1213 = vmatprep.subr.bf16.mxu0 0
  %1214 = vmatpush1.bf16.msra.mxu0 %v625
  %1215 = vmatprep.subr.bf16.mxu0 0
  %1216 = vmatpush1.bf16.msra.mxu0 0
  %1217 = vmatprep.subr.bf16.mxu0 0
  %1218 = vmatpush1.bf16.msra.mxu0 0
  %1219 = vmatprep.subr.bf16.mxu0 0
  %1220 = vmatpush1.bf16.msra.mxu0 0
  %1221 = vmatprep.subr.bf16.mxu0 0
  %1222 = vmatpush1.bf16.msra.mxu0 0
  %1223 = vmatprep.subr.bf16.mxu0 0
  %1224 = vmatpush1.bf16.msra.mxu0 0
  %1225 = vmatprep.subr.bf16.mxu0 0
  %1226 = vmatpush1.bf16.msra.mxu0 0
  %1227 = vmatprep.subr.bf16.mxu0 0
  %1228 = vmatpush1.bf16.msra.mxu0 0
  %1229 = vmatprep.subr.bf16.mxu0 0
  %1230 = vmatpush1.bf16.msra.mxu0 0
  %1231 = vmatprep.subr.bf16.mxu0 0
  %1232 = vmatpush1.bf16.msra.mxu0 0
  %1233 = vmatprep.subr.bf16.mxu0 0
  %1234 = vmatpush1.bf16.msra.mxu0 0
  %1235 = vmatprep.subr.bf16.mxu0 0
  %1236 = vmatpush1.bf16.msra.mxu0 0
  %1237 = vmatprep.subr.bf16.mxu0 0
  %1238 = vmatpush1.bf16.msra.mxu0 0
  %1239 = vmatprep.subr.bf16.mxu0 0
  %1240 = vmatpush1.bf16.msra.mxu0 0
  %1241 = vmatprep.subr.bf16.mxu0 0
  %1242 = vmatpush1.bf16.msra.mxu0 0
  %1243 = vmatprep.mubr.bf16.mxu0 0
  %1244 = vmatmul.mubr.bf16.gmra.mrb[0].mxu0 %v1209
  %v1245 = vpop.f32.mrb[0].mxu0
  %v1246 = vadd.f32 %v65, %v1245
  %v1247 = vpop.f32.mrb[0].mxu0
  %v1248 = vpop.f32.mrb[0].mxu0
  %v1249 = vpop.f32.mrb[0].mxu0
  %1250 = vdwg.mxu0
  %v1251 = vadd.f32 %v773, %v1246
  %v1252 = vpack.c.bf16 %v1251, %v1251
  %v1254 = vsel %vm159, %v1252, 0
  %1256 = vmatprep.subr.bf16.mxu0 0
  %1257 = vmatpush1.bf16.msra.mxu0 %v681
  %1258 = vmatprep.subr.bf16.mxu0 0
  %1259 = vmatpush1.bf16.msra.mxu0 %v682
  %1260 = vmatprep.subr.bf16.mxu0 0
  %1261 = vmatpush1.bf16.msra.mxu0 0
  %1262 = vmatprep.subr.bf16.mxu0 0
  %1263 = vmatpush1.bf16.msra.mxu0 0
  %1264 = vmatprep.subr.bf16.mxu0 0
  %1265 = vmatpush1.bf16.msra.mxu0 0
  %1266 = vmatprep.subr.bf16.mxu0 0
  %1267 = vmatpush1.bf16.msra.mxu0 0
  %1268 = vmatprep.subr.bf16.mxu0 0
  %1269 = vmatpush1.bf16.msra.mxu0 0
  %1270 = vmatprep.subr.bf16.mxu0 0
  %1271 = vmatpush1.bf16.msra.mxu0 0
  %1272 = vmatprep.subr.bf16.mxu0 0
  %1273 = vmatpush1.bf16.msra.mxu0 0
  %1274 = vmatprep.subr.bf16.mxu0 0
  %1275 = vmatpush1.bf16.msra.mxu0 0
  %1276 = vmatprep.subr.bf16.mxu0 0
  %1277 = vmatpush1.bf16.msra.mxu0 0
  %1278 = vmatprep.subr.bf16.mxu0 0
  %1279 = vmatpush1.bf16.msra.mxu0 0
  %1280 = vmatprep.subr.bf16.mxu0 0
  %1281 = vmatpush1.bf16.msra.mxu0 0
  %1282 = vmatprep.subr.bf16.mxu0 0
  %1283 = vmatpush1.bf16.msra.mxu0 0
  %1284 = vmatprep.subr.bf16.mxu0 0
  %1285 = vmatpush1.bf16.msra.mxu0 0
  %1286 = vmatprep.subr.bf16.mxu0 0
  %1287 = vmatpush1.bf16.msra.mxu0 0
  %1288 = vmatprep.mubr.bf16.mxu0 0
  %1289 = vmatmul.mubr.bf16.gmra.mrb[0].mxu0 %v1254
  %v1290 = vpop.f32.mrb[0].mxu0
  %v1291 = vadd.f32 %v70, %v1290
  %v1292 = vpop.f32.mrb[0].mxu0
  %v1293 = vpop.f32.mrb[0].mxu0
  %v1294 = vpop.f32.mrb[0].mxu0
  %1295 = vdwg.mxu0
  %s1296 = scalar_lea.vmem %s12, 1
  %1297 = vst.msk [vmem:[%s1296] sm:$0x1] %vm728, %v1291
  // Predicated region
  $region50: #{multiscale_apply.14} parent=0 // pred_check
    _
  $region51: #{multiscale_apply.14} parent=0 // pred_check_branch
    %1299 = sbr.rel (0) target = $region53
  $region52: #{multiscale_apply.14} parent=0 // pred_region
    _
  $region53: #{multiscale_apply.14} parent=0 // pred_fallthru
    _
  // Predicated region
  $region54: #{multiscale_apply.14} parent=0 // pred_check
    _
  $region55: #{multiscale_apply.14} parent=0 // pred_check_branch
    %1301 = sbr.rel (0) target = $region57
  $region56: #{multiscale_apply.14} parent=0 // pred_region
    _
  $region57: #{multiscale_apply.14} parent=0 // pred_fallthru
    _

// kernel: multiscale_apply.15
$region0: #{multiscale_apply.15}
  #allocation0 [shape = 'u32[]', space=smem, size = 0x4, offset = 0x4, fixed_abs, tag = 'smem constant byte address 0x4 - core index']
  #allocation1 [shape = 'u32[144,128]{1,0:T(1,128)}', space=vmem, size = 0x12000, scoped, tag = 'internal scratch']
  %s0 = inlined_call_operand.vmem [shape: f32[2,1,32], index: 0, kind: input, shape index: {}]
  %s1 = inlined_call_operand.vmem [shape: f32[2,4,64], index: 1, kind: input, shape index: {}]
  %s2 = inlined_call_operand.vmem [shape: bf16[32,64], index: 2, kind: input, shape index: {}]
  %s3 = inlined_call_operand.vmem [shape: f32[1,64], index: 3, kind: input, shape index: {}]
  %s4 = inlined_call_operand.vmem [shape: f32[1,64], index: 4, kind: input, shape index: {}]
  %s5 = inlined_call_operand.vmem [shape: f32[1,64], index: 5, kind: input, shape index: {}]
  %s6 = inlined_call_operand.vmem [shape: bf16[64,128], index: 6, kind: input, shape index: {}]
  %s7 = inlined_call_operand.vmem [shape: bf16[64,64], index: 7, kind: input, shape index: {}]
  %s8 = inlined_call_operand.vmem [shape: bf16[64,64], index: 8, kind: input, shape index: {}]
  %s9 = inlined_call_operand.vmem [shape: f32[1,64], index: 9, kind: input, shape index: {}]
  %s10 = inlined_call_operand.vmem [shape: bf16[64,32], index: 10, kind: input, shape index: {}]
  %s11 = inlined_call_operand.vmem [shape: f32[1,32], index: 11, kind: input, shape index: {}]
  %s12 = inlined_call_operand.vmem [shape: f32[2,1,32], index: 12, kind: output, shape index: {}]
  %s13 = sld [smem:[#allocation0]]
  $region58: #{multiscale_apply.15} parent=0
    _
  %s15 = ssub.s32 1, %s13
  %s16 = scalar_select 0, %s15, %s13
  // Predicated region
  $region2: #{multiscale_apply.15} parent=0 // pred_check
    _
  $region3: #{multiscale_apply.15} parent=0 // pred_check_branch
    %18 = sbr.rel (0) target = $region5
  $region4: #{multiscale_apply.15} parent=0 // pred_region
    _
  $region5: #{multiscale_apply.15} parent=0 // pred_fallthru
    _
  // Predicated region
  $region6: #{multiscale_apply.15} parent=0 // pred_check
    _
  $region7: #{multiscale_apply.15} parent=0 // pred_check_branch
    %20 = sbr.rel (0) target = $region9
  $region8: #{multiscale_apply.15} parent=0 // pred_region
    _
  $region9: #{multiscale_apply.15} parent=0 // pred_fallthru
    _
  // Predicated region
  $region10: #{multiscale_apply.15} parent=0 // pred_check
    _
  $region11: #{multiscale_apply.15} parent=0 // pred_check_branch
    %22 = sbr.rel (0) target = $region13
  $region12: #{multiscale_apply.15} parent=0 // pred_region
    _
  $region13: #{multiscale_apply.15} parent=0 // pred_fallthru
    _
  // Predicated region
  $region14: #{multiscale_apply.15} parent=0 // pred_check
    _
  $region15: #{multiscale_apply.15} parent=0 // pred_check_branch
    %24 = sbr.rel (0) target = $region17
  $region16: #{multiscale_apply.15} parent=0 // pred_region
    _
  $region17: #{multiscale_apply.15} parent=0 // pred_fallthru
    _
  // Predicated region
  $region18: #{multiscale_apply.15} parent=0 // pred_check
    _
  $region19: #{multiscale_apply.15} parent=0 // pred_check_branch
    %26 = sbr.rel (0) target = $region21
  $region20: #{multiscale_apply.15} parent=0 // pred_region
    _
  $region21: #{multiscale_apply.15} parent=0 // pred_fallthru
    _
  // Predicated region
  $region22: #{multiscale_apply.15} parent=0 // pred_check
    _
  $region23: #{multiscale_apply.15} parent=0 // pred_check_branch
    %28 = sbr.rel (0) target = $region25
  $region24: #{multiscale_apply.15} parent=0 // pred_region
    _
  $region25: #{multiscale_apply.15} parent=0 // pred_fallthru
    _
  // Predicated region
  $region26: #{multiscale_apply.15} parent=0 // pred_check
    _
  $region27: #{multiscale_apply.15} parent=0 // pred_check_branch
    %30 = sbr.rel (0) target = $region29
  $region28: #{multiscale_apply.15} parent=0 // pred_region
    _
  $region29: #{multiscale_apply.15} parent=0 // pred_fallthru
    _
  // Predicated region
  $region30: #{multiscale_apply.15} parent=0 // pred_check
    _
  $region31: #{multiscale_apply.15} parent=0 // pred_check_branch
    %32 = sbr.rel (0) target = $region33
  $region32: #{multiscale_apply.15} parent=0 // pred_region
    _
  $region33: #{multiscale_apply.15} parent=0 // pred_fallthru
    _
  // Predicated region
  $region34: #{multiscale_apply.15} parent=0 // pred_check
    _
  $region35: #{multiscale_apply.15} parent=0 // pred_check_branch
    %34 = sbr.rel (0) target = $region37
  $region36: #{multiscale_apply.15} parent=0 // pred_region
    _
  $region37: #{multiscale_apply.15} parent=0 // pred_fallthru
    _
  // Predicated region
  $region38: #{multiscale_apply.15} parent=0 // pred_check
    _
  $region39: #{multiscale_apply.15} parent=0 // pred_check_branch
    %36 = sbr.rel (0) target = $region41
  $region40: #{multiscale_apply.15} parent=0 // pred_region
    _
  $region41: #{multiscale_apply.15} parent=0 // pred_fallthru
    _
  // Predicated region
  $region42: #{multiscale_apply.15} parent=0 // pred_check
    _
  $region43: #{multiscale_apply.15} parent=0 // pred_check_branch
    %38 = sbr.rel (0) target = $region45
  $region44: #{multiscale_apply.15} parent=0 // pred_region
    _
  $region45: #{multiscale_apply.15} parent=0 // pred_fallthru
    _
  // Predicated region
  $region46: #{multiscale_apply.15} parent=0 // pred_check
    _
  $region47: #{multiscale_apply.15} parent=0 // pred_check_branch
    %40 = sbr.rel (0) target = $region49
  $region48: #{multiscale_apply.15} parent=0 // pred_region
    _
  $region49: #{multiscale_apply.15} parent=0 // pred_fallthru
    _
  %v42 = vld [vmem:[%s4] sm:$0x1]
  %v43 = vld [vmem:[%s5] sm:$0x1]
  %v44 = vld [vmem:[%s2] sm:$0xf]
  %v45 = vld [vmem:[%s2 + $0x4] sm:$0xf]
  %v46 = vld [vmem:[%s2 + $0x8] sm:$0xf]
  %v47 = vld [vmem:[%s2 + $0xc] sm:$0xf]
  %v48 = vld [vmem:[%s3] sm:$0x1]
  %v49 = vld [vmem:[%s6] sm:$0xf]
  %v50 = vld [vmem:[%s6 + $0x4] sm:$0xf]
  %v51 = vld [vmem:[%s6 + $0x8] sm:$0xf]
  %v52 = vld [vmem:[%s6 + $0xc] sm:$0xf]
  %v53 = vld [vmem:[%s6 + $0x10] sm:$0xf]
  %v54 = vld [vmem:[%s6 + $0x14] sm:$0xf]
  %v55 = vld [vmem:[%s6 + $0x18] sm:$0xf]
  %v56 = vld [vmem:[%s6 + $0x1c] sm:$0xf]
  %v57 = vld [vmem:[%s7] sm:$0xf]
  %v58 = vld [vmem:[%s7 + $0x4] sm:$0xf]
  %v59 = vld [vmem:[%s7 + $0x8] sm:$0xf]
  %v60 = vld [vmem:[%s7 + $0xc] sm:$0xf]
  %v61 = vld [vmem:[%s7 + $0x10] sm:$0xf]
  %v62 = vld [vmem:[%s7 + $0x14] sm:$0xf]
  %v63 = vld [vmem:[%s7 + $0x18] sm:$0xf]
  %v64 = vld [vmem:[%s7 + $0x1c] sm:$0xf]
  %v65 = vld [vmem:[%s8] sm:$0xf]
  %v66 = vld [vmem:[%s8 + $0x4] sm:$0xf]
  %v67 = vld [vmem:[%s8 + $0x8] sm:$0xf]
  %v68 = vld [vmem:[%s8 + $0xc] sm:$0xf]
  %v69 = vld [vmem:[%s8 + $0x10] sm:$0xf]
  %v70 = vld [vmem:[%s8 + $0x14] sm:$0xf]
  %v71 = vld [vmem:[%s8 + $0x18] sm:$0xf]
  %v72 = vld [vmem:[%s8 + $0x1c] sm:$0xf]
  %v73 = vld [vmem:[%s9] sm:$0x1]
  %v74 = vld [vmem:[%s10] sm:$0xf]
  %v75 = vld [vmem:[%s10 + $0x4] sm:$0xf]
  %v76 = vld [vmem:[%s10 + $0x8] sm:$0xf]
  %v77 = vld [vmem:[%s10 + $0xc] sm:$0xf]
  %v78 = vld [vmem:[%s10 + $0x10] sm:$0xf]
  %v79 = vld [vmem:[%s10 + $0x14] sm:$0xf]
  %v80 = vld [vmem:[%s10 + $0x18] sm:$0xf]
  %v81 = vld [vmem:[%s10 + $0x1c] sm:$0xf]
  %v82 = vld [vmem:[%s11] sm:$0x1]
  %v83 = vld [vmem:[%s0] sm:$0x1]
  %v84 = vld [vmem:[%s1] sm:$0xf]
  %v85 = vpack.c.bf16 %v83, %v83
  %v90 = vunpack.c.l.b16 %v44
  %v91 = vunpack.c.l.b16 %v45
  %v92 = vunpack.c.l.b16 %v46
  %v93 = vunpack.c.l.b16 %v47
  %v94 = vpack.c.b16 %v91, %v90
  %v95 = vpack.c.b16 %v93, %v92
  %vm98 = vcmask 261120
  %v100 = vsel %vm98, %v85, 0
  %102 = vmatprep.subr.bf16.mxu0 0
  %103 = vmatpush1.bf16.msra.mxu0 %v94
  %104 = vmatprep.subr.bf16.mxu0 0
  %105 = vmatpush1.bf16.msra.mxu0 %v95
  %106 = vmatprep.subr.bf16.mxu0 0
  %107 = vmatpush1.bf16.msra.mxu0 0
  %108 = vmatprep.subr.bf16.mxu0 0
  %109 = vmatpush1.bf16.msra.mxu0 0
  %110 = vmatprep.subr.bf16.mxu0 0
  %111 = vmatpush1.bf16.msra.mxu0 0
  %112 = vmatprep.subr.bf16.mxu0 0
  %113 = vmatpush1.bf16.msra.mxu0 0
  %114 = vmatprep.subr.bf16.mxu0 0
  %115 = vmatpush1.bf16.msra.mxu0 0
  %116 = vmatprep.subr.bf16.mxu0 0
  %117 = vmatpush1.bf16.msra.mxu0 0
  %118 = vmatprep.subr.bf16.mxu0 0
  %119 = vmatpush1.bf16.msra.mxu0 0
  %120 = vmatprep.subr.bf16.mxu0 0
  %121 = vmatpush1.bf16.msra.mxu0 0
  %122 = vmatprep.subr.bf16.mxu0 0
  %123 = vmatpush1.bf16.msra.mxu0 0
  %124 = vmatprep.subr.bf16.mxu0 0
  %125 = vmatpush1.bf16.msra.mxu0 0
  %126 = vmatprep.subr.bf16.mxu0 0
  %127 = vmatpush1.bf16.msra.mxu0 0
  %128 = vmatprep.subr.bf16.mxu0 0
  %129 = vmatpush1.bf16.msra.mxu0 0
  %130 = vmatprep.subr.bf16.mxu0 0
  %131 = vmatpush1.bf16.msra.mxu0 0
  %132 = vmatprep.subr.bf16.mxu0 0
  %133 = vmatpush1.bf16.msra.mxu0 0
  %134 = vmatprep.mubr.bf16.mxu0 0
  %135 = vmatmul.mubr.bf16.gmra.mrb[0].mxu0 %v100
  %v136 = vpop.f32.mrb[0].mxu0
  %v137 = vadd.f32 %v48, %v136
  %v138 = vpop.f32.mrb[0].mxu0
  %v139 = vpop.f32.mrb[0].mxu0
  %v140 = vpop.f32.mrb[0].mxu0
  %141 = vdwg.mxu0
  %vm142 = vcmask 516096
  %v143 = vsel %vm142, %v137, 0.0
  %144 = vadd.xlane.f32.xlu0 %v143
  %v145 = vpop.xlane.xlu0 %144
  %v146 = vrcp.pop 64.0
  %v147 = vmul.f32 %v145, %v146
  %v148 = vsub.f32 %v137, %v147
  %v149 = vmul.f32 %v148, %v148
  %v150 = vsel %vm142, %v149, 0.0
  %151 = vadd.xlane.f32.xlu0 %v150
  %v152 = vpop.xlane.xlu0 %151
  %v153 = vmul.f32 %v152, %v146
  %v154 = vadd.f32 %v153, 1e-05
  %v155 = vrsqrt.pop %v154
  %v156 = vmul.f32 %v148, %v155
  %v157 = vmul.f32 %v156, %v42
  %v158 = vadd.f32 %v157, %v43
  %vm159 = vcmask 519168
  %v160 = vsel %vm159, %v84, 0.0
  %161 = vadd.xlane.f32.xlu0 %v160
  %v162 = vpop.xlane.xlu0 %161
  %v163 = vmul.f32 %v162, %v146
  %v164 = vsub.f32 %v84, %v163
  %v165 = vmul.f32 %v164, %v164
  %v166 = vsel %vm159, %v165, 0.0
  %167 = vadd.xlane.f32.xlu0 %v166
  %v168 = vpop.xlane.xlu0 %167
  %v169 = vmul.f32 %v168, %v146
  %v170 = vadd.f32 %v169, 1e-05
  %v171 = vrsqrt.pop %v170
  %v172 = vmul.f32 %v164, %v171
  %v174 = vlaneseq
  %v175 = vshrl.u32 %v174, 7
  %v176 = vsub.s32 0, %v175
  %v177 = vrot.slane %v42, %v176
  %v179 = vmul.f32 %v172, %v177
  %v181 = vlaneseq
  %v182 = vshrl.u32 %v181, 7
  %v183 = vsub.s32 0, %v182
  %v184 = vrot.slane %v43, %v183
  %v186 = vadd.f32 %v179, %v184
  %v187 = vpack.c.bf16 %v158, %v158
  %v196 = vunpack.c.l.b16 %v49
  %v197 = vunpack.c.l.b16 %v50
  %v198 = vunpack.c.l.b16 %v51
  %v199 = vunpack.c.l.b16 %v52
  %v200 = vunpack.c.l.b16 %v53
  %v201 = vunpack.c.l.b16 %v54
  %v202 = vunpack.c.l.b16 %v55
  %v203 = vunpack.c.l.b16 %v56
  %v204 = vpack.c.b16 %v197, %v196
  %v205 = vpack.c.b16 %v199, %v198
  %v206 = vpack.c.b16 %v201, %v200
  %v207 = vpack.c.b16 %v203, %v202
  %vm212 = vcmask 523264
  %v214 = vsel %vm212, %v187, 0
  %216 = vmatprep.subr.bf16.mxu0 0
  %217 = vmatpush1.bf16.msra.mxu0 %v204
  %218 = vmatprep.subr.bf16.mxu0 0
  %219 = vmatpush1.bf16.msra.mxu0 %v205
  %220 = vmatprep.subr.bf16.mxu0 0
  %221 = vmatpush1.bf16.msra.mxu0 %v206
  %222 = vmatprep.subr.bf16.mxu0 0
  %223 = vmatpush1.bf16.msra.mxu0 %v207
  %224 = vmatprep.subr.bf16.mxu0 0
  %225 = vmatpush1.bf16.msra.mxu0 0
  %226 = vmatprep.subr.bf16.mxu0 0
  %227 = vmatpush1.bf16.msra.mxu0 0
  %228 = vmatprep.subr.bf16.mxu0 0
  %229 = vmatpush1.bf16.msra.mxu0 0
  %230 = vmatprep.subr.bf16.mxu0 0
  %231 = vmatpush1.bf16.msra.mxu0 0
  %232 = vmatprep.subr.bf16.mxu0 0
  %233 = vmatpush1.bf16.msra.mxu0 0
  %234 = vmatprep.subr.bf16.mxu0 0
  %235 = vmatpush1.bf16.msra.mxu0 0
  %236 = vmatprep.subr.bf16.mxu0 0
  %237 = vmatpush1.bf16.msra.mxu0 0
  %238 = vmatprep.subr.bf16.mxu0 0
  %239 = vmatpush1.bf16.msra.mxu0 0
  %240 = vmatprep.subr.bf16.mxu0 0
  %241 = vmatpush1.bf16.msra.mxu0 0
  %242 = vmatprep.subr.bf16.mxu0 0
  %243 = vmatpush1.bf16.msra.mxu0 0
  %244 = vmatprep.subr.bf16.mxu0 0
  %245 = vmatpush1.bf16.msra.mxu0 0
  %246 = vmatprep.subr.bf16.mxu0 0
  %247 = vmatpush1.bf16.msra.mxu0 0
  %248 = vmatprep.mubr.bf16.mxu0 0
  %249 = vmatmul.mubr.bf16.gmra.mrb[0].mxu0 %v214
  %v250 = vpop.f32.mrb[0].mxu0
  %v251 = vadd.f32 0.0, %v250
  %v252 = vpop.f32.mrb[0].mxu0
  %v253 = vpop.f32.mrb[0].mxu0
  %v254 = vpop.f32.mrb[0].mxu0
  %255 = vdwg.mxu0
  %v264 = vunpack.c.l.b16 %v57
  %v265 = vunpack.c.l.b16 %v58
  %v266 = vunpack.c.l.b16 %v59
  %v267 = vunpack.c.l.b16 %v60
  %v268 = vunpack.c.l.b16 %v61
  %v269 = vunpack.c.l.b16 %v62
  %v270 = vunpack.c.l.b16 %v63
  %v271 = vunpack.c.l.b16 %v64
  %v272 = vpack.c.b16 %v265, %v264
  %v273 = vpack.c.b16 %v267, %v266
  %v274 = vpack.c.b16 %v269, %v268
  %v275 = vpack.c.b16 %v271, %v270
  %280 = vmatprep.subr.bf16.mxu0 0
  %281 = vmatpush1.bf16.msra.mxu0 %v272
  %282 = vmatprep.subr.bf16.mxu0 0
  %283 = vmatpush1.bf16.msra.mxu0 %v273
  %284 = vmatprep.subr.bf16.mxu0 0
  %285 = vmatpush1.bf16.msra.mxu0 %v274
  %286 = vmatprep.subr.bf16.mxu0 0
  %287 = vmatpush1.bf16.msra.mxu0 %v275
  %288 = vmatprep.subr.bf16.mxu0 0
  %289 = vmatpush1.bf16.msra.mxu0 0
  %290 = vmatprep.subr.bf16.mxu0 0
  %291 = vmatpush1.bf16.msra.mxu0 0
  %292 = vmatprep.subr.bf16.mxu0 0
  %293 = vmatpush1.bf16.msra.mxu0 0
  %294 = vmatprep.subr.bf16.mxu0 0
  %295 = vmatpush1.bf16.msra.mxu0 0
  %296 = vmatprep.subr.bf16.mxu0 0
  %297 = vmatpush1.bf16.msra.mxu0 0
  %298 = vmatprep.subr.bf16.mxu0 0
  %299 = vmatpush1.bf16.msra.mxu0 0
  %300 = vmatprep.subr.bf16.mxu0 0
  %301 = vmatpush1.bf16.msra.mxu0 0
  %302 = vmatprep.subr.bf16.mxu0 0
  %303 = vmatpush1.bf16.msra.mxu0 0
  %304 = vmatprep.subr.bf16.mxu0 0
  %305 = vmatpush1.bf16.msra.mxu0 0
  %306 = vmatprep.subr.bf16.mxu0 0
  %307 = vmatpush1.bf16.msra.mxu0 0
  %308 = vmatprep.subr.bf16.mxu0 0
  %309 = vmatpush1.bf16.msra.mxu0 0
  %310 = vmatprep.subr.bf16.mxu0 0
  %311 = vmatpush1.bf16.msra.mxu0 0
  %312 = vmatprep.mubr.bf16.mxu0 0
  %313 = vmatmul.mubr.bf16.gmra.mrb[0].mxu0 %v214
  %v314 = vpop.f32.mrb[0].mxu0
  %v315 = vadd.f32 0.0, %v314
  %v316 = vpop.f32.mrb[0].mxu0
  %v317 = vpop.f32.mrb[0].mxu0
  %v318 = vpop.f32.mrb[0].mxu0
  %319 = vdwg.mxu0
  %v320 = vpack.c.bf16 %v186, %v186
  %v322 = vsel %vm212, %v320, 0
  %324 = vmatprep.subr.bf16.mxu0 0
  %325 = vmatpush1.bf16.msra.mxu0 %v204
  %326 = vmatprep.subr.bf16.mxu0 0
  %327 = vmatpush1.bf16.msra.mxu0 %v205
  %328 = vmatprep.subr.bf16.mxu0 0
  %329 = vmatpush1.bf16.msra.mxu0 %v206
  %330 = vmatprep.subr.bf16.mxu0 0
  %331 = vmatpush1.bf16.msra.mxu0 %v207
  %332 = vmatprep.subr.bf16.mxu0 0
  %333 = vmatpush1.bf16.msra.mxu0 0
  %334 = vmatprep.subr.bf16.mxu0 0
  %335 = vmatpush1.bf16.msra.mxu0 0
  %336 = vmatprep.subr.bf16.mxu0 0
  %337 = vmatpush1.bf16.msra.mxu0 0
  %338 = vmatprep.subr.bf16.mxu0 0
  %339 = vmatpush1.bf16.msra.mxu0 0
  %340 = vmatprep.subr.bf16.mxu0 0
  %341 = vmatpush1.bf16.msra.mxu0 0
  %342 = vmatprep.subr.bf16.mxu0 0
  %343 = vmatpush1.bf16.msra.mxu0 0
  %344 = vmatprep.subr.bf16.mxu0 0
  %345 = vmatpush1.bf16.msra.mxu0 0
  %346 = vmatprep.subr.bf16.mxu0 0
  %347 = vmatpush1.bf16.msra.mxu0 0
  %348 = vmatprep.subr.bf16.mxu0 0
  %349 = vmatpush1.bf16.msra.mxu0 0
  %350 = vmatprep.subr.bf16.mxu0 0
  %351 = vmatpush1.bf16.msra.mxu0 0
  %352 = vmatprep.subr.bf16.mxu0 0
  %353 = vmatpush1.bf16.msra.mxu0 0
  %354 = vmatprep.subr.bf16.mxu0 0
  %355 = vmatpush1.bf16.msra.mxu0 0
  %356 = vmatprep.mubr.bf16.mxu0 0
  %357 = vmatmul.mubr.bf16.gmra.mrb[0].mxu0 %v322
  %v358 = vpop.f32.mrb[0].mxu0
  %v359 = vadd.f32 0.0, %v358
  %v360 = vpop.f32.mrb[0].mxu0
  %v361 = vpop.f32.mrb[0].mxu0
  %v362 = vpop.f32.mrb[0].mxu0
  %363 = vdwg.mxu0
  %v364 = vpack.c.bf16 %v315, %v315
  %v365 = vunpack.c.l.bf16 %v364
  %v366 = vpack.c.bf16 %v251, %v251
  %v367 = vunpack.c.l.bf16 %v366
  %v368 = vmul.f32 %v365, %v367
  %vm369 = vcmask 253952
  %v370 = vsel %vm369, %v368, 0.0
  %371 = vadd.xlane.f32.xlu0 %v370
  %v372 = vpop.xlane.xlu0 %371
  %v373 = vmul.f32 %v372, 0.17677669
  %v374 = vpack.c.bf16 %v359, %v359
  %v376 = vsel %vm98, %v364, 0
  %v379 = vsel %vm98, %v374, 0
  %381 = vmatprep.subr.bf16.mxu0 0
  %382 = vmatpush1.bf16.xpose.msra.mxu0 %v379
  %383 = vmatprep.subr.bf16.mxu0 0
  %384 = vmatpush1.bf16.xpose.msra.mxu0 0
  %385 = vmatprep.subr.bf16.mxu0 0
  %386 = vmatpush1.bf16.xpose.msra.mxu0 0
  %387 = vmatprep.subr.bf16.mxu0 0
  %388 = vmatpush1.bf16.xpose.msra.mxu0 0
  %389 = vmatprep.subr.bf16.mxu0 0
  %390 = vmatpush1.bf16.xpose.msra.mxu0 0
  %391 = vmatprep.subr.bf16.mxu0 0
  %392 = vmatpush1.bf16.xpose.msra.mxu0 0
  %393 = vmatprep.subr.bf16.mxu0 0
  %394 = vmatpush1.bf16.xpose.msra.mxu0 0
  %395 = vmatprep.subr.bf16.mxu0 0
  %396 = vmatpush1.bf16.xpose.msra.mxu0 0
  %397 = vmatprep.subr.bf16.mxu0 0
  %398 = vmatpush1.bf16.xpose.msra.mxu0 0
  %399 = vmatprep.subr.bf16.mxu0 0
  %400 = vmatpush1.bf16.xpose.msra.mxu0 0
  %401 = vmatprep.subr.bf16.mxu0 0
  %402 = vmatpush1.bf16.xpose.msra.mxu0 0
  %403 = vmatprep.subr.bf16.mxu0 0
  %404 = vmatpush1.bf16.xpose.msra.mxu0 0
  %405 = vmatprep.subr.bf16.mxu0 0
  %406 = vmatpush1.bf16.xpose.msra.mxu0 0
  %407 = vmatprep.subr.bf16.mxu0 0
  %408 = vmatpush1.bf16.xpose.msra.mxu0 0
  %409 = vmatprep.subr.bf16.mxu0 0
  %410 = vmatpush1.bf16.xpose.msra.mxu0 0
  %411 = vmatprep.subr.bf16.mxu0 0
  %412 = vmatpush1.bf16.xpose.msra.mxu0 0
  %413 = vmatprep.mubr.bf16.mxu0 0
  %414 = vmatmul.mubr.bf16.gmra.mrb[0].mxu0 %v376
  %v415 = vpop.f32.mrb[0].mxu0
  %v416 = vadd.f32 0.0, %v415
  %v417 = vpop.f32.mrb[0].mxu0
  %v418 = vpop.f32.mrb[0].mxu0
  %v419 = vpop.f32.mrb[0].mxu0
  %420 = vdwg.mxu0
  %v421 = vmul.f32 %v416, 0.17677669
  %vm422 = vcmask 24576
  %v423 = vsel %vm422, %v421, -inf
  %424 = vmax.xlane.f32.xlu0 %v423
  %v425 = vpop.xlane.xlu0 %424
  %v426 = vmax.f32 %v373, %v425
  %v427 = vsub.f32 %v373, %v426
  %v428 = vmul.f32 %v427, 1.442695
  %v429 = vpow.pop %v428
  %v430 = vsub.f32 %v421, %v426
  %v431 = vmul.f32 %v430, 1.442695
  %v432 = vpow.pop %v431
  %v433 = vsel %vm422, %v432, 0.0
  %434 = vadd.xlane.f32.xlu0 %v433
  %v435 = vpop.xlane.xlu0 %434
  %v436 = vadd.f32 %v429, %v435
  %v437 = vrcp.pop %v436
  %v438 = vmul.f32 %v429, %v437
  %v439 = vmul.f32 %v438, %v251
  %v440 = vmul.f32 %v432, %v437
  %v441 = vpack.c.bf16 %v440, %v440
  %443 = vrot.lane.b32.xlu0 %v374, 64
  %v444 = vpop.permute.xlu0 %443
  %vm445 = vcmask 31744
  %v447 = vsel %vm445, %v441, 0
  %vm449 = vcmask 1041408
  %v451 = vsel %vm449, %v444, 0
  %453 = vmatprep.subr.bf16.mxu0 0
  %454 = vmatpush1.bf16.msra.mxu0 %v451
  %455 = vmatprep.subr.bf16.mxu0 0
  %456 = vmatpush1.bf16.msra.mxu0 0
  %457 = vmatprep.subr.bf16.mxu0 0
  %458 = vmatpush1.bf16.msra.mxu0 0
  %459 = vmatprep.subr.bf16.mxu0 0
  %460 = vmatpush1.bf16.msra.mxu0 0
  %461 = vmatprep.subr.bf16.mxu0 0
  %462 = vmatpush1.bf16.msra.mxu0 0
  %463 = vmatprep.subr.bf16.mxu0 0
  %464 = vmatpush1.bf16.msra.mxu0 0
  %465 = vmatprep.subr.bf16.mxu0 0
  %466 = vmatpush1.bf16.msra.mxu0 0
  %467 = vmatprep.subr.bf16.mxu0 0
  %468 = vmatpush1.bf16.msra.mxu0 0
  %469 = vmatprep.subr.bf16.mxu0 0
  %470 = vmatpush1.bf16.msra.mxu0 0
  %471 = vmatprep.subr.bf16.mxu0 0
  %472 = vmatpush1.bf16.msra.mxu0 0
  %473 = vmatprep.subr.bf16.mxu0 0
  %474 = vmatpush1.bf16.msra.mxu0 0
  %475 = vmatprep.subr.bf16.mxu0 0
  %476 = vmatpush1.bf16.msra.mxu0 0
  %477 = vmatprep.subr.bf16.mxu0 0
  %478 = vmatpush1.bf16.msra.mxu0 0
  %479 = vmatprep.subr.bf16.mxu0 0
  %480 = vmatpush1.bf16.msra.mxu0 0
  %481 = vmatprep.subr.bf16.mxu0 0
  %482 = vmatpush1.bf16.msra.mxu0 0
  %483 = vmatprep.subr.bf16.mxu0 0
  %484 = vmatpush1.bf16.msra.mxu0 0
  %485 = vmatprep.mubr.bf16.mxu0 0
  %486 = vmatmul.mubr.bf16.gmra.mrb[0].mxu0 %v447
  %v487 = vpop.f32.mrb[0].mxu0
  %v488 = vadd.f32 0.0, %v487
  %v489 = vpop.f32.mrb[0].mxu0
  %v490 = vpop.f32.mrb[0].mxu0
  %v491 = vpop.f32.mrb[0].mxu0
  %492 = vdwg.mxu0
  %494 = vrot.lane.b32.xlu0 %v488, 64
  %v495 = vpop.permute.xlu0 %494
  %v497 = vadd.f32 %v439, %v495
  %499 = vrot.lane.b32.xlu0 %v368, 96
  %v500 = vpop.permute.xlu0 %499
  %v502 = vsel %vm369, %v500, 0.0
  %503 = vadd.xlane.f32.xlu0 %v502
  %v504 = vpop.xlane.xlu0 %503
  %v505 = vmul.f32 %v504, 0.17677669
  %507 = vrot.lane.b32.xlu0 %v364, 96
  %v508 = vpop.permute.xlu0 %507
  %509 = vrot.lane.b32.xlu0 %v374, 96
  %v510 = vpop.permute.xlu0 %509
  %v512 = vsel %vm98, %v508, 0
  %v515 = vsel %vm98, %v510, 0
  %517 = vmatprep.subr.bf16.mxu0 0
  %518 = vmatpush1.bf16.xpose.msra.mxu0 %v515
  %519 = vmatprep.subr.bf16.mxu0 0
  %520 = vmatpush1.bf16.xpose.msra.mxu0 0
  %521 = vmatprep.subr.bf16.mxu0 0
  %522 = vmatpush1.bf16.xpose.msra.mxu0 0
  %523 = vmatprep.subr.bf16.mxu0 0
  %524 = vmatpush1.bf16.xpose.msra.mxu0 0
  %525 = vmatprep.subr.bf16.mxu0 0
  %526 = vmatpush1.bf16.xpose.msra.mxu0 0
  %527 = vmatprep.subr.bf16.mxu0 0
  %528 = vmatpush1.bf16.xpose.msra.mxu0 0
  %529 = vmatprep.subr.bf16.mxu0 0
  %530 = vmatpush1.bf16.xpose.msra.mxu0 0
  %531 = vmatprep.subr.bf16.mxu0 0
  %532 = vmatpush1.bf16.xpose.msra.mxu0 0
  %533 = vmatprep.subr.bf16.mxu0 0
  %534 = vmatpush1.bf16.xpose.msra.mxu0 0
  %535 = vmatprep.subr.bf16.mxu0 0
  %536 = vmatpush1.bf16.xpose.msra.mxu0 0
  %537 = vmatprep.subr.bf16.mxu0 0
  %538 = vmatpush1.bf16.xpose.msra.mxu0 0
  %539 = vmatprep.subr.bf16.mxu0 0
  %540 = vmatpush1.bf16.xpose.msra.mxu0 0
  %541 = vmatprep.subr.bf16.mxu0 0
  %542 = vmatpush1.bf16.xpose.msra.mxu0 0
  %543 = vmatprep.subr.bf16.mxu0 0
  %544 = vmatpush1.bf16.xpose.msra.mxu0 0
  %545 = vmatprep.subr.bf16.mxu0 0
  %546 = vmatpush1.bf16.xpose.msra.mxu0 0
  %547 = vmatprep.subr.bf16.mxu0 0
  %548 = vmatpush1.bf16.xpose.msra.mxu0 0
  %549 = vmatprep.mubr.bf16.mxu0 0
  %550 = vmatmul.mubr.bf16.gmra.mrb[0].mxu0 %v512
  %v551 = vpop.f32.mrb[0].mxu0
  %v552 = vadd.f32 0.0, %v551
  %v553 = vpop.f32.mrb[0].mxu0
  %v554 = vpop.f32.mrb[0].mxu0
  %v555 = vpop.f32.mrb[0].mxu0
  %556 = vdwg.mxu0
  %v557 = vmul.f32 %v552, 0.17677669
  %v558 = vsel %vm422, %v557, -inf
  %559 = vmax.xlane.f32.xlu0 %v558
  %v560 = vpop.xlane.xlu0 %559
  %v561 = vmax.f32 %v505, %v560
  %v562 = vsub.f32 %v505, %v561
  %v563 = vmul.f32 %v562, 1.442695
  %v564 = vpow.pop %v563
  %v565 = vsub.f32 %v557, %v561
  %v566 = vmul.f32 %v565, 1.442695
  %v567 = vpow.pop %v566
  %v568 = vsel %vm422, %v567, 0.0
  %569 = vadd.xlane.f32.xlu0 %v568
  %v570 = vpop.xlane.xlu0 %569
  %v571 = vadd.f32 %v564, %v570
  %v572 = vrcp.pop %v571
  %v573 = vmul.f32 %v564, %v572
  %v574 = vmul.f32 %v573, %v251
  %v575 = vmul.f32 %v567, %v572
  %v576 = vpack.c.bf16 %v575, %v575
  %577 = vrot.lane.b32.xlu0 %v374, 32
  %v578 = vpop.permute.xlu0 %577
  %v580 = vsel %vm445, %v576, 0
  %v583 = vsel %vm449, %v578, 0
  %585 = vmatprep.subr.bf16.mxu0 0
  %586 = vmatpush1.bf16.msra.mxu0 %v583
  %587 = vmatprep.subr.bf16.mxu0 0
  %588 = vmatpush1.bf16.msra.mxu0 0
  %589 = vmatprep.subr.bf16.mxu0 0
  %590 = vmatpush1.bf16.msra.mxu0 0
  %591 = vmatprep.subr.bf16.mxu0 0
  %592 = vmatpush1.bf16.msra.mxu0 0
  %593 = vmatprep.subr.bf16.mxu0 0
  %594 = vmatpush1.bf16.msra.mxu0 0
  %595 = vmatprep.subr.bf16.mxu0 0
  %596 = vmatpush1.bf16.msra.mxu0 0
  %597 = vmatprep.subr.bf16.mxu0 0
  %598 = vmatpush1.bf16.msra.mxu0 0
  %599 = vmatprep.subr.bf16.mxu0 0
  %600 = vmatpush1.bf16.msra.mxu0 0
  %601 = vmatprep.subr.bf16.mxu0 0
  %602 = vmatpush1.bf16.msra.mxu0 0
  %603 = vmatprep.subr.bf16.mxu0 0
  %604 = vmatpush1.bf16.msra.mxu0 0
  %605 = vmatprep.subr.bf16.mxu0 0
  %606 = vmatpush1.bf16.msra.mxu0 0
  %607 = vmatprep.subr.bf16.mxu0 0
  %608 = vmatpush1.bf16.msra.mxu0 0
  %609 = vmatprep.subr.bf16.mxu0 0
  %610 = vmatpush1.bf16.msra.mxu0 0
  %611 = vmatprep.subr.bf16.mxu0 0
  %612 = vmatpush1.bf16.msra.mxu0 0
  %613 = vmatprep.subr.bf16.mxu0 0
  %614 = vmatpush1.bf16.msra.mxu0 0
  %615 = vmatprep.subr.bf16.mxu0 0
  %616 = vmatpush1.bf16.msra.mxu0 0
  %617 = vmatprep.mubr.bf16.mxu0 0
  %618 = vmatmul.mubr.bf16.gmra.mrb[0].mxu0 %v580
  %v619 = vpop.f32.mrb[0].mxu0
  %v620 = vadd.f32 0.0, %v619
  %v621 = vpop.f32.mrb[0].mxu0
  %v622 = vpop.f32.mrb[0].mxu0
  %v623 = vpop.f32.mrb[0].mxu0
  %624 = vdwg.mxu0
  %626 = vrot.lane.b32.xlu0 %v620, 96
  %v627 = vpop.permute.xlu0 %626
  %v629 = vadd.f32 %v574, %v627
  %631 = vrot.lane.b32.xlu0 %v497, 64
  %v632 = vpop.permute.xlu0 %631
  %635 = vrot.lane.b32.xlu0 %v629, 64
  %v636 = vpop.permute.xlu0 %635
  %v638 = vsel %vm98, %v632, %v636
  %v639 = vpack.c.bf16 %v638, %v638
  %v648 = vunpack.c.l.b16 %v65
  %v649 = vunpack.c.l.b16 %v66
  %v650 = vunpack.c.l.b16 %v67
  %v651 = vunpack.c.l.b16 %v68
  %v652 = vunpack.c.l.b16 %v69
  %v653 = vunpack.c.l.b16 %v70
  %v654 = vunpack.c.l.b16 %v71
  %v655 = vunpack.c.l.b16 %v72
  %v656 = vpack.c.b16 %v649, %v648
  %v657 = vpack.c.b16 %v651, %v650
  %v658 = vpack.c.b16 %v653, %v652
  %v659 = vpack.c.b16 %v655, %v654
  %v665 = vsel %vm212, %v639, 0
  %667 = vmatprep.subr.bf16.mxu0 0
  %668 = vmatpush1.bf16.msra.mxu0 %v656
  %669 = vmatprep.subr.bf16.mxu0 0
  %670 = vmatpush1.bf16.msra.mxu0 %v657
  %671 = vmatprep.subr.bf16.mxu0 0
  %672 = vmatpush1.bf16.msra.mxu0 %v658
  %673 = vmatprep.subr.bf16.mxu0 0
  %674 = vmatpush1.bf16.msra.mxu0 %v659
  %675 = vmatprep.subr.bf16.mxu0 0
  %676 = vmatpush1.bf16.msra.mxu0 0
  %677 = vmatprep.subr.bf16.mxu0 0
  %678 = vmatpush1.bf16.msra.mxu0 0
  %679 = vmatprep.subr.bf16.mxu0 0
  %680 = vmatpush1.bf16.msra.mxu0 0
  %681 = vmatprep.subr.bf16.mxu0 0
  %682 = vmatpush1.bf16.msra.mxu0 0
  %683 = vmatprep.subr.bf16.mxu0 0
  %684 = vmatpush1.bf16.msra.mxu0 0
  %685 = vmatprep.subr.bf16.mxu0 0
  %686 = vmatpush1.bf16.msra.mxu0 0
  %687 = vmatprep.subr.bf16.mxu0 0
  %688 = vmatpush1.bf16.msra.mxu0 0
  %689 = vmatprep.subr.bf16.mxu0 0
  %690 = vmatpush1.bf16.msra.mxu0 0
  %691 = vmatprep.subr.bf16.mxu0 0
  %692 = vmatpush1.bf16.msra.mxu0 0
  %693 = vmatprep.subr.bf16.mxu0 0
  %694 = vmatpush1.bf16.msra.mxu0 0
  %695 = vmatprep.subr.bf16.mxu0 0
  %696 = vmatpush1.bf16.msra.mxu0 0
  %697 = vmatprep.subr.bf16.mxu0 0
  %698 = vmatpush1.bf16.msra.mxu0 0
  %699 = vmatprep.mubr.bf16.mxu0 0
  %700 = vmatmul.mubr.bf16.gmra.mrb[0].mxu0 %v665
  %v701 = vpop.f32.mrb[0].mxu0
  %v702 = vadd.f32 %v73, %v701
  %v703 = vpop.f32.mrb[0].mxu0
  %v704 = vpop.f32.mrb[0].mxu0
  %v705 = vpop.f32.mrb[0].mxu0
  %706 = vdwg.mxu0
  %v707 = vadd.f32 %v137, %v702
  %v708 = vpack.c.bf16 %v707, %v707
  %v717 = vunpack.c.l.b16 %v74
  %v718 = vunpack.c.l.b16 %v75
  %v719 = vunpack.c.l.b16 %v76
  %v720 = vunpack.c.l.b16 %v77
  %v721 = vunpack.c.l.b16 %v78
  %v722 = vunpack.c.l.b16 %v79
  %v723 = vunpack.c.l.b16 %v80
  %v724 = vunpack.c.l.b16 %v81
  %v725 = vpack.c.b16 %v718, %v717
  %v726 = vpack.c.b16 %v720, %v719
  %v727 = vpack.c.b16 %v722, %v721
  %v728 = vpack.c.b16 %v724, %v723
  %v734 = vsel %vm212, %v708, 0
  %736 = vmatprep.subr.bf16.mxu0 0
  %737 = vmatpush1.bf16.msra.mxu0 %v725
  %738 = vmatprep.subr.bf16.mxu0 0
  %739 = vmatpush1.bf16.msra.mxu0 %v726
  %740 = vmatprep.subr.bf16.mxu0 0
  %741 = vmatpush1.bf16.msra.mxu0 %v727
  %742 = vmatprep.subr.bf16.mxu0 0
  %743 = vmatpush1.bf16.msra.mxu0 %v728
  %744 = vmatprep.subr.bf16.mxu0 0
  %745 = vmatpush1.bf16.msra.mxu0 0
  %746 = vmatprep.subr.bf16.mxu0 0
  %747 = vmatpush1.bf16.msra.mxu0 0
  %748 = vmatprep.subr.bf16.mxu0 0
  %749 = vmatpush1.bf16.msra.mxu0 0
  %750 = vmatprep.subr.bf16.mxu0 0
  %751 = vmatpush1.bf16.msra.mxu0 0
  %752 = vmatprep.subr.bf16.mxu0 0
  %753 = vmatpush1.bf16.msra.mxu0 0
  %754 = vmatprep.subr.bf16.mxu0 0
  %755 = vmatpush1.bf16.msra.mxu0 0
  %756 = vmatprep.subr.bf16.mxu0 0
  %757 = vmatpush1.bf16.msra.mxu0 0
  %758 = vmatprep.subr.bf16.mxu0 0
  %759 = vmatpush1.bf16.msra.mxu0 0
  %760 = vmatprep.subr.bf16.mxu0 0
  %761 = vmatpush1.bf16.msra.mxu0 0
  %762 = vmatprep.subr.bf16.mxu0 0
  %763 = vmatpush1.bf16.msra.mxu0 0
  %764 = vmatprep.subr.bf16.mxu0 0
  %765 = vmatpush1.bf16.msra.mxu0 0
  %766 = vmatprep.subr.bf16.mxu0 0
  %767 = vmatpush1.bf16.msra.mxu0 0
  %768 = vmatprep.mubr.bf16.mxu0 0
  %769 = vmatmul.mubr.bf16.gmra.mrb[0].mxu0 %v734
  %v770 = vpop.f32.mrb[0].mxu0
  %v771 = vadd.f32 %v82, %v770
  %v772 = vpop.f32.mrb[0].mxu0
  %v773 = vpop.f32.mrb[0].mxu0
  %v774 = vpop.f32.mrb[0].mxu0
  %775 = vdwg.mxu0
  %776 = vst.msk [vmem:[%s12] sm:$0x1] %vm369, %v771
  %s777 = scalar_lea.vmem %s0, 1
  %v778 = vld [vmem:[%s777] sm:$0x1]
  %s779 = scalar_lea.vmem %s1, 4
  %v780 = vld [vmem:[%s779] sm:$0xf]
  %v781 = vpack.c.bf16 %v778, %v778
  %v783 = vsel %vm98, %v781, 0
  %785 = vmatprep.subr.bf16.mxu0 0
  %786 = vmatpush1.bf16.msra.mxu0 %v94
  %787 = vmatprep.subr.bf16.mxu0 0
  %788 = vmatpush1.bf16.msra.mxu0 %v95
  %789 = vmatprep.subr.bf16.mxu0 0
  %790 = vmatpush1.bf16.msra.mxu0 0
  %791 = vmatprep.subr.bf16.mxu0 0
  %792 = vmatpush1.bf16.msra.mxu0 0
  %793 = vmatprep.subr.bf16.mxu0 0
  %794 = vmatpush1.bf16.msra.mxu0 0
  %795 = vmatprep.subr.bf16.mxu0 0
  %796 = vmatpush1.bf16.msra.mxu0 0
  %797 = vmatprep.subr.bf16.mxu0 0
  %798 = vmatpush1.bf16.msra.mxu0 0
  %799 = vmatprep.subr.bf16.mxu0 0
  %800 = vmatpush1.bf16.msra.mxu0 0
  %801 = vmatprep.subr.bf16.mxu0 0
  %802 = vmatpush1.bf16.msra.mxu0 0
  %803 = vmatprep.subr.bf16.mxu0 0
  %804 = vmatpush1.bf16.msra.mxu0 0
  %805 = vmatprep.subr.bf16.mxu0 0
  %806 = vmatpush1.bf16.msra.mxu0 0
  %807 = vmatprep.subr.bf16.mxu0 0
  %808 = vmatpush1.bf16.msra.mxu0 0
  %809 = vmatprep.subr.bf16.mxu0 0
  %810 = vmatpush1.bf16.msra.mxu0 0
  %811 = vmatprep.subr.bf16.mxu0 0
  %812 = vmatpush1.bf16.msra.mxu0 0
  %813 = vmatprep.subr.bf16.mxu0 0
  %814 = vmatpush1.bf16.msra.mxu0 0
  %815 = vmatprep.subr.bf16.mxu0 0
  %816 = vmatpush1.bf16.msra.mxu0 0
  %817 = vmatprep.mubr.bf16.mxu0 0
  %818 = vmatmul.mubr.bf16.gmra.mrb[0].mxu0 %v783
  %v819 = vpop.f32.mrb[0].mxu0
  %v820 = vadd.f32 %v48, %v819
  %v821 = vpop.f32.mrb[0].mxu0
  %v822 = vpop.f32.mrb[0].mxu0
  %v823 = vpop.f32.mrb[0].mxu0
  %824 = vdwg.mxu0
  %v825 = vsel %vm142, %v820, 0.0
  %826 = vadd.xlane.f32.xlu0 %v825
  %v827 = vpop.xlane.xlu0 %826
  %v828 = vmul.f32 %v827, %v146
  %v829 = vsub.f32 %v820, %v828
  %v830 = vmul.f32 %v829, %v829
  %v831 = vsel %vm142, %v830, 0.0
  %832 = vadd.xlane.f32.xlu0 %v831
  %v833 = vpop.xlane.xlu0 %832
  %v834 = vmul.f32 %v833, %v146
  %v835 = vadd.f32 %v834, 1e-05
  %v836 = vrsqrt.pop %v835
  %v837 = vmul.f32 %v829, %v836
  %v838 = vmul.f32 %v837, %v42
  %v839 = vadd.f32 %v838, %v43
  %v840 = vsel %vm159, %v780, 0.0
  %841 = vadd.xlane.f32.xlu0 %v840
  %v842 = vpop.xlane.xlu0 %841
  %v843 = vmul.f32 %v842, %v146
  %v844 = vsub.f32 %v780, %v843
  %v845 = vmul.f32 %v844, %v844
  %v846 = vsel %vm159, %v845, 0.0
  %847 = vadd.xlane.f32.xlu0 %v846
  %v848 = vpop.xlane.xlu0 %847
  %v849 = vmul.f32 %v848, %v146
  %v850 = vadd.f32 %v849, 1e-05
  %v851 = vrsqrt.pop %v850
  %v852 = vmul.f32 %v844, %v851
  %v853 = vmul.f32 %v852, %v177
  %v854 = vadd.f32 %v853, %v184
  %v855 = vpack.c.bf16 %v839, %v839
  %v857 = vsel %vm212, %v855, 0
  %859 = vmatprep.subr.bf16.mxu0 0
  %860 = vmatpush1.bf16.msra.mxu0 %v204
  %861 = vmatprep.subr.bf16.mxu0 0
  %862 = vmatpush1.bf16.msra.mxu0 %v205
  %863 = vmatprep.subr.bf16.mxu0 0
  %864 = vmatpush1.bf16.msra.mxu0 %v206
  %865 = vmatprep.subr.bf16.mxu0 0
  %866 = vmatpush1.bf16.msra.mxu0 %v207
  %867 = vmatprep.subr.bf16.mxu0 0
  %868 = vmatpush1.bf16.msra.mxu0 0
  %869 = vmatprep.subr.bf16.mxu0 0
  %870 = vmatpush1.bf16.msra.mxu0 0
  %871 = vmatprep.subr.bf16.mxu0 0
  %872 = vmatpush1.bf16.msra.mxu0 0
  %873 = vmatprep.subr.bf16.mxu0 0
  %874 = vmatpush1.bf16.msra.mxu0 0
  %875 = vmatprep.subr.bf16.mxu0 0
  %876 = vmatpush1.bf16.msra.mxu0 0
  %877 = vmatprep.subr.bf16.mxu0 0
  %878 = vmatpush1.bf16.msra.mxu0 0
  %879 = vmatprep.subr.bf16.mxu0 0
  %880 = vmatpush1.bf16.msra.mxu0 0
  %881 = vmatprep.subr.bf16.mxu0 0
  %882 = vmatpush1.bf16.msra.mxu0 0
  %883 = vmatprep.subr.bf16.mxu0 0
  %884 = vmatpush1.bf16.msra.mxu0 0
  %885 = vmatprep.subr.bf16.mxu0 0
  %886 = vmatpush1.bf16.msra.mxu0 0
  %887 = vmatprep.subr.bf16.mxu0 0
  %888 = vmatpush1.bf16.msra.mxu0 0
  %889 = vmatprep.subr.bf16.mxu0 0
  %890 = vmatpush1.bf16.msra.mxu0 0
  %891 = vmatprep.mubr.bf16.mxu0 0
  %892 = vmatmul.mubr.bf16.gmra.mrb[0].mxu0 %v857
  %v893 = vpop.f32.mrb[0].mxu0
  %v894 = vadd.f32 0.0, %v893
  %v895 = vpop.f32.mrb[0].mxu0
  %v896 = vpop.f32.mrb[0].mxu0
  %v897 = vpop.f32.mrb[0].mxu0
  %898 = vdwg.mxu0
  %899 = vmatprep.subr.bf16.mxu0 0
  %900 = vmatpush1.bf16.msra.mxu0 %v272
  %901 = vmatprep.subr.bf16.mxu0 0
  %902 = vmatpush1.bf16.msra.mxu0 %v273
  %903 = vmatprep.subr.bf16.mxu0 0
  %904 = vmatpush1.bf16.msra.mxu0 %v274
  %905 = vmatprep.subr.bf16.mxu0 0
  %906 = vmatpush1.bf16.msra.mxu0 %v275
  %907 = vmatprep.subr.bf16.mxu0 0
  %908 = vmatpush1.bf16.msra.mxu0 0
  %909 = vmatprep.subr.bf16.mxu0 0
  %910 = vmatpush1.bf16.msra.mxu0 0
  %911 = vmatprep.subr.bf16.mxu0 0
  %912 = vmatpush1.bf16.msra.mxu0 0
  %913 = vmatprep.subr.bf16.mxu0 0
  %914 = vmatpush1.bf16.msra.mxu0 0
  %915 = vmatprep.subr.bf16.mxu0 0
  %916 = vmatpush1.bf16.msra.mxu0 0
  %917 = vmatprep.subr.bf16.mxu0 0
  %918 = vmatpush1.bf16.msra.mxu0 0
  %919 = vmatprep.subr.bf16.mxu0 0
  %920 = vmatpush1.bf16.msra.mxu0 0
  %921 = vmatprep.subr.bf16.mxu0 0
  %922 = vmatpush1.bf16.msra.mxu0 0
  %923 = vmatprep.subr.bf16.mxu0 0
  %924 = vmatpush1.bf16.msra.mxu0 0
  %925 = vmatprep.subr.bf16.mxu0 0
  %926 = vmatpush1.bf16.msra.mxu0 0
  %927 = vmatprep.subr.bf16.mxu0 0
  %928 = vmatpush1.bf16.msra.mxu0 0
  %929 = vmatprep.subr.bf16.mxu0 0
  %930 = vmatpush1.bf16.msra.mxu0 0
  %931 = vmatprep.mubr.bf16.mxu0 0
  %932 = vmatmul.mubr.bf16.gmra.mrb[0].mxu0 %v857
  %v933 = vpop.f32.mrb[0].mxu0
  %v934 = vadd.f32 0.0, %v933
  %v935 = vpop.f32.mrb[0].mxu0
  %v936 = vpop.f32.mrb[0].mxu0
  %v937 = vpop.f32.mrb[0].mxu0
  %938 = vdwg.mxu0
  %v939 = vpack.c.bf16 %v854, %v854
  %v941 = vsel %vm212, %v939, 0
  %943 = vmatprep.subr.bf16.mxu0 0
  %944 = vmatpush1.bf16.msra.mxu0 %v204
  %945 = vmatprep.subr.bf16.mxu0 0
  %946 = vmatpush1.bf16.msra.mxu0 %v205
  %947 = vmatprep.subr.bf16.mxu0 0
  %948 = vmatpush1.bf16.msra.mxu0 %v206
  %949 = vmatprep.subr.bf16.mxu0 0
  %950 = vmatpush1.bf16.msra.mxu0 %v207
  %951 = vmatprep.subr.bf16.mxu0 0
  %952 = vmatpush1.bf16.msra.mxu0 0
  %953 = vmatprep.subr.bf16.mxu0 0
  %954 = vmatpush1.bf16.msra.mxu0 0
  %955 = vmatprep.subr.bf16.mxu0 0
  %956 = vmatpush1.bf16.msra.mxu0 0
  %957 = vmatprep.subr.bf16.mxu0 0
  %958 = vmatpush1.bf16.msra.mxu0 0
  %959 = vmatprep.subr.bf16.mxu0 0
  %960 = vmatpush1.bf16.msra.mxu0 0
  %961 = vmatprep.subr.bf16.mxu0 0
  %962 = vmatpush1.bf16.msra.mxu0 0
  %963 = vmatprep.subr.bf16.mxu0 0
  %964 = vmatpush1.bf16.msra.mxu0 0
  %965 = vmatprep.subr.bf16.mxu0 0
  %966 = vmatpush1.bf16.msra.mxu0 0
  %967 = vmatprep.subr.bf16.mxu0 0
  %968 = vmatpush1.bf16.msra.mxu0 0
  %969 = vmatprep.subr.bf16.mxu0 0
  %970 = vmatpush1.bf16.msra.mxu0 0
  %971 = vmatprep.subr.bf16.mxu0 0
  %972 = vmatpush1.bf16.msra.mxu0 0
  %973 = vmatprep.subr.bf16.mxu0 0
  %974 = vmatpush1.bf16.msra.mxu0 0
  %975 = vmatprep.mubr.bf16.mxu0 0
  %976 = vmatmul.mubr.bf16.gmra.mrb[0].mxu0 %v941
  %v977 = vpop.f32.mrb[0].mxu0
  %v978 = vadd.f32 0.0, %v977
  %v979 = vpop.f32.mrb[0].mxu0
  %v980 = vpop.f32.mrb[0].mxu0
  %v981 = vpop.f32.mrb[0].mxu0
  %982 = vdwg.mxu0
  %v983 = vpack.c.bf16 %v934, %v934
  %v984 = vunpack.c.l.bf16 %v983
  %v985 = vpack.c.bf16 %v894, %v894
  %v986 = vunpack.c.l.bf16 %v985
  %v987 = vmul.f32 %v984, %v986
  %v988 = vsel %vm369, %v987, 0.0
  %989 = vadd.xlane.f32.xlu0 %v988
  %v990 = vpop.xlane.xlu0 %989
  %v991 = vmul.f32 %v990, 0.17677669
  %v992 = vpack.c.bf16 %v978, %v978
  %v994 = vsel %vm98, %v983, 0
  %v997 = vsel %vm98, %v992, 0
  %999 = vmatprep.subr.bf16.mxu0 0
  %1000 = vmatpush1.bf16.xpose.msra.mxu0 %v997
  %1001 = vmatprep.subr.bf16.mxu0 0
  %1002 = vmatpush1.bf16.xpose.msra.mxu0 0
  %1003 = vmatprep.subr.bf16.mxu0 0
  %1004 = vmatpush1.bf16.xpose.msra.mxu0 0
  %1005 = vmatprep.subr.bf16.mxu0 0
  %1006 = vmatpush1.bf16.xpose.msra.mxu0 0
  %1007 = vmatprep.subr.bf16.mxu0 0
  %1008 = vmatpush1.bf16.xpose.msra.mxu0 0
  %1009 = vmatprep.subr.bf16.mxu0 0
  %1010 = vmatpush1.bf16.xpose.msra.mxu0 0
  %1011 = vmatprep.subr.bf16.mxu0 0
  %1012 = vmatpush1.bf16.xpose.msra.mxu0 0
  %1013 = vmatprep.subr.bf16.mxu0 0
  %1014 = vmatpush1.bf16.xpose.msra.mxu0 0
  %1015 = vmatprep.subr.bf16.mxu0 0
  %1016 = vmatpush1.bf16.xpose.msra.mxu0 0
  %1017 = vmatprep.subr.bf16.mxu0 0
  %1018 = vmatpush1.bf16.xpose.msra.mxu0 0
  %1019 = vmatprep.subr.bf16.mxu0 0
  %1020 = vmatpush1.bf16.xpose.msra.mxu0 0
  %1021 = vmatprep.subr.bf16.mxu0 0
  %1022 = vmatpush1.bf16.xpose.msra.mxu0 0
  %1023 = vmatprep.subr.bf16.mxu0 0
  %1024 = vmatpush1.bf16.xpose.msra.mxu0 0
  %1025 = vmatprep.subr.bf16.mxu0 0
  %1026 = vmatpush1.bf16.xpose.msra.mxu0 0
  %1027 = vmatprep.subr.bf16.mxu0 0
  %1028 = vmatpush1.bf16.xpose.msra.mxu0 0
  %1029 = vmatprep.subr.bf16.mxu0 0
  %1030 = vmatpush1.bf16.xpose.msra.mxu0 0
  %1031 = vmatprep.mubr.bf16.mxu0 0
  %1032 = vmatmul.mubr.bf16.gmra.mrb[0].mxu0 %v994
  %v1033 = vpop.f32.mrb[0].mxu0
  %v1034 = vadd.f32 0.0, %v1033
  %v1035 = vpop.f32.mrb[0].mxu0
  %v1036 = vpop.f32.mrb[0].mxu0
  %v1037 = vpop.f32.mrb[0].mxu0
  %1038 = vdwg.mxu0
  %v1039 = vmul.f32 %v1034, 0.17677669
  %v1040 = vsel %vm422, %v1039, -inf
  %1041 = vmax.xlane.f32.xlu0 %v1040
  %v1042 = vpop.xlane.xlu0 %1041
  %v1043 = vmax.f32 %v991, %v1042
  %v1044 = vsub.f32 %v991, %v1043
  %v1045 = vmul.f32 %v1044, 1.442695
  %v1046 = vpow.pop %v1045
  %v1047 = vsub.f32 %v1039, %v1043
  %v1048 = vmul.f32 %v1047, 1.442695
  %v1049 = vpow.pop %v1048
  %v1050 = vsel %vm422, %v1049, 0.0
  %1051 = vadd.xlane.f32.xlu0 %v1050
  %v1052 = vpop.xlane.xlu0 %1051
  %v1053 = vadd.f32 %v1046, %v1052
  %v1054 = vrcp.pop %v1053
  %v1055 = vmul.f32 %v1046, %v1054
  %v1056 = vmul.f32 %v1055, %v894
  %v1057 = vmul.f32 %v1049, %v1054
  %v1058 = vpack.c.bf16 %v1057, %v1057
  %1060 = vrot.lane.b32.xlu0 %v992, 64
  %v1061 = vpop.permute.xlu0 %1060
  %v1063 = vsel %vm445, %v1058, 0
  %v1066 = vsel %vm449, %v1061, 0
  %1068 = vmatprep.subr.bf16.mxu0 0
  %1069 = vmatpush1.bf16.msra.mxu0 %v1066
  %1070 = vmatprep.subr.bf16.mxu0 0
  %1071 = vmatpush1.bf16.msra.mxu0 0
  %1072 = vmatprep.subr.bf16.mxu0 0
  %1073 = vmatpush1.bf16.msra.mxu0 0
  %1074 = vmatprep.subr.bf16.mxu0 0
  %1075 = vmatpush1.bf16.msra.mxu0 0
  %1076 = vmatprep.subr.bf16.mxu0 0
  %1077 = vmatpush1.bf16.msra.mxu0 0
  %1078 = vmatprep.subr.bf16.mxu0 0
  %1079 = vmatpush1.bf16.msra.mxu0 0
  %1080 = vmatprep.subr.bf16.mxu0 0
  %1081 = vmatpush1.bf16.msra.mxu0 0
  %1082 = vmatprep.subr.bf16.mxu0 0
  %1083 = vmatpush1.bf16.msra.mxu0 0
  %1084 = vmatprep.subr.bf16.mxu0 0
  %1085 = vmatpush1.bf16.msra.mxu0 0
  %1086 = vmatprep.subr.bf16.mxu0 0
  %1087 = vmatpush1.bf16.msra.mxu0 0
  %1088 = vmatprep.subr.bf16.mxu0 0
  %1089 = vmatpush1.bf16.msra.mxu0 0
  %1090 = vmatprep.subr.bf16.mxu0 0
  %1091 = vmatpush1.bf16.msra.mxu0 0
  %1092 = vmatprep.subr.bf16.mxu0 0
  %1093 = vmatpush1.bf16.msra.mxu0 0
  %1094 = vmatprep.subr.bf16.mxu0 0
  %1095 = vmatpush1.bf16.msra.mxu0 0
  %1096 = vmatprep.subr.bf16.mxu0 0
  %1097 = vmatpush1.bf16.msra.mxu0 0
  %1098 = vmatprep.subr.bf16.mxu0 0
  %1099 = vmatpush1.bf16.msra.mxu0 0
  %1100 = vmatprep.mubr.bf16.mxu0 0
  %1101 = vmatmul.mubr.bf16.gmra.mrb[0].mxu0 %v1063
  %v1102 = vpop.f32.mrb[0].mxu0
  %v1103 = vadd.f32 0.0, %v1102
  %v1104 = vpop.f32.mrb[0].mxu0
  %v1105 = vpop.f32.mrb[0].mxu0
  %v1106 = vpop.f32.mrb[0].mxu0
  %1107 = vdwg.mxu0
  %1109 = vrot.lane.b32.xlu0 %v1103, 64
  %v1110 = vpop.permute.xlu0 %1109
  %v1112 = vadd.f32 %v1056, %v1110
  %1114 = vrot.lane.b32.xlu0 %v987, 96
  %v1115 = vpop.permute.xlu0 %1114
  %v1117 = vsel %vm369, %v1115, 0.0
  %1118 = vadd.xlane.f32.xlu0 %v1117
  %v1119 = vpop.xlane.xlu0 %1118
  %v1120 = vmul.f32 %v1119, 0.17677669
  %1122 = vrot.lane.b32.xlu0 %v983, 96
  %v1123 = vpop.permute.xlu0 %1122
  %1124 = vrot.lane.b32.xlu0 %v992, 96
  %v1125 = vpop.permute.xlu0 %1124
  %v1127 = vsel %vm98, %v1123, 0
  %v1130 = vsel %vm98, %v1125, 0
  %1132 = vmatprep.subr.bf16.mxu0 0
  %1133 = vmatpush1.bf16.xpose.msra.mxu0 %v1130
  %1134 = vmatprep.subr.bf16.mxu0 0
  %1135 = vmatpush1.bf16.xpose.msra.mxu0 0
  %1136 = vmatprep.subr.bf16.mxu0 0
  %1137 = vmatpush1.bf16.xpose.msra.mxu0 0
  %1138 = vmatprep.subr.bf16.mxu0 0
  %1139 = vmatpush1.bf16.xpose.msra.mxu0 0
  %1140 = vmatprep.subr.bf16.mxu0 0
  %1141 = vmatpush1.bf16.xpose.msra.mxu0 0
  %1142 = vmatprep.subr.bf16.mxu0 0
  %1143 = vmatpush1.bf16.xpose.msra.mxu0 0
  %1144 = vmatprep.subr.bf16.mxu0 0
  %1145 = vmatpush1.bf16.xpose.msra.mxu0 0
  %1146 = vmatprep.subr.bf16.mxu0 0
  %1147 = vmatpush1.bf16.xpose.msra.mxu0 0
  %1148 = vmatprep.subr.bf16.mxu0 0
  %1149 = vmatpush1.bf16.xpose.msra.mxu0 0
  %1150 = vmatprep.subr.bf16.mxu0 0
  %1151 = vmatpush1.bf16.xpose.msra.mxu0 0
  %1152 = vmatprep.subr.bf16.mxu0 0
  %1153 = vmatpush1.bf16.xpose.msra.mxu0 0
  %1154 = vmatprep.subr.bf16.mxu0 0
  %1155 = vmatpush1.bf16.xpose.msra.mxu0 0
  %1156 = vmatprep.subr.bf16.mxu0 0
  %1157 = vmatpush1.bf16.xpose.msra.mxu0 0
  %1158 = vmatprep.subr.bf16.mxu0 0
  %1159 = vmatpush1.bf16.xpose.msra.mxu0 0
  %1160 = vmatprep.subr.bf16.mxu0 0
  %1161 = vmatpush1.bf16.xpose.msra.mxu0 0
  %1162 = vmatprep.subr.bf16.mxu0 0
  %1163 = vmatpush1.bf16.xpose.msra.mxu0 0
  %1164 = vmatprep.mubr.bf16.mxu0 0
  %1165 = vmatmul.mubr.bf16.gmra.mrb[0].mxu0 %v1127
  %v1166 = vpop.f32.mrb[0].mxu0
  %v1167 = vadd.f32 0.0, %v1166
  %v1168 = vpop.f32.mrb[0].mxu0
  %v1169 = vpop.f32.mrb[0].mxu0
  %v1170 = vpop.f32.mrb[0].mxu0
  %1171 = vdwg.mxu0
  %v1172 = vmul.f32 %v1167, 0.17677669
  %v1173 = vsel %vm422, %v1172, -inf
  %1174 = vmax.xlane.f32.xlu0 %v1173
  %v1175 = vpop.xlane.xlu0 %1174
  %v1176 = vmax.f32 %v1120, %v1175
  %v1177 = vsub.f32 %v1120, %v1176
  %v1178 = vmul.f32 %v1177, 1.442695
  %v1179 = vpow.pop %v1178
  %v1180 = vsub.f32 %v1172, %v1176
  %v1181 = vmul.f32 %v1180, 1.442695
  %v1182 = vpow.pop %v1181
  %v1183 = vsel %vm422, %v1182, 0.0
  %1184 = vadd.xlane.f32.xlu0 %v1183
  %v1185 = vpop.xlane.xlu0 %1184
  %v1186 = vadd.f32 %v1179, %v1185
  %v1187 = vrcp.pop %v1186
  %v1188 = vmul.f32 %v1179, %v1187
  %v1189 = vmul.f32 %v1188, %v894
  %v1190 = vmul.f32 %v1182, %v1187
  %v1191 = vpack.c.bf16 %v1190, %v1190
  %1192 = vrot.lane.b32.xlu0 %v992, 32
  %v1193 = vpop.permute.xlu0 %1192
  %v1195 = vsel %vm445, %v1191, 0
  %v1198 = vsel %vm449, %v1193, 0
  %1200 = vmatprep.subr.bf16.mxu0 0
  %1201 = vmatpush1.bf16.msra.mxu0 %v1198
  %1202 = vmatprep.subr.bf16.mxu0 0
  %1203 = vmatpush1.bf16.msra.mxu0 0
  %1204 = vmatprep.subr.bf16.mxu0 0
  %1205 = vmatpush1.bf16.msra.mxu0 0
  %1206 = vmatprep.subr.bf16.mxu0 0
  %1207 = vmatpush1.bf16.msra.mxu0 0
  %1208 = vmatprep.subr.bf16.mxu0 0
  %1209 = vmatpush1.bf16.msra.mxu0 0
  %1210 = vmatprep.subr.bf16.mxu0 0
  %1211 = vmatpush1.bf16.msra.mxu0 0
  %1212 = vmatprep.subr.bf16.mxu0 0
  %1213 = vmatpush1.bf16.msra.mxu0 0
  %1214 = vmatprep.subr.bf16.mxu0 0
  %1215 = vmatpush1.bf16.msra.mxu0 0
  %1216 = vmatprep.subr.bf16.mxu0 0
  %1217 = vmatpush1.bf16.msra.mxu0 0
  %1218 = vmatprep.subr.bf16.mxu0 0
  %1219 = vmatpush1.bf16.msra.mxu0 0
  %1220 = vmatprep.subr.bf16.mxu0 0
  %1221 = vmatpush1.bf16.msra.mxu0 0
  %1222 = vmatprep.subr.bf16.mxu0 0
  %1223 = vmatpush1.bf16.msra.mxu0 0
  %1224 = vmatprep.subr.bf16.mxu0 0
  %1225 = vmatpush1.bf16.msra.mxu0 0
  %1226 = vmatprep.subr.bf16.mxu0 0
  %1227 = vmatpush1.bf16.msra.mxu0 0
  %1228 = vmatprep.subr.bf16.mxu0 0
  %1229 = vmatpush1.bf16.msra.mxu0 0
  %1230 = vmatprep.subr.bf16.mxu0 0
  %1231 = vmatpush1.bf16.msra.mxu0 0
  %1232 = vmatprep.mubr.bf16.mxu0 0
  %1233 = vmatmul.mubr.bf16.gmra.mrb[0].mxu0 %v1195
  %v1234 = vpop.f32.mrb[0].mxu0
  %v1235 = vadd.f32 0.0, %v1234
  %v1236 = vpop.f32.mrb[0].mxu0
  %v1237 = vpop.f32.mrb[0].mxu0
  %v1238 = vpop.f32.mrb[0].mxu0
  %1239 = vdwg.mxu0
  %1241 = vrot.lane.b32.xlu0 %v1235, 96
  %v1242 = vpop.permute.xlu0 %1241
  %v1244 = vadd.f32 %v1189, %v1242
  %1246 = vrot.lane.b32.xlu0 %v1112, 64
  %v1247 = vpop.permute.xlu0 %1246
  %1250 = vrot.lane.b32.xlu0 %v1244, 64
  %v1251 = vpop.permute.xlu0 %1250
  %v1253 = vsel %vm98, %v1247, %v1251
  %v1254 = vpack.c.bf16 %v1253, %v1253
  %v1256 = vsel %vm212, %v1254, 0
  %1258 = vmatprep.subr.bf16.mxu0 0
  %1259 = vmatpush1.bf16.msra.mxu0 %v656
  %1260 = vmatprep.subr.bf16.mxu0 0
  %1261 = vmatpush1.bf16.msra.mxu0 %v657
  %1262 = vmatprep.subr.bf16.mxu0 0
  %1263 = vmatpush1.bf16.msra.mxu0 %v658
  %1264 = vmatprep.subr.bf16.mxu0 0
  %1265 = vmatpush1.bf16.msra.mxu0 %v659
  %1266 = vmatprep.subr.bf16.mxu0 0
  %1267 = vmatpush1.bf16.msra.mxu0 0
  %1268 = vmatprep.subr.bf16.mxu0 0
  %1269 = vmatpush1.bf16.msra.mxu0 0
  %1270 = vmatprep.subr.bf16.mxu0 0
  %1271 = vmatpush1.bf16.msra.mxu0 0
  %1272 = vmatprep.subr.bf16.mxu0 0
  %1273 = vmatpush1.bf16.msra.mxu0 0
  %1274 = vmatprep.subr.bf16.mxu0 0
  %1275 = vmatpush1.bf16.msra.mxu0 0
  %1276 = vmatprep.subr.bf16.mxu0 0
  %1277 = vmatpush1.bf16.msra.mxu0 0
  %1278 = vmatprep.subr.bf16.mxu0 0
  %1279 = vmatpush1.bf16.msra.mxu0 0
  %1280 = vmatprep.subr.bf16.mxu0 0
  %1281 = vmatpush1.bf16.msra.mxu0 0
  %1282 = vmatprep.subr.bf16.mxu0 0
  %1283 = vmatpush1.bf16.msra.mxu0 0
  %1284 = vmatprep.subr.bf16.mxu0 0
  %1285 = vmatpush1.bf16.msra.mxu0 0
  %1286 = vmatprep.subr.bf16.mxu0 0
  %1287 = vmatpush1.bf16.msra.mxu0 0
  %1288 = vmatprep.subr.bf16.mxu0 0
  %1289 = vmatpush1.bf16.msra.mxu0 0
  %1290 = vmatprep.mubr.bf16.mxu0 0
  %1291 = vmatmul.mubr.bf16.gmra.mrb[0].mxu0 %v1256
  %v1292 = vpop.f32.mrb[0].mxu0
  %v1293 = vadd.f32 %v73, %v1292
  %v1294 = vpop.f32.mrb[0].mxu0
  %v1295 = vpop.f32.mrb[0].mxu0
  %v1296 = vpop.f32.mrb[0].mxu0
  %1297 = vdwg.mxu0
  %v1298 = vadd.f32 %v820, %v1293
  %v1299 = vpack.c.bf16 %v1298, %v1298
  %v1301 = vsel %vm212, %v1299, 0
  %1303 = vmatprep.subr.bf16.mxu0 0
  %1304 = vmatpush1.bf16.msra.mxu0 %v725
  %1305 = vmatprep.subr.bf16.mxu0 0
  %1306 = vmatpush1.bf16.msra.mxu0 %v726
  %1307 = vmatprep.subr.bf16.mxu0 0
  %1308 = vmatpush1.bf16.msra.mxu0 %v727
  %1309 = vmatprep.subr.bf16.mxu0 0
  %1310 = vmatpush1.bf16.msra.mxu0 %v728
  %1311 = vmatprep.subr.bf16.mxu0 0
  %1312 = vmatpush1.bf16.msra.mxu0 0
  %1313 = vmatprep.subr.bf16.mxu0 0
  %1314 = vmatpush1.bf16.msra.mxu0 0
  %1315 = vmatprep.subr.bf16.mxu0 0
  %1316 = vmatpush1.bf16.msra.mxu0 0
  %1317 = vmatprep.subr.bf16.mxu0 0
  %1318 = vmatpush1.bf16.msra.mxu0 0
  %1319 = vmatprep.subr.bf16.mxu0 0
  %1320 = vmatpush1.bf16.msra.mxu0 0
  %1321 = vmatprep.subr.bf16.mxu0 0
  %1322 = vmatpush1.bf16.msra.mxu0 0
  %1323 = vmatprep.subr.bf16.mxu0 0
  %1324 = vmatpush1.bf16.msra.mxu0 0
  %1325 = vmatprep.subr.bf16.mxu0 0
  %1326 = vmatpush1.bf16.msra.mxu0 0
  %1327 = vmatprep.subr.bf16.mxu0 0
  %1328 = vmatpush1.bf16.msra.mxu0 0
  %1329 = vmatprep.subr.bf16.mxu0 0
  %1330 = vmatpush1.bf16.msra.mxu0 0
  %1331 = vmatprep.subr.bf16.mxu0 0
  %1332 = vmatpush1.bf16.msra.mxu0 0
  %1333 = vmatprep.subr.bf16.mxu0 0
  %1334 = vmatpush1.bf16.msra.mxu0 0
  %1335 = vmatprep.mubr.bf16.mxu0 0
  %1336 = vmatmul.mubr.bf16.gmra.mrb[0].mxu0 %v1301
  %v1337 = vpop.f32.mrb[0].mxu0
  %v1338 = vadd.f32 %v82, %v1337
  %v1339 = vpop.f32.mrb[0].mxu0
  %v1340 = vpop.f32.mrb[0].mxu0
  %v1341 = vpop.f32.mrb[0].mxu0
  %1342 = vdwg.mxu0
  %s1343 = scalar_lea.vmem %s12, 1
  %1344 = vst.msk [vmem:[%s1343] sm:$0x1] %vm369, %v1338
  // Predicated region
  $region50: #{multiscale_apply.15} parent=0 // pred_check
    _
  $region51: #{multiscale_apply.15} parent=0 // pred_check_branch
    %1346 = sbr.rel (0) target = $region53
  $region52: #{multiscale_apply.15} parent=0 // pred_region
    _
  $region53: #{multiscale_apply.15} parent=0 // pred_fallthru
    _
  // Predicated region
  $region54: #{multiscale_apply.15} parent=0 // pred_check
    _
  $region55: #{multiscale_apply.15} parent=0 // pred_check_branch
    %1348 = sbr.rel (0) target = $region57
  $region56: #{multiscale_apply.15} parent=0 // pred_region
    _
  $region57: #{multiscale_apply.15} parent=0 // pred_fallthru
    _

</llo_original>
